<compile_context>
chip_gen: v6e
topology: v6e:2x2x1
jax: 0.10.0
libtpu: 0.0.40
codegen_flags: <defaults>
</compile_context>

<pallas_src>
import functools

import jax
import jax.numpy as jnp
from jax import lax
from jax.experimental import pallas as pl
from jax.experimental.pallas import tpu as pltpu

# --- FlowLoss defaults (see PyTorch module) ---
FLOW_TEMP = 0.1
RADIUS = 0.7
KERNEL_SIZE = 5
STRIDE = 2
LOSS_WEIGHT_MARGIN = 0.01
STATIC_THRESHOLD = 0.1


@functools.lru_cache(maxsize=1)
def _gen_params():
    """(feature dtype, vmem_limit_bytes) tuned per TPU generation."""
    kind = ""
    try:
        kind = jax.devices()[0].device_kind.lower()
    except Exception:
        pass
    vmem_phys = None
    try:
        vmem_phys = int(pltpu.get_tpu_info().vmem_capacity_bytes)
    except Exception:
        vmem_phys = None
    # v5e and older have no bf16 VALU: bf16 arithmetic only adds converts there.
    use_bf16 = not any(t in kind for t in ("v2", "v3", "v4", "v5"))
    feat_dtype = jnp.bfloat16 if use_bf16 else jnp.float32
    if vmem_phys is None:
        vmem_phys = 64 * 1024 * 1024            # assume smallest (v7x) VMEM
    vmem_limit = min(int(0.75 * vmem_phys), 100 * 1024 * 1024)
    return feat_dtype, vmem_limit


def _flow_seg_loss_kernel(mask_ref, flow_ref, feat_ref, sal_ref, out_ref):
    """One batch element per grid step.

    Parity-split layout:  x_ps[hp, wp, ..., r, c] == x[..., 2r+hp, 2c+wp]
      mask_ref: (1, 2, 2, H2, W2)      segmentation logits           f32
      flow_ref: (1, 2, 2, 2, H2, W2)   optical flow (u, v)           f32
      feat_ref: (1, 2, 2, C, H2, W2)   features                      f32/bf16
      sal_ref : (1, 2, 2, H2, W2)      saliency                      f32
      out_ref : (1, 8, 128)  row0 = bce_sum, row1 = sum(ce*fw), row2 = sum(fw)
    """
    k = KERNEL_SIZE
    h2, w2 = sal_ref.shape[-2], sal_ref.shape[-1]
    c = feat_ref.shape[3]
    h = (2 * h2 - k) // STRIDE + 1
    w = (2 * w2 - k) // STRIDE + 1
    inv_t = 1.0 / FLOW_TEMP
    inv_r = 1.0 / RADIUS

    # ---------------- supervised BCE vs. flow-motion mask ----------------
    x = mask_ref[0]                              # (2,2,H2,W2) logits
    flw = flow_ref[0]                            # (2,2,2,H2,W2)
    u, v = flw[:, :, 0], flw[:, :, 1]
    flow_norm = jnp.sqrt(u * u + v * v)          # |flow| per pixel (uncentered)
    max_norm = jnp.max(flow_norm)                # flows.norm(dim=1).max() per batch

    # target: |flow - mean(flow)| > 0.2 * max(|flow - mean|)  (squared compare)
    uc = u - jnp.mean(u)
    vc = v - jnp.mean(v)
    cnorm_sq = uc * uc + vc * vc
    target = (cnorm_sq > 0.04 * jnp.max(cnorm_sq)).astype(jnp.float32)
    # stable BCE-with-logits:  max(x,0) - x*t + log(1 + exp(-|x|))
    bce = jnp.maximum(x, 0.0) - x * target + jnp.log(1.0 + jnp.exp(-jnp.abs(x)))
    bce_sum = jnp.sum(bce)

    # flow-norm map of make_optical_flow_grid(normalize=False, maximum_norm=max_norm)
    fn_map = jnp.maximum(flow_norm * (1.0 / (1e-6 + max_norm)) - STATIC_THRESHOLD, 0.0)

    # per-pixel inverse feature norm (F.normalize(dim=channels), eps=1e-12);
    # products in the feature dtype, accumulation in f32.
    feat_full = feat_ref[0]                      # (2,2,C,H2,W2)
    inv_fnorm = lax.rsqrt(jnp.maximum(
        jnp.sum(feat_full * feat_full, axis=2, dtype=jnp.float32), 1e-24))

    # ---------------- pass 1: in-window saliency argmax -> center selection ------------
    # kw (lane shift) hoisted to the outer loop: column slabs materialized once per
    # kw; the 5 kh offsets are sublane-only slices.  Loops stay statically unrolled.
    smax = jnp.full((h, w), -jnp.inf, jnp.float32)
    center_feat = jnp.zeros((c, h, w), feat_full.dtype)   # raw features at the center
    center_inv = jnp.zeros((h, w), jnp.float32)           # their inverse norm
    center_flow = jnp.zeros((2, h, w), jnp.float32)       # raw flow at the center
    for kw in range(k):
        wp, co = kw & 1, kw // 2
        cs = slice(co, co + w)
        sal_col = sal_ref[0, :, wp, :, cs]                # (2, h2, w)
        inv_col = inv_fnorm[:, wp, :, cs]                 # (2, h2, w)
        feat_col = feat_ref[0, :, wp, :, :, cs]           # (2, C, h2, w)
        flow_col = flow_ref[0, :, wp, :, :, cs]           # (2, 2, h2, w)
        for kh in range(k):
            hp, ro = kh & 1, kh // 2
            rs = slice(ro, ro + h)
            s_k = sal_col[hp, rs, :]                      # (h, w)
            new = s_k > smax
            smax = jnp.where(new, s_k, smax)
            center_inv = jnp.where(new, inv_col[hp, rs, :], center_inv)
            center_feat = jnp.where(new[None], feat_col[hp, :, rs, :], center_feat)
            center_flow = jnp.where(new[None], flow_col[hp, :, rs, :], center_flow)

    sa = jnp.maximum(jnp.sum(center_flow * center_flow, axis=0), 1e-16)  # ||flow_c||^2

    # ---------------- pass 2: streaming softmax / CE over the 25 offsets ----------------
    # flow-grid values are in [0, ~1] and feature sims in [-1, 1]: exp(./T) cannot
    # overflow in f32, so no running max/rescale -- only 4 (h, w) accumulators.
    s_l = jnp.zeros((h, w), jnp.float32)        # sum_k exp(lg_k / T)
    s_lf = jnp.zeros((h, w), jnp.float32)       # sum_k exp(lg_k / T) * fg_k
    s_f = jnp.zeros((h, w), jnp.float32)        # sum_k exp(fg_k / T)
    sum_lg = jnp.zeros((h, w), jnp.float32)     # sum_k lg_k  (-> loss weights)
    for kw in range(k):
        wp, co = kw & 1, kw // 2
        cs = slice(co, co + w)
        feat_col = feat_ref[0, :, wp, :, :, cs]           # (2, C, h2, w)
        flow_col = flow_ref[0, :, wp, :, :, cs]           # (2, 2, h2, w)
        fn_col = fn_map[:, wp, :, cs]                     # (2, h2, w)
        inv_col = inv_fnorm[:, wp, :, cs]                 # (2, h2, w)
        for kh in range(k):
            hp, ro = kh & 1, kh // 2
            rs = slice(ro, ro + h)
            f_k = feat_col[hp, :, rs, :]                  # (C, h, w)
            fl_k = flow_col[hp, :, rs, :]                 # (2, h, w)
            # normalized feature similarity: raw dot * inv_norm_center * inv_norm_block
            fg = (jnp.sum(center_feat * f_k, axis=0, dtype=jnp.float32)
                  * (center_inv * inv_col[hp, rs, :]))
            # F.cosine_similarity(eps=1e-8), clamped to [0, 1] as in the reference
            dot = jnp.sum(center_flow * fl_k, axis=0)
            sb = jnp.maximum(jnp.sum(fl_k * fl_k, axis=0), 1e-16)
            cos = jnp.clip(dot * lax.rsqrt(sa * sb), 0.0, 1.0)
            lg = jnp.exp((cos - 1.0) * inv_r) * fn_col[hp, rs, :]   # flow-grid value
            e_l = jnp.exp(lg * inv_t)
            s_l = s_l + e_l
            s_lf = s_lf + e_l * fg
            s_f = s_f + jnp.exp(fg * inv_t)
            sum_lg = sum_lg + lg

    # distilled CE:  ce = logsumexp(fg/T) - (1/T) * sum_k softmax(lg/T)_k * fg_k
    ce = jnp.log(s_f) - (s_lf / s_l) * inv_t              # (h, w)
    # per-block loss weights ('norm' mode); normalization finished on the host
    fw = jnp.maximum(sum_lg * (1.0 / (k * k)) - LOSS_WEIGHT_MARGIN, 0.0)
    ce_fw_sum = jnp.sum(ce * fw)
    fw_sum = jnp.sum(fw)

    # single unmasked store of a full (8, 128) tile
    row = lax.broadcasted_iota(jnp.int32, (8, 128), 0)
    slab = jnp.where(row == 0, bce_sum,
           jnp.where(row == 1, ce_fw_sum,
           jnp.where(row == 2, fw_sum, 0.0)))
    out_ref[...] = slab[None].astype(out_ref.dtype)


def flow_guided_seg_loss(masks, feats, flows):
    """masks: (N,H,W) logits; feats: (N,H,W,C+1) (last channel = saliency);
    flows: (N,2,H,W).  Returns scalar loss = BCE(mean) + FlowLoss(batch mean)."""
    feat_dtype, vmem_limit = _gen_params()

    masks = masks.astype(jnp.float32)
    feats = feats.astype(jnp.float32)
    flows = flows.astype(jnp.float32)

    n, hh, ww = masks.shape
    c = feats.shape[-1] - 1
    assert hh % 2 == 0 and ww % 2 == 0 and min(hh, ww) >= KERNEL_SIZE + 1, \
        "even spatial dims >= kernel_size+1 required"
    h2, w2 = hh // 2, ww // 2

    # parity-split layout: x_ps[b, hp, wp, ..., r, c] = x[b, ..., 2r+hp, 2c+wp]
    # (pure reshape/transpose at 1x data size -- no 25x unfold, no gather)
    masks_ps = masks.reshape(n, h2, 2, w2, 2).transpose(0, 2, 4, 1, 3)
    flows_ps = flows.reshape(n, 2, h2, 2, w2, 2).transpose(0, 3, 5, 1, 2, 4)
    feat_chw = jnp.transpose(feats[..., :-1].astype(feat_dtype), (0, 3, 1, 2))
    feat_ps = feat_chw.reshape(n, c, h2, 2, w2, 2).transpose(0, 3, 5, 1, 2, 4)
    sal_ps = feats[..., -1].reshape(n, h2, 2, w2, 2).transpose(0, 2, 4, 1, 3)

    parts = pl.pallas_call(
        _flow_seg_loss_kernel,
        out_shape=jax.ShapeDtypeStruct((n, 8, 128), jnp.float32),
        grid_spec=pltpu.PrefetchScalarGridSpec(
            num_scalar_prefetch=0,
            grid=(n,),
            in_specs=[
                pl.BlockSpec((1, 2, 2, h2, w2), lambda i: (i, 0, 0, 0, 0)),
                pl.BlockSpec((1, 2, 2, 2, h2, w2), lambda i: (i, 0, 0, 0, 0, 0)),
                pl.BlockSpec((1, 2, 2, c, h2, w2), lambda i: (i, 0, 0, 0, 0, 0)),
                pl.BlockSpec((1, 2, 2, h2, w2), lambda i: (i, 0, 0, 0, 0)),
            ],
            out_specs=pl.BlockSpec((1, 8, 128), lambda i: (i, 0, 0)),
        ),
        compiler_params=pltpu.CompilerParams(
            dimension_semantics=("parallel",),
            vmem_limit_bytes=vmem_limit,
        ),
    )(masks_ps, flows_ps, feat_ps, sal_ps)

    bce_sum = parts[:, 0, 0]
    ce_fw = parts[:, 1, 0]
    fw_sum = parts[:, 2, 0]
    loss_sup = jnp.sum(bce_sum) / (n * hh * ww)                      # BCE 'mean'
    loss_unsup = jnp.mean(jnp.nan_to_num(ce_fw / (fw_sum + 1e-6)))   # FlowLoss batch mean
    return loss_sup + loss_unsup


if __name__ == "__main__":
    key = jax.random.PRNGKey(0)
    N, H, W, C = 2, 16, 16, 4
    k1, k2_, k3 = jax.random.split(key, 3)
    masks = jax.random.normal(k1, (N, H, W), dtype=jnp.float32)
    feats = jax.random.normal(k2_, (N, H, W, C + 1), dtype=jnp.float32)
    flows = jax.random.normal(k3, (N, 2, H, W), dtype=jnp.float32)

    loss = jax.jit(flow_guided_seg_loss)(masks, feats, flows)
    jax.block_until_ready(loss)
    assert loss.shape == () and bool(jnp.isfinite(loss))
    print("KERNEL_OK")
</pallas_src>

<mosaic_0001>
module attributes {stable_mosaic.version = 11 : i64} {
  func.func @_flow_seg_loss_kernel(%arg0: i32, %arg1: memref<1x2x2x8x8xf32, #tpu.memory_space<vmem>>, %arg2: memref<1x2x2x2x8x8xf32, #tpu.memory_space<vmem>>, %arg3: memref<1x2x2x4x8x8xbf16, #tpu.memory_space<vmem>>, %arg4: memref<1x2x2x8x8xf32, #tpu.memory_space<vmem>>, %arg5: memref<1x8x128xf32, #tpu.memory_space<vmem>>) attributes {dimension_semantics = [#tpu.dimension_semantics<parallel>], iteration_bounds = array<i64: 2>, scalar_prefetch = 0 : i64, scratch_operands = 0 : i64, tpu.core_type = #tpu.core_type<tc>, window_params = [{transform_indices = @transform_0, window_bounds = array<i64: 1, 2, 2, 8, 8>}, {transform_indices = @transform_1, window_bounds = array<i64: 1, 2, 2, 2, 8, 8>}, {transform_indices = @transform_2, window_bounds = array<i64: 1, 2, 2, 4, 8, 8>}, {transform_indices = @transform_3, window_bounds = array<i64: 1, 2, 2, 8, 8>}, {transform_indices = @transform_4, window_bounds = array<i64: 1, 8, 128>}]} {
    %c0 = arith.constant 0 : index
    %c0_0 = arith.constant 0 : index
    %c0_1 = arith.constant 0 : index
    %c0_2 = arith.constant 0 : index
    %c0_3 = arith.constant 0 : index
    %0 = vector.load %arg1[%c0, %c0_0, %c0_1, %c0_2, %c0_3] : memref<1x2x2x8x8xf32, #tpu.memory_space<vmem>>, vector<1x2x2x8x8xf32>
    %1 = vector.shape_cast %0 : vector<1x2x2x8x8xf32> to vector<2x2x8x8xf32>
    %c0_4 = arith.constant 0 : index
    %c0_5 = arith.constant 0 : index
    %c0_6 = arith.constant 0 : index
    %c0_7 = arith.constant 0 : index
    %c0_8 = arith.constant 0 : index
    %c0_9 = arith.constant 0 : index
    %2 = vector.load %arg2[%c0_4, %c0_5, %c0_6, %c0_7, %c0_8, %c0_9] : memref<1x2x2x2x8x8xf32, #tpu.memory_space<vmem>>, vector<1x2x2x2x8x8xf32>
    %3 = vector.shape_cast %2 : vector<1x2x2x2x8x8xf32> to vector<2x2x2x8x8xf32>
    %4 = vector.extract_strided_slice %3 {offsets = [0, 0, 0, 0, 0], sizes = [2, 2, 1, 8, 8], strides = [1, 1, 1, 1, 1]} : vector<2x2x2x8x8xf32> to vector<2x2x1x8x8xf32>
    %5 = vector.shape_cast %4 : vector<2x2x1x8x8xf32> to vector<2x2x8x8xf32>
    %6 = vector.extract_strided_slice %3 {offsets = [0, 0, 1, 0, 0], sizes = [2, 2, 1, 8, 8], strides = [1, 1, 1, 1, 1]} : vector<2x2x2x8x8xf32> to vector<2x2x1x8x8xf32>
    %7 = vector.shape_cast %6 : vector<2x2x1x8x8xf32> to vector<2x2x8x8xf32>
    %8 = arith.mulf %5, %5 : vector<2x2x8x8xf32>
    %9 = arith.mulf %7, %7 : vector<2x2x8x8xf32>
    %10 = arith.addf %8, %9 : vector<2x2x8x8xf32>
    %11 = math.sqrt %10 : vector<2x2x8x8xf32>
    %12 = vector.shape_cast %11 : vector<2x2x8x8xf32> to vector<1x2x2x8x8xf32>
    %cst = arith.constant dense<0xFF800000> : vector<1xf32>
    %13 = vector.multi_reduction <maximumf>, %12, %cst [1, 2, 3, 4] : vector<1x2x2x8x8xf32> to vector<1xf32>
    %14 = vector.shape_cast %13 : vector<1xf32> to vector<1x1x1x1x1xf32>
    %15 = vector.extract %14[0, 0, 0, 0, 0] : f32 from vector<1x1x1x1x1xf32>
    %16 = vector.shape_cast %5 : vector<2x2x8x8xf32> to vector<1x2x2x8x8xf32>
    %cst_10 = arith.constant dense<0.000000e+00> : vector<1xf32>
    %17 = vector.multi_reduction <add>, %16, %cst_10 [1, 2, 3, 4] : vector<1x2x2x8x8xf32> to vector<1xf32>
    %18 = vector.shape_cast %17 : vector<1xf32> to vector<1x1x1x1x1xf32>
    %19 = vector.extract %18[0, 0, 0, 0, 0] : f32 from vector<1x1x1x1x1xf32>
    %cst_11 = arith.constant 2.560000e+02 : f32
    %20 = arith.divf %19, %cst_11 : f32
    %21 = vector.broadcast %20 : f32 to vector<2x2x8x8xf32>
    %22 = arith.subf %5, %21 : vector<2x2x8x8xf32>
    %23 = vector.shape_cast %7 : vector<2x2x8x8xf32> to vector<1x2x2x8x8xf32>
    %cst_12 = arith.constant dense<0.000000e+00> : vector<1xf32>
    %24 = vector.multi_reduction <add>, %23, %cst_12 [1, 2, 3, 4] : vector<1x2x2x8x8xf32> to vector<1xf32>
    %25 = vector.shape_cast %24 : vector<1xf32> to vector<1x1x1x1x1xf32>
    %26 = vector.extract %25[0, 0, 0, 0, 0] : f32 from vector<1x1x1x1x1xf32>
    %cst_13 = arith.constant 2.560000e+02 : f32
    %27 = arith.divf %26, %cst_13 : f32
    %28 = vector.broadcast %27 : f32 to vector<2x2x8x8xf32>
    %29 = arith.subf %7, %28 : vector<2x2x8x8xf32>
    %30 = arith.mulf %22, %22 : vector<2x2x8x8xf32>
    %31 = arith.mulf %29, %29 : vector<2x2x8x8xf32>
    %32 = arith.addf %30, %31 : vector<2x2x8x8xf32>
    %33 = vector.shape_cast %32 : vector<2x2x8x8xf32> to vector<1x2x2x8x8xf32>
    %cst_14 = arith.constant dense<0xFF800000> : vector<1xf32>
    %34 = vector.multi_reduction <maximumf>, %33, %cst_14 [1, 2, 3, 4] : vector<1x2x2x8x8xf32> to vector<1xf32>
    %35 = vector.shape_cast %34 : vector<1xf32> to vector<1x1x1x1x1xf32>
    %36 = vector.extract %35[0, 0, 0, 0, 0] : f32 from vector<1x1x1x1x1xf32>
    %cst_15 = arith.constant 4.000000e-02 : f32
    %37 = arith.mulf %cst_15, %36 : f32
    %38 = vector.broadcast %37 : f32 to vector<2x2x8x8xf32>
    %39 = arith.cmpf ogt, %32, %38 : vector<2x2x8x8xf32>
    %40 = arith.extui %39 : vector<2x2x8x8xi1> to vector<2x2x8x8xi32>
    %41 = arith.sitofp %40 : vector<2x2x8x8xi32> to vector<2x2x8x8xf32>
    %cst_16 = arith.constant 0.000000e+00 : f32
    %42 = vector.broadcast %cst_16 : f32 to vector<2x2x8x8xf32>
    %43 = arith.maximumf %1, %42 : vector<2x2x8x8xf32>
    %44 = arith.mulf %1, %41 : vector<2x2x8x8xf32>
    %45 = arith.subf %43, %44 : vector<2x2x8x8xf32>
    %46 = math.absf %1 : vector<2x2x8x8xf32>
    %cst_17 = arith.constant 0.000000e+00 : f32
    %47 = vector.broadcast %cst_17 : f32 to vector<2x2x8x8xf32>
    %48 = arith.subf %47, %46 : vector<2x2x8x8xf32>
    %49 = math.exp %48 : vector<2x2x8x8xf32>
    %cst_18 = arith.constant 1.000000e+00 : f32
    %50 = vector.broadcast %cst_18 : f32 to vector<2x2x8x8xf32>
    %51 = arith.addf %50, %49 : vector<2x2x8x8xf32>
    %52 = math.log %51 : vector<2x2x8x8xf32>
    %53 = arith.addf %45, %52 : vector<2x2x8x8xf32>
    %54 = vector.shape_cast %53 : vector<2x2x8x8xf32> to vector<1x2x2x8x8xf32>
    %cst_19 = arith.constant dense<0.000000e+00> : vector<1xf32>
    %55 = vector.multi_reduction <add>, %54, %cst_19 [1, 2, 3, 4] : vector<1x2x2x8x8xf32> to vector<1xf32>
    %56 = vector.shape_cast %55 : vector<1xf32> to vector<1x1x1x1x1xf32>
    %57 = vector.extract %56[0, 0, 0, 0, 0] : f32 from vector<1x1x1x1x1xf32>
    %cst_20 = arith.constant 9.99999997E-7 : f32
    %58 = arith.addf %cst_20, %15 : f32
    %cst_21 = arith.constant 1.000000e+00 : f32
    %59 = arith.divf %cst_21, %58 : f32
    %60 = vector.broadcast %59 : f32 to vector<2x2x8x8xf32>
    %61 = arith.mulf %11, %60 : vector<2x2x8x8xf32>
    %cst_22 = arith.constant 1.000000e-01 : f32
    %62 = vector.broadcast %cst_22 : f32 to vector<2x2x8x8xf32>
    %63 = arith.subf %61, %62 : vector<2x2x8x8xf32>
    %cst_23 = arith.constant 0.000000e+00 : f32
    %64 = vector.broadcast %cst_23 : f32 to vector<2x2x8x8xf32>
    %65 = arith.maximumf %63, %64 : vector<2x2x8x8xf32>
    %c0_24 = arith.constant 0 : index
    %c0_25 = arith.constant 0 : index
    %c0_26 = arith.constant 0 : index
    %c0_27 = arith.constant 0 : index
    %c0_28 = arith.constant 0 : index
    %c0_29 = arith.constant 0 : index
    %66 = vector.load %arg3[%c0_24, %c0_25, %c0_26, %c0_27, %c0_28, %c0_29] : memref<1x2x2x4x8x8xbf16, #tpu.memory_space<vmem>>, vector<1x2x2x4x8x8xbf16>
    %67 = vector.shape_cast %66 : vector<1x2x2x4x8x8xbf16> to vector<2x2x4x8x8xbf16>
    %68 = arith.mulf %67, %67 : vector<2x2x4x8x8xbf16>
    %69 = arith.extf %68 : vector<2x2x4x8x8xbf16> to vector<2x2x4x8x8xf32>
    %cst_30 = arith.constant dense<0.000000e+00> : vector<2x2x8x8xf32>
    %70 = vector.multi_reduction <add>, %69, %cst_30 [2] : vector<2x2x4x8x8xf32> to vector<2x2x8x8xf32>
    %cst_31 = arith.constant 1.000000e-24 : f32
    %71 = vector.broadcast %cst_31 : f32 to vector<2x2x8x8xf32>
    %72 = arith.maximumf %70, %71 : vector<2x2x8x8xf32>
    %73 = math.rsqrt %72 : vector<2x2x8x8xf32>
    %cst_32 = arith.constant 0xFF800000 : f32
    %74 = vector.broadcast %cst_32 : f32 to vector<6x6xf32>
    %cst_33 = arith.constant 0.000000e+00 : bf16
    %75 = vector.broadcast %cst_33 : bf16 to vector<4x6x6xbf16>
    %cst_34 = arith.constant 0.000000e+00 : f32
    %76 = vector.broadcast %cst_34 : f32 to vector<6x6xf32>
    %cst_35 = arith.constant 0.000000e+00 : f32
    %77 = vector.broadcast %cst_35 : f32 to vector<2x6x6xf32>
    %c0_36 = arith.constant 0 : index
    %c0_37 = arith.constant 0 : index
    %c0_38 = arith.constant 0 : index
    %c0_39 = arith.constant 0 : index
    %c0_40 = arith.constant 0 : index
    %78 = vector.load %arg4[%c0_36, %c0_37, %c0_38, %c0_39, %c0_40] : memref<1x2x2x8x8xf32, #tpu.memory_space<vmem>>, vector<1x2x1x8x6xf32>
    %79 = vector.shape_cast %78 : vector<1x2x1x8x6xf32> to vector<2x8x6xf32>
    %80 = vector.extract_strided_slice %73 {offsets = [0, 0, 0, 0], sizes = [2, 1, 8, 6], strides = [1, 1, 1, 1]} : vector<2x2x8x8xf32> to vector<2x1x8x6xf32>
    %81 = vector.shape_cast %80 : vector<2x1x8x6xf32> to vector<2x8x6xf32>
    %c0_41 = arith.constant 0 : index
    %c0_42 = arith.constant 0 : index
    %c0_43 = arith.constant 0 : index
    %c0_44 = arith.constant 0 : index
    %c0_45 = arith.constant 0 : index
    %c0_46 = arith.constant 0 : index
    %82 = vector.load %arg3[%c0_41, %c0_42, %c0_43, %c0_44, %c0_45, %c0_46] : memref<1x2x2x4x8x8xbf16, #tpu.memory_space<vmem>>, vector<1x2x1x4x8x6xbf16>
    %83 = vector.shape_cast %82 : vector<1x2x1x4x8x6xbf16> to vector<2x4x8x6xbf16>
    %c0_47 = arith.constant 0 : index
    %c0_48 = arith.constant 0 : index
    %c0_49 = arith.constant 0 : index
    %c0_50 = arith.constant 0 : index
    %c0_51 = arith.constant 0 : index
    %c0_52 = arith.constant 0 : index
    %84 = vector.load %arg2[%c0_47, %c0_48, %c0_49, %c0_50, %c0_51, %c0_52] : memref<1x2x2x2x8x8xf32, #tpu.memory_space<vmem>>, vector<1x2x1x2x8x6xf32>
    %85 = vector.shape_cast %84 : vector<1x2x1x2x8x6xf32> to vector<2x2x8x6xf32>
    %86 = vector.extract_strided_slice %79 {offsets = [0, 0, 0], sizes = [1, 6, 6], strides = [1, 1, 1]} : vector<2x8x6xf32> to vector<1x6x6xf32>
    %87 = vector.shape_cast %86 : vector<1x6x6xf32> to vector<6x6xf32>
    %88 = arith.cmpf ogt, %87, %74 : vector<6x6xf32>
    %89 = arith.select %88, %87, %74 : vector<6x6xi1>, vector<6x6xf32>
    %90 = vector.extract_strided_slice %81 {offsets = [0, 0, 0], sizes = [1, 6, 6], strides = [1, 1, 1]} : vector<2x8x6xf32> to vector<1x6x6xf32>
    %91 = vector.shape_cast %90 : vector<1x6x6xf32> to vector<6x6xf32>
    %92 = arith.select %88, %91, %76 : vector<6x6xi1>, vector<6x6xf32>
    %93 = vector.shape_cast %88 : vector<6x6xi1> to vector<1x6x6xi1>
    %94 = vector.extract_strided_slice %83 {offsets = [0, 0, 0, 0], sizes = [1, 4, 6, 6], strides = [1, 1, 1, 1]} : vector<2x4x8x6xbf16> to vector<1x4x6x6xbf16>
    %95 = vector.shape_cast %94 : vector<1x4x6x6xbf16> to vector<4x6x6xbf16>
    %96 = vector.shape_cast %93 : vector<1x6x6xi1> to vector<1x6x6xi1>
    %97 = vector.broadcast %96 : vector<1x6x6xi1> to vector<4x6x6xi1>
    %98 = arith.select %97, %95, %75 : vector<4x6x6xi1>, vector<4x6x6xbf16>
    %99 = vector.shape_cast %88 : vector<6x6xi1> to vector<1x6x6xi1>
    %100 = vector.extract_strided_slice %85 {offsets = [0, 0, 0, 0], sizes = [1, 2, 6, 6], strides = [1, 1, 1, 1]} : vector<2x2x8x6xf32> to vector<1x2x6x6xf32>
    %101 = vector.shape_cast %100 : vector<1x2x6x6xf32> to vector<2x6x6xf32>
    %102 = vector.shape_cast %99 : vector<1x6x6xi1> to vector<1x6x6xi1>
    %103 = vector.broadcast %102 : vector<1x6x6xi1> to vector<2x6x6xi1>
    %104 = arith.select %103, %101, %77 : vector<2x6x6xi1>, vector<2x6x6xf32>
    %105 = vector.extract_strided_slice %79 {offsets = [1, 0, 0], sizes = [1, 6, 6], strides = [1, 1, 1]} : vector<2x8x6xf32> to vector<1x6x6xf32>
    %106 = vector.shape_cast %105 : vector<1x6x6xf32> to vector<6x6xf32>
    %107 = arith.cmpf ogt, %106, %89 : vector<6x6xf32>
    %108 = arith.select %107, %106, %89 : vector<6x6xi1>, vector<6x6xf32>
    %109 = vector.extract_strided_slice %81 {offsets = [1, 0, 0], sizes = [1, 6, 6], strides = [1, 1, 1]} : vector<2x8x6xf32> to vector<1x6x6xf32>
    %110 = vector.shape_cast %109 : vector<1x6x6xf32> to vector<6x6xf32>
    %111 = arith.select %107, %110, %92 : vector<6x6xi1>, vector<6x6xf32>
    %112 = vector.shape_cast %107 : vector<6x6xi1> to vector<1x6x6xi1>
    %113 = vector.extract_strided_slice %83 {offsets = [1, 0, 0, 0], sizes = [1, 4, 6, 6], strides = [1, 1, 1, 1]} : vector<2x4x8x6xbf16> to vector<1x4x6x6xbf16>
    %114 = vector.shape_cast %113 : vector<1x4x6x6xbf16> to vector<4x6x6xbf16>
    %115 = vector.shape_cast %112 : vector<1x6x6xi1> to vector<1x6x6xi1>
    %116 = vector.broadcast %115 : vector<1x6x6xi1> to vector<4x6x6xi1>
    %117 = arith.select %116, %114, %98 : vector<4x6x6xi1>, vector<4x6x6xbf16>
    %118 = vector.shape_cast %107 : vector<6x6xi1> to vector<1x6x6xi1>
    %119 = vector.extract_strided_slice %85 {offsets = [1, 0, 0, 0], sizes = [1, 2, 6, 6], strides = [1, 1, 1, 1]} : vector<2x2x8x6xf32> to vector<1x2x6x6xf32>
    %120 = vector.shape_cast %119 : vector<1x2x6x6xf32> to vector<2x6x6xf32>
    %121 = vector.shape_cast %118 : vector<1x6x6xi1> to vector<1x6x6xi1>
    %122 = vector.broadcast %121 : vector<1x6x6xi1> to vector<2x6x6xi1>
    %123 = arith.select %122, %120, %104 : vector<2x6x6xi1>, vector<2x6x6xf32>
    %124 = vector.extract_strided_slice %79 {offsets = [0, 1, 0], sizes = [1, 6, 6], strides = [1, 1, 1]} : vector<2x8x6xf32> to vector<1x6x6xf32>
    %125 = vector.shape_cast %124 : vector<1x6x6xf32> to vector<6x6xf32>
    %126 = arith.cmpf ogt, %125, %108 : vector<6x6xf32>
    %127 = arith.select %126, %125, %108 : vector<6x6xi1>, vector<6x6xf32>
    %128 = vector.extract_strided_slice %81 {offsets = [0, 1, 0], sizes = [1, 6, 6], strides = [1, 1, 1]} : vector<2x8x6xf32> to vector<1x6x6xf32>
    %129 = vector.shape_cast %128 : vector<1x6x6xf32> to vector<6x6xf32>
    %130 = arith.select %126, %129, %111 : vector<6x6xi1>, vector<6x6xf32>
    %131 = vector.shape_cast %126 : vector<6x6xi1> to vector<1x6x6xi1>
    %132 = vector.extract_strided_slice %83 {offsets = [0, 0, 1, 0], sizes = [1, 4, 6, 6], strides = [1, 1, 1, 1]} : vector<2x4x8x6xbf16> to vector<1x4x6x6xbf16>
    %133 = vector.shape_cast %132 : vector<1x4x6x6xbf16> to vector<4x6x6xbf16>
    %134 = vector.shape_cast %131 : vector<1x6x6xi1> to vector<1x6x6xi1>
    %135 = vector.broadcast %134 : vector<1x6x6xi1> to vector<4x6x6xi1>
    %136 = arith.select %135, %133, %117 : vector<4x6x6xi1>, vector<4x6x6xbf16>
    %137 = vector.shape_cast %126 : vector<6x6xi1> to vector<1x6x6xi1>
    %138 = vector.extract_strided_slice %85 {offsets = [0, 0, 1, 0], sizes = [1, 2, 6, 6], strides = [1, 1, 1, 1]} : vector<2x2x8x6xf32> to vector<1x2x6x6xf32>
    %139 = vector.shape_cast %138 : vector<1x2x6x6xf32> to vector<2x6x6xf32>
    %140 = vector.shape_cast %137 : vector<1x6x6xi1> to vector<1x6x6xi1>
    %141 = vector.broadcast %140 : vector<1x6x6xi1> to vector<2x6x6xi1>
    %142 = arith.select %141, %139, %123 : vector<2x6x6xi1>, vector<2x6x6xf32>
    %143 = vector.extract_strided_slice %79 {offsets = [1, 1, 0], sizes = [1, 6, 6], strides = [1, 1, 1]} : vector<2x8x6xf32> to vector<1x6x6xf32>
    %144 = vector.shape_cast %143 : vector<1x6x6xf32> to vector<6x6xf32>
    %145 = arith.cmpf ogt, %144, %127 : vector<6x6xf32>
    %146 = arith.select %145, %144, %127 : vector<6x6xi1>, vector<6x6xf32>
    %147 = vector.extract_strided_slice %81 {offsets = [1, 1, 0], sizes = [1, 6, 6], strides = [1, 1, 1]} : vector<2x8x6xf32> to vector<1x6x6xf32>
    %148 = vector.shape_cast %147 : vector<1x6x6xf32> to vector<6x6xf32>
    %149 = arith.select %145, %148, %130 : vector<6x6xi1>, vector<6x6xf32>
    %150 = vector.shape_cast %145 : vector<6x6xi1> to vector<1x6x6xi1>
    %151 = vector.extract_strided_slice %83 {offsets = [1, 0, 1, 0], sizes = [1, 4, 6, 6], strides = [1, 1, 1, 1]} : vector<2x4x8x6xbf16> to vector<1x4x6x6xbf16>
    %152 = vector.shape_cast %151 : vector<1x4x6x6xbf16> to vector<4x6x6xbf16>
    %153 = vector.shape_cast %150 : vector<1x6x6xi1> to vector<1x6x6xi1>
    %154 = vector.broadcast %153 : vector<1x6x6xi1> to vector<4x6x6xi1>
    %155 = arith.select %154, %152, %136 : vector<4x6x6xi1>, vector<4x6x6xbf16>
    %156 = vector.shape_cast %145 : vector<6x6xi1> to vector<1x6x6xi1>
    %157 = vector.extract_strided_slice %85 {offsets = [1, 0, 1, 0], sizes = [1, 2, 6, 6], strides = [1, 1, 1, 1]} : vector<2x2x8x6xf32> to vector<1x2x6x6xf32>
    %158 = vector.shape_cast %157 : vector<1x2x6x6xf32> to vector<2x6x6xf32>
    %159 = vector.shape_cast %156 : vector<1x6x6xi1> to vector<1x6x6xi1>
    %160 = vector.broadcast %159 : vector<1x6x6xi1> to vector<2x6x6xi1>
    %161 = arith.select %160, %158, %142 : vector<2x6x6xi1>, vector<2x6x6xf32>
    %162 = vector.extract_strided_slice %79 {offsets = [0, 2, 0], sizes = [1, 6, 6], strides = [1, 1, 1]} : vector<2x8x6xf32> to vector<1x6x6xf32>
    %163 = vector.shape_cast %162 : vector<1x6x6xf32> to vector<6x6xf32>
    %164 = arith.cmpf ogt, %163, %146 : vector<6x6xf32>
    %165 = arith.select %164, %163, %146 : vector<6x6xi1>, vector<6x6xf32>
    %166 = vector.extract_strided_slice %81 {offsets = [0, 2, 0], sizes = [1, 6, 6], strides = [1, 1, 1]} : vector<2x8x6xf32> to vector<1x6x6xf32>
    %167 = vector.shape_cast %166 : vector<1x6x6xf32> to vector<6x6xf32>
    %168 = arith.select %164, %167, %149 : vector<6x6xi1>, vector<6x6xf32>
    %169 = vector.shape_cast %164 : vector<6x6xi1> to vector<1x6x6xi1>
    %170 = vector.extract_strided_slice %83 {offsets = [0, 0, 2, 0], sizes = [1, 4, 6, 6], strides = [1, 1, 1, 1]} : vector<2x4x8x6xbf16> to vector<1x4x6x6xbf16>
    %171 = vector.shape_cast %170 : vector<1x4x6x6xbf16> to vector<4x6x6xbf16>
    %172 = vector.shape_cast %169 : vector<1x6x6xi1> to vector<1x6x6xi1>
    %173 = vector.broadcast %172 : vector<1x6x6xi1> to vector<4x6x6xi1>
    %174 = arith.select %173, %171, %155 : vector<4x6x6xi1>, vector<4x6x6xbf16>
    %175 = vector.shape_cast %164 : vector<6x6xi1> to vector<1x6x6xi1>
    %176 = vector.extract_strided_slice %85 {offsets = [0, 0, 2, 0], sizes = [1, 2, 6, 6], strides = [1, 1, 1, 1]} : vector<2x2x8x6xf32> to vector<1x2x6x6xf32>
    %177 = vector.shape_cast %176 : vector<1x2x6x6xf32> to vector<2x6x6xf32>
    %178 = vector.shape_cast %175 : vector<1x6x6xi1> to vector<1x6x6xi1>
    %179 = vector.broadcast %178 : vector<1x6x6xi1> to vector<2x6x6xi1>
    %180 = arith.select %179, %177, %161 : vector<2x6x6xi1>, vector<2x6x6xf32>
    %c0_53 = arith.constant 0 : index
    %c0_54 = arith.constant 0 : index
    %c1 = arith.constant 1 : index
    %c0_55 = arith.constant 0 : index
    %c0_56 = arith.constant 0 : index
    %181 = vector.load %arg4[%c0_53, %c0_54, %c1, %c0_55, %c0_56] : memref<1x2x2x8x8xf32, #tpu.memory_space<vmem>>, vector<1x2x1x8x6xf32>
    %182 = vector.shape_cast %181 : vector<1x2x1x8x6xf32> to vector<2x8x6xf32>
    %183 = vector.extract_strided_slice %73 {offsets = [0, 1, 0, 0], sizes = [2, 1, 8, 6], strides = [1, 1, 1, 1]} : vector<2x2x8x8xf32> to vector<2x1x8x6xf32>
    %184 = vector.shape_cast %183 : vector<2x1x8x6xf32> to vector<2x8x6xf32>
    %c0_57 = arith.constant 0 : index
    %c0_58 = arith.constant 0 : index
    %c1_59 = arith.constant 1 : index
    %c0_60 = arith.constant 0 : index
    %c0_61 = arith.constant 0 : index
    %c0_62 = arith.constant 0 : index
    %185 = vector.load %arg3[%c0_57, %c0_58, %c1_59, %c0_60, %c0_61, %c0_62] : memref<1x2x2x4x8x8xbf16, #tpu.memory_space<vmem>>, vector<1x2x1x4x8x6xbf16>
    %186 = vector.shape_cast %185 : vector<1x2x1x4x8x6xbf16> to vector<2x4x8x6xbf16>
    %c0_63 = arith.constant 0 : index
    %c0_64 = arith.constant 0 : index
    %c1_65 = arith.constant 1 : index
    %c0_66 = arith.constant 0 : index
    %c0_67 = arith.constant 0 : index
    %c0_68 = arith.constant 0 : index
    %187 = vector.load %arg2[%c0_63, %c0_64, %c1_65, %c0_66, %c0_67, %c0_68] : memref<1x2x2x2x8x8xf32, #tpu.memory_space<vmem>>, vector<1x2x1x2x8x6xf32>
    %188 = vector.shape_cast %187 : vector<1x2x1x2x8x6xf32> to vector<2x2x8x6xf32>
    %189 = vector.extract_strided_slice %182 {offsets = [0, 0, 0], sizes = [1, 6, 6], strides = [1, 1, 1]} : vector<2x8x6xf32> to vector<1x6x6xf32>
    %190 = vector.shape_cast %189 : vector<1x6x6xf32> to vector<6x6xf32>
    %191 = arith.cmpf ogt, %190, %165 : vector<6x6xf32>
    %192 = arith.select %191, %190, %165 : vector<6x6xi1>, vector<6x6xf32>
    %193 = vector.extract_strided_slice %184 {offsets = [0, 0, 0], sizes = [1, 6, 6], strides = [1, 1, 1]} : vector<2x8x6xf32> to vector<1x6x6xf32>
    %194 = vector.shape_cast %193 : vector<1x6x6xf32> to vector<6x6xf32>
    %195 = arith.select %191, %194, %168 : vector<6x6xi1>, vector<6x6xf32>
    %196 = vector.shape_cast %191 : vector<6x6xi1> to vector<1x6x6xi1>
    %197 = vector.extract_strided_slice %186 {offsets = [0, 0, 0, 0], sizes = [1, 4, 6, 6], strides = [1, 1, 1, 1]} : vector<2x4x8x6xbf16> to vector<1x4x6x6xbf16>
    %198 = vector.shape_cast %197 : vector<1x4x6x6xbf16> to vector<4x6x6xbf16>
    %199 = vector.shape_cast %196 : vector<1x6x6xi1> to vector<1x6x6xi1>
    %200 = vector.broadcast %199 : vector<1x6x6xi1> to vector<4x6x6xi1>
    %201 = arith.select %200, %198, %174 : vector<4x6x6xi1>, vector<4x6x6xbf16>
    %202 = vector.shape_cast %191 : vector<6x6xi1> to vector<1x6x6xi1>
    %203 = vector.extract_strided_slice %188 {offsets = [0, 0, 0, 0], sizes = [1, 2, 6, 6], strides = [1, 1, 1, 1]} : vector<2x2x8x6xf32> to vector<1x2x6x6xf32>
    %204 = vector.shape_cast %203 : vector<1x2x6x6xf32> to vector<2x6x6xf32>
    %205 = vector.shape_cast %202 : vector<1x6x6xi1> to vector<1x6x6xi1>
    %206 = vector.broadcast %205 : vector<1x6x6xi1> to vector<2x6x6xi1>
    %207 = arith.select %206, %204, %180 : vector<2x6x6xi1>, vector<2x6x6xf32>
    %208 = vector.extract_strided_slice %182 {offsets = [1, 0, 0], sizes = [1, 6, 6], strides = [1, 1, 1]} : vector<2x8x6xf32> to vector<1x6x6xf32>
    %209 = vector.shape_cast %208 : vector<1x6x6xf32> to vector<6x6xf32>
    %210 = arith.cmpf ogt, %209, %192 : vector<6x6xf32>
    %211 = arith.select %210, %209, %192 : vector<6x6xi1>, vector<6x6xf32>
    %212 = vector.extract_strided_slice %184 {offsets = [1, 0, 0], sizes = [1, 6, 6], strides = [1, 1, 1]} : vector<2x8x6xf32> to vector<1x6x6xf32>
    %213 = vector.shape_cast %212 : vector<1x6x6xf32> to vector<6x6xf32>
    %214 = arith.select %210, %213, %195 : vector<6x6xi1>, vector<6x6xf32>
    %215 = vector.shape_cast %210 : vector<6x6xi1> to vector<1x6x6xi1>
    %216 = vector.extract_strided_slice %186 {offsets = [1, 0, 0, 0], sizes = [1, 4, 6, 6], strides = [1, 1, 1, 1]} : vector<2x4x8x6xbf16> to vector<1x4x6x6xbf16>
    %217 = vector.shape_cast %216 : vector<1x4x6x6xbf16> to vector<4x6x6xbf16>
    %218 = vector.shape_cast %215 : vector<1x6x6xi1> to vector<1x6x6xi1>
    %219 = vector.broadcast %218 : vector<1x6x6xi1> to vector<4x6x6xi1>
    %220 = arith.select %219, %217, %201 : vector<4x6x6xi1>, vector<4x6x6xbf16>
    %221 = vector.shape_cast %210 : vector<6x6xi1> to vector<1x6x6xi1>
    %222 = vector.extract_strided_slice %188 {offsets = [1, 0, 0, 0], sizes = [1, 2, 6, 6], strides = [1, 1, 1, 1]} : vector<2x2x8x6xf32> to vector<1x2x6x6xf32>
    %223 = vector.shape_cast %222 : vector<1x2x6x6xf32> to vector<2x6x6xf32>
    %224 = vector.shape_cast %221 : vector<1x6x6xi1> to vector<1x6x6xi1>
    %225 = vector.broadcast %224 : vector<1x6x6xi1> to vector<2x6x6xi1>
    %226 = arith.select %225, %223, %207 : vector<2x6x6xi1>, vector<2x6x6xf32>
    %227 = vector.extract_strided_slice %182 {offsets = [0, 1, 0], sizes = [1, 6, 6], strides = [1, 1, 1]} : vector<2x8x6xf32> to vector<1x6x6xf32>
    %228 = vector.shape_cast %227 : vector<1x6x6xf32> to vector<6x6xf32>
    %229 = arith.cmpf ogt, %228, %211 : vector<6x6xf32>
    %230 = arith.select %229, %228, %211 : vector<6x6xi1>, vector<6x6xf32>
    %231 = vector.extract_strided_slice %184 {offsets = [0, 1, 0], sizes = [1, 6, 6], strides = [1, 1, 1]} : vector<2x8x6xf32> to vector<1x6x6xf32>
    %232 = vector.shape_cast %231 : vector<1x6x6xf32> to vector<6x6xf32>
    %233 = arith.select %229, %232, %214 : vector<6x6xi1>, vector<6x6xf32>
    %234 = vector.shape_cast %229 : vector<6x6xi1> to vector<1x6x6xi1>
    %235 = vector.extract_strided_slice %186 {offsets = [0, 0, 1, 0], sizes = [1, 4, 6, 6], strides = [1, 1, 1, 1]} : vector<2x4x8x6xbf16> to vector<1x4x6x6xbf16>
    %236 = vector.shape_cast %235 : vector<1x4x6x6xbf16> to vector<4x6x6xbf16>
    %237 = vector.shape_cast %234 : vector<1x6x6xi1> to vector<1x6x6xi1>
    %238 = vector.broadcast %237 : vector<1x6x6xi1> to vector<4x6x6xi1>
    %239 = arith.select %238, %236, %220 : vector<4x6x6xi1>, vector<4x6x6xbf16>
    %240 = vector.shape_cast %229 : vector<6x6xi1> to vector<1x6x6xi1>
    %241 = vector.extract_strided_slice %188 {offsets = [0, 0, 1, 0], sizes = [1, 2, 6, 6], strides = [1, 1, 1, 1]} : vector<2x2x8x6xf32> to vector<1x2x6x6xf32>
    %242 = vector.shape_cast %241 : vector<1x2x6x6xf32> to vector<2x6x6xf32>
    %243 = vector.shape_cast %240 : vector<1x6x6xi1> to vector<1x6x6xi1>
    %244 = vector.broadcast %243 : vector<1x6x6xi1> to vector<2x6x6xi1>
    %245 = arith.select %244, %242, %226 : vector<2x6x6xi1>, vector<2x6x6xf32>
    %246 = vector.extract_strided_slice %182 {offsets = [1, 1, 0], sizes = [1, 6, 6], strides = [1, 1, 1]} : vector<2x8x6xf32> to vector<1x6x6xf32>
    %247 = vector.shape_cast %246 : vector<1x6x6xf32> to vector<6x6xf32>
    %248 = arith.cmpf ogt, %247, %230 : vector<6x6xf32>
    %249 = arith.select %248, %247, %230 : vector<6x6xi1>, vector<6x6xf32>
    %250 = vector.extract_strided_slice %184 {offsets = [1, 1, 0], sizes = [1, 6, 6], strides = [1, 1, 1]} : vector<2x8x6xf32> to vector<1x6x6xf32>
    %251 = vector.shape_cast %250 : vector<1x6x6xf32> to vector<6x6xf32>
    %252 = arith.select %248, %251, %233 : vector<6x6xi1>, vector<6x6xf32>
    %253 = vector.shape_cast %248 : vector<6x6xi1> to vector<1x6x6xi1>
    %254 = vector.extract_strided_slice %186 {offsets = [1, 0, 1, 0], sizes = [1, 4, 6, 6], strides = [1, 1, 1, 1]} : vector<2x4x8x6xbf16> to vector<1x4x6x6xbf16>
    %255 = vector.shape_cast %254 : vector<1x4x6x6xbf16> to vector<4x6x6xbf16>
    %256 = vector.shape_cast %253 : vector<1x6x6xi1> to vector<1x6x6xi1>
    %257 = vector.broadcast %256 : vector<1x6x6xi1> to vector<4x6x6xi1>
    %258 = arith.select %257, %255, %239 : vector<4x6x6xi1>, vector<4x6x6xbf16>
    %259 = vector.shape_cast %248 : vector<6x6xi1> to vector<1x6x6xi1>
    %260 = vector.extract_strided_slice %188 {offsets = [1, 0, 1, 0], sizes = [1, 2, 6, 6], strides = [1, 1, 1, 1]} : vector<2x2x8x6xf32> to vector<1x2x6x6xf32>
    %261 = vector.shape_cast %260 : vector<1x2x6x6xf32> to vector<2x6x6xf32>
    %262 = vector.shape_cast %259 : vector<1x6x6xi1> to vector<1x6x6xi1>
    %263 = vector.broadcast %262 : vector<1x6x6xi1> to vector<2x6x6xi1>
    %264 = arith.select %263, %261, %245 : vector<2x6x6xi1>, vector<2x6x6xf32>
    %265 = vector.extract_strided_slice %182 {offsets = [0, 2, 0], sizes = [1, 6, 6], strides = [1, 1, 1]} : vector<2x8x6xf32> to vector<1x6x6xf32>
    %266 = vector.shape_cast %265 : vector<1x6x6xf32> to vector<6x6xf32>
    %267 = arith.cmpf ogt, %266, %249 : vector<6x6xf32>
    %268 = arith.select %267, %266, %249 : vector<6x6xi1>, vector<6x6xf32>
    %269 = vector.extract_strided_slice %184 {offsets = [0, 2, 0], sizes = [1, 6, 6], strides = [1, 1, 1]} : vector<2x8x6xf32> to vector<1x6x6xf32>
    %270 = vector.shape_cast %269 : vector<1x6x6xf32> to vector<6x6xf32>
    %271 = arith.select %267, %270, %252 : vector<6x6xi1>, vector<6x6xf32>
    %272 = vector.shape_cast %267 : vector<6x6xi1> to vector<1x6x6xi1>
    %273 = vector.extract_strided_slice %186 {offsets = [0, 0, 2, 0], sizes = [1, 4, 6, 6], strides = [1, 1, 1, 1]} : vector<2x4x8x6xbf16> to vector<1x4x6x6xbf16>
    %274 = vector.shape_cast %273 : vector<1x4x6x6xbf16> to vector<4x6x6xbf16>
    %275 = vector.shape_cast %272 : vector<1x6x6xi1> to vector<1x6x6xi1>
    %276 = vector.broadcast %275 : vector<1x6x6xi1> to vector<4x6x6xi1>
    %277 = arith.select %276, %274, %258 : vector<4x6x6xi1>, vector<4x6x6xbf16>
    %278 = vector.shape_cast %267 : vector<6x6xi1> to vector<1x6x6xi1>
    %279 = vector.extract_strided_slice %188 {offsets = [0, 0, 2, 0], sizes = [1, 2, 6, 6], strides = [1, 1, 1, 1]} : vector<2x2x8x6xf32> to vector<1x2x6x6xf32>
    %280 = vector.shape_cast %279 : vector<1x2x6x6xf32> to vector<2x6x6xf32>
    %281 = vector.shape_cast %278 : vector<1x6x6xi1> to vector<1x6x6xi1>
    %282 = vector.broadcast %281 : vector<1x6x6xi1> to vector<2x6x6xi1>
    %283 = arith.select %282, %280, %264 : vector<2x6x6xi1>, vector<2x6x6xf32>
    %c0_69 = arith.constant 0 : index
    %c0_70 = arith.constant 0 : index
    %c0_71 = arith.constant 0 : index
    %c0_72 = arith.constant 0 : index
    %c1_73 = arith.constant 1 : index
    %284 = vector.load %arg4[%c0_69, %c0_70, %c0_71, %c0_72, %c1_73] : memref<1x2x2x8x8xf32, #tpu.memory_space<vmem>>, vector<1x2x1x8x6xf32>
    %285 = vector.shape_cast %284 : vector<1x2x1x8x6xf32> to vector<2x8x6xf32>
    %286 = vector.extract_strided_slice %73 {offsets = [0, 0, 0, 1], sizes = [2, 1, 8, 6], strides = [1, 1, 1, 1]} : vector<2x2x8x8xf32> to vector<2x1x8x6xf32>
    %287 = vector.shape_cast %286 : vector<2x1x8x6xf32> to vector<2x8x6xf32>
    %c0_74 = arith.constant 0 : index
    %c0_75 = arith.constant 0 : index
    %c0_76 = arith.constant 0 : index
    %c0_77 = arith.constant 0 : index
    %c0_78 = arith.constant 0 : index
    %c1_79 = arith.constant 1 : index
    %288 = vector.load %arg3[%c0_74, %c0_75, %c0_76, %c0_77, %c0_78, %c1_79] : memref<1x2x2x4x8x8xbf16, #tpu.memory_space<vmem>>, vector<1x2x1x4x8x6xbf16>
    %289 = vector.shape_cast %288 : vector<1x2x1x4x8x6xbf16> to vector<2x4x8x6xbf16>
    %c0_80 = arith.constant 0 : index
    %c0_81 = arith.constant 0 : index
    %c0_82 = arith.constant 0 : index
    %c0_83 = arith.constant 0 : index
    %c0_84 = arith.constant 0 : index
    %c1_85 = arith.constant 1 : index
    %290 = vector.load %arg2[%c0_80, %c0_81, %c0_82, %c0_83, %c0_84, %c1_85] : memref<1x2x2x2x8x8xf32, #tpu.memory_space<vmem>>, vector<1x2x1x2x8x6xf32>
    %291 = vector.shape_cast %290 : vector<1x2x1x2x8x6xf32> to vector<2x2x8x6xf32>
    %292 = vector.extract_strided_slice %285 {offsets = [0, 0, 0], sizes = [1, 6, 6], strides = [1, 1, 1]} : vector<2x8x6xf32> to vector<1x6x6xf32>
    %293 = vector.shape_cast %292 : vector<1x6x6xf32> to vector<6x6xf32>
    %294 = arith.cmpf ogt, %293, %268 : vector<6x6xf32>
    %295 = arith.select %294, %293, %268 : vector<6x6xi1>, vector<6x6xf32>
    %296 = vector.extract_strided_slice %287 {offsets = [0, 0, 0], sizes = [1, 6, 6], strides = [1, 1, 1]} : vector<2x8x6xf32> to vector<1x6x6xf32>
    %297 = vector.shape_cast %296 : vector<1x6x6xf32> to vector<6x6xf32>
    %298 = arith.select %294, %297, %271 : vector<6x6xi1>, vector<6x6xf32>
    %299 = vector.shape_cast %294 : vector<6x6xi1> to vector<1x6x6xi1>
    %300 = vector.extract_strided_slice %289 {offsets = [0, 0, 0, 0], sizes = [1, 4, 6, 6], strides = [1, 1, 1, 1]} : vector<2x4x8x6xbf16> to vector<1x4x6x6xbf16>
    %301 = vector.shape_cast %300 : vector<1x4x6x6xbf16> to vector<4x6x6xbf16>
    %302 = vector.shape_cast %299 : vector<1x6x6xi1> to vector<1x6x6xi1>
    %303 = vector.broadcast %302 : vector<1x6x6xi1> to vector<4x6x6xi1>
    %304 = arith.select %303, %301, %277 : vector<4x6x6xi1>, vector<4x6x6xbf16>
    %305 = vector.shape_cast %294 : vector<6x6xi1> to vector<1x6x6xi1>
    %306 = vector.extract_strided_slice %291 {offsets = [0, 0, 0, 0], sizes = [1, 2, 6, 6], strides = [1, 1, 1, 1]} : vector<2x2x8x6xf32> to vector<1x2x6x6xf32>
    %307 = vector.shape_cast %306 : vector<1x2x6x6xf32> to vector<2x6x6xf32>
    %308 = vector.shape_cast %305 : vector<1x6x6xi1> to vector<1x6x6xi1>
    %309 = vector.broadcast %308 : vector<1x6x6xi1> to vector<2x6x6xi1>
    %310 = arith.select %309, %307, %283 : vector<2x6x6xi1>, vector<2x6x6xf32>
    %311 = vector.extract_strided_slice %285 {offsets = [1, 0, 0], sizes = [1, 6, 6], strides = [1, 1, 1]} : vector<2x8x6xf32> to vector<1x6x6xf32>
    %312 = vector.shape_cast %311 : vector<1x6x6xf32> to vector<6x6xf32>
    %313 = arith.cmpf ogt, %312, %295 : vector<6x6xf32>
    %314 = arith.select %313, %312, %295 : vector<6x6xi1>, vector<6x6xf32>
    %315 = vector.extract_strided_slice %287 {offsets = [1, 0, 0], sizes = [1, 6, 6], strides = [1, 1, 1]} : vector<2x8x6xf32> to vector<1x6x6xf32>
    %316 = vector.shape_cast %315 : vector<1x6x6xf32> to vector<6x6xf32>
    %317 = arith.select %313, %316, %298 : vector<6x6xi1>, vector<6x6xf32>
    %318 = vector.shape_cast %313 : vector<6x6xi1> to vector<1x6x6xi1>
    %319 = vector.extract_strided_slice %289 {offsets = [1, 0, 0, 0], sizes = [1, 4, 6, 6], strides = [1, 1, 1, 1]} : vector<2x4x8x6xbf16> to vector<1x4x6x6xbf16>
    %320 = vector.shape_cast %319 : vector<1x4x6x6xbf16> to vector<4x6x6xbf16>
    %321 = vector.shape_cast %318 : vector<1x6x6xi1> to vector<1x6x6xi1>
    %322 = vector.broadcast %321 : vector<1x6x6xi1> to vector<4x6x6xi1>
    %323 = arith.select %322, %320, %304 : vector<4x6x6xi1>, vector<4x6x6xbf16>
    %324 = vector.shape_cast %313 : vector<6x6xi1> to vector<1x6x6xi1>
    %325 = vector.extract_strided_slice %291 {offsets = [1, 0, 0, 0], sizes = [1, 2, 6, 6], strides = [1, 1, 1, 1]} : vector<2x2x8x6xf32> to vector<1x2x6x6xf32>
    %326 = vector.shape_cast %325 : vector<1x2x6x6xf32> to vector<2x6x6xf32>
    %327 = vector.shape_cast %324 : vector<1x6x6xi1> to vector<1x6x6xi1>
    %328 = vector.broadcast %327 : vector<1x6x6xi1> to vector<2x6x6xi1>
    %329 = arith.select %328, %326, %310 : vector<2x6x6xi1>, vector<2x6x6xf32>
    %330 = vector.extract_strided_slice %285 {offsets = [0, 1, 0], sizes = [1, 6, 6], strides = [1, 1, 1]} : vector<2x8x6xf32> to vector<1x6x6xf32>
    %331 = vector.shape_cast %330 : vector<1x6x6xf32> to vector<6x6xf32>
    %332 = arith.cmpf ogt, %331, %314 : vector<6x6xf32>
    %333 = arith.select %332, %331, %314 : vector<6x6xi1>, vector<6x6xf32>
    %334 = vector.extract_strided_slice %287 {offsets = [0, 1, 0], sizes = [1, 6, 6], strides = [1, 1, 1]} : vector<2x8x6xf32> to vector<1x6x6xf32>
    %335 = vector.shape_cast %334 : vector<1x6x6xf32> to vector<6x6xf32>
    %336 = arith.select %332, %335, %317 : vector<6x6xi1>, vector<6x6xf32>
    %337 = vector.shape_cast %332 : vector<6x6xi1> to vector<1x6x6xi1>
    %338 = vector.extract_strided_slice %289 {offsets = [0, 0, 1, 0], sizes = [1, 4, 6, 6], strides = [1, 1, 1, 1]} : vector<2x4x8x6xbf16> to vector<1x4x6x6xbf16>
    %339 = vector.shape_cast %338 : vector<1x4x6x6xbf16> to vector<4x6x6xbf16>
    %340 = vector.shape_cast %337 : vector<1x6x6xi1> to vector<1x6x6xi1>
    %341 = vector.broadcast %340 : vector<1x6x6xi1> to vector<4x6x6xi1>
    %342 = arith.select %341, %339, %323 : vector<4x6x6xi1>, vector<4x6x6xbf16>
    %343 = vector.shape_cast %332 : vector<6x6xi1> to vector<1x6x6xi1>
    %344 = vector.extract_strided_slice %291 {offsets = [0, 0, 1, 0], sizes = [1, 2, 6, 6], strides = [1, 1, 1, 1]} : vector<2x2x8x6xf32> to vector<1x2x6x6xf32>
    %345 = vector.shape_cast %344 : vector<1x2x6x6xf32> to vector<2x6x6xf32>
    %346 = vector.shape_cast %343 : vector<1x6x6xi1> to vector<1x6x6xi1>
    %347 = vector.broadcast %346 : vector<1x6x6xi1> to vector<2x6x6xi1>
    %348 = arith.select %347, %345, %329 : vector<2x6x6xi1>, vector<2x6x6xf32>
    %349 = vector.extract_strided_slice %285 {offsets = [1, 1, 0], sizes = [1, 6, 6], strides = [1, 1, 1]} : vector<2x8x6xf32> to vector<1x6x6xf32>
    %350 = vector.shape_cast %349 : vector<1x6x6xf32> to vector<6x6xf32>
    %351 = arith.cmpf ogt, %350, %333 : vector<6x6xf32>
    %352 = arith.select %351, %350, %333 : vector<6x6xi1>, vector<6x6xf32>
    %353 = vector.extract_strided_slice %287 {offsets = [1, 1, 0], sizes = [1, 6, 6], strides = [1, 1, 1]} : vector<2x8x6xf32> to vector<1x6x6xf32>
    %354 = vector.shape_cast %353 : vector<1x6x6xf32> to vector<6x6xf32>
    %355 = arith.select %351, %354, %336 : vector<6x6xi1>, vector<6x6xf32>
    %356 = vector.shape_cast %351 : vector<6x6xi1> to vector<1x6x6xi1>
    %357 = vector.extract_strided_slice %289 {offsets = [1, 0, 1, 0], sizes = [1, 4, 6, 6], strides = [1, 1, 1, 1]} : vector<2x4x8x6xbf16> to vector<1x4x6x6xbf16>
    %358 = vector.shape_cast %357 : vector<1x4x6x6xbf16> to vector<4x6x6xbf16>
    %359 = vector.shape_cast %356 : vector<1x6x6xi1> to vector<1x6x6xi1>
    %360 = vector.broadcast %359 : vector<1x6x6xi1> to vector<4x6x6xi1>
    %361 = arith.select %360, %358, %342 : vector<4x6x6xi1>, vector<4x6x6xbf16>
    %362 = vector.shape_cast %351 : vector<6x6xi1> to vector<1x6x6xi1>
    %363 = vector.extract_strided_slice %291 {offsets = [1, 0, 1, 0], sizes = [1, 2, 6, 6], strides = [1, 1, 1, 1]} : vector<2x2x8x6xf32> to vector<1x2x6x6xf32>
    %364 = vector.shape_cast %363 : vector<1x2x6x6xf32> to vector<2x6x6xf32>
    %365 = vector.shape_cast %362 : vector<1x6x6xi1> to vector<1x6x6xi1>
    %366 = vector.broadcast %365 : vector<1x6x6xi1> to vector<2x6x6xi1>
    %367 = arith.select %366, %364, %348 : vector<2x6x6xi1>, vector<2x6x6xf32>
    %368 = vector.extract_strided_slice %285 {offsets = [0, 2, 0], sizes = [1, 6, 6], strides = [1, 1, 1]} : vector<2x8x6xf32> to vector<1x6x6xf32>
    %369 = vector.shape_cast %368 : vector<1x6x6xf32> to vector<6x6xf32>
    %370 = arith.cmpf ogt, %369, %352 : vector<6x6xf32>
    %371 = arith.select %370, %369, %352 : vector<6x6xi1>, vector<6x6xf32>
    %372 = vector.extract_strided_slice %287 {offsets = [0, 2, 0], sizes = [1, 6, 6], strides = [1, 1, 1]} : vector<2x8x6xf32> to vector<1x6x6xf32>
    %373 = vector.shape_cast %372 : vector<1x6x6xf32> to vector<6x6xf32>
    %374 = arith.select %370, %373, %355 : vector<6x6xi1>, vector<6x6xf32>
    %375 = vector.shape_cast %370 : vector<6x6xi1> to vector<1x6x6xi1>
    %376 = vector.extract_strided_slice %289 {offsets = [0, 0, 2, 0], sizes = [1, 4, 6, 6], strides = [1, 1, 1, 1]} : vector<2x4x8x6xbf16> to vector<1x4x6x6xbf16>
    %377 = vector.shape_cast %376 : vector<1x4x6x6xbf16> to vector<4x6x6xbf16>
    %378 = vector.shape_cast %375 : vector<1x6x6xi1> to vector<1x6x6xi1>
    %379 = vector.broadcast %378 : vector<1x6x6xi1> to vector<4x6x6xi1>
    %380 = arith.select %379, %377, %361 : vector<4x6x6xi1>, vector<4x6x6xbf16>
    %381 = vector.shape_cast %370 : vector<6x6xi1> to vector<1x6x6xi1>
    %382 = vector.extract_strided_slice %291 {offsets = [0, 0, 2, 0], sizes = [1, 2, 6, 6], strides = [1, 1, 1, 1]} : vector<2x2x8x6xf32> to vector<1x2x6x6xf32>
    %383 = vector.shape_cast %382 : vector<1x2x6x6xf32> to vector<2x6x6xf32>
    %384 = vector.shape_cast %381 : vector<1x6x6xi1> to vector<1x6x6xi1>
    %385 = vector.broadcast %384 : vector<1x6x6xi1> to vector<2x6x6xi1>
    %386 = arith.select %385, %383, %367 : vector<2x6x6xi1>, vector<2x6x6xf32>
    %c0_86 = arith.constant 0 : index
    %c0_87 = arith.constant 0 : index
    %c1_88 = arith.constant 1 : index
    %c0_89 = arith.constant 0 : index
    %c1_90 = arith.constant 1 : index
    %387 = vector.load %arg4[%c0_86, %c0_87, %c1_88, %c0_89, %c1_90] : memref<1x2x2x8x8xf32, #tpu.memory_space<vmem>>, vector<1x2x1x8x6xf32>
    %388 = vector.shape_cast %387 : vector<1x2x1x8x6xf32> to vector<2x8x6xf32>
    %389 = vector.extract_strided_slice %73 {offsets = [0, 1, 0, 1], sizes = [2, 1, 8, 6], strides = [1, 1, 1, 1]} : vector<2x2x8x8xf32> to vector<2x1x8x6xf32>
    %390 = vector.shape_cast %389 : vector<2x1x8x6xf32> to vector<2x8x6xf32>
    %c0_91 = arith.constant 0 : index
    %c0_92 = arith.constant 0 : index
    %c1_93 = arith.constant 1 : index
    %c0_94 = arith.constant 0 : index
    %c0_95 = arith.constant 0 : index
    %c1_96 = arith.constant 1 : index
    %391 = vector.load %arg3[%c0_91, %c0_92, %c1_93, %c0_94, %c0_95, %c1_96] : memref<1x2x2x4x8x8xbf16, #tpu.memory_space<vmem>>, vector<1x2x1x4x8x6xbf16>
    %392 = vector.shape_cast %391 : vector<1x2x1x4x8x6xbf16> to vector<2x4x8x6xbf16>
    %c0_97 = arith.constant 0 : index
    %c0_98 = arith.constant 0 : index
    %c1_99 = arith.constant 1 : index
    %c0_100 = arith.constant 0 : index
    %c0_101 = arith.constant 0 : index
    %c1_102 = arith.constant 1 : index
    %393 = vector.load %arg2[%c0_97, %c0_98, %c1_99, %c0_100, %c0_101, %c1_102] : memref<1x2x2x2x8x8xf32, #tpu.memory_space<vmem>>, vector<1x2x1x2x8x6xf32>
    %394 = vector.shape_cast %393 : vector<1x2x1x2x8x6xf32> to vector<2x2x8x6xf32>
    %395 = vector.extract_strided_slice %388 {offsets = [0, 0, 0], sizes = [1, 6, 6], strides = [1, 1, 1]} : vector<2x8x6xf32> to vector<1x6x6xf32>
    %396 = vector.shape_cast %395 : vector<1x6x6xf32> to vector<6x6xf32>
    %397 = arith.cmpf ogt, %396, %371 : vector<6x6xf32>
    %398 = arith.select %397, %396, %371 : vector<6x6xi1>, vector<6x6xf32>
    %399 = vector.extract_strided_slice %390 {offsets = [0, 0, 0], sizes = [1, 6, 6], strides = [1, 1, 1]} : vector<2x8x6xf32> to vector<1x6x6xf32>
    %400 = vector.shape_cast %399 : vector<1x6x6xf32> to vector<6x6xf32>
    %401 = arith.select %397, %400, %374 : vector<6x6xi1>, vector<6x6xf32>
    %402 = vector.shape_cast %397 : vector<6x6xi1> to vector<1x6x6xi1>
    %403 = vector.extract_strided_slice %392 {offsets = [0, 0, 0, 0], sizes = [1, 4, 6, 6], strides = [1, 1, 1, 1]} : vector<2x4x8x6xbf16> to vector<1x4x6x6xbf16>
    %404 = vector.shape_cast %403 : vector<1x4x6x6xbf16> to vector<4x6x6xbf16>
    %405 = vector.shape_cast %402 : vector<1x6x6xi1> to vector<1x6x6xi1>
    %406 = vector.broadcast %405 : vector<1x6x6xi1> to vector<4x6x6xi1>
    %407 = arith.select %406, %404, %380 : vector<4x6x6xi1>, vector<4x6x6xbf16>
    %408 = vector.shape_cast %397 : vector<6x6xi1> to vector<1x6x6xi1>
    %409 = vector.extract_strided_slice %394 {offsets = [0, 0, 0, 0], sizes = [1, 2, 6, 6], strides = [1, 1, 1, 1]} : vector<2x2x8x6xf32> to vector<1x2x6x6xf32>
    %410 = vector.shape_cast %409 : vector<1x2x6x6xf32> to vector<2x6x6xf32>
    %411 = vector.shape_cast %408 : vector<1x6x6xi1> to vector<1x6x6xi1>
    %412 = vector.broadcast %411 : vector<1x6x6xi1> to vector<2x6x6xi1>
    %413 = arith.select %412, %410, %386 : vector<2x6x6xi1>, vector<2x6x6xf32>
    %414 = vector.extract_strided_slice %388 {offsets = [1, 0, 0], sizes = [1, 6, 6], strides = [1, 1, 1]} : vector<2x8x6xf32> to vector<1x6x6xf32>
    %415 = vector.shape_cast %414 : vector<1x6x6xf32> to vector<6x6xf32>
    %416 = arith.cmpf ogt, %415, %398 : vector<6x6xf32>
    %417 = arith.select %416, %415, %398 : vector<6x6xi1>, vector<6x6xf32>
    %418 = vector.extract_strided_slice %390 {offsets = [1, 0, 0], sizes = [1, 6, 6], strides = [1, 1, 1]} : vector<2x8x6xf32> to vector<1x6x6xf32>
    %419 = vector.shape_cast %418 : vector<1x6x6xf32> to vector<6x6xf32>
    %420 = arith.select %416, %419, %401 : vector<6x6xi1>, vector<6x6xf32>
    %421 = vector.shape_cast %416 : vector<6x6xi1> to vector<1x6x6xi1>
    %422 = vector.extract_strided_slice %392 {offsets = [1, 0, 0, 0], sizes = [1, 4, 6, 6], strides = [1, 1, 1, 1]} : vector<2x4x8x6xbf16> to vector<1x4x6x6xbf16>
    %423 = vector.shape_cast %422 : vector<1x4x6x6xbf16> to vector<4x6x6xbf16>
    %424 = vector.shape_cast %421 : vector<1x6x6xi1> to vector<1x6x6xi1>
    %425 = vector.broadcast %424 : vector<1x6x6xi1> to vector<4x6x6xi1>
    %426 = arith.select %425, %423, %407 : vector<4x6x6xi1>, vector<4x6x6xbf16>
    %427 = vector.shape_cast %416 : vector<6x6xi1> to vector<1x6x6xi1>
    %428 = vector.extract_strided_slice %394 {offsets = [1, 0, 0, 0], sizes = [1, 2, 6, 6], strides = [1, 1, 1, 1]} : vector<2x2x8x6xf32> to vector<1x2x6x6xf32>
    %429 = vector.shape_cast %428 : vector<1x2x6x6xf32> to vector<2x6x6xf32>
    %430 = vector.shape_cast %427 : vector<1x6x6xi1> to vector<1x6x6xi1>
    %431 = vector.broadcast %430 : vector<1x6x6xi1> to vector<2x6x6xi1>
    %432 = arith.select %431, %429, %413 : vector<2x6x6xi1>, vector<2x6x6xf32>
    %433 = vector.extract_strided_slice %388 {offsets = [0, 1, 0], sizes = [1, 6, 6], strides = [1, 1, 1]} : vector<2x8x6xf32> to vector<1x6x6xf32>
    %434 = vector.shape_cast %433 : vector<1x6x6xf32> to vector<6x6xf32>
    %435 = arith.cmpf ogt, %434, %417 : vector<6x6xf32>
    %436 = arith.select %435, %434, %417 : vector<6x6xi1>, vector<6x6xf32>
    %437 = vector.extract_strided_slice %390 {offsets = [0, 1, 0], sizes = [1, 6, 6], strides = [1, 1, 1]} : vector<2x8x6xf32> to vector<1x6x6xf32>
    %438 = vector.shape_cast %437 : vector<1x6x6xf32> to vector<6x6xf32>
    %439 = arith.select %435, %438, %420 : vector<6x6xi1>, vector<6x6xf32>
    %440 = vector.shape_cast %435 : vector<6x6xi1> to vector<1x6x6xi1>
    %441 = vector.extract_strided_slice %392 {offsets = [0, 0, 1, 0], sizes = [1, 4, 6, 6], strides = [1, 1, 1, 1]} : vector<2x4x8x6xbf16> to vector<1x4x6x6xbf16>
    %442 = vector.shape_cast %441 : vector<1x4x6x6xbf16> to vector<4x6x6xbf16>
    %443 = vector.shape_cast %440 : vector<1x6x6xi1> to vector<1x6x6xi1>
    %444 = vector.broadcast %443 : vector<1x6x6xi1> to vector<4x6x6xi1>
    %445 = arith.select %444, %442, %426 : vector<4x6x6xi1>, vector<4x6x6xbf16>
    %446 = vector.shape_cast %435 : vector<6x6xi1> to vector<1x6x6xi1>
    %447 = vector.extract_strided_slice %394 {offsets = [0, 0, 1, 0], sizes = [1, 2, 6, 6], strides = [1, 1, 1, 1]} : vector<2x2x8x6xf32> to vector<1x2x6x6xf32>
    %448 = vector.shape_cast %447 : vector<1x2x6x6xf32> to vector<2x6x6xf32>
    %449 = vector.shape_cast %446 : vector<1x6x6xi1> to vector<1x6x6xi1>
    %450 = vector.broadcast %449 : vector<1x6x6xi1> to vector<2x6x6xi1>
    %451 = arith.select %450, %448, %432 : vector<2x6x6xi1>, vector<2x6x6xf32>
    %452 = vector.extract_strided_slice %388 {offsets = [1, 1, 0], sizes = [1, 6, 6], strides = [1, 1, 1]} : vector<2x8x6xf32> to vector<1x6x6xf32>
    %453 = vector.shape_cast %452 : vector<1x6x6xf32> to vector<6x6xf32>
    %454 = arith.cmpf ogt, %453, %436 : vector<6x6xf32>
    %455 = arith.select %454, %453, %436 : vector<6x6xi1>, vector<6x6xf32>
    %456 = vector.extract_strided_slice %390 {offsets = [1, 1, 0], sizes = [1, 6, 6], strides = [1, 1, 1]} : vector<2x8x6xf32> to vector<1x6x6xf32>
    %457 = vector.shape_cast %456 : vector<1x6x6xf32> to vector<6x6xf32>
    %458 = arith.select %454, %457, %439 : vector<6x6xi1>, vector<6x6xf32>
    %459 = vector.shape_cast %454 : vector<6x6xi1> to vector<1x6x6xi1>
    %460 = vector.extract_strided_slice %392 {offsets = [1, 0, 1, 0], sizes = [1, 4, 6, 6], strides = [1, 1, 1, 1]} : vector<2x4x8x6xbf16> to vector<1x4x6x6xbf16>
    %461 = vector.shape_cast %460 : vector<1x4x6x6xbf16> to vector<4x6x6xbf16>
    %462 = vector.shape_cast %459 : vector<1x6x6xi1> to vector<1x6x6xi1>
    %463 = vector.broadcast %462 : vector<1x6x6xi1> to vector<4x6x6xi1>
    %464 = arith.select %463, %461, %445 : vector<4x6x6xi1>, vector<4x6x6xbf16>
    %465 = vector.shape_cast %454 : vector<6x6xi1> to vector<1x6x6xi1>
    %466 = vector.extract_strided_slice %394 {offsets = [1, 0, 1, 0], sizes = [1, 2, 6, 6], strides = [1, 1, 1, 1]} : vector<2x2x8x6xf32> to vector<1x2x6x6xf32>
    %467 = vector.shape_cast %466 : vector<1x2x6x6xf32> to vector<2x6x6xf32>
    %468 = vector.shape_cast %465 : vector<1x6x6xi1> to vector<1x6x6xi1>
    %469 = vector.broadcast %468 : vector<1x6x6xi1> to vector<2x6x6xi1>
    %470 = arith.select %469, %467, %451 : vector<2x6x6xi1>, vector<2x6x6xf32>
    %471 = vector.extract_strided_slice %388 {offsets = [0, 2, 0], sizes = [1, 6, 6], strides = [1, 1, 1]} : vector<2x8x6xf32> to vector<1x6x6xf32>
    %472 = vector.shape_cast %471 : vector<1x6x6xf32> to vector<6x6xf32>
    %473 = arith.cmpf ogt, %472, %455 : vector<6x6xf32>
    %474 = arith.select %473, %472, %455 : vector<6x6xi1>, vector<6x6xf32>
    %475 = vector.extract_strided_slice %390 {offsets = [0, 2, 0], sizes = [1, 6, 6], strides = [1, 1, 1]} : vector<2x8x6xf32> to vector<1x6x6xf32>
    %476 = vector.shape_cast %475 : vector<1x6x6xf32> to vector<6x6xf32>
    %477 = arith.select %473, %476, %458 : vector<6x6xi1>, vector<6x6xf32>
    %478 = vector.shape_cast %473 : vector<6x6xi1> to vector<1x6x6xi1>
    %479 = vector.extract_strided_slice %392 {offsets = [0, 0, 2, 0], sizes = [1, 4, 6, 6], strides = [1, 1, 1, 1]} : vector<2x4x8x6xbf16> to vector<1x4x6x6xbf16>
    %480 = vector.shape_cast %479 : vector<1x4x6x6xbf16> to vector<4x6x6xbf16>
    %481 = vector.shape_cast %478 : vector<1x6x6xi1> to vector<1x6x6xi1>
    %482 = vector.broadcast %481 : vector<1x6x6xi1> to vector<4x6x6xi1>
    %483 = arith.select %482, %480, %464 : vector<4x6x6xi1>, vector<4x6x6xbf16>
    %484 = vector.shape_cast %473 : vector<6x6xi1> to vector<1x6x6xi1>
    %485 = vector.extract_strided_slice %394 {offsets = [0, 0, 2, 0], sizes = [1, 2, 6, 6], strides = [1, 1, 1, 1]} : vector<2x2x8x6xf32> to vector<1x2x6x6xf32>
    %486 = vector.shape_cast %485 : vector<1x2x6x6xf32> to vector<2x6x6xf32>
    %487 = vector.shape_cast %484 : vector<1x6x6xi1> to vector<1x6x6xi1>
    %488 = vector.broadcast %487 : vector<1x6x6xi1> to vector<2x6x6xi1>
    %489 = arith.select %488, %486, %470 : vector<2x6x6xi1>, vector<2x6x6xf32>
    %c0_103 = arith.constant 0 : index
    %c0_104 = arith.constant 0 : index
    %c0_105 = arith.constant 0 : index
    %c0_106 = arith.constant 0 : index
    %c2 = arith.constant 2 : index
    %490 = vector.load %arg4[%c0_103, %c0_104, %c0_105, %c0_106, %c2] : memref<1x2x2x8x8xf32, #tpu.memory_space<vmem>>, vector<1x2x1x8x6xf32>
    %491 = vector.shape_cast %490 : vector<1x2x1x8x6xf32> to vector<2x8x6xf32>
    %492 = vector.extract_strided_slice %73 {offsets = [0, 0, 0, 2], sizes = [2, 1, 8, 6], strides = [1, 1, 1, 1]} : vector<2x2x8x8xf32> to vector<2x1x8x6xf32>
    %493 = vector.shape_cast %492 : vector<2x1x8x6xf32> to vector<2x8x6xf32>
    %c0_107 = arith.constant 0 : index
    %c0_108 = arith.constant 0 : index
    %c0_109 = arith.constant 0 : index
    %c0_110 = arith.constant 0 : index
    %c0_111 = arith.constant 0 : index
    %c2_112 = arith.constant 2 : index
    %494 = vector.load %arg3[%c0_107, %c0_108, %c0_109, %c0_110, %c0_111, %c2_112] : memref<1x2x2x4x8x8xbf16, #tpu.memory_space<vmem>>, vector<1x2x1x4x8x6xbf16>
    %495 = vector.shape_cast %494 : vector<1x2x1x4x8x6xbf16> to vector<2x4x8x6xbf16>
    %c0_113 = arith.constant 0 : index
    %c0_114 = arith.constant 0 : index
    %c0_115 = arith.constant 0 : index
    %c0_116 = arith.constant 0 : index
    %c0_117 = arith.constant 0 : index
    %c2_118 = arith.constant 2 : index
    %496 = vector.load %arg2[%c0_113, %c0_114, %c0_115, %c0_116, %c0_117, %c2_118] : memref<1x2x2x2x8x8xf32, #tpu.memory_space<vmem>>, vector<1x2x1x2x8x6xf32>
    %497 = vector.shape_cast %496 : vector<1x2x1x2x8x6xf32> to vector<2x2x8x6xf32>
    %498 = vector.extract_strided_slice %491 {offsets = [0, 0, 0], sizes = [1, 6, 6], strides = [1, 1, 1]} : vector<2x8x6xf32> to vector<1x6x6xf32>
    %499 = vector.shape_cast %498 : vector<1x6x6xf32> to vector<6x6xf32>
    %500 = arith.cmpf ogt, %499, %474 : vector<6x6xf32>
    %501 = arith.select %500, %499, %474 : vector<6x6xi1>, vector<6x6xf32>
    %502 = vector.extract_strided_slice %493 {offsets = [0, 0, 0], sizes = [1, 6, 6], strides = [1, 1, 1]} : vector<2x8x6xf32> to vector<1x6x6xf32>
    %503 = vector.shape_cast %502 : vector<1x6x6xf32> to vector<6x6xf32>
    %504 = arith.select %500, %503, %477 : vector<6x6xi1>, vector<6x6xf32>
    %505 = vector.shape_cast %500 : vector<6x6xi1> to vector<1x6x6xi1>
    %506 = vector.extract_strided_slice %495 {offsets = [0, 0, 0, 0], sizes = [1, 4, 6, 6], strides = [1, 1, 1, 1]} : vector<2x4x8x6xbf16> to vector<1x4x6x6xbf16>
    %507 = vector.shape_cast %506 : vector<1x4x6x6xbf16> to vector<4x6x6xbf16>
    %508 = vector.shape_cast %505 : vector<1x6x6xi1> to vector<1x6x6xi1>
    %509 = vector.broadcast %508 : vector<1x6x6xi1> to vector<4x6x6xi1>
    %510 = arith.select %509, %507, %483 : vector<4x6x6xi1>, vector<4x6x6xbf16>
    %511 = vector.shape_cast %500 : vector<6x6xi1> to vector<1x6x6xi1>
    %512 = vector.extract_strided_slice %497 {offsets = [0, 0, 0, 0], sizes = [1, 2, 6, 6], strides = [1, 1, 1, 1]} : vector<2x2x8x6xf32> to vector<1x2x6x6xf32>
    %513 = vector.shape_cast %512 : vector<1x2x6x6xf32> to vector<2x6x6xf32>
    %514 = vector.shape_cast %511 : vector<1x6x6xi1> to vector<1x6x6xi1>
    %515 = vector.broadcast %514 : vector<1x6x6xi1> to vector<2x6x6xi1>
    %516 = arith.select %515, %513, %489 : vector<2x6x6xi1>, vector<2x6x6xf32>
    %517 = vector.extract_strided_slice %491 {offsets = [1, 0, 0], sizes = [1, 6, 6], strides = [1, 1, 1]} : vector<2x8x6xf32> to vector<1x6x6xf32>
    %518 = vector.shape_cast %517 : vector<1x6x6xf32> to vector<6x6xf32>
    %519 = arith.cmpf ogt, %518, %501 : vector<6x6xf32>
    %520 = arith.select %519, %518, %501 : vector<6x6xi1>, vector<6x6xf32>
    %521 = vector.extract_strided_slice %493 {offsets = [1, 0, 0], sizes = [1, 6, 6], strides = [1, 1, 1]} : vector<2x8x6xf32> to vector<1x6x6xf32>
    %522 = vector.shape_cast %521 : vector<1x6x6xf32> to vector<6x6xf32>
    %523 = arith.select %519, %522, %504 : vector<6x6xi1>, vector<6x6xf32>
    %524 = vector.shape_cast %519 : vector<6x6xi1> to vector<1x6x6xi1>
    %525 = vector.extract_strided_slice %495 {offsets = [1, 0, 0, 0], sizes = [1, 4, 6, 6], strides = [1, 1, 1, 1]} : vector<2x4x8x6xbf16> to vector<1x4x6x6xbf16>
    %526 = vector.shape_cast %525 : vector<1x4x6x6xbf16> to vector<4x6x6xbf16>
    %527 = vector.shape_cast %524 : vector<1x6x6xi1> to vector<1x6x6xi1>
    %528 = vector.broadcast %527 : vector<1x6x6xi1> to vector<4x6x6xi1>
    %529 = arith.select %528, %526, %510 : vector<4x6x6xi1>, vector<4x6x6xbf16>
    %530 = vector.shape_cast %519 : vector<6x6xi1> to vector<1x6x6xi1>
    %531 = vector.extract_strided_slice %497 {offsets = [1, 0, 0, 0], sizes = [1, 2, 6, 6], strides = [1, 1, 1, 1]} : vector<2x2x8x6xf32> to vector<1x2x6x6xf32>
    %532 = vector.shape_cast %531 : vector<1x2x6x6xf32> to vector<2x6x6xf32>
    %533 = vector.shape_cast %530 : vector<1x6x6xi1> to vector<1x6x6xi1>
    %534 = vector.broadcast %533 : vector<1x6x6xi1> to vector<2x6x6xi1>
    %535 = arith.select %534, %532, %516 : vector<2x6x6xi1>, vector<2x6x6xf32>
    %536 = vector.extract_strided_slice %491 {offsets = [0, 1, 0], sizes = [1, 6, 6], strides = [1, 1, 1]} : vector<2x8x6xf32> to vector<1x6x6xf32>
    %537 = vector.shape_cast %536 : vector<1x6x6xf32> to vector<6x6xf32>
    %538 = arith.cmpf ogt, %537, %520 : vector<6x6xf32>
    %539 = arith.select %538, %537, %520 : vector<6x6xi1>, vector<6x6xf32>
    %540 = vector.extract_strided_slice %493 {offsets = [0, 1, 0], sizes = [1, 6, 6], strides = [1, 1, 1]} : vector<2x8x6xf32> to vector<1x6x6xf32>
    %541 = vector.shape_cast %540 : vector<1x6x6xf32> to vector<6x6xf32>
    %542 = arith.select %538, %541, %523 : vector<6x6xi1>, vector<6x6xf32>
    %543 = vector.shape_cast %538 : vector<6x6xi1> to vector<1x6x6xi1>
    %544 = vector.extract_strided_slice %495 {offsets = [0, 0, 1, 0], sizes = [1, 4, 6, 6], strides = [1, 1, 1, 1]} : vector<2x4x8x6xbf16> to vector<1x4x6x6xbf16>
    %545 = vector.shape_cast %544 : vector<1x4x6x6xbf16> to vector<4x6x6xbf16>
    %546 = vector.shape_cast %543 : vector<1x6x6xi1> to vector<1x6x6xi1>
    %547 = vector.broadcast %546 : vector<1x6x6xi1> to vector<4x6x6xi1>
    %548 = arith.select %547, %545, %529 : vector<4x6x6xi1>, vector<4x6x6xbf16>
    %549 = vector.shape_cast %538 : vector<6x6xi1> to vector<1x6x6xi1>
    %550 = vector.extract_strided_slice %497 {offsets = [0, 0, 1, 0], sizes = [1, 2, 6, 6], strides = [1, 1, 1, 1]} : vector<2x2x8x6xf32> to vector<1x2x6x6xf32>
    %551 = vector.shape_cast %550 : vector<1x2x6x6xf32> to vector<2x6x6xf32>
    %552 = vector.shape_cast %549 : vector<1x6x6xi1> to vector<1x6x6xi1>
    %553 = vector.broadcast %552 : vector<1x6x6xi1> to vector<2x6x6xi1>
    %554 = arith.select %553, %551, %535 : vector<2x6x6xi1>, vector<2x6x6xf32>
    %555 = vector.extract_strided_slice %491 {offsets = [1, 1, 0], sizes = [1, 6, 6], strides = [1, 1, 1]} : vector<2x8x6xf32> to vector<1x6x6xf32>
    %556 = vector.shape_cast %555 : vector<1x6x6xf32> to vector<6x6xf32>
    %557 = arith.cmpf ogt, %556, %539 : vector<6x6xf32>
    %558 = arith.select %557, %556, %539 : vector<6x6xi1>, vector<6x6xf32>
    %559 = vector.extract_strided_slice %493 {offsets = [1, 1, 0], sizes = [1, 6, 6], strides = [1, 1, 1]} : vector<2x8x6xf32> to vector<1x6x6xf32>
    %560 = vector.shape_cast %559 : vector<1x6x6xf32> to vector<6x6xf32>
    %561 = arith.select %557, %560, %542 : vector<6x6xi1>, vector<6x6xf32>
    %562 = vector.shape_cast %557 : vector<6x6xi1> to vector<1x6x6xi1>
    %563 = vector.extract_strided_slice %495 {offsets = [1, 0, 1, 0], sizes = [1, 4, 6, 6], strides = [1, 1, 1, 1]} : vector<2x4x8x6xbf16> to vector<1x4x6x6xbf16>
    %564 = vector.shape_cast %563 : vector<1x4x6x6xbf16> to vector<4x6x6xbf16>
    %565 = vector.shape_cast %562 : vector<1x6x6xi1> to vector<1x6x6xi1>
    %566 = vector.broadcast %565 : vector<1x6x6xi1> to vector<4x6x6xi1>
    %567 = arith.select %566, %564, %548 : vector<4x6x6xi1>, vector<4x6x6xbf16>
    %568 = vector.shape_cast %557 : vector<6x6xi1> to vector<1x6x6xi1>
    %569 = vector.extract_strided_slice %497 {offsets = [1, 0, 1, 0], sizes = [1, 2, 6, 6], strides = [1, 1, 1, 1]} : vector<2x2x8x6xf32> to vector<1x2x6x6xf32>
    %570 = vector.shape_cast %569 : vector<1x2x6x6xf32> to vector<2x6x6xf32>
    %571 = vector.shape_cast %568 : vector<1x6x6xi1> to vector<1x6x6xi1>
    %572 = vector.broadcast %571 : vector<1x6x6xi1> to vector<2x6x6xi1>
    %573 = arith.select %572, %570, %554 : vector<2x6x6xi1>, vector<2x6x6xf32>
    %574 = vector.extract_strided_slice %491 {offsets = [0, 2, 0], sizes = [1, 6, 6], strides = [1, 1, 1]} : vector<2x8x6xf32> to vector<1x6x6xf32>
    %575 = vector.shape_cast %574 : vector<1x6x6xf32> to vector<6x6xf32>
    %576 = arith.cmpf ogt, %575, %558 : vector<6x6xf32>
    %577 = vector.extract_strided_slice %493 {offsets = [0, 2, 0], sizes = [1, 6, 6], strides = [1, 1, 1]} : vector<2x8x6xf32> to vector<1x6x6xf32>
    %578 = vector.shape_cast %577 : vector<1x6x6xf32> to vector<6x6xf32>
    %579 = arith.select %576, %578, %561 : vector<6x6xi1>, vector<6x6xf32>
    %580 = vector.shape_cast %576 : vector<6x6xi1> to vector<1x6x6xi1>
    %581 = vector.extract_strided_slice %495 {offsets = [0, 0, 2, 0], sizes = [1, 4, 6, 6], strides = [1, 1, 1, 1]} : vector<2x4x8x6xbf16> to vector<1x4x6x6xbf16>
    %582 = vector.shape_cast %581 : vector<1x4x6x6xbf16> to vector<4x6x6xbf16>
    %583 = vector.shape_cast %580 : vector<1x6x6xi1> to vector<1x6x6xi1>
    %584 = vector.broadcast %583 : vector<1x6x6xi1> to vector<4x6x6xi1>
    %585 = arith.select %584, %582, %567 : vector<4x6x6xi1>, vector<4x6x6xbf16>
    %586 = vector.shape_cast %576 : vector<6x6xi1> to vector<1x6x6xi1>
    %587 = vector.extract_strided_slice %497 {offsets = [0, 0, 2, 0], sizes = [1, 2, 6, 6], strides = [1, 1, 1, 1]} : vector<2x2x8x6xf32> to vector<1x2x6x6xf32>
    %588 = vector.shape_cast %587 : vector<1x2x6x6xf32> to vector<2x6x6xf32>
    %589 = vector.shape_cast %586 : vector<1x6x6xi1> to vector<1x6x6xi1>
    %590 = vector.broadcast %589 : vector<1x6x6xi1> to vector<2x6x6xi1>
    %591 = arith.select %590, %588, %573 : vector<2x6x6xi1>, vector<2x6x6xf32>
    %592 = arith.mulf %591, %591 : vector<2x6x6xf32>
    %cst_119 = arith.constant dense<0.000000e+00> : vector<6x6xf32>
    %593 = vector.multi_reduction <add>, %592, %cst_119 [0] : vector<2x6x6xf32> to vector<6x6xf32>
    %cst_120 = arith.constant 1.000000e-16 : f32
    %594 = vector.broadcast %cst_120 : f32 to vector<6x6xf32>
    %595 = arith.maximumf %593, %594 : vector<6x6xf32>
    %cst_121 = arith.constant 0.000000e+00 : f32
    %596 = vector.broadcast %cst_121 : f32 to vector<6x6xf32>
    %cst_122 = arith.constant 0.000000e+00 : f32
    %597 = vector.broadcast %cst_122 : f32 to vector<6x6xf32>
    %cst_123 = arith.constant 0.000000e+00 : f32
    %598 = vector.broadcast %cst_123 : f32 to vector<6x6xf32>
    %cst_124 = arith.constant 0.000000e+00 : f32
    %599 = vector.broadcast %cst_124 : f32 to vector<6x6xf32>
    %c0_125 = arith.constant 0 : index
    %c0_126 = arith.constant 0 : index
    %c0_127 = arith.constant 0 : index
    %c0_128 = arith.constant 0 : index
    %c0_129 = arith.constant 0 : index
    %c0_130 = arith.constant 0 : index
    %600 = vector.load %arg3[%c0_125, %c0_126, %c0_127, %c0_128, %c0_129, %c0_130] : memref<1x2x2x4x8x8xbf16, #tpu.memory_space<vmem>>, vector<1x2x1x4x8x6xbf16>
    %601 = vector.shape_cast %600 : vector<1x2x1x4x8x6xbf16> to vector<2x4x8x6xbf16>
    %c0_131 = arith.constant 0 : index
    %c0_132 = arith.constant 0 : index
    %c0_133 = arith.constant 0 : index
    %c0_134 = arith.constant 0 : index
    %c0_135 = arith.constant 0 : index
    %c0_136 = arith.constant 0 : index
    %602 = vector.load %arg2[%c0_131, %c0_132, %c0_133, %c0_134, %c0_135, %c0_136] : memref<1x2x2x2x8x8xf32, #tpu.memory_space<vmem>>, vector<1x2x1x2x8x6xf32>
    %603 = vector.shape_cast %602 : vector<1x2x1x2x8x6xf32> to vector<2x2x8x6xf32>
    %604 = vector.extract_strided_slice %65 {offsets = [0, 0, 0, 0], sizes = [2, 1, 8, 6], strides = [1, 1, 1, 1]} : vector<2x2x8x8xf32> to vector<2x1x8x6xf32>
    %605 = vector.shape_cast %604 : vector<2x1x8x6xf32> to vector<2x8x6xf32>
    %606 = vector.extract_strided_slice %73 {offsets = [0, 0, 0, 0], sizes = [2, 1, 8, 6], strides = [1, 1, 1, 1]} : vector<2x2x8x8xf32> to vector<2x1x8x6xf32>
    %607 = vector.shape_cast %606 : vector<2x1x8x6xf32> to vector<2x8x6xf32>
    %608 = vector.extract_strided_slice %601 {offsets = [0, 0, 0, 0], sizes = [1, 4, 6, 6], strides = [1, 1, 1, 1]} : vector<2x4x8x6xbf16> to vector<1x4x6x6xbf16>
    %609 = vector.shape_cast %608 : vector<1x4x6x6xbf16> to vector<4x6x6xbf16>
    %610 = vector.extract_strided_slice %603 {offsets = [0, 0, 0, 0], sizes = [1, 2, 6, 6], strides = [1, 1, 1, 1]} : vector<2x2x8x6xf32> to vector<1x2x6x6xf32>
    %611 = vector.shape_cast %610 : vector<1x2x6x6xf32> to vector<2x6x6xf32>
    %612 = arith.mulf %585, %609 : vector<4x6x6xbf16>
    %613 = arith.extf %612 : vector<4x6x6xbf16> to vector<4x6x6xf32>
    %cst_137 = arith.constant dense<0.000000e+00> : vector<6x6xf32>
    %614 = vector.multi_reduction <add>, %613, %cst_137 [0] : vector<4x6x6xf32> to vector<6x6xf32>
    %615 = vector.extract_strided_slice %607 {offsets = [0, 0, 0], sizes = [1, 6, 6], strides = [1, 1, 1]} : vector<2x8x6xf32> to vector<1x6x6xf32>
    %616 = vector.shape_cast %615 : vector<1x6x6xf32> to vector<6x6xf32>
    %617 = arith.mulf %579, %616 : vector<6x6xf32>
    %618 = arith.mulf %614, %617 : vector<6x6xf32>
    %619 = arith.mulf %591, %611 : vector<2x6x6xf32>
    %cst_138 = arith.constant dense<0.000000e+00> : vector<6x6xf32>
    %620 = vector.multi_reduction <add>, %619, %cst_138 [0] : vector<2x6x6xf32> to vector<6x6xf32>
    %621 = arith.mulf %611, %611 : vector<2x6x6xf32>
    %cst_139 = arith.constant dense<0.000000e+00> : vector<6x6xf32>
    %622 = vector.multi_reduction <add>, %621, %cst_139 [0] : vector<2x6x6xf32> to vector<6x6xf32>
    %cst_140 = arith.constant 1.000000e-16 : f32
    %623 = vector.broadcast %cst_140 : f32 to vector<6x6xf32>
    %624 = arith.maximumf %622, %623 : vector<6x6xf32>
    %625 = arith.mulf %595, %624 : vector<6x6xf32>
    %626 = math.rsqrt %625 : vector<6x6xf32>
    %627 = arith.mulf %620, %626 : vector<6x6xf32>
    %cst_141 = arith.constant 0.000000e+00 : f32
    %cst_142 = arith.constant 1.000000e+00 : f32
    %628 = vector.broadcast %cst_141 : f32 to vector<6x6xf32>
    %629 = arith.maximumf %628, %627 : vector<6x6xf32>
    %630 = vector.broadcast %cst_142 : f32 to vector<6x6xf32>
    %631 = arith.minimumf %630, %629 : vector<6x6xf32>
    %cst_143 = arith.constant 1.000000e+00 : f32
    %632 = vector.broadcast %cst_143 : f32 to vector<6x6xf32>
    %633 = arith.subf %631, %632 : vector<6x6xf32>
    %cst_144 = arith.constant 1.42857146 : f32
    %634 = vector.broadcast %cst_144 : f32 to vector<6x6xf32>
    %635 = arith.mulf %633, %634 : vector<6x6xf32>
    %636 = math.exp %635 : vector<6x6xf32>
    %637 = vector.extract_strided_slice %605 {offsets = [0, 0, 0], sizes = [1, 6, 6], strides = [1, 1, 1]} : vector<2x8x6xf32> to vector<1x6x6xf32>
    %638 = vector.shape_cast %637 : vector<1x6x6xf32> to vector<6x6xf32>
    %639 = arith.mulf %636, %638 : vector<6x6xf32>
    %cst_145 = arith.constant 1.000000e+01 : f32
    %640 = vector.broadcast %cst_145 : f32 to vector<6x6xf32>
    %641 = arith.mulf %639, %640 : vector<6x6xf32>
    %642 = math.exp %641 : vector<6x6xf32>
    %643 = arith.addf %596, %642 : vector<6x6xf32>
    %644 = arith.mulf %642, %618 : vector<6x6xf32>
    %645 = arith.addf %597, %644 : vector<6x6xf32>
    %cst_146 = arith.constant 1.000000e+01 : f32
    %646 = vector.broadcast %cst_146 : f32 to vector<6x6xf32>
    %647 = arith.mulf %618, %646 : vector<6x6xf32>
    %648 = math.exp %647 : vector<6x6xf32>
    %649 = arith.addf %598, %648 : vector<6x6xf32>
    %650 = arith.addf %599, %639 : vector<6x6xf32>
    %651 = vector.extract_strided_slice %601 {offsets = [1, 0, 0, 0], sizes = [1, 4, 6, 6], strides = [1, 1, 1, 1]} : vector<2x4x8x6xbf16> to vector<1x4x6x6xbf16>
    %652 = vector.shape_cast %651 : vector<1x4x6x6xbf16> to vector<4x6x6xbf16>
    %653 = vector.extract_strided_slice %603 {offsets = [1, 0, 0, 0], sizes = [1, 2, 6, 6], strides = [1, 1, 1, 1]} : vector<2x2x8x6xf32> to vector<1x2x6x6xf32>
    %654 = vector.shape_cast %653 : vector<1x2x6x6xf32> to vector<2x6x6xf32>
    %655 = arith.mulf %585, %652 : vector<4x6x6xbf16>
    %656 = arith.extf %655 : vector<4x6x6xbf16> to vector<4x6x6xf32>
    %cst_147 = arith.constant dense<0.000000e+00> : vector<6x6xf32>
    %657 = vector.multi_reduction <add>, %656, %cst_147 [0] : vector<4x6x6xf32> to vector<6x6xf32>
    %658 = vector.extract_strided_slice %607 {offsets = [1, 0, 0], sizes = [1, 6, 6], strides = [1, 1, 1]} : vector<2x8x6xf32> to vector<1x6x6xf32>
    %659 = vector.shape_cast %658 : vector<1x6x6xf32> to vector<6x6xf32>
    %660 = arith.mulf %579, %659 : vector<6x6xf32>
    %661 = arith.mulf %657, %660 : vector<6x6xf32>
    %662 = arith.mulf %591, %654 : vector<2x6x6xf32>
    %cst_148 = arith.constant dense<0.000000e+00> : vector<6x6xf32>
    %663 = vector.multi_reduction <add>, %662, %cst_148 [0] : vector<2x6x6xf32> to vector<6x6xf32>
    %664 = arith.mulf %654, %654 : vector<2x6x6xf32>
    %cst_149 = arith.constant dense<0.000000e+00> : vector<6x6xf32>
    %665 = vector.multi_reduction <add>, %664, %cst_149 [0] : vector<2x6x6xf32> to vector<6x6xf32>
    %cst_150 = arith.constant 1.000000e-16 : f32
    %666 = vector.broadcast %cst_150 : f32 to vector<6x6xf32>
    %667 = arith.maximumf %665, %666 : vector<6x6xf32>
    %668 = arith.mulf %595, %667 : vector<6x6xf32>
    %669 = math.rsqrt %668 : vector<6x6xf32>
    %670 = arith.mulf %663, %669 : vector<6x6xf32>
    %cst_151 = arith.constant 0.000000e+00 : f32
    %cst_152 = arith.constant 1.000000e+00 : f32
    %671 = vector.broadcast %cst_151 : f32 to vector<6x6xf32>
    %672 = arith.maximumf %671, %670 : vector<6x6xf32>
    %673 = vector.broadcast %cst_152 : f32 to vector<6x6xf32>
    %674 = arith.minimumf %673, %672 : vector<6x6xf32>
    %cst_153 = arith.constant 1.000000e+00 : f32
    %675 = vector.broadcast %cst_153 : f32 to vector<6x6xf32>
    %676 = arith.subf %674, %675 : vector<6x6xf32>
    %cst_154 = arith.constant 1.42857146 : f32
    %677 = vector.broadcast %cst_154 : f32 to vector<6x6xf32>
    %678 = arith.mulf %676, %677 : vector<6x6xf32>
    %679 = math.exp %678 : vector<6x6xf32>
    %680 = vector.extract_strided_slice %605 {offsets = [1, 0, 0], sizes = [1, 6, 6], strides = [1, 1, 1]} : vector<2x8x6xf32> to vector<1x6x6xf32>
    %681 = vector.shape_cast %680 : vector<1x6x6xf32> to vector<6x6xf32>
    %682 = arith.mulf %679, %681 : vector<6x6xf32>
    %cst_155 = arith.constant 1.000000e+01 : f32
    %683 = vector.broadcast %cst_155 : f32 to vector<6x6xf32>
    %684 = arith.mulf %682, %683 : vector<6x6xf32>
    %685 = math.exp %684 : vector<6x6xf32>
    %686 = arith.addf %643, %685 : vector<6x6xf32>
    %687 = arith.mulf %685, %661 : vector<6x6xf32>
    %688 = arith.addf %645, %687 : vector<6x6xf32>
    %cst_156 = arith.constant 1.000000e+01 : f32
    %689 = vector.broadcast %cst_156 : f32 to vector<6x6xf32>
    %690 = arith.mulf %661, %689 : vector<6x6xf32>
    %691 = math.exp %690 : vector<6x6xf32>
    %692 = arith.addf %649, %691 : vector<6x6xf32>
    %693 = arith.addf %650, %682 : vector<6x6xf32>
    %694 = vector.extract_strided_slice %601 {offsets = [0, 0, 1, 0], sizes = [1, 4, 6, 6], strides = [1, 1, 1, 1]} : vector<2x4x8x6xbf16> to vector<1x4x6x6xbf16>
    %695 = vector.shape_cast %694 : vector<1x4x6x6xbf16> to vector<4x6x6xbf16>
    %696 = vector.extract_strided_slice %603 {offsets = [0, 0, 1, 0], sizes = [1, 2, 6, 6], strides = [1, 1, 1, 1]} : vector<2x2x8x6xf32> to vector<1x2x6x6xf32>
    %697 = vector.shape_cast %696 : vector<1x2x6x6xf32> to vector<2x6x6xf32>
    %698 = arith.mulf %585, %695 : vector<4x6x6xbf16>
    %699 = arith.extf %698 : vector<4x6x6xbf16> to vector<4x6x6xf32>
    %cst_157 = arith.constant dense<0.000000e+00> : vector<6x6xf32>
    %700 = vector.multi_reduction <add>, %699, %cst_157 [0] : vector<4x6x6xf32> to vector<6x6xf32>
    %701 = vector.extract_strided_slice %607 {offsets = [0, 1, 0], sizes = [1, 6, 6], strides = [1, 1, 1]} : vector<2x8x6xf32> to vector<1x6x6xf32>
    %702 = vector.shape_cast %701 : vector<1x6x6xf32> to vector<6x6xf32>
    %703 = arith.mulf %579, %702 : vector<6x6xf32>
    %704 = arith.mulf %700, %703 : vector<6x6xf32>
    %705 = arith.mulf %591, %697 : vector<2x6x6xf32>
    %cst_158 = arith.constant dense<0.000000e+00> : vector<6x6xf32>
    %706 = vector.multi_reduction <add>, %705, %cst_158 [0] : vector<2x6x6xf32> to vector<6x6xf32>
    %707 = arith.mulf %697, %697 : vector<2x6x6xf32>
    %cst_159 = arith.constant dense<0.000000e+00> : vector<6x6xf32>
    %708 = vector.multi_reduction <add>, %707, %cst_159 [0] : vector<2x6x6xf32> to vector<6x6xf32>
    %cst_160 = arith.constant 1.000000e-16 : f32
    %709 = vector.broadcast %cst_160 : f32 to vector<6x6xf32>
    %710 = arith.maximumf %708, %709 : vector<6x6xf32>
    %711 = arith.mulf %595, %710 : vector<6x6xf32>
    %712 = math.rsqrt %711 : vector<6x6xf32>
    %713 = arith.mulf %706, %712 : vector<6x6xf32>
    %cst_161 = arith.constant 0.000000e+00 : f32
    %cst_162 = arith.constant 1.000000e+00 : f32
    %714 = vector.broadcast %cst_161 : f32 to vector<6x6xf32>
    %715 = arith.maximumf %714, %713 : vector<6x6xf32>
    %716 = vector.broadcast %cst_162 : f32 to vector<6x6xf32>
    %717 = arith.minimumf %716, %715 : vector<6x6xf32>
    %cst_163 = arith.constant 1.000000e+00 : f32
    %718 = vector.broadcast %cst_163 : f32 to vector<6x6xf32>
    %719 = arith.subf %717, %718 : vector<6x6xf32>
    %cst_164 = arith.constant 1.42857146 : f32
    %720 = vector.broadcast %cst_164 : f32 to vector<6x6xf32>
    %721 = arith.mulf %719, %720 : vector<6x6xf32>
    %722 = math.exp %721 : vector<6x6xf32>
    %723 = vector.extract_strided_slice %605 {offsets = [0, 1, 0], sizes = [1, 6, 6], strides = [1, 1, 1]} : vector<2x8x6xf32> to vector<1x6x6xf32>
    %724 = vector.shape_cast %723 : vector<1x6x6xf32> to vector<6x6xf32>
    %725 = arith.mulf %722, %724 : vector<6x6xf32>
    %cst_165 = arith.constant 1.000000e+01 : f32
    %726 = vector.broadcast %cst_165 : f32 to vector<6x6xf32>
    %727 = arith.mulf %725, %726 : vector<6x6xf32>
    %728 = math.exp %727 : vector<6x6xf32>
    %729 = arith.addf %686, %728 : vector<6x6xf32>
    %730 = arith.mulf %728, %704 : vector<6x6xf32>
    %731 = arith.addf %688, %730 : vector<6x6xf32>
    %cst_166 = arith.constant 1.000000e+01 : f32
    %732 = vector.broadcast %cst_166 : f32 to vector<6x6xf32>
    %733 = arith.mulf %704, %732 : vector<6x6xf32>
    %734 = math.exp %733 : vector<6x6xf32>
    %735 = arith.addf %692, %734 : vector<6x6xf32>
    %736 = arith.addf %693, %725 : vector<6x6xf32>
    %737 = vector.extract_strided_slice %601 {offsets = [1, 0, 1, 0], sizes = [1, 4, 6, 6], strides = [1, 1, 1, 1]} : vector<2x4x8x6xbf16> to vector<1x4x6x6xbf16>
    %738 = vector.shape_cast %737 : vector<1x4x6x6xbf16> to vector<4x6x6xbf16>
    %739 = vector.extract_strided_slice %603 {offsets = [1, 0, 1, 0], sizes = [1, 2, 6, 6], strides = [1, 1, 1, 1]} : vector<2x2x8x6xf32> to vector<1x2x6x6xf32>
    %740 = vector.shape_cast %739 : vector<1x2x6x6xf32> to vector<2x6x6xf32>
    %741 = arith.mulf %585, %738 : vector<4x6x6xbf16>
    %742 = arith.extf %741 : vector<4x6x6xbf16> to vector<4x6x6xf32>
    %cst_167 = arith.constant dense<0.000000e+00> : vector<6x6xf32>
    %743 = vector.multi_reduction <add>, %742, %cst_167 [0] : vector<4x6x6xf32> to vector<6x6xf32>
    %744 = vector.extract_strided_slice %607 {offsets = [1, 1, 0], sizes = [1, 6, 6], strides = [1, 1, 1]} : vector<2x8x6xf32> to vector<1x6x6xf32>
    %745 = vector.shape_cast %744 : vector<1x6x6xf32> to vector<6x6xf32>
    %746 = arith.mulf %579, %745 : vector<6x6xf32>
    %747 = arith.mulf %743, %746 : vector<6x6xf32>
    %748 = arith.mulf %591, %740 : vector<2x6x6xf32>
    %cst_168 = arith.constant dense<0.000000e+00> : vector<6x6xf32>
    %749 = vector.multi_reduction <add>, %748, %cst_168 [0] : vector<2x6x6xf32> to vector<6x6xf32>
    %750 = arith.mulf %740, %740 : vector<2x6x6xf32>
    %cst_169 = arith.constant dense<0.000000e+00> : vector<6x6xf32>
    %751 = vector.multi_reduction <add>, %750, %cst_169 [0] : vector<2x6x6xf32> to vector<6x6xf32>
    %cst_170 = arith.constant 1.000000e-16 : f32
    %752 = vector.broadcast %cst_170 : f32 to vector<6x6xf32>
    %753 = arith.maximumf %751, %752 : vector<6x6xf32>
    %754 = arith.mulf %595, %753 : vector<6x6xf32>
    %755 = math.rsqrt %754 : vector<6x6xf32>
    %756 = arith.mulf %749, %755 : vector<6x6xf32>
    %cst_171 = arith.constant 0.000000e+00 : f32
    %cst_172 = arith.constant 1.000000e+00 : f32
    %757 = vector.broadcast %cst_171 : f32 to vector<6x6xf32>
    %758 = arith.maximumf %757, %756 : vector<6x6xf32>
    %759 = vector.broadcast %cst_172 : f32 to vector<6x6xf32>
    %760 = arith.minimumf %759, %758 : vector<6x6xf32>
    %cst_173 = arith.constant 1.000000e+00 : f32
    %761 = vector.broadcast %cst_173 : f32 to vector<6x6xf32>
    %762 = arith.subf %760, %761 : vector<6x6xf32>
    %cst_174 = arith.constant 1.42857146 : f32
    %763 = vector.broadcast %cst_174 : f32 to vector<6x6xf32>
    %764 = arith.mulf %762, %763 : vector<6x6xf32>
    %765 = math.exp %764 : vector<6x6xf32>
    %766 = vector.extract_strided_slice %605 {offsets = [1, 1, 0], sizes = [1, 6, 6], strides = [1, 1, 1]} : vector<2x8x6xf32> to vector<1x6x6xf32>
    %767 = vector.shape_cast %766 : vector<1x6x6xf32> to vector<6x6xf32>
    %768 = arith.mulf %765, %767 : vector<6x6xf32>
    %cst_175 = arith.constant 1.000000e+01 : f32
    %769 = vector.broadcast %cst_175 : f32 to vector<6x6xf32>
    %770 = arith.mulf %768, %769 : vector<6x6xf32>
    %771 = math.exp %770 : vector<6x6xf32>
    %772 = arith.addf %729, %771 : vector<6x6xf32>
    %773 = arith.mulf %771, %747 : vector<6x6xf32>
    %774 = arith.addf %731, %773 : vector<6x6xf32>
    %cst_176 = arith.constant 1.000000e+01 : f32
    %775 = vector.broadcast %cst_176 : f32 to vector<6x6xf32>
    %776 = arith.mulf %747, %775 : vector<6x6xf32>
    %777 = math.exp %776 : vector<6x6xf32>
    %778 = arith.addf %735, %777 : vector<6x6xf32>
    %779 = arith.addf %736, %768 : vector<6x6xf32>
    %780 = vector.extract_strided_slice %601 {offsets = [0, 0, 2, 0], sizes = [1, 4, 6, 6], strides = [1, 1, 1, 1]} : vector<2x4x8x6xbf16> to vector<1x4x6x6xbf16>
    %781 = vector.shape_cast %780 : vector<1x4x6x6xbf16> to vector<4x6x6xbf16>
    %782 = vector.extract_strided_slice %603 {offsets = [0, 0, 2, 0], sizes = [1, 2, 6, 6], strides = [1, 1, 1, 1]} : vector<2x2x8x6xf32> to vector<1x2x6x6xf32>
    %783 = vector.shape_cast %782 : vector<1x2x6x6xf32> to vector<2x6x6xf32>
    %784 = arith.mulf %585, %781 : vector<4x6x6xbf16>
    %785 = arith.extf %784 : vector<4x6x6xbf16> to vector<4x6x6xf32>
    %cst_177 = arith.constant dense<0.000000e+00> : vector<6x6xf32>
    %786 = vector.multi_reduction <add>, %785, %cst_177 [0] : vector<4x6x6xf32> to vector<6x6xf32>
    %787 = vector.extract_strided_slice %607 {offsets = [0, 2, 0], sizes = [1, 6, 6], strides = [1, 1, 1]} : vector<2x8x6xf32> to vector<1x6x6xf32>
    %788 = vector.shape_cast %787 : vector<1x6x6xf32> to vector<6x6xf32>
    %789 = arith.mulf %579, %788 : vector<6x6xf32>
    %790 = arith.mulf %786, %789 : vector<6x6xf32>
    %791 = arith.mulf %591, %783 : vector<2x6x6xf32>
    %cst_178 = arith.constant dense<0.000000e+00> : vector<6x6xf32>
    %792 = vector.multi_reduction <add>, %791, %cst_178 [0] : vector<2x6x6xf32> to vector<6x6xf32>
    %793 = arith.mulf %783, %783 : vector<2x6x6xf32>
    %cst_179 = arith.constant dense<0.000000e+00> : vector<6x6xf32>
    %794 = vector.multi_reduction <add>, %793, %cst_179 [0] : vector<2x6x6xf32> to vector<6x6xf32>
    %cst_180 = arith.constant 1.000000e-16 : f32
    %795 = vector.broadcast %cst_180 : f32 to vector<6x6xf32>
    %796 = arith.maximumf %794, %795 : vector<6x6xf32>
    %797 = arith.mulf %595, %796 : vector<6x6xf32>
    %798 = math.rsqrt %797 : vector<6x6xf32>
    %799 = arith.mulf %792, %798 : vector<6x6xf32>
    %cst_181 = arith.constant 0.000000e+00 : f32
    %cst_182 = arith.constant 1.000000e+00 : f32
    %800 = vector.broadcast %cst_181 : f32 to vector<6x6xf32>
    %801 = arith.maximumf %800, %799 : vector<6x6xf32>
    %802 = vector.broadcast %cst_182 : f32 to vector<6x6xf32>
    %803 = arith.minimumf %802, %801 : vector<6x6xf32>
    %cst_183 = arith.constant 1.000000e+00 : f32
    %804 = vector.broadcast %cst_183 : f32 to vector<6x6xf32>
    %805 = arith.subf %803, %804 : vector<6x6xf32>
    %cst_184 = arith.constant 1.42857146 : f32
    %806 = vector.broadcast %cst_184 : f32 to vector<6x6xf32>
    %807 = arith.mulf %805, %806 : vector<6x6xf32>
    %808 = math.exp %807 : vector<6x6xf32>
    %809 = vector.extract_strided_slice %605 {offsets = [0, 2, 0], sizes = [1, 6, 6], strides = [1, 1, 1]} : vector<2x8x6xf32> to vector<1x6x6xf32>
    %810 = vector.shape_cast %809 : vector<1x6x6xf32> to vector<6x6xf32>
    %811 = arith.mulf %808, %810 : vector<6x6xf32>
    %cst_185 = arith.constant 1.000000e+01 : f32
    %812 = vector.broadcast %cst_185 : f32 to vector<6x6xf32>
    %813 = arith.mulf %811, %812 : vector<6x6xf32>
    %814 = math.exp %813 : vector<6x6xf32>
    %815 = arith.addf %772, %814 : vector<6x6xf32>
    %816 = arith.mulf %814, %790 : vector<6x6xf32>
    %817 = arith.addf %774, %816 : vector<6x6xf32>
    %cst_186 = arith.constant 1.000000e+01 : f32
    %818 = vector.broadcast %cst_186 : f32 to vector<6x6xf32>
    %819 = arith.mulf %790, %818 : vector<6x6xf32>
    %820 = math.exp %819 : vector<6x6xf32>
    %821 = arith.addf %778, %820 : vector<6x6xf32>
    %822 = arith.addf %779, %811 : vector<6x6xf32>
    %c0_187 = arith.constant 0 : index
    %c0_188 = arith.constant 0 : index
    %c1_189 = arith.constant 1 : index
    %c0_190 = arith.constant 0 : index
    %c0_191 = arith.constant 0 : index
    %c0_192 = arith.constant 0 : index
    %823 = vector.load %arg3[%c0_187, %c0_188, %c1_189, %c0_190, %c0_191, %c0_192] : memref<1x2x2x4x8x8xbf16, #tpu.memory_space<vmem>>, vector<1x2x1x4x8x6xbf16>
    %824 = vector.shape_cast %823 : vector<1x2x1x4x8x6xbf16> to vector<2x4x8x6xbf16>
    %c0_193 = arith.constant 0 : index
    %c0_194 = arith.constant 0 : index
    %c1_195 = arith.constant 1 : index
    %c0_196 = arith.constant 0 : index
    %c0_197 = arith.constant 0 : index
    %c0_198 = arith.constant 0 : index
    %825 = vector.load %arg2[%c0_193, %c0_194, %c1_195, %c0_196, %c0_197, %c0_198] : memref<1x2x2x2x8x8xf32, #tpu.memory_space<vmem>>, vector<1x2x1x2x8x6xf32>
    %826 = vector.shape_cast %825 : vector<1x2x1x2x8x6xf32> to vector<2x2x8x6xf32>
    %827 = vector.extract_strided_slice %65 {offsets = [0, 1, 0, 0], sizes = [2, 1, 8, 6], strides = [1, 1, 1, 1]} : vector<2x2x8x8xf32> to vector<2x1x8x6xf32>
    %828 = vector.shape_cast %827 : vector<2x1x8x6xf32> to vector<2x8x6xf32>
    %829 = vector.extract_strided_slice %73 {offsets = [0, 1, 0, 0], sizes = [2, 1, 8, 6], strides = [1, 1, 1, 1]} : vector<2x2x8x8xf32> to vector<2x1x8x6xf32>
    %830 = vector.shape_cast %829 : vector<2x1x8x6xf32> to vector<2x8x6xf32>
    %831 = vector.extract_strided_slice %824 {offsets = [0, 0, 0, 0], sizes = [1, 4, 6, 6], strides = [1, 1, 1, 1]} : vector<2x4x8x6xbf16> to vector<1x4x6x6xbf16>
    %832 = vector.shape_cast %831 : vector<1x4x6x6xbf16> to vector<4x6x6xbf16>
    %833 = vector.extract_strided_slice %826 {offsets = [0, 0, 0, 0], sizes = [1, 2, 6, 6], strides = [1, 1, 1, 1]} : vector<2x2x8x6xf32> to vector<1x2x6x6xf32>
    %834 = vector.shape_cast %833 : vector<1x2x6x6xf32> to vector<2x6x6xf32>
    %835 = arith.mulf %585, %832 : vector<4x6x6xbf16>
    %836 = arith.extf %835 : vector<4x6x6xbf16> to vector<4x6x6xf32>
    %cst_199 = arith.constant dense<0.000000e+00> : vector<6x6xf32>
    %837 = vector.multi_reduction <add>, %836, %cst_199 [0] : vector<4x6x6xf32> to vector<6x6xf32>
    %838 = vector.extract_strided_slice %830 {offsets = [0, 0, 0], sizes = [1, 6, 6], strides = [1, 1, 1]} : vector<2x8x6xf32> to vector<1x6x6xf32>
    %839 = vector.shape_cast %838 : vector<1x6x6xf32> to vector<6x6xf32>
    %840 = arith.mulf %579, %839 : vector<6x6xf32>
    %841 = arith.mulf %837, %840 : vector<6x6xf32>
    %842 = arith.mulf %591, %834 : vector<2x6x6xf32>
    %cst_200 = arith.constant dense<0.000000e+00> : vector<6x6xf32>
    %843 = vector.multi_reduction <add>, %842, %cst_200 [0] : vector<2x6x6xf32> to vector<6x6xf32>
    %844 = arith.mulf %834, %834 : vector<2x6x6xf32>
    %cst_201 = arith.constant dense<0.000000e+00> : vector<6x6xf32>
    %845 = vector.multi_reduction <add>, %844, %cst_201 [0] : vector<2x6x6xf32> to vector<6x6xf32>
    %cst_202 = arith.constant 1.000000e-16 : f32
    %846 = vector.broadcast %cst_202 : f32 to vector<6x6xf32>
    %847 = arith.maximumf %845, %846 : vector<6x6xf32>
    %848 = arith.mulf %595, %847 : vector<6x6xf32>
    %849 = math.rsqrt %848 : vector<6x6xf32>
    %850 = arith.mulf %843, %849 : vector<6x6xf32>
    %cst_203 = arith.constant 0.000000e+00 : f32
    %cst_204 = arith.constant 1.000000e+00 : f32
    %851 = vector.broadcast %cst_203 : f32 to vector<6x6xf32>
    %852 = arith.maximumf %851, %850 : vector<6x6xf32>
    %853 = vector.broadcast %cst_204 : f32 to vector<6x6xf32>
    %854 = arith.minimumf %853, %852 : vector<6x6xf32>
    %cst_205 = arith.constant 1.000000e+00 : f32
    %855 = vector.broadcast %cst_205 : f32 to vector<6x6xf32>
    %856 = arith.subf %854, %855 : vector<6x6xf32>
    %cst_206 = arith.constant 1.42857146 : f32
    %857 = vector.broadcast %cst_206 : f32 to vector<6x6xf32>
    %858 = arith.mulf %856, %857 : vector<6x6xf32>
    %859 = math.exp %858 : vector<6x6xf32>
    %860 = vector.extract_strided_slice %828 {offsets = [0, 0, 0], sizes = [1, 6, 6], strides = [1, 1, 1]} : vector<2x8x6xf32> to vector<1x6x6xf32>
    %861 = vector.shape_cast %860 : vector<1x6x6xf32> to vector<6x6xf32>
    %862 = arith.mulf %859, %861 : vector<6x6xf32>
    %cst_207 = arith.constant 1.000000e+01 : f32
    %863 = vector.broadcast %cst_207 : f32 to vector<6x6xf32>
    %864 = arith.mulf %862, %863 : vector<6x6xf32>
    %865 = math.exp %864 : vector<6x6xf32>
    %866 = arith.addf %815, %865 : vector<6x6xf32>
    %867 = arith.mulf %865, %841 : vector<6x6xf32>
    %868 = arith.addf %817, %867 : vector<6x6xf32>
    %cst_208 = arith.constant 1.000000e+01 : f32
    %869 = vector.broadcast %cst_208 : f32 to vector<6x6xf32>
    %870 = arith.mulf %841, %869 : vector<6x6xf32>
    %871 = math.exp %870 : vector<6x6xf32>
    %872 = arith.addf %821, %871 : vector<6x6xf32>
    %873 = arith.addf %822, %862 : vector<6x6xf32>
    %874 = vector.extract_strided_slice %824 {offsets = [1, 0, 0, 0], sizes = [1, 4, 6, 6], strides = [1, 1, 1, 1]} : vector<2x4x8x6xbf16> to vector<1x4x6x6xbf16>
    %875 = vector.shape_cast %874 : vector<1x4x6x6xbf16> to vector<4x6x6xbf16>
    %876 = vector.extract_strided_slice %826 {offsets = [1, 0, 0, 0], sizes = [1, 2, 6, 6], strides = [1, 1, 1, 1]} : vector<2x2x8x6xf32> to vector<1x2x6x6xf32>
    %877 = vector.shape_cast %876 : vector<1x2x6x6xf32> to vector<2x6x6xf32>
    %878 = arith.mulf %585, %875 : vector<4x6x6xbf16>
    %879 = arith.extf %878 : vector<4x6x6xbf16> to vector<4x6x6xf32>
    %cst_209 = arith.constant dense<0.000000e+00> : vector<6x6xf32>
    %880 = vector.multi_reduction <add>, %879, %cst_209 [0] : vector<4x6x6xf32> to vector<6x6xf32>
    %881 = vector.extract_strided_slice %830 {offsets = [1, 0, 0], sizes = [1, 6, 6], strides = [1, 1, 1]} : vector<2x8x6xf32> to vector<1x6x6xf32>
    %882 = vector.shape_cast %881 : vector<1x6x6xf32> to vector<6x6xf32>
    %883 = arith.mulf %579, %882 : vector<6x6xf32>
    %884 = arith.mulf %880, %883 : vector<6x6xf32>
    %885 = arith.mulf %591, %877 : vector<2x6x6xf32>
    %cst_210 = arith.constant dense<0.000000e+00> : vector<6x6xf32>
    %886 = vector.multi_reduction <add>, %885, %cst_210 [0] : vector<2x6x6xf32> to vector<6x6xf32>
    %887 = arith.mulf %877, %877 : vector<2x6x6xf32>
    %cst_211 = arith.constant dense<0.000000e+00> : vector<6x6xf32>
    %888 = vector.multi_reduction <add>, %887, %cst_211 [0] : vector<2x6x6xf32> to vector<6x6xf32>
    %cst_212 = arith.constant 1.000000e-16 : f32
    %889 = vector.broadcast %cst_212 : f32 to vector<6x6xf32>
    %890 = arith.maximumf %888, %889 : vector<6x6xf32>
    %891 = arith.mulf %595, %890 : vector<6x6xf32>
    %892 = math.rsqrt %891 : vector<6x6xf32>
    %893 = arith.mulf %886, %892 : vector<6x6xf32>
    %cst_213 = arith.constant 0.000000e+00 : f32
    %cst_214 = arith.constant 1.000000e+00 : f32
    %894 = vector.broadcast %cst_213 : f32 to vector<6x6xf32>
    %895 = arith.maximumf %894, %893 : vector<6x6xf32>
    %896 = vector.broadcast %cst_214 : f32 to vector<6x6xf32>
    %897 = arith.minimumf %896, %895 : vector<6x6xf32>
    %cst_215 = arith.constant 1.000000e+00 : f32
    %898 = vector.broadcast %cst_215 : f32 to vector<6x6xf32>
    %899 = arith.subf %897, %898 : vector<6x6xf32>
    %cst_216 = arith.constant 1.42857146 : f32
    %900 = vector.broadcast %cst_216 : f32 to vector<6x6xf32>
    %901 = arith.mulf %899, %900 : vector<6x6xf32>
    %902 = math.exp %901 : vector<6x6xf32>
    %903 = vector.extract_strided_slice %828 {offsets = [1, 0, 0], sizes = [1, 6, 6], strides = [1, 1, 1]} : vector<2x8x6xf32> to vector<1x6x6xf32>
    %904 = vector.shape_cast %903 : vector<1x6x6xf32> to vector<6x6xf32>
    %905 = arith.mulf %902, %904 : vector<6x6xf32>
    %cst_217 = arith.constant 1.000000e+01 : f32
    %906 = vector.broadcast %cst_217 : f32 to vector<6x6xf32>
    %907 = arith.mulf %905, %906 : vector<6x6xf32>
    %908 = math.exp %907 : vector<6x6xf32>
    %909 = arith.addf %866, %908 : vector<6x6xf32>
    %910 = arith.mulf %908, %884 : vector<6x6xf32>
    %911 = arith.addf %868, %910 : vector<6x6xf32>
    %cst_218 = arith.constant 1.000000e+01 : f32
    %912 = vector.broadcast %cst_218 : f32 to vector<6x6xf32>
    %913 = arith.mulf %884, %912 : vector<6x6xf32>
    %914 = math.exp %913 : vector<6x6xf32>
    %915 = arith.addf %872, %914 : vector<6x6xf32>
    %916 = arith.addf %873, %905 : vector<6x6xf32>
    %917 = vector.extract_strided_slice %824 {offsets = [0, 0, 1, 0], sizes = [1, 4, 6, 6], strides = [1, 1, 1, 1]} : vector<2x4x8x6xbf16> to vector<1x4x6x6xbf16>
    %918 = vector.shape_cast %917 : vector<1x4x6x6xbf16> to vector<4x6x6xbf16>
    %919 = vector.extract_strided_slice %826 {offsets = [0, 0, 1, 0], sizes = [1, 2, 6, 6], strides = [1, 1, 1, 1]} : vector<2x2x8x6xf32> to vector<1x2x6x6xf32>
    %920 = vector.shape_cast %919 : vector<1x2x6x6xf32> to vector<2x6x6xf32>
    %921 = arith.mulf %585, %918 : vector<4x6x6xbf16>
    %922 = arith.extf %921 : vector<4x6x6xbf16> to vector<4x6x6xf32>
    %cst_219 = arith.constant dense<0.000000e+00> : vector<6x6xf32>
    %923 = vector.multi_reduction <add>, %922, %cst_219 [0] : vector<4x6x6xf32> to vector<6x6xf32>
    %924 = vector.extract_strided_slice %830 {offsets = [0, 1, 0], sizes = [1, 6, 6], strides = [1, 1, 1]} : vector<2x8x6xf32> to vector<1x6x6xf32>
    %925 = vector.shape_cast %924 : vector<1x6x6xf32> to vector<6x6xf32>
    %926 = arith.mulf %579, %925 : vector<6x6xf32>
    %927 = arith.mulf %923, %926 : vector<6x6xf32>
    %928 = arith.mulf %591, %920 : vector<2x6x6xf32>
    %cst_220 = arith.constant dense<0.000000e+00> : vector<6x6xf32>
    %929 = vector.multi_reduction <add>, %928, %cst_220 [0] : vector<2x6x6xf32> to vector<6x6xf32>
    %930 = arith.mulf %920, %920 : vector<2x6x6xf32>
    %cst_221 = arith.constant dense<0.000000e+00> : vector<6x6xf32>
    %931 = vector.multi_reduction <add>, %930, %cst_221 [0] : vector<2x6x6xf32> to vector<6x6xf32>
    %cst_222 = arith.constant 1.000000e-16 : f32
    %932 = vector.broadcast %cst_222 : f32 to vector<6x6xf32>
    %933 = arith.maximumf %931, %932 : vector<6x6xf32>
    %934 = arith.mulf %595, %933 : vector<6x6xf32>
    %935 = math.rsqrt %934 : vector<6x6xf32>
    %936 = arith.mulf %929, %935 : vector<6x6xf32>
    %cst_223 = arith.constant 0.000000e+00 : f32
    %cst_224 = arith.constant 1.000000e+00 : f32
    %937 = vector.broadcast %cst_223 : f32 to vector<6x6xf32>
    %938 = arith.maximumf %937, %936 : vector<6x6xf32>
    %939 = vector.broadcast %cst_224 : f32 to vector<6x6xf32>
    %940 = arith.minimumf %939, %938 : vector<6x6xf32>
    %cst_225 = arith.constant 1.000000e+00 : f32
    %941 = vector.broadcast %cst_225 : f32 to vector<6x6xf32>
    %942 = arith.subf %940, %941 : vector<6x6xf32>
    %cst_226 = arith.constant 1.42857146 : f32
    %943 = vector.broadcast %cst_226 : f32 to vector<6x6xf32>
    %944 = arith.mulf %942, %943 : vector<6x6xf32>
    %945 = math.exp %944 : vector<6x6xf32>
    %946 = vector.extract_strided_slice %828 {offsets = [0, 1, 0], sizes = [1, 6, 6], strides = [1, 1, 1]} : vector<2x8x6xf32> to vector<1x6x6xf32>
    %947 = vector.shape_cast %946 : vector<1x6x6xf32> to vector<6x6xf32>
    %948 = arith.mulf %945, %947 : vector<6x6xf32>
    %cst_227 = arith.constant 1.000000e+01 : f32
    %949 = vector.broadcast %cst_227 : f32 to vector<6x6xf32>
    %950 = arith.mulf %948, %949 : vector<6x6xf32>
    %951 = math.exp %950 : vector<6x6xf32>
    %952 = arith.addf %909, %951 : vector<6x6xf32>
    %953 = arith.mulf %951, %927 : vector<6x6xf32>
    %954 = arith.addf %911, %953 : vector<6x6xf32>
    %cst_228 = arith.constant 1.000000e+01 : f32
    %955 = vector.broadcast %cst_228 : f32 to vector<6x6xf32>
    %956 = arith.mulf %927, %955 : vector<6x6xf32>
    %957 = math.exp %956 : vector<6x6xf32>
    %958 = arith.addf %915, %957 : vector<6x6xf32>
    %959 = arith.addf %916, %948 : vector<6x6xf32>
    %960 = vector.extract_strided_slice %824 {offsets = [1, 0, 1, 0], sizes = [1, 4, 6, 6], strides = [1, 1, 1, 1]} : vector<2x4x8x6xbf16> to vector<1x4x6x6xbf16>
    %961 = vector.shape_cast %960 : vector<1x4x6x6xbf16> to vector<4x6x6xbf16>
    %962 = vector.extract_strided_slice %826 {offsets = [1, 0, 1, 0], sizes = [1, 2, 6, 6], strides = [1, 1, 1, 1]} : vector<2x2x8x6xf32> to vector<1x2x6x6xf32>
    %963 = vector.shape_cast %962 : vector<1x2x6x6xf32> to vector<2x6x6xf32>
    %964 = arith.mulf %585, %961 : vector<4x6x6xbf16>
    %965 = arith.extf %964 : vector<4x6x6xbf16> to vector<4x6x6xf32>
    %cst_229 = arith.constant dense<0.000000e+00> : vector<6x6xf32>
    %966 = vector.multi_reduction <add>, %965, %cst_229 [0] : vector<4x6x6xf32> to vector<6x6xf32>
    %967 = vector.extract_strided_slice %830 {offsets = [1, 1, 0], sizes = [1, 6, 6], strides = [1, 1, 1]} : vector<2x8x6xf32> to vector<1x6x6xf32>
    %968 = vector.shape_cast %967 : vector<1x6x6xf32> to vector<6x6xf32>
    %969 = arith.mulf %579, %968 : vector<6x6xf32>
    %970 = arith.mulf %966, %969 : vector<6x6xf32>
    %971 = arith.mulf %591, %963 : vector<2x6x6xf32>
    %cst_230 = arith.constant dense<0.000000e+00> : vector<6x6xf32>
    %972 = vector.multi_reduction <add>, %971, %cst_230 [0] : vector<2x6x6xf32> to vector<6x6xf32>
    %973 = arith.mulf %963, %963 : vector<2x6x6xf32>
    %cst_231 = arith.constant dense<0.000000e+00> : vector<6x6xf32>
    %974 = vector.multi_reduction <add>, %973, %cst_231 [0] : vector<2x6x6xf32> to vector<6x6xf32>
    %cst_232 = arith.constant 1.000000e-16 : f32
    %975 = vector.broadcast %cst_232 : f32 to vector<6x6xf32>
    %976 = arith.maximumf %974, %975 : vector<6x6xf32>
    %977 = arith.mulf %595, %976 : vector<6x6xf32>
    %978 = math.rsqrt %977 : vector<6x6xf32>
    %979 = arith.mulf %972, %978 : vector<6x6xf32>
    %cst_233 = arith.constant 0.000000e+00 : f32
    %cst_234 = arith.constant 1.000000e+00 : f32
    %980 = vector.broadcast %cst_233 : f32 to vector<6x6xf32>
    %981 = arith.maximumf %980, %979 : vector<6x6xf32>
    %982 = vector.broadcast %cst_234 : f32 to vector<6x6xf32>
    %983 = arith.minimumf %982, %981 : vector<6x6xf32>
    %cst_235 = arith.constant 1.000000e+00 : f32
    %984 = vector.broadcast %cst_235 : f32 to vector<6x6xf32>
    %985 = arith.subf %983, %984 : vector<6x6xf32>
    %cst_236 = arith.constant 1.42857146 : f32
    %986 = vector.broadcast %cst_236 : f32 to vector<6x6xf32>
    %987 = arith.mulf %985, %986 : vector<6x6xf32>
    %988 = math.exp %987 : vector<6x6xf32>
    %989 = vector.extract_strided_slice %828 {offsets = [1, 1, 0], sizes = [1, 6, 6], strides = [1, 1, 1]} : vector<2x8x6xf32> to vector<1x6x6xf32>
    %990 = vector.shape_cast %989 : vector<1x6x6xf32> to vector<6x6xf32>
    %991 = arith.mulf %988, %990 : vector<6x6xf32>
    %cst_237 = arith.constant 1.000000e+01 : f32
    %992 = vector.broadcast %cst_237 : f32 to vector<6x6xf32>
    %993 = arith.mulf %991, %992 : vector<6x6xf32>
    %994 = math.exp %993 : vector<6x6xf32>
    %995 = arith.addf %952, %994 : vector<6x6xf32>
    %996 = arith.mulf %994, %970 : vector<6x6xf32>
    %997 = arith.addf %954, %996 : vector<6x6xf32>
    %cst_238 = arith.constant 1.000000e+01 : f32
    %998 = vector.broadcast %cst_238 : f32 to vector<6x6xf32>
    %999 = arith.mulf %970, %998 : vector<6x6xf32>
    %1000 = math.exp %999 : vector<6x6xf32>
    %1001 = arith.addf %958, %1000 : vector<6x6xf32>
    %1002 = arith.addf %959, %991 : vector<6x6xf32>
    %1003 = vector.extract_strided_slice %824 {offsets = [0, 0, 2, 0], sizes = [1, 4, 6, 6], strides = [1, 1, 1, 1]} : vector<2x4x8x6xbf16> to vector<1x4x6x6xbf16>
    %1004 = vector.shape_cast %1003 : vector<1x4x6x6xbf16> to vector<4x6x6xbf16>
    %1005 = vector.extract_strided_slice %826 {offsets = [0, 0, 2, 0], sizes = [1, 2, 6, 6], strides = [1, 1, 1, 1]} : vector<2x2x8x6xf32> to vector<1x2x6x6xf32>
    %1006 = vector.shape_cast %1005 : vector<1x2x6x6xf32> to vector<2x6x6xf32>
    %1007 = arith.mulf %585, %1004 : vector<4x6x6xbf16>
    %1008 = arith.extf %1007 : vector<4x6x6xbf16> to vector<4x6x6xf32>
    %cst_239 = arith.constant dense<0.000000e+00> : vector<6x6xf32>
    %1009 = vector.multi_reduction <add>, %1008, %cst_239 [0] : vector<4x6x6xf32> to vector<6x6xf32>
    %1010 = vector.extract_strided_slice %830 {offsets = [0, 2, 0], sizes = [1, 6, 6], strides = [1, 1, 1]} : vector<2x8x6xf32> to vector<1x6x6xf32>
    %1011 = vector.shape_cast %1010 : vector<1x6x6xf32> to vector<6x6xf32>
    %1012 = arith.mulf %579, %1011 : vector<6x6xf32>
    %1013 = arith.mulf %1009, %1012 : vector<6x6xf32>
    %1014 = arith.mulf %591, %1006 : vector<2x6x6xf32>
    %cst_240 = arith.constant dense<0.000000e+00> : vector<6x6xf32>
    %1015 = vector.multi_reduction <add>, %1014, %cst_240 [0] : vector<2x6x6xf32> to vector<6x6xf32>
    %1016 = arith.mulf %1006, %1006 : vector<2x6x6xf32>
    %cst_241 = arith.constant dense<0.000000e+00> : vector<6x6xf32>
    %1017 = vector.multi_reduction <add>, %1016, %cst_241 [0] : vector<2x6x6xf32> to vector<6x6xf32>
    %cst_242 = arith.constant 1.000000e-16 : f32
    %1018 = vector.broadcast %cst_242 : f32 to vector<6x6xf32>
    %1019 = arith.maximumf %1017, %1018 : vector<6x6xf32>
    %1020 = arith.mulf %595, %1019 : vector<6x6xf32>
    %1021 = math.rsqrt %1020 : vector<6x6xf32>
    %1022 = arith.mulf %1015, %1021 : vector<6x6xf32>
    %cst_243 = arith.constant 0.000000e+00 : f32
    %cst_244 = arith.constant 1.000000e+00 : f32
    %1023 = vector.broadcast %cst_243 : f32 to vector<6x6xf32>
    %1024 = arith.maximumf %1023, %1022 : vector<6x6xf32>
    %1025 = vector.broadcast %cst_244 : f32 to vector<6x6xf32>
    %1026 = arith.minimumf %1025, %1024 : vector<6x6xf32>
    %cst_245 = arith.constant 1.000000e+00 : f32
    %1027 = vector.broadcast %cst_245 : f32 to vector<6x6xf32>
    %1028 = arith.subf %1026, %1027 : vector<6x6xf32>
    %cst_246 = arith.constant 1.42857146 : f32
    %1029 = vector.broadcast %cst_246 : f32 to vector<6x6xf32>
    %1030 = arith.mulf %1028, %1029 : vector<6x6xf32>
    %1031 = math.exp %1030 : vector<6x6xf32>
    %1032 = vector.extract_strided_slice %828 {offsets = [0, 2, 0], sizes = [1, 6, 6], strides = [1, 1, 1]} : vector<2x8x6xf32> to vector<1x6x6xf32>
    %1033 = vector.shape_cast %1032 : vector<1x6x6xf32> to vector<6x6xf32>
    %1034 = arith.mulf %1031, %1033 : vector<6x6xf32>
    %cst_247 = arith.constant 1.000000e+01 : f32
    %1035 = vector.broadcast %cst_247 : f32 to vector<6x6xf32>
    %1036 = arith.mulf %1034, %1035 : vector<6x6xf32>
    %1037 = math.exp %1036 : vector<6x6xf32>
    %1038 = arith.addf %995, %1037 : vector<6x6xf32>
    %1039 = arith.mulf %1037, %1013 : vector<6x6xf32>
    %1040 = arith.addf %997, %1039 : vector<6x6xf32>
    %cst_248 = arith.constant 1.000000e+01 : f32
    %1041 = vector.broadcast %cst_248 : f32 to vector<6x6xf32>
    %1042 = arith.mulf %1013, %1041 : vector<6x6xf32>
    %1043 = math.exp %1042 : vector<6x6xf32>
    %1044 = arith.addf %1001, %1043 : vector<6x6xf32>
    %1045 = arith.addf %1002, %1034 : vector<6x6xf32>
    %c0_249 = arith.constant 0 : index
    %c0_250 = arith.constant 0 : index
    %c0_251 = arith.constant 0 : index
    %c0_252 = arith.constant 0 : index
    %c0_253 = arith.constant 0 : index
    %c1_254 = arith.constant 1 : index
    %1046 = vector.load %arg3[%c0_249, %c0_250, %c0_251, %c0_252, %c0_253, %c1_254] : memref<1x2x2x4x8x8xbf16, #tpu.memory_space<vmem>>, vector<1x2x1x4x8x6xbf16>
    %1047 = vector.shape_cast %1046 : vector<1x2x1x4x8x6xbf16> to vector<2x4x8x6xbf16>
    %c0_255 = arith.constant 0 : index
    %c0_256 = arith.constant 0 : index
    %c0_257 = arith.constant 0 : index
    %c0_258 = arith.constant 0 : index
    %c0_259 = arith.constant 0 : index
    %c1_260 = arith.constant 1 : index
    %1048 = vector.load %arg2[%c0_255, %c0_256, %c0_257, %c0_258, %c0_259, %c1_260] : memref<1x2x2x2x8x8xf32, #tpu.memory_space<vmem>>, vector<1x2x1x2x8x6xf32>
    %1049 = vector.shape_cast %1048 : vector<1x2x1x2x8x6xf32> to vector<2x2x8x6xf32>
    %1050 = vector.extract_strided_slice %65 {offsets = [0, 0, 0, 1], sizes = [2, 1, 8, 6], strides = [1, 1, 1, 1]} : vector<2x2x8x8xf32> to vector<2x1x8x6xf32>
    %1051 = vector.shape_cast %1050 : vector<2x1x8x6xf32> to vector<2x8x6xf32>
    %1052 = vector.extract_strided_slice %73 {offsets = [0, 0, 0, 1], sizes = [2, 1, 8, 6], strides = [1, 1, 1, 1]} : vector<2x2x8x8xf32> to vector<2x1x8x6xf32>
    %1053 = vector.shape_cast %1052 : vector<2x1x8x6xf32> to vector<2x8x6xf32>
    %1054 = vector.extract_strided_slice %1047 {offsets = [0, 0, 0, 0], sizes = [1, 4, 6, 6], strides = [1, 1, 1, 1]} : vector<2x4x8x6xbf16> to vector<1x4x6x6xbf16>
    %1055 = vector.shape_cast %1054 : vector<1x4x6x6xbf16> to vector<4x6x6xbf16>
    %1056 = vector.extract_strided_slice %1049 {offsets = [0, 0, 0, 0], sizes = [1, 2, 6, 6], strides = [1, 1, 1, 1]} : vector<2x2x8x6xf32> to vector<1x2x6x6xf32>
    %1057 = vector.shape_cast %1056 : vector<1x2x6x6xf32> to vector<2x6x6xf32>
    %1058 = arith.mulf %585, %1055 : vector<4x6x6xbf16>
    %1059 = arith.extf %1058 : vector<4x6x6xbf16> to vector<4x6x6xf32>
    %cst_261 = arith.constant dense<0.000000e+00> : vector<6x6xf32>
    %1060 = vector.multi_reduction <add>, %1059, %cst_261 [0] : vector<4x6x6xf32> to vector<6x6xf32>
    %1061 = vector.extract_strided_slice %1053 {offsets = [0, 0, 0], sizes = [1, 6, 6], strides = [1, 1, 1]} : vector<2x8x6xf32> to vector<1x6x6xf32>
    %1062 = vector.shape_cast %1061 : vector<1x6x6xf32> to vector<6x6xf32>
    %1063 = arith.mulf %579, %1062 : vector<6x6xf32>
    %1064 = arith.mulf %1060, %1063 : vector<6x6xf32>
    %1065 = arith.mulf %591, %1057 : vector<2x6x6xf32>
    %cst_262 = arith.constant dense<0.000000e+00> : vector<6x6xf32>
    %1066 = vector.multi_reduction <add>, %1065, %cst_262 [0] : vector<2x6x6xf32> to vector<6x6xf32>
    %1067 = arith.mulf %1057, %1057 : vector<2x6x6xf32>
    %cst_263 = arith.constant dense<0.000000e+00> : vector<6x6xf32>
    %1068 = vector.multi_reduction <add>, %1067, %cst_263 [0] : vector<2x6x6xf32> to vector<6x6xf32>
    %cst_264 = arith.constant 1.000000e-16 : f32
    %1069 = vector.broadcast %cst_264 : f32 to vector<6x6xf32>
    %1070 = arith.maximumf %1068, %1069 : vector<6x6xf32>
    %1071 = arith.mulf %595, %1070 : vector<6x6xf32>
    %1072 = math.rsqrt %1071 : vector<6x6xf32>
    %1073 = arith.mulf %1066, %1072 : vector<6x6xf32>
    %cst_265 = arith.constant 0.000000e+00 : f32
    %cst_266 = arith.constant 1.000000e+00 : f32
    %1074 = vector.broadcast %cst_265 : f32 to vector<6x6xf32>
    %1075 = arith.maximumf %1074, %1073 : vector<6x6xf32>
    %1076 = vector.broadcast %cst_266 : f32 to vector<6x6xf32>
    %1077 = arith.minimumf %1076, %1075 : vector<6x6xf32>
    %cst_267 = arith.constant 1.000000e+00 : f32
    %1078 = vector.broadcast %cst_267 : f32 to vector<6x6xf32>
    %1079 = arith.subf %1077, %1078 : vector<6x6xf32>
    %cst_268 = arith.constant 1.42857146 : f32
    %1080 = vector.broadcast %cst_268 : f32 to vector<6x6xf32>
    %1081 = arith.mulf %1079, %1080 : vector<6x6xf32>
    %1082 = math.exp %1081 : vector<6x6xf32>
    %1083 = vector.extract_strided_slice %1051 {offsets = [0, 0, 0], sizes = [1, 6, 6], strides = [1, 1, 1]} : vector<2x8x6xf32> to vector<1x6x6xf32>
    %1084 = vector.shape_cast %1083 : vector<1x6x6xf32> to vector<6x6xf32>
    %1085 = arith.mulf %1082, %1084 : vector<6x6xf32>
    %cst_269 = arith.constant 1.000000e+01 : f32
    %1086 = vector.broadcast %cst_269 : f32 to vector<6x6xf32>
    %1087 = arith.mulf %1085, %1086 : vector<6x6xf32>
    %1088 = math.exp %1087 : vector<6x6xf32>
    %1089 = arith.addf %1038, %1088 : vector<6x6xf32>
    %1090 = arith.mulf %1088, %1064 : vector<6x6xf32>
    %1091 = arith.addf %1040, %1090 : vector<6x6xf32>
    %cst_270 = arith.constant 1.000000e+01 : f32
    %1092 = vector.broadcast %cst_270 : f32 to vector<6x6xf32>
    %1093 = arith.mulf %1064, %1092 : vector<6x6xf32>
    %1094 = math.exp %1093 : vector<6x6xf32>
    %1095 = arith.addf %1044, %1094 : vector<6x6xf32>
    %1096 = arith.addf %1045, %1085 : vector<6x6xf32>
    %1097 = vector.extract_strided_slice %1047 {offsets = [1, 0, 0, 0], sizes = [1, 4, 6, 6], strides = [1, 1, 1, 1]} : vector<2x4x8x6xbf16> to vector<1x4x6x6xbf16>
    %1098 = vector.shape_cast %1097 : vector<1x4x6x6xbf16> to vector<4x6x6xbf16>
    %1099 = vector.extract_strided_slice %1049 {offsets = [1, 0, 0, 0], sizes = [1, 2, 6, 6], strides = [1, 1, 1, 1]} : vector<2x2x8x6xf32> to vector<1x2x6x6xf32>
    %1100 = vector.shape_cast %1099 : vector<1x2x6x6xf32> to vector<2x6x6xf32>
    %1101 = arith.mulf %585, %1098 : vector<4x6x6xbf16>
    %1102 = arith.extf %1101 : vector<4x6x6xbf16> to vector<4x6x6xf32>
    %cst_271 = arith.constant dense<0.000000e+00> : vector<6x6xf32>
    %1103 = vector.multi_reduction <add>, %1102, %cst_271 [0] : vector<4x6x6xf32> to vector<6x6xf32>
    %1104 = vector.extract_strided_slice %1053 {offsets = [1, 0, 0], sizes = [1, 6, 6], strides = [1, 1, 1]} : vector<2x8x6xf32> to vector<1x6x6xf32>
    %1105 = vector.shape_cast %1104 : vector<1x6x6xf32> to vector<6x6xf32>
    %1106 = arith.mulf %579, %1105 : vector<6x6xf32>
    %1107 = arith.mulf %1103, %1106 : vector<6x6xf32>
    %1108 = arith.mulf %591, %1100 : vector<2x6x6xf32>
    %cst_272 = arith.constant dense<0.000000e+00> : vector<6x6xf32>
    %1109 = vector.multi_reduction <add>, %1108, %cst_272 [0] : vector<2x6x6xf32> to vector<6x6xf32>
    %1110 = arith.mulf %1100, %1100 : vector<2x6x6xf32>
    %cst_273 = arith.constant dense<0.000000e+00> : vector<6x6xf32>
    %1111 = vector.multi_reduction <add>, %1110, %cst_273 [0] : vector<2x6x6xf32> to vector<6x6xf32>
    %cst_274 = arith.constant 1.000000e-16 : f32
    %1112 = vector.broadcast %cst_274 : f32 to vector<6x6xf32>
    %1113 = arith.maximumf %1111, %1112 : vector<6x6xf32>
    %1114 = arith.mulf %595, %1113 : vector<6x6xf32>
    %1115 = math.rsqrt %1114 : vector<6x6xf32>
    %1116 = arith.mulf %1109, %1115 : vector<6x6xf32>
    %cst_275 = arith.constant 0.000000e+00 : f32
    %cst_276 = arith.constant 1.000000e+00 : f32
    %1117 = vector.broadcast %cst_275 : f32 to vector<6x6xf32>
    %1118 = arith.maximumf %1117, %1116 : vector<6x6xf32>
    %1119 = vector.broadcast %cst_276 : f32 to vector<6x6xf32>
    %1120 = arith.minimumf %1119, %1118 : vector<6x6xf32>
    %cst_277 = arith.constant 1.000000e+00 : f32
    %1121 = vector.broadcast %cst_277 : f32 to vector<6x6xf32>
    %1122 = arith.subf %1120, %1121 : vector<6x6xf32>
    %cst_278 = arith.constant 1.42857146 : f32
    %1123 = vector.broadcast %cst_278 : f32 to vector<6x6xf32>
    %1124 = arith.mulf %1122, %1123 : vector<6x6xf32>
    %1125 = math.exp %1124 : vector<6x6xf32>
    %1126 = vector.extract_strided_slice %1051 {offsets = [1, 0, 0], sizes = [1, 6, 6], strides = [1, 1, 1]} : vector<2x8x6xf32> to vector<1x6x6xf32>
    %1127 = vector.shape_cast %1126 : vector<1x6x6xf32> to vector<6x6xf32>
    %1128 = arith.mulf %1125, %1127 : vector<6x6xf32>
    %cst_279 = arith.constant 1.000000e+01 : f32
    %1129 = vector.broadcast %cst_279 : f32 to vector<6x6xf32>
    %1130 = arith.mulf %1128, %1129 : vector<6x6xf32>
    %1131 = math.exp %1130 : vector<6x6xf32>
    %1132 = arith.addf %1089, %1131 : vector<6x6xf32>
    %1133 = arith.mulf %1131, %1107 : vector<6x6xf32>
    %1134 = arith.addf %1091, %1133 : vector<6x6xf32>
    %cst_280 = arith.constant 1.000000e+01 : f32
    %1135 = vector.broadcast %cst_280 : f32 to vector<6x6xf32>
    %1136 = arith.mulf %1107, %1135 : vector<6x6xf32>
    %1137 = math.exp %1136 : vector<6x6xf32>
    %1138 = arith.addf %1095, %1137 : vector<6x6xf32>
    %1139 = arith.addf %1096, %1128 : vector<6x6xf32>
    %1140 = vector.extract_strided_slice %1047 {offsets = [0, 0, 1, 0], sizes = [1, 4, 6, 6], strides = [1, 1, 1, 1]} : vector<2x4x8x6xbf16> to vector<1x4x6x6xbf16>
    %1141 = vector.shape_cast %1140 : vector<1x4x6x6xbf16> to vector<4x6x6xbf16>
    %1142 = vector.extract_strided_slice %1049 {offsets = [0, 0, 1, 0], sizes = [1, 2, 6, 6], strides = [1, 1, 1, 1]} : vector<2x2x8x6xf32> to vector<1x2x6x6xf32>
    %1143 = vector.shape_cast %1142 : vector<1x2x6x6xf32> to vector<2x6x6xf32>
    %1144 = arith.mulf %585, %1141 : vector<4x6x6xbf16>
    %1145 = arith.extf %1144 : vector<4x6x6xbf16> to vector<4x6x6xf32>
    %cst_281 = arith.constant dense<0.000000e+00> : vector<6x6xf32>
    %1146 = vector.multi_reduction <add>, %1145, %cst_281 [0] : vector<4x6x6xf32> to vector<6x6xf32>
    %1147 = vector.extract_strided_slice %1053 {offsets = [0, 1, 0], sizes = [1, 6, 6], strides = [1, 1, 1]} : vector<2x8x6xf32> to vector<1x6x6xf32>
    %1148 = vector.shape_cast %1147 : vector<1x6x6xf32> to vector<6x6xf32>
    %1149 = arith.mulf %579, %1148 : vector<6x6xf32>
    %1150 = arith.mulf %1146, %1149 : vector<6x6xf32>
    %1151 = arith.mulf %591, %1143 : vector<2x6x6xf32>
    %cst_282 = arith.constant dense<0.000000e+00> : vector<6x6xf32>
    %1152 = vector.multi_reduction <add>, %1151, %cst_282 [0] : vector<2x6x6xf32> to vector<6x6xf32>
    %1153 = arith.mulf %1143, %1143 : vector<2x6x6xf32>
    %cst_283 = arith.constant dense<0.000000e+00> : vector<6x6xf32>
    %1154 = vector.multi_reduction <add>, %1153, %cst_283 [0] : vector<2x6x6xf32> to vector<6x6xf32>
    %cst_284 = arith.constant 1.000000e-16 : f32
    %1155 = vector.broadcast %cst_284 : f32 to vector<6x6xf32>
    %1156 = arith.maximumf %1154, %1155 : vector<6x6xf32>
    %1157 = arith.mulf %595, %1156 : vector<6x6xf32>
    %1158 = math.rsqrt %1157 : vector<6x6xf32>
    %1159 = arith.mulf %1152, %1158 : vector<6x6xf32>
    %cst_285 = arith.constant 0.000000e+00 : f32
    %cst_286 = arith.constant 1.000000e+00 : f32
    %1160 = vector.broadcast %cst_285 : f32 to vector<6x6xf32>
    %1161 = arith.maximumf %1160, %1159 : vector<6x6xf32>
    %1162 = vector.broadcast %cst_286 : f32 to vector<6x6xf32>
    %1163 = arith.minimumf %1162, %1161 : vector<6x6xf32>
    %cst_287 = arith.constant 1.000000e+00 : f32
    %1164 = vector.broadcast %cst_287 : f32 to vector<6x6xf32>
    %1165 = arith.subf %1163, %1164 : vector<6x6xf32>
    %cst_288 = arith.constant 1.42857146 : f32
    %1166 = vector.broadcast %cst_288 : f32 to vector<6x6xf32>
    %1167 = arith.mulf %1165, %1166 : vector<6x6xf32>
    %1168 = math.exp %1167 : vector<6x6xf32>
    %1169 = vector.extract_strided_slice %1051 {offsets = [0, 1, 0], sizes = [1, 6, 6], strides = [1, 1, 1]} : vector<2x8x6xf32> to vector<1x6x6xf32>
    %1170 = vector.shape_cast %1169 : vector<1x6x6xf32> to vector<6x6xf32>
    %1171 = arith.mulf %1168, %1170 : vector<6x6xf32>
    %cst_289 = arith.constant 1.000000e+01 : f32
    %1172 = vector.broadcast %cst_289 : f32 to vector<6x6xf32>
    %1173 = arith.mulf %1171, %1172 : vector<6x6xf32>
    %1174 = math.exp %1173 : vector<6x6xf32>
    %1175 = arith.addf %1132, %1174 : vector<6x6xf32>
    %1176 = arith.mulf %1174, %1150 : vector<6x6xf32>
    %1177 = arith.addf %1134, %1176 : vector<6x6xf32>
    %cst_290 = arith.constant 1.000000e+01 : f32
    %1178 = vector.broadcast %cst_290 : f32 to vector<6x6xf32>
    %1179 = arith.mulf %1150, %1178 : vector<6x6xf32>
    %1180 = math.exp %1179 : vector<6x6xf32>
    %1181 = arith.addf %1138, %1180 : vector<6x6xf32>
    %1182 = arith.addf %1139, %1171 : vector<6x6xf32>
    %1183 = vector.extract_strided_slice %1047 {offsets = [1, 0, 1, 0], sizes = [1, 4, 6, 6], strides = [1, 1, 1, 1]} : vector<2x4x8x6xbf16> to vector<1x4x6x6xbf16>
    %1184 = vector.shape_cast %1183 : vector<1x4x6x6xbf16> to vector<4x6x6xbf16>
    %1185 = vector.extract_strided_slice %1049 {offsets = [1, 0, 1, 0], sizes = [1, 2, 6, 6], strides = [1, 1, 1, 1]} : vector<2x2x8x6xf32> to vector<1x2x6x6xf32>
    %1186 = vector.shape_cast %1185 : vector<1x2x6x6xf32> to vector<2x6x6xf32>
    %1187 = arith.mulf %585, %1184 : vector<4x6x6xbf16>
    %1188 = arith.extf %1187 : vector<4x6x6xbf16> to vector<4x6x6xf32>
    %cst_291 = arith.constant dense<0.000000e+00> : vector<6x6xf32>
    %1189 = vector.multi_reduction <add>, %1188, %cst_291 [0] : vector<4x6x6xf32> to vector<6x6xf32>
    %1190 = vector.extract_strided_slice %1053 {offsets = [1, 1, 0], sizes = [1, 6, 6], strides = [1, 1, 1]} : vector<2x8x6xf32> to vector<1x6x6xf32>
    %1191 = vector.shape_cast %1190 : vector<1x6x6xf32> to vector<6x6xf32>
    %1192 = arith.mulf %579, %1191 : vector<6x6xf32>
    %1193 = arith.mulf %1189, %1192 : vector<6x6xf32>
    %1194 = arith.mulf %591, %1186 : vector<2x6x6xf32>
    %cst_292 = arith.constant dense<0.000000e+00> : vector<6x6xf32>
    %1195 = vector.multi_reduction <add>, %1194, %cst_292 [0] : vector<2x6x6xf32> to vector<6x6xf32>
    %1196 = arith.mulf %1186, %1186 : vector<2x6x6xf32>
    %cst_293 = arith.constant dense<0.000000e+00> : vector<6x6xf32>
    %1197 = vector.multi_reduction <add>, %1196, %cst_293 [0] : vector<2x6x6xf32> to vector<6x6xf32>
    %cst_294 = arith.constant 1.000000e-16 : f32
    %1198 = vector.broadcast %cst_294 : f32 to vector<6x6xf32>
    %1199 = arith.maximumf %1197, %1198 : vector<6x6xf32>
    %1200 = arith.mulf %595, %1199 : vector<6x6xf32>
    %1201 = math.rsqrt %1200 : vector<6x6xf32>
    %1202 = arith.mulf %1195, %1201 : vector<6x6xf32>
    %cst_295 = arith.constant 0.000000e+00 : f32
    %cst_296 = arith.constant 1.000000e+00 : f32
    %1203 = vector.broadcast %cst_295 : f32 to vector<6x6xf32>
    %1204 = arith.maximumf %1203, %1202 : vector<6x6xf32>
    %1205 = vector.broadcast %cst_296 : f32 to vector<6x6xf32>
    %1206 = arith.minimumf %1205, %1204 : vector<6x6xf32>
    %cst_297 = arith.constant 1.000000e+00 : f32
    %1207 = vector.broadcast %cst_297 : f32 to vector<6x6xf32>
    %1208 = arith.subf %1206, %1207 : vector<6x6xf32>
    %cst_298 = arith.constant 1.42857146 : f32
    %1209 = vector.broadcast %cst_298 : f32 to vector<6x6xf32>
    %1210 = arith.mulf %1208, %1209 : vector<6x6xf32>
    %1211 = math.exp %1210 : vector<6x6xf32>
    %1212 = vector.extract_strided_slice %1051 {offsets = [1, 1, 0], sizes = [1, 6, 6], strides = [1, 1, 1]} : vector<2x8x6xf32> to vector<1x6x6xf32>
    %1213 = vector.shape_cast %1212 : vector<1x6x6xf32> to vector<6x6xf32>
    %1214 = arith.mulf %1211, %1213 : vector<6x6xf32>
    %cst_299 = arith.constant 1.000000e+01 : f32
    %1215 = vector.broadcast %cst_299 : f32 to vector<6x6xf32>
    %1216 = arith.mulf %1214, %1215 : vector<6x6xf32>
    %1217 = math.exp %1216 : vector<6x6xf32>
    %1218 = arith.addf %1175, %1217 : vector<6x6xf32>
    %1219 = arith.mulf %1217, %1193 : vector<6x6xf32>
    %1220 = arith.addf %1177, %1219 : vector<6x6xf32>
    %cst_300 = arith.constant 1.000000e+01 : f32
    %1221 = vector.broadcast %cst_300 : f32 to vector<6x6xf32>
    %1222 = arith.mulf %1193, %1221 : vector<6x6xf32>
    %1223 = math.exp %1222 : vector<6x6xf32>
    %1224 = arith.addf %1181, %1223 : vector<6x6xf32>
    %1225 = arith.addf %1182, %1214 : vector<6x6xf32>
    %1226 = vector.extract_strided_slice %1047 {offsets = [0, 0, 2, 0], sizes = [1, 4, 6, 6], strides = [1, 1, 1, 1]} : vector<2x4x8x6xbf16> to vector<1x4x6x6xbf16>
    %1227 = vector.shape_cast %1226 : vector<1x4x6x6xbf16> to vector<4x6x6xbf16>
    %1228 = vector.extract_strided_slice %1049 {offsets = [0, 0, 2, 0], sizes = [1, 2, 6, 6], strides = [1, 1, 1, 1]} : vector<2x2x8x6xf32> to vector<1x2x6x6xf32>
    %1229 = vector.shape_cast %1228 : vector<1x2x6x6xf32> to vector<2x6x6xf32>
    %1230 = arith.mulf %585, %1227 : vector<4x6x6xbf16>
    %1231 = arith.extf %1230 : vector<4x6x6xbf16> to vector<4x6x6xf32>
    %cst_301 = arith.constant dense<0.000000e+00> : vector<6x6xf32>
    %1232 = vector.multi_reduction <add>, %1231, %cst_301 [0] : vector<4x6x6xf32> to vector<6x6xf32>
    %1233 = vector.extract_strided_slice %1053 {offsets = [0, 2, 0], sizes = [1, 6, 6], strides = [1, 1, 1]} : vector<2x8x6xf32> to vector<1x6x6xf32>
    %1234 = vector.shape_cast %1233 : vector<1x6x6xf32> to vector<6x6xf32>
    %1235 = arith.mulf %579, %1234 : vector<6x6xf32>
    %1236 = arith.mulf %1232, %1235 : vector<6x6xf32>
    %1237 = arith.mulf %591, %1229 : vector<2x6x6xf32>
    %cst_302 = arith.constant dense<0.000000e+00> : vector<6x6xf32>
    %1238 = vector.multi_reduction <add>, %1237, %cst_302 [0] : vector<2x6x6xf32> to vector<6x6xf32>
    %1239 = arith.mulf %1229, %1229 : vector<2x6x6xf32>
    %cst_303 = arith.constant dense<0.000000e+00> : vector<6x6xf32>
    %1240 = vector.multi_reduction <add>, %1239, %cst_303 [0] : vector<2x6x6xf32> to vector<6x6xf32>
    %cst_304 = arith.constant 1.000000e-16 : f32
    %1241 = vector.broadcast %cst_304 : f32 to vector<6x6xf32>
    %1242 = arith.maximumf %1240, %1241 : vector<6x6xf32>
    %1243 = arith.mulf %595, %1242 : vector<6x6xf32>
    %1244 = math.rsqrt %1243 : vector<6x6xf32>
    %1245 = arith.mulf %1238, %1244 : vector<6x6xf32>
    %cst_305 = arith.constant 0.000000e+00 : f32
    %cst_306 = arith.constant 1.000000e+00 : f32
    %1246 = vector.broadcast %cst_305 : f32 to vector<6x6xf32>
    %1247 = arith.maximumf %1246, %1245 : vector<6x6xf32>
    %1248 = vector.broadcast %cst_306 : f32 to vector<6x6xf32>
    %1249 = arith.minimumf %1248, %1247 : vector<6x6xf32>
    %cst_307 = arith.constant 1.000000e+00 : f32
    %1250 = vector.broadcast %cst_307 : f32 to vector<6x6xf32>
    %1251 = arith.subf %1249, %1250 : vector<6x6xf32>
    %cst_308 = arith.constant 1.42857146 : f32
    %1252 = vector.broadcast %cst_308 : f32 to vector<6x6xf32>
    %1253 = arith.mulf %1251, %1252 : vector<6x6xf32>
    %1254 = math.exp %1253 : vector<6x6xf32>
    %1255 = vector.extract_strided_slice %1051 {offsets = [0, 2, 0], sizes = [1, 6, 6], strides = [1, 1, 1]} : vector<2x8x6xf32> to vector<1x6x6xf32>
    %1256 = vector.shape_cast %1255 : vector<1x6x6xf32> to vector<6x6xf32>
    %1257 = arith.mulf %1254, %1256 : vector<6x6xf32>
    %cst_309 = arith.constant 1.000000e+01 : f32
    %1258 = vector.broadcast %cst_309 : f32 to vector<6x6xf32>
    %1259 = arith.mulf %1257, %1258 : vector<6x6xf32>
    %1260 = math.exp %1259 : vector<6x6xf32>
    %1261 = arith.addf %1218, %1260 : vector<6x6xf32>
    %1262 = arith.mulf %1260, %1236 : vector<6x6xf32>
    %1263 = arith.addf %1220, %1262 : vector<6x6xf32>
    %cst_310 = arith.constant 1.000000e+01 : f32
    %1264 = vector.broadcast %cst_310 : f32 to vector<6x6xf32>
    %1265 = arith.mulf %1236, %1264 : vector<6x6xf32>
    %1266 = math.exp %1265 : vector<6x6xf32>
    %1267 = arith.addf %1224, %1266 : vector<6x6xf32>
    %1268 = arith.addf %1225, %1257 : vector<6x6xf32>
    %c0_311 = arith.constant 0 : index
    %c0_312 = arith.constant 0 : index
    %c1_313 = arith.constant 1 : index
    %c0_314 = arith.constant 0 : index
    %c0_315 = arith.constant 0 : index
    %c1_316 = arith.constant 1 : index
    %1269 = vector.load %arg3[%c0_311, %c0_312, %c1_313, %c0_314, %c0_315, %c1_316] : memref<1x2x2x4x8x8xbf16, #tpu.memory_space<vmem>>, vector<1x2x1x4x8x6xbf16>
    %1270 = vector.shape_cast %1269 : vector<1x2x1x4x8x6xbf16> to vector<2x4x8x6xbf16>
    %c0_317 = arith.constant 0 : index
    %c0_318 = arith.constant 0 : index
    %c1_319 = arith.constant 1 : index
    %c0_320 = arith.constant 0 : index
    %c0_321 = arith.constant 0 : index
    %c1_322 = arith.constant 1 : index
    %1271 = vector.load %arg2[%c0_317, %c0_318, %c1_319, %c0_320, %c0_321, %c1_322] : memref<1x2x2x2x8x8xf32, #tpu.memory_space<vmem>>, vector<1x2x1x2x8x6xf32>
    %1272 = vector.shape_cast %1271 : vector<1x2x1x2x8x6xf32> to vector<2x2x8x6xf32>
    %1273 = vector.extract_strided_slice %65 {offsets = [0, 1, 0, 1], sizes = [2, 1, 8, 6], strides = [1, 1, 1, 1]} : vector<2x2x8x8xf32> to vector<2x1x8x6xf32>
    %1274 = vector.shape_cast %1273 : vector<2x1x8x6xf32> to vector<2x8x6xf32>
    %1275 = vector.extract_strided_slice %73 {offsets = [0, 1, 0, 1], sizes = [2, 1, 8, 6], strides = [1, 1, 1, 1]} : vector<2x2x8x8xf32> to vector<2x1x8x6xf32>
    %1276 = vector.shape_cast %1275 : vector<2x1x8x6xf32> to vector<2x8x6xf32>
    %1277 = vector.extract_strided_slice %1270 {offsets = [0, 0, 0, 0], sizes = [1, 4, 6, 6], strides = [1, 1, 1, 1]} : vector<2x4x8x6xbf16> to vector<1x4x6x6xbf16>
    %1278 = vector.shape_cast %1277 : vector<1x4x6x6xbf16> to vector<4x6x6xbf16>
    %1279 = vector.extract_strided_slice %1272 {offsets = [0, 0, 0, 0], sizes = [1, 2, 6, 6], strides = [1, 1, 1, 1]} : vector<2x2x8x6xf32> to vector<1x2x6x6xf32>
    %1280 = vector.shape_cast %1279 : vector<1x2x6x6xf32> to vector<2x6x6xf32>
    %1281 = arith.mulf %585, %1278 : vector<4x6x6xbf16>
    %1282 = arith.extf %1281 : vector<4x6x6xbf16> to vector<4x6x6xf32>
    %cst_323 = arith.constant dense<0.000000e+00> : vector<6x6xf32>
    %1283 = vector.multi_reduction <add>, %1282, %cst_323 [0] : vector<4x6x6xf32> to vector<6x6xf32>
    %1284 = vector.extract_strided_slice %1276 {offsets = [0, 0, 0], sizes = [1, 6, 6], strides = [1, 1, 1]} : vector<2x8x6xf32> to vector<1x6x6xf32>
    %1285 = vector.shape_cast %1284 : vector<1x6x6xf32> to vector<6x6xf32>
    %1286 = arith.mulf %579, %1285 : vector<6x6xf32>
    %1287 = arith.mulf %1283, %1286 : vector<6x6xf32>
    %1288 = arith.mulf %591, %1280 : vector<2x6x6xf32>
    %cst_324 = arith.constant dense<0.000000e+00> : vector<6x6xf32>
    %1289 = vector.multi_reduction <add>, %1288, %cst_324 [0] : vector<2x6x6xf32> to vector<6x6xf32>
    %1290 = arith.mulf %1280, %1280 : vector<2x6x6xf32>
    %cst_325 = arith.constant dense<0.000000e+00> : vector<6x6xf32>
    %1291 = vector.multi_reduction <add>, %1290, %cst_325 [0] : vector<2x6x6xf32> to vector<6x6xf32>
    %cst_326 = arith.constant 1.000000e-16 : f32
    %1292 = vector.broadcast %cst_326 : f32 to vector<6x6xf32>
    %1293 = arith.maximumf %1291, %1292 : vector<6x6xf32>
    %1294 = arith.mulf %595, %1293 : vector<6x6xf32>
    %1295 = math.rsqrt %1294 : vector<6x6xf32>
    %1296 = arith.mulf %1289, %1295 : vector<6x6xf32>
    %cst_327 = arith.constant 0.000000e+00 : f32
    %cst_328 = arith.constant 1.000000e+00 : f32
    %1297 = vector.broadcast %cst_327 : f32 to vector<6x6xf32>
    %1298 = arith.maximumf %1297, %1296 : vector<6x6xf32>
    %1299 = vector.broadcast %cst_328 : f32 to vector<6x6xf32>
    %1300 = arith.minimumf %1299, %1298 : vector<6x6xf32>
    %cst_329 = arith.constant 1.000000e+00 : f32
    %1301 = vector.broadcast %cst_329 : f32 to vector<6x6xf32>
    %1302 = arith.subf %1300, %1301 : vector<6x6xf32>
    %cst_330 = arith.constant 1.42857146 : f32
    %1303 = vector.broadcast %cst_330 : f32 to vector<6x6xf32>
    %1304 = arith.mulf %1302, %1303 : vector<6x6xf32>
    %1305 = math.exp %1304 : vector<6x6xf32>
    %1306 = vector.extract_strided_slice %1274 {offsets = [0, 0, 0], sizes = [1, 6, 6], strides = [1, 1, 1]} : vector<2x8x6xf32> to vector<1x6x6xf32>
    %1307 = vector.shape_cast %1306 : vector<1x6x6xf32> to vector<6x6xf32>
    %1308 = arith.mulf %1305, %1307 : vector<6x6xf32>
    %cst_331 = arith.constant 1.000000e+01 : f32
    %1309 = vector.broadcast %cst_331 : f32 to vector<6x6xf32>
    %1310 = arith.mulf %1308, %1309 : vector<6x6xf32>
    %1311 = math.exp %1310 : vector<6x6xf32>
    %1312 = arith.addf %1261, %1311 : vector<6x6xf32>
    %1313 = arith.mulf %1311, %1287 : vector<6x6xf32>
    %1314 = arith.addf %1263, %1313 : vector<6x6xf32>
    %cst_332 = arith.constant 1.000000e+01 : f32
    %1315 = vector.broadcast %cst_332 : f32 to vector<6x6xf32>
    %1316 = arith.mulf %1287, %1315 : vector<6x6xf32>
    %1317 = math.exp %1316 : vector<6x6xf32>
    %1318 = arith.addf %1267, %1317 : vector<6x6xf32>
    %1319 = arith.addf %1268, %1308 : vector<6x6xf32>
    %1320 = vector.extract_strided_slice %1270 {offsets = [1, 0, 0, 0], sizes = [1, 4, 6, 6], strides = [1, 1, 1, 1]} : vector<2x4x8x6xbf16> to vector<1x4x6x6xbf16>
    %1321 = vector.shape_cast %1320 : vector<1x4x6x6xbf16> to vector<4x6x6xbf16>
    %1322 = vector.extract_strided_slice %1272 {offsets = [1, 0, 0, 0], sizes = [1, 2, 6, 6], strides = [1, 1, 1, 1]} : vector<2x2x8x6xf32> to vector<1x2x6x6xf32>
    %1323 = vector.shape_cast %1322 : vector<1x2x6x6xf32> to vector<2x6x6xf32>
    %1324 = arith.mulf %585, %1321 : vector<4x6x6xbf16>
    %1325 = arith.extf %1324 : vector<4x6x6xbf16> to vector<4x6x6xf32>
    %cst_333 = arith.constant dense<0.000000e+00> : vector<6x6xf32>
    %1326 = vector.multi_reduction <add>, %1325, %cst_333 [0] : vector<4x6x6xf32> to vector<6x6xf32>
    %1327 = vector.extract_strided_slice %1276 {offsets = [1, 0, 0], sizes = [1, 6, 6], strides = [1, 1, 1]} : vector<2x8x6xf32> to vector<1x6x6xf32>
    %1328 = vector.shape_cast %1327 : vector<1x6x6xf32> to vector<6x6xf32>
    %1329 = arith.mulf %579, %1328 : vector<6x6xf32>
    %1330 = arith.mulf %1326, %1329 : vector<6x6xf32>
    %1331 = arith.mulf %591, %1323 : vector<2x6x6xf32>
    %cst_334 = arith.constant dense<0.000000e+00> : vector<6x6xf32>
    %1332 = vector.multi_reduction <add>, %1331, %cst_334 [0] : vector<2x6x6xf32> to vector<6x6xf32>
    %1333 = arith.mulf %1323, %1323 : vector<2x6x6xf32>
    %cst_335 = arith.constant dense<0.000000e+00> : vector<6x6xf32>
    %1334 = vector.multi_reduction <add>, %1333, %cst_335 [0] : vector<2x6x6xf32> to vector<6x6xf32>
    %cst_336 = arith.constant 1.000000e-16 : f32
    %1335 = vector.broadcast %cst_336 : f32 to vector<6x6xf32>
    %1336 = arith.maximumf %1334, %1335 : vector<6x6xf32>
    %1337 = arith.mulf %595, %1336 : vector<6x6xf32>
    %1338 = math.rsqrt %1337 : vector<6x6xf32>
    %1339 = arith.mulf %1332, %1338 : vector<6x6xf32>
    %cst_337 = arith.constant 0.000000e+00 : f32
    %cst_338 = arith.constant 1.000000e+00 : f32
    %1340 = vector.broadcast %cst_337 : f32 to vector<6x6xf32>
    %1341 = arith.maximumf %1340, %1339 : vector<6x6xf32>
    %1342 = vector.broadcast %cst_338 : f32 to vector<6x6xf32>
    %1343 = arith.minimumf %1342, %1341 : vector<6x6xf32>
    %cst_339 = arith.constant 1.000000e+00 : f32
    %1344 = vector.broadcast %cst_339 : f32 to vector<6x6xf32>
    %1345 = arith.subf %1343, %1344 : vector<6x6xf32>
    %cst_340 = arith.constant 1.42857146 : f32
    %1346 = vector.broadcast %cst_340 : f32 to vector<6x6xf32>
    %1347 = arith.mulf %1345, %1346 : vector<6x6xf32>
    %1348 = math.exp %1347 : vector<6x6xf32>
    %1349 = vector.extract_strided_slice %1274 {offsets = [1, 0, 0], sizes = [1, 6, 6], strides = [1, 1, 1]} : vector<2x8x6xf32> to vector<1x6x6xf32>
    %1350 = vector.shape_cast %1349 : vector<1x6x6xf32> to vector<6x6xf32>
    %1351 = arith.mulf %1348, %1350 : vector<6x6xf32>
    %cst_341 = arith.constant 1.000000e+01 : f32
    %1352 = vector.broadcast %cst_341 : f32 to vector<6x6xf32>
    %1353 = arith.mulf %1351, %1352 : vector<6x6xf32>
    %1354 = math.exp %1353 : vector<6x6xf32>
    %1355 = arith.addf %1312, %1354 : vector<6x6xf32>
    %1356 = arith.mulf %1354, %1330 : vector<6x6xf32>
    %1357 = arith.addf %1314, %1356 : vector<6x6xf32>
    %cst_342 = arith.constant 1.000000e+01 : f32
    %1358 = vector.broadcast %cst_342 : f32 to vector<6x6xf32>
    %1359 = arith.mulf %1330, %1358 : vector<6x6xf32>
    %1360 = math.exp %1359 : vector<6x6xf32>
    %1361 = arith.addf %1318, %1360 : vector<6x6xf32>
    %1362 = arith.addf %1319, %1351 : vector<6x6xf32>
    %1363 = vector.extract_strided_slice %1270 {offsets = [0, 0, 1, 0], sizes = [1, 4, 6, 6], strides = [1, 1, 1, 1]} : vector<2x4x8x6xbf16> to vector<1x4x6x6xbf16>
    %1364 = vector.shape_cast %1363 : vector<1x4x6x6xbf16> to vector<4x6x6xbf16>
    %1365 = vector.extract_strided_slice %1272 {offsets = [0, 0, 1, 0], sizes = [1, 2, 6, 6], strides = [1, 1, 1, 1]} : vector<2x2x8x6xf32> to vector<1x2x6x6xf32>
    %1366 = vector.shape_cast %1365 : vector<1x2x6x6xf32> to vector<2x6x6xf32>
    %1367 = arith.mulf %585, %1364 : vector<4x6x6xbf16>
    %1368 = arith.extf %1367 : vector<4x6x6xbf16> to vector<4x6x6xf32>
    %cst_343 = arith.constant dense<0.000000e+00> : vector<6x6xf32>
    %1369 = vector.multi_reduction <add>, %1368, %cst_343 [0] : vector<4x6x6xf32> to vector<6x6xf32>
    %1370 = vector.extract_strided_slice %1276 {offsets = [0, 1, 0], sizes = [1, 6, 6], strides = [1, 1, 1]} : vector<2x8x6xf32> to vector<1x6x6xf32>
    %1371 = vector.shape_cast %1370 : vector<1x6x6xf32> to vector<6x6xf32>
    %1372 = arith.mulf %579, %1371 : vector<6x6xf32>
    %1373 = arith.mulf %1369, %1372 : vector<6x6xf32>
    %1374 = arith.mulf %591, %1366 : vector<2x6x6xf32>
    %cst_344 = arith.constant dense<0.000000e+00> : vector<6x6xf32>
    %1375 = vector.multi_reduction <add>, %1374, %cst_344 [0] : vector<2x6x6xf32> to vector<6x6xf32>
    %1376 = arith.mulf %1366, %1366 : vector<2x6x6xf32>
    %cst_345 = arith.constant dense<0.000000e+00> : vector<6x6xf32>
    %1377 = vector.multi_reduction <add>, %1376, %cst_345 [0] : vector<2x6x6xf32> to vector<6x6xf32>
    %cst_346 = arith.constant 1.000000e-16 : f32
    %1378 = vector.broadcast %cst_346 : f32 to vector<6x6xf32>
    %1379 = arith.maximumf %1377, %1378 : vector<6x6xf32>
    %1380 = arith.mulf %595, %1379 : vector<6x6xf32>
    %1381 = math.rsqrt %1380 : vector<6x6xf32>
    %1382 = arith.mulf %1375, %1381 : vector<6x6xf32>
    %cst_347 = arith.constant 0.000000e+00 : f32
    %cst_348 = arith.constant 1.000000e+00 : f32
    %1383 = vector.broadcast %cst_347 : f32 to vector<6x6xf32>
    %1384 = arith.maximumf %1383, %1382 : vector<6x6xf32>
    %1385 = vector.broadcast %cst_348 : f32 to vector<6x6xf32>
    %1386 = arith.minimumf %1385, %1384 : vector<6x6xf32>
    %cst_349 = arith.constant 1.000000e+00 : f32
    %1387 = vector.broadcast %cst_349 : f32 to vector<6x6xf32>
    %1388 = arith.subf %1386, %1387 : vector<6x6xf32>
    %cst_350 = arith.constant 1.42857146 : f32
    %1389 = vector.broadcast %cst_350 : f32 to vector<6x6xf32>
    %1390 = arith.mulf %1388, %1389 : vector<6x6xf32>
    %1391 = math.exp %1390 : vector<6x6xf32>
    %1392 = vector.extract_strided_slice %1274 {offsets = [0, 1, 0], sizes = [1, 6, 6], strides = [1, 1, 1]} : vector<2x8x6xf32> to vector<1x6x6xf32>
    %1393 = vector.shape_cast %1392 : vector<1x6x6xf32> to vector<6x6xf32>
    %1394 = arith.mulf %1391, %1393 : vector<6x6xf32>
    %cst_351 = arith.constant 1.000000e+01 : f32
    %1395 = vector.broadcast %cst_351 : f32 to vector<6x6xf32>
    %1396 = arith.mulf %1394, %1395 : vector<6x6xf32>
    %1397 = math.exp %1396 : vector<6x6xf32>
    %1398 = arith.addf %1355, %1397 : vector<6x6xf32>
    %1399 = arith.mulf %1397, %1373 : vector<6x6xf32>
    %1400 = arith.addf %1357, %1399 : vector<6x6xf32>
    %cst_352 = arith.constant 1.000000e+01 : f32
    %1401 = vector.broadcast %cst_352 : f32 to vector<6x6xf32>
    %1402 = arith.mulf %1373, %1401 : vector<6x6xf32>
    %1403 = math.exp %1402 : vector<6x6xf32>
    %1404 = arith.addf %1361, %1403 : vector<6x6xf32>
    %1405 = arith.addf %1362, %1394 : vector<6x6xf32>
    %1406 = vector.extract_strided_slice %1270 {offsets = [1, 0, 1, 0], sizes = [1, 4, 6, 6], strides = [1, 1, 1, 1]} : vector<2x4x8x6xbf16> to vector<1x4x6x6xbf16>
    %1407 = vector.shape_cast %1406 : vector<1x4x6x6xbf16> to vector<4x6x6xbf16>
    %1408 = vector.extract_strided_slice %1272 {offsets = [1, 0, 1, 0], sizes = [1, 2, 6, 6], strides = [1, 1, 1, 1]} : vector<2x2x8x6xf32> to vector<1x2x6x6xf32>
    %1409 = vector.shape_cast %1408 : vector<1x2x6x6xf32> to vector<2x6x6xf32>
    %1410 = arith.mulf %585, %1407 : vector<4x6x6xbf16>
    %1411 = arith.extf %1410 : vector<4x6x6xbf16> to vector<4x6x6xf32>
    %cst_353 = arith.constant dense<0.000000e+00> : vector<6x6xf32>
    %1412 = vector.multi_reduction <add>, %1411, %cst_353 [0] : vector<4x6x6xf32> to vector<6x6xf32>
    %1413 = vector.extract_strided_slice %1276 {offsets = [1, 1, 0], sizes = [1, 6, 6], strides = [1, 1, 1]} : vector<2x8x6xf32> to vector<1x6x6xf32>
    %1414 = vector.shape_cast %1413 : vector<1x6x6xf32> to vector<6x6xf32>
    %1415 = arith.mulf %579, %1414 : vector<6x6xf32>
    %1416 = arith.mulf %1412, %1415 : vector<6x6xf32>
    %1417 = arith.mulf %591, %1409 : vector<2x6x6xf32>
    %cst_354 = arith.constant dense<0.000000e+00> : vector<6x6xf32>
    %1418 = vector.multi_reduction <add>, %1417, %cst_354 [0] : vector<2x6x6xf32> to vector<6x6xf32>
    %1419 = arith.mulf %1409, %1409 : vector<2x6x6xf32>
    %cst_355 = arith.constant dense<0.000000e+00> : vector<6x6xf32>
    %1420 = vector.multi_reduction <add>, %1419, %cst_355 [0] : vector<2x6x6xf32> to vector<6x6xf32>
    %cst_356 = arith.constant 1.000000e-16 : f32
    %1421 = vector.broadcast %cst_356 : f32 to vector<6x6xf32>
    %1422 = arith.maximumf %1420, %1421 : vector<6x6xf32>
    %1423 = arith.mulf %595, %1422 : vector<6x6xf32>
    %1424 = math.rsqrt %1423 : vector<6x6xf32>
    %1425 = arith.mulf %1418, %1424 : vector<6x6xf32>
    %cst_357 = arith.constant 0.000000e+00 : f32
    %cst_358 = arith.constant 1.000000e+00 : f32
    %1426 = vector.broadcast %cst_357 : f32 to vector<6x6xf32>
    %1427 = arith.maximumf %1426, %1425 : vector<6x6xf32>
    %1428 = vector.broadcast %cst_358 : f32 to vector<6x6xf32>
    %1429 = arith.minimumf %1428, %1427 : vector<6x6xf32>
    %cst_359 = arith.constant 1.000000e+00 : f32
    %1430 = vector.broadcast %cst_359 : f32 to vector<6x6xf32>
    %1431 = arith.subf %1429, %1430 : vector<6x6xf32>
    %cst_360 = arith.constant 1.42857146 : f32
    %1432 = vector.broadcast %cst_360 : f32 to vector<6x6xf32>
    %1433 = arith.mulf %1431, %1432 : vector<6x6xf32>
    %1434 = math.exp %1433 : vector<6x6xf32>
    %1435 = vector.extract_strided_slice %1274 {offsets = [1, 1, 0], sizes = [1, 6, 6], strides = [1, 1, 1]} : vector<2x8x6xf32> to vector<1x6x6xf32>
    %1436 = vector.shape_cast %1435 : vector<1x6x6xf32> to vector<6x6xf32>
    %1437 = arith.mulf %1434, %1436 : vector<6x6xf32>
    %cst_361 = arith.constant 1.000000e+01 : f32
    %1438 = vector.broadcast %cst_361 : f32 to vector<6x6xf32>
    %1439 = arith.mulf %1437, %1438 : vector<6x6xf32>
    %1440 = math.exp %1439 : vector<6x6xf32>
    %1441 = arith.addf %1398, %1440 : vector<6x6xf32>
    %1442 = arith.mulf %1440, %1416 : vector<6x6xf32>
    %1443 = arith.addf %1400, %1442 : vector<6x6xf32>
    %cst_362 = arith.constant 1.000000e+01 : f32
    %1444 = vector.broadcast %cst_362 : f32 to vector<6x6xf32>
    %1445 = arith.mulf %1416, %1444 : vector<6x6xf32>
    %1446 = math.exp %1445 : vector<6x6xf32>
    %1447 = arith.addf %1404, %1446 : vector<6x6xf32>
    %1448 = arith.addf %1405, %1437 : vector<6x6xf32>
    %1449 = vector.extract_strided_slice %1270 {offsets = [0, 0, 2, 0], sizes = [1, 4, 6, 6], strides = [1, 1, 1, 1]} : vector<2x4x8x6xbf16> to vector<1x4x6x6xbf16>
    %1450 = vector.shape_cast %1449 : vector<1x4x6x6xbf16> to vector<4x6x6xbf16>
    %1451 = vector.extract_strided_slice %1272 {offsets = [0, 0, 2, 0], sizes = [1, 2, 6, 6], strides = [1, 1, 1, 1]} : vector<2x2x8x6xf32> to vector<1x2x6x6xf32>
    %1452 = vector.shape_cast %1451 : vector<1x2x6x6xf32> to vector<2x6x6xf32>
    %1453 = arith.mulf %585, %1450 : vector<4x6x6xbf16>
    %1454 = arith.extf %1453 : vector<4x6x6xbf16> to vector<4x6x6xf32>
    %cst_363 = arith.constant dense<0.000000e+00> : vector<6x6xf32>
    %1455 = vector.multi_reduction <add>, %1454, %cst_363 [0] : vector<4x6x6xf32> to vector<6x6xf32>
    %1456 = vector.extract_strided_slice %1276 {offsets = [0, 2, 0], sizes = [1, 6, 6], strides = [1, 1, 1]} : vector<2x8x6xf32> to vector<1x6x6xf32>
    %1457 = vector.shape_cast %1456 : vector<1x6x6xf32> to vector<6x6xf32>
    %1458 = arith.mulf %579, %1457 : vector<6x6xf32>
    %1459 = arith.mulf %1455, %1458 : vector<6x6xf32>
    %1460 = arith.mulf %591, %1452 : vector<2x6x6xf32>
    %cst_364 = arith.constant dense<0.000000e+00> : vector<6x6xf32>
    %1461 = vector.multi_reduction <add>, %1460, %cst_364 [0] : vector<2x6x6xf32> to vector<6x6xf32>
    %1462 = arith.mulf %1452, %1452 : vector<2x6x6xf32>
    %cst_365 = arith.constant dense<0.000000e+00> : vector<6x6xf32>
    %1463 = vector.multi_reduction <add>, %1462, %cst_365 [0] : vector<2x6x6xf32> to vector<6x6xf32>
    %cst_366 = arith.constant 1.000000e-16 : f32
    %1464 = vector.broadcast %cst_366 : f32 to vector<6x6xf32>
    %1465 = arith.maximumf %1463, %1464 : vector<6x6xf32>
    %1466 = arith.mulf %595, %1465 : vector<6x6xf32>
    %1467 = math.rsqrt %1466 : vector<6x6xf32>
    %1468 = arith.mulf %1461, %1467 : vector<6x6xf32>
    %cst_367 = arith.constant 0.000000e+00 : f32
    %cst_368 = arith.constant 1.000000e+00 : f32
    %1469 = vector.broadcast %cst_367 : f32 to vector<6x6xf32>
    %1470 = arith.maximumf %1469, %1468 : vector<6x6xf32>
    %1471 = vector.broadcast %cst_368 : f32 to vector<6x6xf32>
    %1472 = arith.minimumf %1471, %1470 : vector<6x6xf32>
    %cst_369 = arith.constant 1.000000e+00 : f32
    %1473 = vector.broadcast %cst_369 : f32 to vector<6x6xf32>
    %1474 = arith.subf %1472, %1473 : vector<6x6xf32>
    %cst_370 = arith.constant 1.42857146 : f32
    %1475 = vector.broadcast %cst_370 : f32 to vector<6x6xf32>
    %1476 = arith.mulf %1474, %1475 : vector<6x6xf32>
    %1477 = math.exp %1476 : vector<6x6xf32>
    %1478 = vector.extract_strided_slice %1274 {offsets = [0, 2, 0], sizes = [1, 6, 6], strides = [1, 1, 1]} : vector<2x8x6xf32> to vector<1x6x6xf32>
    %1479 = vector.shape_cast %1478 : vector<1x6x6xf32> to vector<6x6xf32>
    %1480 = arith.mulf %1477, %1479 : vector<6x6xf32>
    %cst_371 = arith.constant 1.000000e+01 : f32
    %1481 = vector.broadcast %cst_371 : f32 to vector<6x6xf32>
    %1482 = arith.mulf %1480, %1481 : vector<6x6xf32>
    %1483 = math.exp %1482 : vector<6x6xf32>
    %1484 = arith.addf %1441, %1483 : vector<6x6xf32>
    %1485 = arith.mulf %1483, %1459 : vector<6x6xf32>
    %1486 = arith.addf %1443, %1485 : vector<6x6xf32>
    %cst_372 = arith.constant 1.000000e+01 : f32
    %1487 = vector.broadcast %cst_372 : f32 to vector<6x6xf32>
    %1488 = arith.mulf %1459, %1487 : vector<6x6xf32>
    %1489 = math.exp %1488 : vector<6x6xf32>
    %1490 = arith.addf %1447, %1489 : vector<6x6xf32>
    %1491 = arith.addf %1448, %1480 : vector<6x6xf32>
    %c0_373 = arith.constant 0 : index
    %c0_374 = arith.constant 0 : index
    %c0_375 = arith.constant 0 : index
    %c0_376 = arith.constant 0 : index
    %c0_377 = arith.constant 0 : index
    %c2_378 = arith.constant 2 : index
    %1492 = vector.load %arg3[%c0_373, %c0_374, %c0_375, %c0_376, %c0_377, %c2_378] : memref<1x2x2x4x8x8xbf16, #tpu.memory_space<vmem>>, vector<1x2x1x4x8x6xbf16>
    %1493 = vector.shape_cast %1492 : vector<1x2x1x4x8x6xbf16> to vector<2x4x8x6xbf16>
    %c0_379 = arith.constant 0 : index
    %c0_380 = arith.constant 0 : index
    %c0_381 = arith.constant 0 : index
    %c0_382 = arith.constant 0 : index
    %c0_383 = arith.constant 0 : index
    %c2_384 = arith.constant 2 : index
    %1494 = vector.load %arg2[%c0_379, %c0_380, %c0_381, %c0_382, %c0_383, %c2_384] : memref<1x2x2x2x8x8xf32, #tpu.memory_space<vmem>>, vector<1x2x1x2x8x6xf32>
    %1495 = vector.shape_cast %1494 : vector<1x2x1x2x8x6xf32> to vector<2x2x8x6xf32>
    %1496 = vector.extract_strided_slice %65 {offsets = [0, 0, 0, 2], sizes = [2, 1, 8, 6], strides = [1, 1, 1, 1]} : vector<2x2x8x8xf32> to vector<2x1x8x6xf32>
    %1497 = vector.shape_cast %1496 : vector<2x1x8x6xf32> to vector<2x8x6xf32>
    %1498 = vector.extract_strided_slice %73 {offsets = [0, 0, 0, 2], sizes = [2, 1, 8, 6], strides = [1, 1, 1, 1]} : vector<2x2x8x8xf32> to vector<2x1x8x6xf32>
    %1499 = vector.shape_cast %1498 : vector<2x1x8x6xf32> to vector<2x8x6xf32>
    %1500 = vector.extract_strided_slice %1493 {offsets = [0, 0, 0, 0], sizes = [1, 4, 6, 6], strides = [1, 1, 1, 1]} : vector<2x4x8x6xbf16> to vector<1x4x6x6xbf16>
    %1501 = vector.shape_cast %1500 : vector<1x4x6x6xbf16> to vector<4x6x6xbf16>
    %1502 = vector.extract_strided_slice %1495 {offsets = [0, 0, 0, 0], sizes = [1, 2, 6, 6], strides = [1, 1, 1, 1]} : vector<2x2x8x6xf32> to vector<1x2x6x6xf32>
    %1503 = vector.shape_cast %1502 : vector<1x2x6x6xf32> to vector<2x6x6xf32>
    %1504 = arith.mulf %585, %1501 : vector<4x6x6xbf16>
    %1505 = arith.extf %1504 : vector<4x6x6xbf16> to vector<4x6x6xf32>
    %cst_385 = arith.constant dense<0.000000e+00> : vector<6x6xf32>
    %1506 = vector.multi_reduction <add>, %1505, %cst_385 [0] : vector<4x6x6xf32> to vector<6x6xf32>
    %1507 = vector.extract_strided_slice %1499 {offsets = [0, 0, 0], sizes = [1, 6, 6], strides = [1, 1, 1]} : vector<2x8x6xf32> to vector<1x6x6xf32>
    %1508 = vector.shape_cast %1507 : vector<1x6x6xf32> to vector<6x6xf32>
    %1509 = arith.mulf %579, %1508 : vector<6x6xf32>
    %1510 = arith.mulf %1506, %1509 : vector<6x6xf32>
    %1511 = arith.mulf %591, %1503 : vector<2x6x6xf32>
    %cst_386 = arith.constant dense<0.000000e+00> : vector<6x6xf32>
    %1512 = vector.multi_reduction <add>, %1511, %cst_386 [0] : vector<2x6x6xf32> to vector<6x6xf32>
    %1513 = arith.mulf %1503, %1503 : vector<2x6x6xf32>
    %cst_387 = arith.constant dense<0.000000e+00> : vector<6x6xf32>
    %1514 = vector.multi_reduction <add>, %1513, %cst_387 [0] : vector<2x6x6xf32> to vector<6x6xf32>
    %cst_388 = arith.constant 1.000000e-16 : f32
    %1515 = vector.broadcast %cst_388 : f32 to vector<6x6xf32>
    %1516 = arith.maximumf %1514, %1515 : vector<6x6xf32>
    %1517 = arith.mulf %595, %1516 : vector<6x6xf32>
    %1518 = math.rsqrt %1517 : vector<6x6xf32>
    %1519 = arith.mulf %1512, %1518 : vector<6x6xf32>
    %cst_389 = arith.constant 0.000000e+00 : f32
    %cst_390 = arith.constant 1.000000e+00 : f32
    %1520 = vector.broadcast %cst_389 : f32 to vector<6x6xf32>
    %1521 = arith.maximumf %1520, %1519 : vector<6x6xf32>
    %1522 = vector.broadcast %cst_390 : f32 to vector<6x6xf32>
    %1523 = arith.minimumf %1522, %1521 : vector<6x6xf32>
    %cst_391 = arith.constant 1.000000e+00 : f32
    %1524 = vector.broadcast %cst_391 : f32 to vector<6x6xf32>
    %1525 = arith.subf %1523, %1524 : vector<6x6xf32>
    %cst_392 = arith.constant 1.42857146 : f32
    %1526 = vector.broadcast %cst_392 : f32 to vector<6x6xf32>
    %1527 = arith.mulf %1525, %1526 : vector<6x6xf32>
    %1528 = math.exp %1527 : vector<6x6xf32>
    %1529 = vector.extract_strided_slice %1497 {offsets = [0, 0, 0], sizes = [1, 6, 6], strides = [1, 1, 1]} : vector<2x8x6xf32> to vector<1x6x6xf32>
    %1530 = vector.shape_cast %1529 : vector<1x6x6xf32> to vector<6x6xf32>
    %1531 = arith.mulf %1528, %1530 : vector<6x6xf32>
    %cst_393 = arith.constant 1.000000e+01 : f32
    %1532 = vector.broadcast %cst_393 : f32 to vector<6x6xf32>
    %1533 = arith.mulf %1531, %1532 : vector<6x6xf32>
    %1534 = math.exp %1533 : vector<6x6xf32>
    %1535 = arith.addf %1484, %1534 : vector<6x6xf32>
    %1536 = arith.mulf %1534, %1510 : vector<6x6xf32>
    %1537 = arith.addf %1486, %1536 : vector<6x6xf32>
    %cst_394 = arith.constant 1.000000e+01 : f32
    %1538 = vector.broadcast %cst_394 : f32 to vector<6x6xf32>
    %1539 = arith.mulf %1510, %1538 : vector<6x6xf32>
    %1540 = math.exp %1539 : vector<6x6xf32>
    %1541 = arith.addf %1490, %1540 : vector<6x6xf32>
    %1542 = arith.addf %1491, %1531 : vector<6x6xf32>
    %1543 = vector.extract_strided_slice %1493 {offsets = [1, 0, 0, 0], sizes = [1, 4, 6, 6], strides = [1, 1, 1, 1]} : vector<2x4x8x6xbf16> to vector<1x4x6x6xbf16>
    %1544 = vector.shape_cast %1543 : vector<1x4x6x6xbf16> to vector<4x6x6xbf16>
    %1545 = vector.extract_strided_slice %1495 {offsets = [1, 0, 0, 0], sizes = [1, 2, 6, 6], strides = [1, 1, 1, 1]} : vector<2x2x8x6xf32> to vector<1x2x6x6xf32>
    %1546 = vector.shape_cast %1545 : vector<1x2x6x6xf32> to vector<2x6x6xf32>
    %1547 = arith.mulf %585, %1544 : vector<4x6x6xbf16>
    %1548 = arith.extf %1547 : vector<4x6x6xbf16> to vector<4x6x6xf32>
    %cst_395 = arith.constant dense<0.000000e+00> : vector<6x6xf32>
    %1549 = vector.multi_reduction <add>, %1548, %cst_395 [0] : vector<4x6x6xf32> to vector<6x6xf32>
    %1550 = vector.extract_strided_slice %1499 {offsets = [1, 0, 0], sizes = [1, 6, 6], strides = [1, 1, 1]} : vector<2x8x6xf32> to vector<1x6x6xf32>
    %1551 = vector.shape_cast %1550 : vector<1x6x6xf32> to vector<6x6xf32>
    %1552 = arith.mulf %579, %1551 : vector<6x6xf32>
    %1553 = arith.mulf %1549, %1552 : vector<6x6xf32>
    %1554 = arith.mulf %591, %1546 : vector<2x6x6xf32>
    %cst_396 = arith.constant dense<0.000000e+00> : vector<6x6xf32>
    %1555 = vector.multi_reduction <add>, %1554, %cst_396 [0] : vector<2x6x6xf32> to vector<6x6xf32>
    %1556 = arith.mulf %1546, %1546 : vector<2x6x6xf32>
    %cst_397 = arith.constant dense<0.000000e+00> : vector<6x6xf32>
    %1557 = vector.multi_reduction <add>, %1556, %cst_397 [0] : vector<2x6x6xf32> to vector<6x6xf32>
    %cst_398 = arith.constant 1.000000e-16 : f32
    %1558 = vector.broadcast %cst_398 : f32 to vector<6x6xf32>
    %1559 = arith.maximumf %1557, %1558 : vector<6x6xf32>
    %1560 = arith.mulf %595, %1559 : vector<6x6xf32>
    %1561 = math.rsqrt %1560 : vector<6x6xf32>
    %1562 = arith.mulf %1555, %1561 : vector<6x6xf32>
    %cst_399 = arith.constant 0.000000e+00 : f32
    %cst_400 = arith.constant 1.000000e+00 : f32
    %1563 = vector.broadcast %cst_399 : f32 to vector<6x6xf32>
    %1564 = arith.maximumf %1563, %1562 : vector<6x6xf32>
    %1565 = vector.broadcast %cst_400 : f32 to vector<6x6xf32>
    %1566 = arith.minimumf %1565, %1564 : vector<6x6xf32>
    %cst_401 = arith.constant 1.000000e+00 : f32
    %1567 = vector.broadcast %cst_401 : f32 to vector<6x6xf32>
    %1568 = arith.subf %1566, %1567 : vector<6x6xf32>
    %cst_402 = arith.constant 1.42857146 : f32
    %1569 = vector.broadcast %cst_402 : f32 to vector<6x6xf32>
    %1570 = arith.mulf %1568, %1569 : vector<6x6xf32>
    %1571 = math.exp %1570 : vector<6x6xf32>
    %1572 = vector.extract_strided_slice %1497 {offsets = [1, 0, 0], sizes = [1, 6, 6], strides = [1, 1, 1]} : vector<2x8x6xf32> to vector<1x6x6xf32>
    %1573 = vector.shape_cast %1572 : vector<1x6x6xf32> to vector<6x6xf32>
    %1574 = arith.mulf %1571, %1573 : vector<6x6xf32>
    %cst_403 = arith.constant 1.000000e+01 : f32
    %1575 = vector.broadcast %cst_403 : f32 to vector<6x6xf32>
    %1576 = arith.mulf %1574, %1575 : vector<6x6xf32>
    %1577 = math.exp %1576 : vector<6x6xf32>
    %1578 = arith.addf %1535, %1577 : vector<6x6xf32>
    %1579 = arith.mulf %1577, %1553 : vector<6x6xf32>
    %1580 = arith.addf %1537, %1579 : vector<6x6xf32>
    %cst_404 = arith.constant 1.000000e+01 : f32
    %1581 = vector.broadcast %cst_404 : f32 to vector<6x6xf32>
    %1582 = arith.mulf %1553, %1581 : vector<6x6xf32>
    %1583 = math.exp %1582 : vector<6x6xf32>
    %1584 = arith.addf %1541, %1583 : vector<6x6xf32>
    %1585 = arith.addf %1542, %1574 : vector<6x6xf32>
    %1586 = vector.extract_strided_slice %1493 {offsets = [0, 0, 1, 0], sizes = [1, 4, 6, 6], strides = [1, 1, 1, 1]} : vector<2x4x8x6xbf16> to vector<1x4x6x6xbf16>
    %1587 = vector.shape_cast %1586 : vector<1x4x6x6xbf16> to vector<4x6x6xbf16>
    %1588 = vector.extract_strided_slice %1495 {offsets = [0, 0, 1, 0], sizes = [1, 2, 6, 6], strides = [1, 1, 1, 1]} : vector<2x2x8x6xf32> to vector<1x2x6x6xf32>
    %1589 = vector.shape_cast %1588 : vector<1x2x6x6xf32> to vector<2x6x6xf32>
    %1590 = arith.mulf %585, %1587 : vector<4x6x6xbf16>
    %1591 = arith.extf %1590 : vector<4x6x6xbf16> to vector<4x6x6xf32>
    %cst_405 = arith.constant dense<0.000000e+00> : vector<6x6xf32>
    %1592 = vector.multi_reduction <add>, %1591, %cst_405 [0] : vector<4x6x6xf32> to vector<6x6xf32>
    %1593 = vector.extract_strided_slice %1499 {offsets = [0, 1, 0], sizes = [1, 6, 6], strides = [1, 1, 1]} : vector<2x8x6xf32> to vector<1x6x6xf32>
    %1594 = vector.shape_cast %1593 : vector<1x6x6xf32> to vector<6x6xf32>
    %1595 = arith.mulf %579, %1594 : vector<6x6xf32>
    %1596 = arith.mulf %1592, %1595 : vector<6x6xf32>
    %1597 = arith.mulf %591, %1589 : vector<2x6x6xf32>
    %cst_406 = arith.constant dense<0.000000e+00> : vector<6x6xf32>
    %1598 = vector.multi_reduction <add>, %1597, %cst_406 [0] : vector<2x6x6xf32> to vector<6x6xf32>
    %1599 = arith.mulf %1589, %1589 : vector<2x6x6xf32>
    %cst_407 = arith.constant dense<0.000000e+00> : vector<6x6xf32>
    %1600 = vector.multi_reduction <add>, %1599, %cst_407 [0] : vector<2x6x6xf32> to vector<6x6xf32>
    %cst_408 = arith.constant 1.000000e-16 : f32
    %1601 = vector.broadcast %cst_408 : f32 to vector<6x6xf32>
    %1602 = arith.maximumf %1600, %1601 : vector<6x6xf32>
    %1603 = arith.mulf %595, %1602 : vector<6x6xf32>
    %1604 = math.rsqrt %1603 : vector<6x6xf32>
    %1605 = arith.mulf %1598, %1604 : vector<6x6xf32>
    %cst_409 = arith.constant 0.000000e+00 : f32
    %cst_410 = arith.constant 1.000000e+00 : f32
    %1606 = vector.broadcast %cst_409 : f32 to vector<6x6xf32>
    %1607 = arith.maximumf %1606, %1605 : vector<6x6xf32>
    %1608 = vector.broadcast %cst_410 : f32 to vector<6x6xf32>
    %1609 = arith.minimumf %1608, %1607 : vector<6x6xf32>
    %cst_411 = arith.constant 1.000000e+00 : f32
    %1610 = vector.broadcast %cst_411 : f32 to vector<6x6xf32>
    %1611 = arith.subf %1609, %1610 : vector<6x6xf32>
    %cst_412 = arith.constant 1.42857146 : f32
    %1612 = vector.broadcast %cst_412 : f32 to vector<6x6xf32>
    %1613 = arith.mulf %1611, %1612 : vector<6x6xf32>
    %1614 = math.exp %1613 : vector<6x6xf32>
    %1615 = vector.extract_strided_slice %1497 {offsets = [0, 1, 0], sizes = [1, 6, 6], strides = [1, 1, 1]} : vector<2x8x6xf32> to vector<1x6x6xf32>
    %1616 = vector.shape_cast %1615 : vector<1x6x6xf32> to vector<6x6xf32>
    %1617 = arith.mulf %1614, %1616 : vector<6x6xf32>
    %cst_413 = arith.constant 1.000000e+01 : f32
    %1618 = vector.broadcast %cst_413 : f32 to vector<6x6xf32>
    %1619 = arith.mulf %1617, %1618 : vector<6x6xf32>
    %1620 = math.exp %1619 : vector<6x6xf32>
    %1621 = arith.addf %1578, %1620 : vector<6x6xf32>
    %1622 = arith.mulf %1620, %1596 : vector<6x6xf32>
    %1623 = arith.addf %1580, %1622 : vector<6x6xf32>
    %cst_414 = arith.constant 1.000000e+01 : f32
    %1624 = vector.broadcast %cst_414 : f32 to vector<6x6xf32>
    %1625 = arith.mulf %1596, %1624 : vector<6x6xf32>
    %1626 = math.exp %1625 : vector<6x6xf32>
    %1627 = arith.addf %1584, %1626 : vector<6x6xf32>
    %1628 = arith.addf %1585, %1617 : vector<6x6xf32>
    %1629 = vector.extract_strided_slice %1493 {offsets = [1, 0, 1, 0], sizes = [1, 4, 6, 6], strides = [1, 1, 1, 1]} : vector<2x4x8x6xbf16> to vector<1x4x6x6xbf16>
    %1630 = vector.shape_cast %1629 : vector<1x4x6x6xbf16> to vector<4x6x6xbf16>
    %1631 = vector.extract_strided_slice %1495 {offsets = [1, 0, 1, 0], sizes = [1, 2, 6, 6], strides = [1, 1, 1, 1]} : vector<2x2x8x6xf32> to vector<1x2x6x6xf32>
    %1632 = vector.shape_cast %1631 : vector<1x2x6x6xf32> to vector<2x6x6xf32>
    %1633 = arith.mulf %585, %1630 : vector<4x6x6xbf16>
    %1634 = arith.extf %1633 : vector<4x6x6xbf16> to vector<4x6x6xf32>
    %cst_415 = arith.constant dense<0.000000e+00> : vector<6x6xf32>
    %1635 = vector.multi_reduction <add>, %1634, %cst_415 [0] : vector<4x6x6xf32> to vector<6x6xf32>
    %1636 = vector.extract_strided_slice %1499 {offsets = [1, 1, 0], sizes = [1, 6, 6], strides = [1, 1, 1]} : vector<2x8x6xf32> to vector<1x6x6xf32>
    %1637 = vector.shape_cast %1636 : vector<1x6x6xf32> to vector<6x6xf32>
    %1638 = arith.mulf %579, %1637 : vector<6x6xf32>
    %1639 = arith.mulf %1635, %1638 : vector<6x6xf32>
    %1640 = arith.mulf %591, %1632 : vector<2x6x6xf32>
    %cst_416 = arith.constant dense<0.000000e+00> : vector<6x6xf32>
    %1641 = vector.multi_reduction <add>, %1640, %cst_416 [0] : vector<2x6x6xf32> to vector<6x6xf32>
    %1642 = arith.mulf %1632, %1632 : vector<2x6x6xf32>
    %cst_417 = arith.constant dense<0.000000e+00> : vector<6x6xf32>
    %1643 = vector.multi_reduction <add>, %1642, %cst_417 [0] : vector<2x6x6xf32> to vector<6x6xf32>
    %cst_418 = arith.constant 1.000000e-16 : f32
    %1644 = vector.broadcast %cst_418 : f32 to vector<6x6xf32>
    %1645 = arith.maximumf %1643, %1644 : vector<6x6xf32>
    %1646 = arith.mulf %595, %1645 : vector<6x6xf32>
    %1647 = math.rsqrt %1646 : vector<6x6xf32>
    %1648 = arith.mulf %1641, %1647 : vector<6x6xf32>
    %cst_419 = arith.constant 0.000000e+00 : f32
    %cst_420 = arith.constant 1.000000e+00 : f32
    %1649 = vector.broadcast %cst_419 : f32 to vector<6x6xf32>
    %1650 = arith.maximumf %1649, %1648 : vector<6x6xf32>
    %1651 = vector.broadcast %cst_420 : f32 to vector<6x6xf32>
    %1652 = arith.minimumf %1651, %1650 : vector<6x6xf32>
    %cst_421 = arith.constant 1.000000e+00 : f32
    %1653 = vector.broadcast %cst_421 : f32 to vector<6x6xf32>
    %1654 = arith.subf %1652, %1653 : vector<6x6xf32>
    %cst_422 = arith.constant 1.42857146 : f32
    %1655 = vector.broadcast %cst_422 : f32 to vector<6x6xf32>
    %1656 = arith.mulf %1654, %1655 : vector<6x6xf32>
    %1657 = math.exp %1656 : vector<6x6xf32>
    %1658 = vector.extract_strided_slice %1497 {offsets = [1, 1, 0], sizes = [1, 6, 6], strides = [1, 1, 1]} : vector<2x8x6xf32> to vector<1x6x6xf32>
    %1659 = vector.shape_cast %1658 : vector<1x6x6xf32> to vector<6x6xf32>
    %1660 = arith.mulf %1657, %1659 : vector<6x6xf32>
    %cst_423 = arith.constant 1.000000e+01 : f32
    %1661 = vector.broadcast %cst_423 : f32 to vector<6x6xf32>
    %1662 = arith.mulf %1660, %1661 : vector<6x6xf32>
    %1663 = math.exp %1662 : vector<6x6xf32>
    %1664 = arith.addf %1621, %1663 : vector<6x6xf32>
    %1665 = arith.mulf %1663, %1639 : vector<6x6xf32>
    %1666 = arith.addf %1623, %1665 : vector<6x6xf32>
    %cst_424 = arith.constant 1.000000e+01 : f32
    %1667 = vector.broadcast %cst_424 : f32 to vector<6x6xf32>
    %1668 = arith.mulf %1639, %1667 : vector<6x6xf32>
    %1669 = math.exp %1668 : vector<6x6xf32>
    %1670 = arith.addf %1627, %1669 : vector<6x6xf32>
    %1671 = arith.addf %1628, %1660 : vector<6x6xf32>
    %1672 = vector.extract_strided_slice %1493 {offsets = [0, 0, 2, 0], sizes = [1, 4, 6, 6], strides = [1, 1, 1, 1]} : vector<2x4x8x6xbf16> to vector<1x4x6x6xbf16>
    %1673 = vector.shape_cast %1672 : vector<1x4x6x6xbf16> to vector<4x6x6xbf16>
    %1674 = vector.extract_strided_slice %1495 {offsets = [0, 0, 2, 0], sizes = [1, 2, 6, 6], strides = [1, 1, 1, 1]} : vector<2x2x8x6xf32> to vector<1x2x6x6xf32>
    %1675 = vector.shape_cast %1674 : vector<1x2x6x6xf32> to vector<2x6x6xf32>
    %1676 = arith.mulf %585, %1673 : vector<4x6x6xbf16>
    %1677 = arith.extf %1676 : vector<4x6x6xbf16> to vector<4x6x6xf32>
    %cst_425 = arith.constant dense<0.000000e+00> : vector<6x6xf32>
    %1678 = vector.multi_reduction <add>, %1677, %cst_425 [0] : vector<4x6x6xf32> to vector<6x6xf32>
    %1679 = vector.extract_strided_slice %1499 {offsets = [0, 2, 0], sizes = [1, 6, 6], strides = [1, 1, 1]} : vector<2x8x6xf32> to vector<1x6x6xf32>
    %1680 = vector.shape_cast %1679 : vector<1x6x6xf32> to vector<6x6xf32>
    %1681 = arith.mulf %579, %1680 : vector<6x6xf32>
    %1682 = arith.mulf %1678, %1681 : vector<6x6xf32>
    %1683 = arith.mulf %591, %1675 : vector<2x6x6xf32>
    %cst_426 = arith.constant dense<0.000000e+00> : vector<6x6xf32>
    %1684 = vector.multi_reduction <add>, %1683, %cst_426 [0] : vector<2x6x6xf32> to vector<6x6xf32>
    %1685 = arith.mulf %1675, %1675 : vector<2x6x6xf32>
    %cst_427 = arith.constant dense<0.000000e+00> : vector<6x6xf32>
    %1686 = vector.multi_reduction <add>, %1685, %cst_427 [0] : vector<2x6x6xf32> to vector<6x6xf32>
    %cst_428 = arith.constant 1.000000e-16 : f32
    %1687 = vector.broadcast %cst_428 : f32 to vector<6x6xf32>
    %1688 = arith.maximumf %1686, %1687 : vector<6x6xf32>
    %1689 = arith.mulf %595, %1688 : vector<6x6xf32>
    %1690 = math.rsqrt %1689 : vector<6x6xf32>
    %1691 = arith.mulf %1684, %1690 : vector<6x6xf32>
    %cst_429 = arith.constant 0.000000e+00 : f32
    %cst_430 = arith.constant 1.000000e+00 : f32
    %1692 = vector.broadcast %cst_429 : f32 to vector<6x6xf32>
    %1693 = arith.maximumf %1692, %1691 : vector<6x6xf32>
    %1694 = vector.broadcast %cst_430 : f32 to vector<6x6xf32>
    %1695 = arith.minimumf %1694, %1693 : vector<6x6xf32>
    %cst_431 = arith.constant 1.000000e+00 : f32
    %1696 = vector.broadcast %cst_431 : f32 to vector<6x6xf32>
    %1697 = arith.subf %1695, %1696 : vector<6x6xf32>
    %cst_432 = arith.constant 1.42857146 : f32
    %1698 = vector.broadcast %cst_432 : f32 to vector<6x6xf32>
    %1699 = arith.mulf %1697, %1698 : vector<6x6xf32>
    %1700 = math.exp %1699 : vector<6x6xf32>
    %1701 = vector.extract_strided_slice %1497 {offsets = [0, 2, 0], sizes = [1, 6, 6], strides = [1, 1, 1]} : vector<2x8x6xf32> to vector<1x6x6xf32>
    %1702 = vector.shape_cast %1701 : vector<1x6x6xf32> to vector<6x6xf32>
    %1703 = arith.mulf %1700, %1702 : vector<6x6xf32>
    %cst_433 = arith.constant 1.000000e+01 : f32
    %1704 = vector.broadcast %cst_433 : f32 to vector<6x6xf32>
    %1705 = arith.mulf %1703, %1704 : vector<6x6xf32>
    %1706 = math.exp %1705 : vector<6x6xf32>
    %1707 = arith.addf %1664, %1706 : vector<6x6xf32>
    %1708 = arith.mulf %1706, %1682 : vector<6x6xf32>
    %1709 = arith.addf %1666, %1708 : vector<6x6xf32>
    %cst_434 = arith.constant 1.000000e+01 : f32
    %1710 = vector.broadcast %cst_434 : f32 to vector<6x6xf32>
    %1711 = arith.mulf %1682, %1710 : vector<6x6xf32>
    %1712 = math.exp %1711 : vector<6x6xf32>
    %1713 = arith.addf %1670, %1712 : vector<6x6xf32>
    %1714 = arith.addf %1671, %1703 : vector<6x6xf32>
    %1715 = math.log %1713 : vector<6x6xf32>
    %1716 = arith.divf %1709, %1707 : vector<6x6xf32>
    %cst_435 = arith.constant 1.000000e+01 : f32
    %1717 = vector.broadcast %cst_435 : f32 to vector<6x6xf32>
    %1718 = arith.mulf %1716, %1717 : vector<6x6xf32>
    %1719 = arith.subf %1715, %1718 : vector<6x6xf32>
    %cst_436 = arith.constant 4.000000e-02 : f32
    %1720 = vector.broadcast %cst_436 : f32 to vector<6x6xf32>
    %1721 = arith.mulf %1714, %1720 : vector<6x6xf32>
    %cst_437 = arith.constant 0.00999999977 : f32
    %1722 = vector.broadcast %cst_437 : f32 to vector<6x6xf32>
    %1723 = arith.subf %1721, %1722 : vector<6x6xf32>
    %cst_438 = arith.constant 0.000000e+00 : f32
    %1724 = vector.broadcast %cst_438 : f32 to vector<6x6xf32>
    %1725 = arith.maximumf %1723, %1724 : vector<6x6xf32>
    %1726 = arith.mulf %1719, %1725 : vector<6x6xf32>
    %1727 = vector.shape_cast %1726 : vector<6x6xf32> to vector<1x6x6xf32>
    %cst_439 = arith.constant dense<0.000000e+00> : vector<1xf32>
    %1728 = vector.multi_reduction <add>, %1727, %cst_439 [1, 2] : vector<1x6x6xf32> to vector<1xf32>
    %1729 = vector.shape_cast %1728 : vector<1xf32> to vector<1x1x1xf32>
    %1730 = vector.extract %1729[0, 0, 0] : f32 from vector<1x1x1xf32>
    %1731 = vector.shape_cast %1725 : vector<6x6xf32> to vector<1x6x6xf32>
    %cst_440 = arith.constant dense<0.000000e+00> : vector<1xf32>
    %1732 = vector.multi_reduction <add>, %1731, %cst_440 [1, 2] : vector<1x6x6xf32> to vector<1xf32>
    %1733 = vector.shape_cast %1732 : vector<1xf32> to vector<1x1x1xf32>
    %1734 = vector.extract %1733[0, 0, 0] : f32 from vector<1x1x1xf32>
    %1735 = tpu.iota {dimensions = array<i32: 0>} : vector<8x128xi32>
    %c0_i32 = arith.constant 0 : i32
    %1736 = vector.broadcast %c0_i32 : i32 to vector<8x128xi32>
    %1737 = arith.cmpi eq, %1735, %1736 : vector<8x128xi32>
    %c1_i32 = arith.constant 1 : i32
    %1738 = vector.broadcast %c1_i32 : i32 to vector<8x128xi32>
    %1739 = arith.cmpi eq, %1735, %1738 : vector<8x128xi32>
    %c2_i32 = arith.constant 2 : i32
    %1740 = vector.broadcast %c2_i32 : i32 to vector<8x128xi32>
    %1741 = arith.cmpi eq, %1735, %1740 : vector<8x128xi32>
    %cst_441 = arith.constant 0.000000e+00 : f32
    %1742 = vector.broadcast %1734 : f32 to vector<8x128xf32>
    %1743 = vector.broadcast %cst_441 : f32 to vector<8x128xf32>
    %1744 = arith.select %1741, %1742, %1743 : vector<8x128xi1>, vector<8x128xf32>
    %1745 = vector.broadcast %1730 : f32 to vector<8x128xf32>
    %1746 = arith.select %1739, %1745, %1744 : vector<8x128xi1>, vector<8x128xf32>
    %1747 = vector.broadcast %57 : f32 to vector<8x128xf32>
    %1748 = arith.select %1737, %1747, %1746 : vector<8x128xi1>, vector<8x128xf32>
    %1749 = vector.shape_cast %1748 : vector<8x128xf32> to vector<1x8x128xf32>
    %c0_442 = arith.constant 0 : index
    %c0_443 = arith.constant 0 : index
    %c0_444 = arith.constant 0 : index
    %1750 = vector.load %arg5[%c0_442, %c0_443, %c0_444] : memref<1x8x128xf32, #tpu.memory_space<vmem>>, vector<1x8x128xf32>
    tpu.vector_store %arg5[%c0_442, %c0_443, %c0_444], %1749 {strides = array<i32>} : memref<1x8x128xf32, #tpu.memory_space<vmem>>, vector<1x8x128xf32>,
    return
  }
  func.func @transform_0(%arg0: i32) -> (i32, i32, i32, i32, i32) {
    %c0_i32 = arith.constant 0 : i32
    %c0_i32_0 = arith.constant 0 : i32
    %c0_i32_1 = arith.constant 0 : i32
    %c0_i32_2 = arith.constant 0 : i32
    %c0_i32_3 = arith.constant 0 : i32
    return %arg0, %c0_i32, %c0_i32_0, %c0_i32_1, %c0_i32_2 : i32, i32, i32, i32, i32
  }
  func.func @transform_1(%arg0: i32) -> (i32, i32, i32, i32, i32, i32) {
    %c0_i32 = arith.constant 0 : i32
    %c0_i32_0 = arith.constant 0 : i32
    %c0_i32_1 = arith.constant 0 : i32
    %c0_i32_2 = arith.constant 0 : i32
    %c0_i32_3 = arith.constant 0 : i32
    %c0_i32_4 = arith.constant 0 : i32
    return %arg0, %c0_i32, %c0_i32_0, %c0_i32_1, %c0_i32_2, %c0_i32_3 : i32, i32, i32, i32, i32, i32
  }
  func.func @transform_2(%arg0: i32) -> (i32, i32, i32, i32, i32, i32) {
    %c0_i32 = arith.constant 0 : i32
    %c0_i32_0 = arith.constant 0 : i32
    %c0_i32_1 = arith.constant 0 : i32
    %c0_i32_2 = arith.constant 0 : i32
    %c0_i32_3 = arith.constant 0 : i32
    %c0_i32_4 = arith.constant 0 : i32
    return %arg0, %c0_i32, %c0_i32_0, %c0_i32_1, %c0_i32_2, %c0_i32_3 : i32, i32, i32, i32, i32, i32
  }
  func.func @transform_3(%arg0: i32) -> (i32, i32, i32, i32, i32) {
    %c0_i32 = arith.constant 0 : i32
    %c0_i32_0 = arith.constant 0 : i32
    %c0_i32_1 = arith.constant 0 : i32
    %c0_i32_2 = arith.constant 0 : i32
    %c0_i32_3 = arith.constant 0 : i32
    return %arg0, %c0_i32, %c0_i32_0, %c0_i32_1, %c0_i32_2 : i32, i32, i32, i32, i32
  }
  func.func @transform_4(%arg0: i32) -> (i32, i32, i32) {
    %c0_i32 = arith.constant 0 : i32
    %c0_i32_0 = arith.constant 0 : i32
    %c0_i32_1 = arith.constant 0 : i32
    return %arg0, %c0_i32, %c0_i32_0 : i32, i32, i32
  }
}

</mosaic_0001>

<llo_original>
// kernel: squeeze.4
$region0: #{squeeze.4}
  %s0 = inlined_call_operand.vmem [shape: f32[2,16,16,1], index: 0, kind: input, shape index: {}]
  %s1 = inlined_call_operand.vmem [shape: f32[2,8,2,8,2], index: 1, kind: output, shape index: {}]
  %v2 = vld [vmem:[%s0] sm:$0xff]
  %vm3 = vcmask 15360
  %4 = vst.msk [vmem:[%s1] ss:$8 sm:$0xf] %vm3, %v2
  %5 = vst.msk [vmem:[%s1] ss:$8 sm:$0xf0] %vm3, %v2
  %s6 = scalar_lea.vmem %s0, 8
  %v7 = vld [vmem:[%s6] sm:$0xff]
  %vm8 = vcmask 15360
  %s9 = scalar_lea.vmem %s1, 64
  %10 = vst.msk [vmem:[%s9] ss:$8 sm:$0xf] %vm8, %v7
  %s11 = scalar_lea.vmem %s1, 64
  %12 = vst.msk [vmem:[%s11] ss:$8 sm:$0xf0] %vm8, %v7
  %s13 = scalar_lea.vmem %s0, 16
  %v14 = vld [vmem:[%s13] sm:$0xff]
  %vm15 = vcmask 15360
  %s16 = scalar_lea.vmem %s1, 128
  %17 = vst.msk [vmem:[%s16] ss:$8 sm:$0xf] %vm15, %v14
  %s18 = scalar_lea.vmem %s1, 128
  %19 = vst.msk [vmem:[%s18] ss:$8 sm:$0xf0] %vm15, %v14
  %s20 = scalar_lea.vmem %s0, 24
  %v21 = vld [vmem:[%s20] sm:$0xff]
  %vm22 = vcmask 15360
  %s23 = scalar_lea.vmem %s1, 192
  %24 = vst.msk [vmem:[%s23] ss:$8 sm:$0xf] %vm22, %v21
  %s25 = scalar_lea.vmem %s1, 192
  %26 = vst.msk [vmem:[%s25] ss:$8 sm:$0xf0] %vm22, %v21
  %v27 = vld [vmem:[%s0] sm:$0xff]
  %28 = vrot.lane.b32.xlu0 %v27, 126
  %v29 = vpop.permute.xlu0 %28
  %vm30 = vcmask 15360
  %s31 = scalar_lea.vmem %s1, 1
  %32 = vst.msk [vmem:[%s31] ss:$8 sm:$0xf] %vm30, %v29
  %s33 = scalar_lea.vmem %s1, 1
  %34 = vst.msk [vmem:[%s33] ss:$8 sm:$0xf0] %vm30, %v29
  %s35 = scalar_lea.vmem %s0, 8
  %v36 = vld [vmem:[%s35] sm:$0xff]
  %37 = vrot.lane.b32.xlu0 %v36, 126
  %v38 = vpop.permute.xlu0 %37
  %vm39 = vcmask 15360
  %s40 = scalar_lea.vmem %s1, 65
  %41 = vst.msk [vmem:[%s40] ss:$8 sm:$0xf] %vm39, %v38
  %s42 = scalar_lea.vmem %s1, 65
  %43 = vst.msk [vmem:[%s42] ss:$8 sm:$0xf0] %vm39, %v38
  %s44 = scalar_lea.vmem %s0, 16
  %v45 = vld [vmem:[%s44] sm:$0xff]
  %46 = vrot.lane.b32.xlu0 %v45, 126
  %v47 = vpop.permute.xlu0 %46
  %vm48 = vcmask 15360
  %s49 = scalar_lea.vmem %s1, 129
  %50 = vst.msk [vmem:[%s49] ss:$8 sm:$0xf] %vm48, %v47
  %s51 = scalar_lea.vmem %s1, 129
  %52 = vst.msk [vmem:[%s51] ss:$8 sm:$0xf0] %vm48, %v47
  %s53 = scalar_lea.vmem %s0, 24
  %v54 = vld [vmem:[%s53] sm:$0xff]
  %55 = vrot.lane.b32.xlu0 %v54, 126
  %v56 = vpop.permute.xlu0 %55
  %vm57 = vcmask 15360
  %s58 = scalar_lea.vmem %s1, 193
  %59 = vst.msk [vmem:[%s58] ss:$8 sm:$0xf] %vm57, %v56
  %s60 = scalar_lea.vmem %s1, 193
  %61 = vst.msk [vmem:[%s60] ss:$8 sm:$0xf0] %vm57, %v56
  %v62 = vld [vmem:[%s0] sm:$0xff]
  %63 = vrot.lane.b32.xlu0 %v62, 124
  %v64 = vpop.permute.xlu0 %63
  %vm65 = vcmask 15360
  %s66 = scalar_lea.vmem %s1, 2
  %67 = vst.msk [vmem:[%s66] ss:$8 sm:$0xf] %vm65, %v64
  %s68 = scalar_lea.vmem %s1, 2
  %69 = vst.msk [vmem:[%s68] ss:$8 sm:$0xf0] %vm65, %v64
  %s70 = scalar_lea.vmem %s0, 8
  %v71 = vld [vmem:[%s70] sm:$0xff]
  %72 = vrot.lane.b32.xlu0 %v71, 124
  %v73 = vpop.permute.xlu0 %72
  %vm74 = vcmask 15360
  %s75 = scalar_lea.vmem %s1, 66
  %76 = vst.msk [vmem:[%s75] ss:$8 sm:$0xf] %vm74, %v73
  %s77 = scalar_lea.vmem %s1, 66
  %78 = vst.msk [vmem:[%s77] ss:$8 sm:$0xf0] %vm74, %v73
  %s79 = scalar_lea.vmem %s0, 16
  %v80 = vld [vmem:[%s79] sm:$0xff]
  %81 = vrot.lane.b32.xlu0 %v80, 124
  %v82 = vpop.permute.xlu0 %81
  %vm83 = vcmask 15360
  %s84 = scalar_lea.vmem %s1, 130
  %85 = vst.msk [vmem:[%s84] ss:$8 sm:$0xf] %vm83, %v82
  %s86 = scalar_lea.vmem %s1, 130
  %87 = vst.msk [vmem:[%s86] ss:$8 sm:$0xf0] %vm83, %v82
  %s88 = scalar_lea.vmem %s0, 24
  %v89 = vld [vmem:[%s88] sm:$0xff]
  %90 = vrot.lane.b32.xlu0 %v89, 124
  %v91 = vpop.permute.xlu0 %90
  %vm92 = vcmask 15360
  %s93 = scalar_lea.vmem %s1, 194
  %94 = vst.msk [vmem:[%s93] ss:$8 sm:$0xf] %vm92, %v91
  %s95 = scalar_lea.vmem %s1, 194
  %96 = vst.msk [vmem:[%s95] ss:$8 sm:$0xf0] %vm92, %v91
  %v97 = vld [vmem:[%s0] sm:$0xff]
  %98 = vrot.lane.b32.xlu0 %v97, 122
  %v99 = vpop.permute.xlu0 %98
  %vm100 = vcmask 15360
  %s101 = scalar_lea.vmem %s1, 3
  %102 = vst.msk [vmem:[%s101] ss:$8 sm:$0xf] %vm100, %v99
  %s103 = scalar_lea.vmem %s1, 3
  %104 = vst.msk [vmem:[%s103] ss:$8 sm:$0xf0] %vm100, %v99
  %s105 = scalar_lea.vmem %s0, 8
  %v106 = vld [vmem:[%s105] sm:$0xff]
  %107 = vrot.lane.b32.xlu0 %v106, 122
  %v108 = vpop.permute.xlu0 %107
  %vm109 = vcmask 15360
  %s110 = scalar_lea.vmem %s1, 67
  %111 = vst.msk [vmem:[%s110] ss:$8 sm:$0xf] %vm109, %v108
  %s112 = scalar_lea.vmem %s1, 67
  %113 = vst.msk [vmem:[%s112] ss:$8 sm:$0xf0] %vm109, %v108
  %s114 = scalar_lea.vmem %s0, 16
  %v115 = vld [vmem:[%s114] sm:$0xff]
  %116 = vrot.lane.b32.xlu0 %v115, 122
  %v117 = vpop.permute.xlu0 %116
  %vm118 = vcmask 15360
  %s119 = scalar_lea.vmem %s1, 131
  %120 = vst.msk [vmem:[%s119] ss:$8 sm:$0xf] %vm118, %v117
  %s121 = scalar_lea.vmem %s1, 131
  %122 = vst.msk [vmem:[%s121] ss:$8 sm:$0xf0] %vm118, %v117
  %s123 = scalar_lea.vmem %s0, 24
  %v124 = vld [vmem:[%s123] sm:$0xff]
  %125 = vrot.lane.b32.xlu0 %v124, 122
  %v126 = vpop.permute.xlu0 %125
  %vm127 = vcmask 15360
  %s128 = scalar_lea.vmem %s1, 195
  %129 = vst.msk [vmem:[%s128] ss:$8 sm:$0xf] %vm127, %v126
  %s130 = scalar_lea.vmem %s1, 195
  %131 = vst.msk [vmem:[%s130] ss:$8 sm:$0xf0] %vm127, %v126
  %v132 = vld [vmem:[%s0] sm:$0xff]
  %133 = vrot.lane.b32.xlu0 %v132, 120
  %v134 = vpop.permute.xlu0 %133
  %vm135 = vcmask 15360
  %s136 = scalar_lea.vmem %s1, 4
  %137 = vst.msk [vmem:[%s136] ss:$8 sm:$0xf] %vm135, %v134
  %s138 = scalar_lea.vmem %s1, 4
  %139 = vst.msk [vmem:[%s138] ss:$8 sm:$0xf0] %vm135, %v134
  %s140 = scalar_lea.vmem %s0, 8
  %v141 = vld [vmem:[%s140] sm:$0xff]
  %142 = vrot.lane.b32.xlu0 %v141, 120
  %v143 = vpop.permute.xlu0 %142
  %vm144 = vcmask 15360
  %s145 = scalar_lea.vmem %s1, 68
  %146 = vst.msk [vmem:[%s145] ss:$8 sm:$0xf] %vm144, %v143
  %s147 = scalar_lea.vmem %s1, 68
  %148 = vst.msk [vmem:[%s147] ss:$8 sm:$0xf0] %vm144, %v143
  %s149 = scalar_lea.vmem %s0, 16
  %v150 = vld [vmem:[%s149] sm:$0xff]
  %151 = vrot.lane.b32.xlu0 %v150, 120
  %v152 = vpop.permute.xlu0 %151
  %vm153 = vcmask 15360
  %s154 = scalar_lea.vmem %s1, 132
  %155 = vst.msk [vmem:[%s154] ss:$8 sm:$0xf] %vm153, %v152
  %s156 = scalar_lea.vmem %s1, 132
  %157 = vst.msk [vmem:[%s156] ss:$8 sm:$0xf0] %vm153, %v152
  %s158 = scalar_lea.vmem %s0, 24
  %v159 = vld [vmem:[%s158] sm:$0xff]
  %160 = vrot.lane.b32.xlu0 %v159, 120
  %v161 = vpop.permute.xlu0 %160
  %vm162 = vcmask 15360
  %s163 = scalar_lea.vmem %s1, 196
  %164 = vst.msk [vmem:[%s163] ss:$8 sm:$0xf] %vm162, %v161
  %s165 = scalar_lea.vmem %s1, 196
  %166 = vst.msk [vmem:[%s165] ss:$8 sm:$0xf0] %vm162, %v161
  %v167 = vld [vmem:[%s0] sm:$0xff]
  %168 = vrot.lane.b32.xlu0 %v167, 118
  %v169 = vpop.permute.xlu0 %168
  %vm170 = vcmask 15360
  %s171 = scalar_lea.vmem %s1, 5
  %172 = vst.msk [vmem:[%s171] ss:$8 sm:$0xf] %vm170, %v169
  %s173 = scalar_lea.vmem %s1, 5
  %174 = vst.msk [vmem:[%s173] ss:$8 sm:$0xf0] %vm170, %v169
  %s175 = scalar_lea.vmem %s0, 8
  %v176 = vld [vmem:[%s175] sm:$0xff]
  %177 = vrot.lane.b32.xlu0 %v176, 118
  %v178 = vpop.permute.xlu0 %177
  %vm179 = vcmask 15360
  %s180 = scalar_lea.vmem %s1, 69
  %181 = vst.msk [vmem:[%s180] ss:$8 sm:$0xf] %vm179, %v178
  %s182 = scalar_lea.vmem %s1, 69
  %183 = vst.msk [vmem:[%s182] ss:$8 sm:$0xf0] %vm179, %v178
  %s184 = scalar_lea.vmem %s0, 16
  %v185 = vld [vmem:[%s184] sm:$0xff]
  %186 = vrot.lane.b32.xlu0 %v185, 118
  %v187 = vpop.permute.xlu0 %186
  %vm188 = vcmask 15360
  %s189 = scalar_lea.vmem %s1, 133
  %190 = vst.msk [vmem:[%s189] ss:$8 sm:$0xf] %vm188, %v187
  %s191 = scalar_lea.vmem %s1, 133
  %192 = vst.msk [vmem:[%s191] ss:$8 sm:$0xf0] %vm188, %v187
  %s193 = scalar_lea.vmem %s0, 24
  %v194 = vld [vmem:[%s193] sm:$0xff]
  %195 = vrot.lane.b32.xlu0 %v194, 118
  %v196 = vpop.permute.xlu0 %195
  %vm197 = vcmask 15360
  %s198 = scalar_lea.vmem %s1, 197
  %199 = vst.msk [vmem:[%s198] ss:$8 sm:$0xf] %vm197, %v196
  %s200 = scalar_lea.vmem %s1, 197
  %201 = vst.msk [vmem:[%s200] ss:$8 sm:$0xf0] %vm197, %v196
  %v202 = vld [vmem:[%s0] sm:$0xff]
  %203 = vrot.lane.b32.xlu0 %v202, 116
  %v204 = vpop.permute.xlu0 %203
  %vm205 = vcmask 15360
  %s206 = scalar_lea.vmem %s1, 6
  %207 = vst.msk [vmem:[%s206] ss:$8 sm:$0xf] %vm205, %v204
  %s208 = scalar_lea.vmem %s1, 6
  %209 = vst.msk [vmem:[%s208] ss:$8 sm:$0xf0] %vm205, %v204
  %s210 = scalar_lea.vmem %s0, 8
  %v211 = vld [vmem:[%s210] sm:$0xff]
  %212 = vrot.lane.b32.xlu0 %v211, 116
  %v213 = vpop.permute.xlu0 %212
  %vm214 = vcmask 15360
  %s215 = scalar_lea.vmem %s1, 70
  %216 = vst.msk [vmem:[%s215] ss:$8 sm:$0xf] %vm214, %v213
  %s217 = scalar_lea.vmem %s1, 70
  %218 = vst.msk [vmem:[%s217] ss:$8 sm:$0xf0] %vm214, %v213
  %s219 = scalar_lea.vmem %s0, 16
  %v220 = vld [vmem:[%s219] sm:$0xff]
  %221 = vrot.lane.b32.xlu0 %v220, 116
  %v222 = vpop.permute.xlu0 %221
  %vm223 = vcmask 15360
  %s224 = scalar_lea.vmem %s1, 134
  %225 = vst.msk [vmem:[%s224] ss:$8 sm:$0xf] %vm223, %v222
  %s226 = scalar_lea.vmem %s1, 134
  %227 = vst.msk [vmem:[%s226] ss:$8 sm:$0xf0] %vm223, %v222
  %s228 = scalar_lea.vmem %s0, 24
  %v229 = vld [vmem:[%s228] sm:$0xff]
  %230 = vrot.lane.b32.xlu0 %v229, 116
  %v231 = vpop.permute.xlu0 %230
  %vm232 = vcmask 15360
  %s233 = scalar_lea.vmem %s1, 198
  %234 = vst.msk [vmem:[%s233] ss:$8 sm:$0xf] %vm232, %v231
  %s235 = scalar_lea.vmem %s1, 198
  %236 = vst.msk [vmem:[%s235] ss:$8 sm:$0xf0] %vm232, %v231
  %v237 = vld [vmem:[%s0] sm:$0xff]
  %238 = vrot.lane.b32.xlu0 %v237, 114
  %v239 = vpop.permute.xlu0 %238
  %vm240 = vcmask 15360
  %s241 = scalar_lea.vmem %s1, 7
  %242 = vst.msk [vmem:[%s241] ss:$8 sm:$0xf] %vm240, %v239
  %s243 = scalar_lea.vmem %s1, 7
  %244 = vst.msk [vmem:[%s243] ss:$8 sm:$0xf0] %vm240, %v239
  %s245 = scalar_lea.vmem %s0, 8
  %v246 = vld [vmem:[%s245] sm:$0xff]
  %247 = vrot.lane.b32.xlu0 %v246, 114
  %v248 = vpop.permute.xlu0 %247
  %vm249 = vcmask 15360
  %s250 = scalar_lea.vmem %s1, 71
  %251 = vst.msk [vmem:[%s250] ss:$8 sm:$0xf] %vm249, %v248
  %s252 = scalar_lea.vmem %s1, 71
  %253 = vst.msk [vmem:[%s252] ss:$8 sm:$0xf0] %vm249, %v248
  %s254 = scalar_lea.vmem %s0, 16
  %v255 = vld [vmem:[%s254] sm:$0xff]
  %256 = vrot.lane.b32.xlu0 %v255, 114
  %v257 = vpop.permute.xlu0 %256
  %vm258 = vcmask 15360
  %s259 = scalar_lea.vmem %s1, 135
  %260 = vst.msk [vmem:[%s259] ss:$8 sm:$0xf] %vm258, %v257
  %s261 = scalar_lea.vmem %s1, 135
  %262 = vst.msk [vmem:[%s261] ss:$8 sm:$0xf0] %vm258, %v257
  %s263 = scalar_lea.vmem %s0, 24
  %v264 = vld [vmem:[%s263] sm:$0xff]
  %265 = vrot.lane.b32.xlu0 %v264, 114
  %v266 = vpop.permute.xlu0 %265
  %vm267 = vcmask 15360
  %s268 = scalar_lea.vmem %s1, 199
  %269 = vst.msk [vmem:[%s268] ss:$8 sm:$0xf] %vm267, %v266
  %s270 = scalar_lea.vmem %s1, 199
  %271 = vst.msk [vmem:[%s270] ss:$8 sm:$0xf0] %vm267, %v266

// kernel: flow_guided_seg_loss.1
$region0: #{flow_guided_seg_loss.1}
  #allocation0 [shape = 'u32[]', space=smem, size = 0x4, offset = 0x4, fixed_abs, tag = 'smem constant byte address 0x4 - core index']
  #allocation1 [shape = 'u32[144,128]{1,0:T(1,128)}', space=vmem, size = 0x12000, scoped, tag = 'internal scratch']
  %s0 = inlined_call_operand.vmem [shape: f32[2,2,2,8,8], index: 0, kind: input, shape index: {}]
  %s1 = inlined_call_operand.vmem [shape: f32[2,2,2,2,8,8], index: 1, kind: input, shape index: {}]
  %s2 = inlined_call_operand.vmem [shape: bf16[2,2,2,4,8,8], index: 2, kind: input, shape index: {}]
  %s3 = inlined_call_operand.vmem [shape: f32[2,2,2,8,8], index: 3, kind: input, shape index: {}]
  %s4 = inlined_call_operand.vmem [shape: f32[2,8,128], index: 4, kind: output, shape index: {}]
  %s5 = sld [smem:[#allocation0]]
  $region49: #{flow_guided_seg_loss.1} parent=0
    _
  %s7 = ssub.s32 1, %s5
  %s8 = scalar_select 0, %s7, %s5
  loop: start=0, step=1, limit=4
  $region2: #{flow_guided_seg_loss.1} parent=0 // loop_pre_header
    _
  $region3: #{flow_guided_seg_loss.1} parent=0 // loop_header
    %s10 = sphi 0, %s14
    %p11 = scmp.ge.s32.totalorder %s10, 4
    %s20 = sphi 0, %s22
    %s23 = sphi 0, %s20
    %s24 = sphi 0, %s23
    %s40 = sphi 0, %s24
    %s46 = sphi 0, %s48
    %s49 = sphi 0, %s46
    %s50 = sphi 0, %s49
    %s66 = sphi 0, %s50
    %s72 = sphi 0, %s74
    %s75 = sphi 0, %s72
    %s76 = sphi 0, %s75
    %s92 = sphi 0, %s76
    %s98 = sphi 0, %s100
    %s101 = sphi 0, %s98
    %s102 = sphi 0, %s101
    %s118 = sphi 0, %s102
    %s124 = sphi 0, %s126
    %s127 = sphi 0, %s124
    %s128 = sphi 0, %s127
    %s144 = sphi 0, %s128
  $region4: #{flow_guided_seg_loss.1} parent=0 // loop_header_branch
    %13 = sbr.rel (%p11) target = $region8
  $region5: #{flow_guided_seg_loss.1} parent=0 // loop_body
    %s15 = ssub.s32 %s10, 1
    %s16 = ssub.s32 %s10, 2
    %s17 = sadd.s32 %s10, 1
    %s18 = ssub.s32 %s10, %s17
    %p19 = scmp.eq.s32.totalorder %s18, 0
    %s21 = sadd.s32 %s20, 1
    %s22 = scalar_select %p19, %s20, %s21
    %p25 = pneg %p19
    %p26 = scmp.eq.s32.totalorder %s10, 1
    %p27 = por %p25, %p26
    %p28 = scmp.ne.s32.totalorder %s20, %s23
    %p29 = scmp.eq.s32.totalorder %s10, 0
    %p30 = por %p28, %p29
    %p31 = scmp.ne.s32.totalorder %s20, %s23
    %p32 = scmp.eq.s32.totalorder %s15, 1
    %p33 = por %p31, %p32
    %p34 = scmp.ne.s32.totalorder %s23, %s24
    %p35 = scmp.eq.s32.totalorder %s15, 0
    %p36 = por %p34, %p35
    %p37 = scmp.ne.s32.totalorder %s23, %s24
    %p38 = scmp.eq.s32.totalorder %s16, 1
    %p39 = por %p37, %p38
    %p41 = scmp.ne.s32.totalorder %s24, %s40
    %p42 = scmp.eq.s32.totalorder %s16, 0
    %p43 = por %p41, %p42
    %s44 = ssub.s32 %s10, %s17
    %p45 = scmp.eq.s32.totalorder %s44, 0
    %s47 = sadd.s32 %s46, 1
    %s48 = scalar_select %p45, %s46, %s47
    %p51 = pneg %p45
    %p52 = scmp.eq.s32.totalorder %s10, 1
    %p53 = por %p51, %p52
    %p54 = scmp.ne.s32.totalorder %s46, %s49
    %p55 = scmp.eq.s32.totalorder %s10, 0
    %p56 = por %p54, %p55
    %p57 = scmp.ne.s32.totalorder %s46, %s49
    %p58 = scmp.eq.s32.totalorder %s15, 1
    %p59 = por %p57, %p58
    %p60 = scmp.ne.s32.totalorder %s49, %s50
    %p61 = scmp.eq.s32.totalorder %s15, 0
    %p62 = por %p60, %p61
    %p63 = scmp.ne.s32.totalorder %s49, %s50
    %p64 = scmp.eq.s32.totalorder %s16, 1
    %p65 = por %p63, %p64
    %p67 = scmp.ne.s32.totalorder %s50, %s66
    %p68 = scmp.eq.s32.totalorder %s16, 0
    %p69 = por %p67, %p68
    %s70 = ssub.s32 %s10, %s17
    %p71 = scmp.eq.s32.totalorder %s70, 0
    %s73 = sadd.s32 %s72, 1
    %s74 = scalar_select %p71, %s72, %s73
    %p77 = pneg %p71
    %p78 = scmp.eq.s32.totalorder %s10, 1
    %p79 = por %p77, %p78
    %p80 = scmp.ne.s32.totalorder %s72, %s75
    %p81 = scmp.eq.s32.totalorder %s10, 0
    %p82 = por %p80, %p81
    %p83 = scmp.ne.s32.totalorder %s72, %s75
    %p84 = scmp.eq.s32.totalorder %s15, 1
    %p85 = por %p83, %p84
    %p86 = scmp.ne.s32.totalorder %s75, %s76
    %p87 = scmp.eq.s32.totalorder %s15, 0
    %p88 = por %p86, %p87
    %p89 = scmp.ne.s32.totalorder %s75, %s76
    %p90 = scmp.eq.s32.totalorder %s16, 1
    %p91 = por %p89, %p90
    %p93 = scmp.ne.s32.totalorder %s76, %s92
    %p94 = scmp.eq.s32.totalorder %s16, 0
    %p95 = por %p93, %p94
    %s96 = ssub.s32 %s10, %s17
    %p97 = scmp.eq.s32.totalorder %s96, 0
    %s99 = sadd.s32 %s98, 1
    %s100 = scalar_select %p97, %s98, %s99
    %p103 = pneg %p97
    %p104 = scmp.eq.s32.totalorder %s10, 1
    %p105 = por %p103, %p104
    %p106 = scmp.ne.s32.totalorder %s98, %s101
    %p107 = scmp.eq.s32.totalorder %s10, 0
    %p108 = por %p106, %p107
    %p109 = scmp.ne.s32.totalorder %s98, %s101
    %p110 = scmp.eq.s32.totalorder %s15, 1
    %p111 = por %p109, %p110
    %p112 = scmp.ne.s32.totalorder %s101, %s102
    %p113 = scmp.eq.s32.totalorder %s15, 0
    %p114 = por %p112, %p113
    %p115 = scmp.ne.s32.totalorder %s101, %s102
    %p116 = scmp.eq.s32.totalorder %s16, 1
    %p117 = por %p115, %p116
    %p119 = scmp.ne.s32.totalorder %s102, %s118
    %p120 = scmp.eq.s32.totalorder %s16, 0
    %p121 = por %p119, %p120
    %s122 = ssub.s32 %s10, %s17
    %p123 = scmp.eq.s32.totalorder %s122, 0
    %s125 = sadd.s32 %s124, 1
    %s126 = scalar_select %p123, %s124, %s125
    %p129 = pneg %p123
    %p130 = scmp.eq.s32.totalorder %s10, 1
    %p131 = por %p129, %p130
    %p132 = scmp.ne.s32.totalorder %s124, %s127
    %p133 = scmp.eq.s32.totalorder %s10, 0
    %p134 = por %p132, %p133
    %p135 = scmp.ne.s32.totalorder %s124, %s127
    %p136 = scmp.eq.s32.totalorder %s15, 1
    %p137 = por %p135, %p136
    %p138 = scmp.ne.s32.totalorder %s127, %s128
    %p139 = scmp.eq.s32.totalorder %s15, 0
    %p140 = por %p138, %p139
    %p141 = scmp.ne.s32.totalorder %s127, %s128
    %p142 = scmp.eq.s32.totalorder %s16, 1
    %p143 = por %p141, %p142
    %p145 = scmp.ne.s32.totalorder %s128, %s144
    %p146 = scmp.eq.s32.totalorder %s16, 0
    %p147 = por %p145, %p146
    %p148 = scmp.le.s32.totalorder 1, %s10
    %p149 = scmp.lt.s32.totalorder %s10, 3
    %p150 = pnand %p148, %p149
    %p151 = pneg %p150
    // Predicated region
    $region9: #{flow_guided_seg_loss.1} parent=5 // pred_check
      _
    $region10: #{flow_guided_seg_loss.1} parent=5 // pred_check_branch
      %153 = sbr.rel (%p150) target = $region12
    $region11: #{flow_guided_seg_loss.1} parent=5 // pred_region
      %s154 = ssub.s32 %s10, 1
    $region12: #{flow_guided_seg_loss.1} parent=5 // pred_fallthru
      _
    %p155 = scmp.lt.s32.totalorder %s10, 2
    // Predicated region
    $region13: #{flow_guided_seg_loss.1} parent=5 // pred_check
      %p156 = pneg %p155
    $region14: #{flow_guided_seg_loss.1} parent=5 // pred_check_branch
      %158 = sbr.rel (%p156) target = $region16
    $region15: #{flow_guided_seg_loss.1} parent=5 // pred_region
      // Predicated region
      $region17: #{flow_guided_seg_loss.1} parent=15 // pred_check
        %p159 = pneg %p30
      $region18: #{flow_guided_seg_loss.1} parent=15 // pred_check_branch
        %161 = sbr.rel (%p159) target = $region20
      $region19: #{flow_guided_seg_loss.1} parent=15 // pred_region
        %p162 = scmp.lt.s32.totalorder %s10, 1
        %s163 = scalar_select %p162, %s10, 1
        %s164 = smul.addr %s163, 4
        %s165 = smul.addr %s164, 8
        %s166 = scalar_lea.vmem %s0, %s165
      $region20: #{flow_guided_seg_loss.1} parent=15 // pred_fallthru
        _
      // Predicated region
      $region21: #{flow_guided_seg_loss.1} parent=15 // pred_check
        %p167 = pneg %p56
      $region22: #{flow_guided_seg_loss.1} parent=15 // pred_check_branch
        %169 = sbr.rel (%p167) target = $region24
      $region23: #{flow_guided_seg_loss.1} parent=15 // pred_region
        %p170 = scmp.lt.s32.totalorder %s10, 1
        %s171 = scalar_select %p170, %s10, 1
        %s172 = smul.addr %s171, 8
        %s173 = smul.addr %s172, 8
        %s174 = scalar_lea.vmem %s1, %s173
      $region24: #{flow_guided_seg_loss.1} parent=15 // pred_fallthru
        _
      // Predicated region
      $region25: #{flow_guided_seg_loss.1} parent=15 // pred_check
        %p175 = pneg %p82
      $region26: #{flow_guided_seg_loss.1} parent=15 // pred_check_branch
        %177 = sbr.rel (%p175) target = $region28
      $region27: #{flow_guided_seg_loss.1} parent=15 // pred_region
        %p178 = scmp.lt.s32.totalorder %s10, 1
        %s179 = scalar_select %p178, %s10, 1
        %s180 = smul.addr %s179, 16
        %s181 = smul.addr %s180, 4
        %s182 = scalar_lea.vmem %s2, %s181
      $region28: #{flow_guided_seg_loss.1} parent=15 // pred_fallthru
        _
      // Predicated region
      $region29: #{flow_guided_seg_loss.1} parent=15 // pred_check
        %p183 = pneg %p108
      $region30: #{flow_guided_seg_loss.1} parent=15 // pred_check_branch
        %185 = sbr.rel (%p183) target = $region32
      $region31: #{flow_guided_seg_loss.1} parent=15 // pred_region
        %p186 = scmp.lt.s32.totalorder %s10, 1
        %s187 = scalar_select %p186, %s10, 1
        %s188 = smul.addr %s187, 4
        %s189 = smul.addr %s188, 8
        %s190 = scalar_lea.vmem %s3, %s189
      $region32: #{flow_guided_seg_loss.1} parent=15 // pred_fallthru
        _
    $region16: #{flow_guided_seg_loss.1} parent=5 // pred_fallthru
      _
    %p191 = scmp.le.s32.totalorder 1, %s10
    %p192 = scmp.lt.s32.totalorder %s10, 3
    %p193 = pnand %p191, %p192
    %p194 = pneg %p193
    // Predicated region
    $region33: #{flow_guided_seg_loss.1} parent=5 // pred_check
      _
    $region34: #{flow_guided_seg_loss.1} parent=5 // pred_check_branch
      %196 = sbr.rel (%p193) target = $region36
    $region35: #{flow_guided_seg_loss.1} parent=5 // pred_region
      %s197 = ssub.s32 %s10, 1
      %p198 = scmp.lt.s32.totalorder %s15, 1
      %s199 = scalar_select %p198, %s15, 1
      %s200 = smul.addr %s199, 4
      %s201 = smul.addr %s200, 8
      %s202 = scalar_lea.vmem %s0, %s201
      %p203 = pneg %p36
      %p204 = pneg %p33
      %p205 = scmp.lt.s32.totalorder %s15, 1
      %s206 = scalar_select %p205, %s15, 1
      %s207 = smul.addr %s206, 8
      %s208 = smul.addr %s207, 8
      %s209 = scalar_lea.vmem %s1, %s208
      %p210 = pneg %p62
      %p211 = pneg %p59
      %p212 = scmp.lt.s32.totalorder %s15, 1
      %s213 = scalar_select %p212, %s15, 1
      %s214 = smul.addr %s213, 16
      %s215 = smul.addr %s214, 4
      %s216 = scalar_lea.vmem %s2, %s215
      %p217 = pneg %p88
      %p218 = pneg %p85
      %p219 = scmp.lt.s32.totalorder %s15, 1
      %s220 = scalar_select %p219, %s15, 1
      %s221 = smul.addr %s220, 4
      %s222 = smul.addr %s221, 8
      %s223 = scalar_lea.vmem %s3, %s222
      %p224 = pneg %p114
      %p225 = pneg %p111
      %p226 = pneg %p140
      %p227 = pneg %p137
      %p228 = scmp.lt.s32.totalorder %s15, 1
      %s229 = scalar_select %p228, %s15, 1
      %s230 = smul.addr %s229, 8
      %s231 = scalar_lea.vmem %s4, %s230
      %p232 = scmp.lt.s32.totalorder %s15, 1
      %s233 = scalar_select %p232, %s15, 1
      %s234 = smul.addr %s233, 4
      %s235 = smul.addr %s234, 8
      %s236 = scalar_lea.vmem %s0, %s235
      %p237 = scmp.lt.s32.totalorder %s15, 1
      %s238 = scalar_select %p237, %s15, 1
      %s239 = smul.addr %s238, 8
      %s240 = smul.addr %s239, 8
      %s241 = scalar_lea.vmem %s1, %s240
      %p242 = scmp.lt.s32.totalorder %s15, 1
      %s243 = scalar_select %p242, %s15, 1
      %s244 = smul.addr %s243, 16
      %s245 = smul.addr %s244, 4
      %s246 = scalar_lea.vmem %s2, %s245
      %p247 = scmp.lt.s32.totalorder %s15, 1
      %s248 = scalar_select %p247, %s15, 1
      %s249 = smul.addr %s248, 4
      %s250 = smul.addr %s249, 8
      %s251 = scalar_lea.vmem %s3, %s250
      %p252 = scmp.lt.s32.totalorder %s15, 1
      %s253 = scalar_select %p252, %s15, 1
      %s254 = smul.addr %s253, 8
      %s255 = scalar_lea.vmem %s4, %s254
      %v257 = vld [vmem:[%s236] sm:$0xff]
      %v258 = vld [vmem:[%s236 + $0x8] sm:$0xff]
      %v259 = vld [vmem:[%s236 + $0x10] sm:$0xff]
      %v260 = vld [vmem:[%s236 + $0x18] sm:$0xff]
      %v261 = vld [vmem:[%s241] sm:$0xff]
      %v262 = vld [vmem:[%s241 + $0x8] sm:$0xff]
      %v263 = vld [vmem:[%s241 + $0x10] sm:$0xff]
      %v264 = vld [vmem:[%s241 + $0x18] sm:$0xff]
      %v265 = vld [vmem:[%s241 + $0x20] sm:$0xff]
      %v266 = vld [vmem:[%s241 + $0x28] sm:$0xff]
      %v267 = vld [vmem:[%s241 + $0x30] sm:$0xff]
      %v268 = vld [vmem:[%s241 + $0x38] sm:$0xff]
      %v269 = vmul.f32 %v261, %v261
      %v270 = vmul.f32 %v263, %v263
      %v271 = vmul.f32 %v265, %v265
      %v272 = vmul.f32 %v267, %v267
      %v273 = vmul.f32 %v262, %v262
      %v274 = vmul.f32 %v264, %v264
      %v275 = vmul.f32 %v266, %v266
      %v276 = vmul.f32 %v268, %v268
      %v277 = vadd.f32 %v269, %v273
      %v278 = vadd.f32 %v270, %v274
      %v279 = vadd.f32 %v271, %v275
      %v280 = vadd.f32 %v272, %v276
      %v281 = vrsqrt.pop %v277
      %v282 = vmul.f32 %v277, %v281
      %vm283 = vcmp.eq.f32.partialorder %v277, inf
      %v284 = vsel %vm283, %v277, %v282
      %vm285 = vcmp.eq.f32.partialorder %v277, 0.0
      %v286 = vand.u32 %v277, 2147483648
      %v287 = vsel %vm285, %v286, %v284
      %v288 = vrsqrt.pop %v278
      %v289 = vmul.f32 %v278, %v288
      %vm290 = vcmp.eq.f32.partialorder %v278, inf
      %v291 = vsel %vm290, %v278, %v289
      %vm292 = vcmp.eq.f32.partialorder %v278, 0.0
      %v293 = vand.u32 %v278, 2147483648
      %v294 = vsel %vm292, %v293, %v291
      %v295 = vrsqrt.pop %v279
      %v296 = vmul.f32 %v279, %v295
      %vm297 = vcmp.eq.f32.partialorder %v279, inf
      %v298 = vsel %vm297, %v279, %v296
      %vm299 = vcmp.eq.f32.partialorder %v279, 0.0
      %v300 = vand.u32 %v279, 2147483648
      %v301 = vsel %vm299, %v300, %v298
      %v302 = vrsqrt.pop %v280
      %v303 = vmul.f32 %v280, %v302
      %vm304 = vcmp.eq.f32.partialorder %v280, inf
      %v305 = vsel %vm304, %v280, %v303
      %vm306 = vcmp.eq.f32.partialorder %v280, 0.0
      %v307 = vand.u32 %v280, 2147483648
      %v308 = vsel %vm306, %v307, %v305
      %vm309 = vcmask 64512
      %v310 = vsel %vm309, %v287, -inf
      %v311 = vsel %vm309, %v294, -inf
      %v312 = vsel %vm309, %v301, -inf
      %v313 = vsel %vm309, %v308, -inf
      %v314 = vmax.f32 %v310, %v311
      %v315 = vmax.f32 %v312, %v313
      %v316 = vmax.f32 %v314, %v315
      %317 = vmax.xlane.f32.xlu0 %v316
      %v318 = vpop.xlane.xlu0 %317
      %v319 = vrot.slane %v318, 4
      %v320 = vmax.f32 %v318, %v319
      %v321 = vrot.slane %v320, 2
      %v322 = vmax.f32 %v320, %v321
      %v323 = vrot.slane %v322, 1
      %v324 = vmax.f32 %v322, %v323
      %s325 = vtos %v324
      %v326 = vsel %vm309, %v261, 0.0
      %v327 = vsel %vm309, %v263, 0.0
      %v328 = vadd.f32 %v326, %v327
      %v329 = vsel %vm309, %v265, 0.0
      %v330 = vadd.f32 %v328, %v329
      %v331 = vsel %vm309, %v267, 0.0
      %v332 = vadd.f32 %v330, %v331
      %333 = vadd.xlane.f32.xlu0 %v332
      %v334 = vpop.xlane.xlu0 %333
      %v335 = vrot.slane %v334, 4
      %v336 = vadd.f32 %v334, %v335
      %v337 = vrot.slane %v336, 2
      %v338 = vadd.f32 %v336, %v337
      %v339 = vrot.slane %v338, 1
      %v340 = vadd.f32 %v338, %v339
      %s341 = vtos %v340
      %v342 = vrcp.pop 256.0
      %s343 = vtos %v342
      %s344 = smul.f32 %s341, %s343
      %v345 = vstv %s344
      %v346 = vsub.f32 %v261, %v345
      %v347 = vsub.f32 %v263, %v345
      %v348 = vsub.f32 %v265, %v345
      %v349 = vsub.f32 %v267, %v345
      %v350 = vsel %vm309, %v262, 0.0
      %v351 = vsel %vm309, %v264, 0.0
      %v352 = vadd.f32 %v350, %v351
      %v353 = vsel %vm309, %v266, 0.0
      %v354 = vadd.f32 %v352, %v353
      %v355 = vsel %vm309, %v268, 0.0
      %v356 = vadd.f32 %v354, %v355
      %357 = vadd.xlane.f32.xlu0 %v356
      %v358 = vpop.xlane.xlu0 %357
      %v359 = vrot.slane %v358, 4
      %v360 = vadd.f32 %v358, %v359
      %v361 = vrot.slane %v360, 2
      %v362 = vadd.f32 %v360, %v361
      %v363 = vrot.slane %v362, 1
      %v364 = vadd.f32 %v362, %v363
      %s365 = vtos %v364
      %v366 = vrcp.pop 256.0
      %s367 = vtos %v366
      %s368 = smul.f32 %s365, %s367
      %v369 = vstv %s368
      %v370 = vsub.f32 %v262, %v369
      %v371 = vsub.f32 %v264, %v369
      %v372 = vsub.f32 %v266, %v369
      %v373 = vsub.f32 %v268, %v369
      %v374 = vmul.f32 %v346, %v346
      %v375 = vmul.f32 %v347, %v347
      %v376 = vmul.f32 %v348, %v348
      %v377 = vmul.f32 %v349, %v349
      %v378 = vmul.f32 %v370, %v370
      %v379 = vmul.f32 %v371, %v371
      %v380 = vmul.f32 %v372, %v372
      %v381 = vmul.f32 %v373, %v373
      %v382 = vadd.f32 %v374, %v378
      %v383 = vadd.f32 %v375, %v379
      %v384 = vadd.f32 %v376, %v380
      %v385 = vadd.f32 %v377, %v381
      %v386 = vsel %vm309, %v382, -inf
      %v387 = vsel %vm309, %v383, -inf
      %v388 = vsel %vm309, %v384, -inf
      %v389 = vsel %vm309, %v385, -inf
      %v390 = vmax.f32 %v386, %v387
      %v391 = vmax.f32 %v388, %v389
      %v392 = vmax.f32 %v390, %v391
      %393 = vmax.xlane.f32.xlu0 %v392
      %v394 = vpop.xlane.xlu0 %393
      %v395 = vrot.slane %v394, 4
      %v396 = vmax.f32 %v394, %v395
      %v397 = vrot.slane %v396, 2
      %v398 = vmax.f32 %v396, %v397
      %v399 = vrot.slane %v398, 1
      %v400 = vmax.f32 %v398, %v399
      %s401 = vtos %v400
      %s402 = smul.f32 %s401, 0.04
      %v403 = vstv %s402
      %vm404 = vcmp.gt.f32.partialorder %v382, %v403
      %vm405 = vcmp.gt.f32.partialorder %v383, %v403
      %vm406 = vcmp.gt.f32.partialorder %v384, %v403
      %vm407 = vcmp.gt.f32.partialorder %v385, %v403
      %v408 = vsel %vm404, 1, 0
      %v409 = vsel %vm405, 1, 0
      %v410 = vsel %vm406, 1, 0
      %v411 = vsel %vm407, 1, 0
      %v412 = vcvt.s32.f32 %v408
      %v413 = vcvt.s32.f32 %v409
      %v414 = vcvt.s32.f32 %v410
      %v415 = vcvt.s32.f32 %v411
      %v416 = vmax.f32 %v257, 0.0
      %v417 = vmax.f32 %v258, 0.0
      %v418 = vmax.f32 %v259, 0.0
      %v419 = vmax.f32 %v260, 0.0
      %v420 = vmul.f32 %v257, %v412
      %v421 = vmul.f32 %v258, %v413
      %v422 = vmul.f32 %v259, %v414
      %v423 = vmul.f32 %v260, %v415
      %v424 = vsub.f32 %v416, %v420
      %v425 = vsub.f32 %v417, %v421
      %v426 = vsub.f32 %v418, %v422
      %v427 = vsub.f32 %v419, %v423
      %v428 = vand.u32 2147483647, %v257
      %v429 = vand.u32 2147483647, %v258
      %v430 = vand.u32 2147483647, %v259
      %v431 = vand.u32 2147483647, %v260
      %v432 = vsub.f32 0.0, %v428
      %v433 = vsub.f32 0.0, %v429
      %v434 = vsub.f32 0.0, %v430
      %v435 = vsub.f32 0.0, %v431
      %v436 = vmul.f32 %v432, 1.442695
      %v437 = vpow.pop %v436
      %v438 = vmul.f32 %v433, 1.442695
      %v439 = vpow.pop %v438
      %v440 = vmul.f32 %v434, 1.442695
      %v441 = vpow.pop %v440
      %v442 = vmul.f32 %v435, 1.442695
      %v443 = vpow.pop %v442
      %v444 = vadd.f32 %v437, 1.0
      %v445 = vadd.f32 %v439, 1.0
      %v446 = vadd.f32 %v441, 1.0
      %v447 = vadd.f32 %v443, 1.0
      %v448 = vlog2.pop %v444
      %v449 = vmul.f32 %v448, 0.6931472
      %v450 = vlog2.pop %v445
      %v451 = vmul.f32 %v450, 0.6931472
      %v452 = vlog2.pop %v446
      %v453 = vmul.f32 %v452, 0.6931472
      %v454 = vlog2.pop %v447
      %v455 = vmul.f32 %v454, 0.6931472
      %v456 = vadd.f32 %v424, %v449
      %v457 = vadd.f32 %v425, %v451
      %v458 = vadd.f32 %v426, %v453
      %v459 = vadd.f32 %v427, %v455
      %v460 = vsel %vm309, %v456, 0.0
      %v461 = vsel %vm309, %v457, 0.0
      %v462 = vadd.f32 %v460, %v461
      %v463 = vsel %vm309, %v458, 0.0
      %v464 = vadd.f32 %v462, %v463
      %v465 = vsel %vm309, %v459, 0.0
      %v466 = vadd.f32 %v464, %v465
      %467 = vadd.xlane.f32.xlu0 %v466
      %v468 = vpop.xlane.xlu0 %467
      %v469 = vrot.slane %v468, 4
      %v470 = vadd.f32 %v468, %v469
      %v471 = vrot.slane %v470, 2
      %v472 = vadd.f32 %v470, %v471
      %v473 = vrot.slane %v472, 1
      %v474 = vadd.f32 %v472, %v473
      %s475 = vtos %v474
      %s476 = sadd.f32 %s325, 1e-06
      %v477 = vstv %s476
      %v478 = vrcp.pop %v477
      %s479 = vtos %v478
      %v480 = vstv %s479
      %v481 = vmul.f32 %v287, %v480
      %v482 = vmul.f32 %v294, %v480
      %v483 = vmul.f32 %v301, %v480
      %v484 = vmul.f32 %v308, %v480
      %v485 = vsub.f32 %v481, 0.1
      %v486 = vsub.f32 %v482, 0.1
      %v487 = vsub.f32 %v483, 0.1
      %v488 = vsub.f32 %v484, 0.1
      %v489 = vmax.f32 %v485, 0.0
      %v490 = vmax.f32 %v486, 0.0
      %v491 = vmax.f32 %v487, 0.0
      %v492 = vmax.f32 %v488, 0.0
      %v493 = vld [vmem:[%s246] sm:$0xf]
      %v494 = vld [vmem:[%s246 + $0x4] sm:$0xf]
      %v495 = vld [vmem:[%s246 + $0x8] sm:$0xf]
      %v496 = vld [vmem:[%s246 + $0xc] sm:$0xf]
      %v497 = vld [vmem:[%s246 + $0x10] sm:$0xf]
      %v498 = vld [vmem:[%s246 + $0x14] sm:$0xf]
      %v499 = vld [vmem:[%s246 + $0x18] sm:$0xf]
      %v500 = vld [vmem:[%s246 + $0x1c] sm:$0xf]
      %v501 = vld [vmem:[%s246 + $0x20] sm:$0xf]
      %v502 = vld [vmem:[%s246 + $0x24] sm:$0xf]
      %v503 = vld [vmem:[%s246 + $0x28] sm:$0xf]
      %v504 = vld [vmem:[%s246 + $0x2c] sm:$0xf]
      %v505 = vld [vmem:[%s246 + $0x30] sm:$0xf]
      %v506 = vld [vmem:[%s246 + $0x34] sm:$0xf]
      %v507 = vld [vmem:[%s246 + $0x38] sm:$0xf]
      %v508 = vld [vmem:[%s246 + $0x3c] sm:$0xf]
      %v509 = vmul.bf16 %v493, %v493
      %v510 = vmul.bf16 %v494, %v494
      %v511 = vmul.bf16 %v495, %v495
      %v512 = vmul.bf16 %v496, %v496
      %v513 = vmul.bf16 %v497, %v497
      %v514 = vmul.bf16 %v498, %v498
      %v515 = vmul.bf16 %v499, %v499
      %v516 = vmul.bf16 %v500, %v500
      %v517 = vmul.bf16 %v501, %v501
      %v518 = vmul.bf16 %v502, %v502
      %v519 = vmul.bf16 %v503, %v503
      %v520 = vmul.bf16 %v504, %v504
      %v521 = vmul.bf16 %v505, %v505
      %v522 = vmul.bf16 %v506, %v506
      %v523 = vmul.bf16 %v507, %v507
      %v524 = vmul.bf16 %v508, %v508
      %v525 = vunpack.c.l.bf16 %v509
      %v526 = vunpack.c.l.bf16 %v510
      %v527 = vunpack.c.l.bf16 %v511
      %v528 = vunpack.c.l.bf16 %v512
      %v529 = vunpack.c.l.bf16 %v513
      %v530 = vunpack.c.l.bf16 %v514
      %v531 = vunpack.c.l.bf16 %v515
      %v532 = vunpack.c.l.bf16 %v516
      %v533 = vunpack.c.l.bf16 %v517
      %v534 = vunpack.c.l.bf16 %v518
      %v535 = vunpack.c.l.bf16 %v519
      %v536 = vunpack.c.l.bf16 %v520
      %v537 = vunpack.c.l.bf16 %v521
      %v538 = vunpack.c.l.bf16 %v522
      %v539 = vunpack.c.l.bf16 %v523
      %v540 = vunpack.c.l.bf16 %v524
      %v541 = vsel %vm309, %v525, 0.0
      %v542 = vsel %vm309, %v526, 0.0
      %v543 = vadd.f32 %v541, %v542
      %v544 = vsel %vm309, %v527, 0.0
      %v545 = vadd.f32 %v543, %v544
      %v546 = vsel %vm309, %v528, 0.0
      %v547 = vadd.f32 %v545, %v546
      %v548 = vsel %vm309, %v529, 0.0
      %v549 = vsel %vm309, %v530, 0.0
      %v550 = vadd.f32 %v548, %v549
      %v551 = vsel %vm309, %v531, 0.0
      %v552 = vadd.f32 %v550, %v551
      %v553 = vsel %vm309, %v532, 0.0
      %v554 = vadd.f32 %v552, %v553
      %v555 = vsel %vm309, %v533, 0.0
      %v556 = vsel %vm309, %v534, 0.0
      %v557 = vadd.f32 %v555, %v556
      %v558 = vsel %vm309, %v535, 0.0
      %v559 = vadd.f32 %v557, %v558
      %v560 = vsel %vm309, %v536, 0.0
      %v561 = vadd.f32 %v559, %v560
      %v562 = vsel %vm309, %v537, 0.0
      %v563 = vsel %vm309, %v538, 0.0
      %v564 = vadd.f32 %v562, %v563
      %v565 = vsel %vm309, %v539, 0.0
      %v566 = vadd.f32 %v564, %v565
      %v567 = vsel %vm309, %v540, 0.0
      %v568 = vadd.f32 %v566, %v567
      %v569 = vmax.f32 %v547, 1e-24
      %v570 = vmax.f32 %v554, 1e-24
      %v571 = vmax.f32 %v561, 1e-24
      %v572 = vmax.f32 %v568, 1e-24
      %v573 = vrsqrt.pop %v569
      %v574 = vrsqrt.pop %v570
      %v575 = vrsqrt.pop %v571
      %v576 = vrsqrt.pop %v572
      %v577 = vld [vmem:[%s251] sm:$0xff]
      %v578 = vld [vmem:[%s251 + $0x10] sm:$0xff]
      %vm579 = vcmp.gt.f32.partialorder %v577, -inf
      %v580 = vsel %vm579, %v577, -inf
      %v581 = vsel %vm579, %v573, 0.0
      %v582 = vsel %vm579, 1, 0
      %vm583 = vcmp.eq.s32.totalorder %v582, 1
      %vm584 = vmpackc.low %vm583, %vm583
      %v585 = vsel %vm584, %v493, 0
      %v586 = vsel %vm584, %v494, 0
      %v587 = vsel %vm584, %v495, 0
      %v588 = vsel %vm584, %v496, 0
      %v589 = vsel %vm583, %v261, 0.0
      %v590 = vsel %vm583, %v262, 0.0
      %vm591 = vcmp.gt.f32.partialorder %v578, %v580
      %v592 = vsel %vm591, %v578, %v580
      %v593 = vsel %vm591, %v575, %v581
      %v594 = vsel %vm591, 1, 0
      %vm595 = vcmp.eq.s32.totalorder %v594, 1
      %vm596 = vmpackc.low %vm595, %vm595
      %v597 = vsel %vm596, %v501, %v585
      %v598 = vsel %vm596, %v502, %v586
      %v599 = vsel %vm596, %v503, %v587
      %v600 = vsel %vm596, %v504, %v588
      %v601 = vsel %vm595, %v265, %v589
      %v602 = vsel %vm595, %v266, %v590
      %v604 = vrot.slane %v592, 7
      %vm606 = vcmp.gt.f32.partialorder %v577, %v604
      %v607 = vsel %vm606, %v577, %v604
      %v609 = vrot.slane %v593, 7
      %v611 = vsel %vm606, %v573, %v609
      %v612 = vsel %vm606, 1, 0
      %vm613 = vcmp.eq.s32.totalorder %v612, 1
      %vm614 = vmpackc.low %vm613, %vm613
      %v616 = vshrl.u32 %v597, 16
      %v618 = vrot.slane %v616, 7
      %v619 = vshll.u32 %v597, 16
      %v621 = vor.u32 %v618, %v619
      %v623 = vshrl.u32 %v598, 16
      %v625 = vrot.slane %v623, 7
      %v626 = vshll.u32 %v598, 16
      %v628 = vor.u32 %v625, %v626
      %v630 = vshrl.u32 %v599, 16
      %v632 = vrot.slane %v630, 7
      %v633 = vshll.u32 %v599, 16
      %v635 = vor.u32 %v632, %v633
      %v637 = vshrl.u32 %v600, 16
      %v639 = vrot.slane %v637, 7
      %v640 = vshll.u32 %v600, 16
      %v642 = vor.u32 %v639, %v640
      %v647 = vsel %vm614, %v493, %v621
      %v648 = vsel %vm614, %v494, %v628
      %v649 = vsel %vm614, %v495, %v635
      %v650 = vsel %vm614, %v496, %v642
      %v653 = vrot.slane %v601, 7
      %v654 = vrot.slane %v602, 7
      %v657 = vsel %vm613, %v261, %v653
      %v658 = vsel %vm613, %v262, %v654
      %vm659 = vcmp.gt.f32.partialorder %v578, %v607
      %v660 = vsel %vm659, %v578, %v607
      %v661 = vsel %vm659, %v575, %v611
      %v662 = vsel %vm659, 1, 0
      %vm663 = vcmp.eq.s32.totalorder %v662, 1
      %vm664 = vmpackc.low %vm663, %vm663
      %v665 = vsel %vm664, %v501, %v647
      %v666 = vsel %vm664, %v502, %v648
      %v667 = vsel %vm664, %v503, %v649
      %v668 = vsel %vm664, %v504, %v650
      %v669 = vsel %vm663, %v265, %v657
      %v670 = vsel %vm663, %v266, %v658
      %v672 = vrot.slane %v660, 7
      %vm674 = vcmp.gt.f32.partialorder %v577, %v672
      %v675 = vsel %vm674, %v577, %v672
      %v677 = vrot.slane %v661, 7
      %v679 = vsel %vm674, %v573, %v677
      %v680 = vsel %vm674, 1, 0
      %vm681 = vcmp.eq.s32.totalorder %v680, 1
      %vm682 = vmpackc.low %vm681, %vm681
      %v684 = vshrl.u32 %v665, 16
      %v686 = vrot.slane %v684, 7
      %v687 = vshll.u32 %v665, 16
      %v689 = vor.u32 %v686, %v687
      %v691 = vshrl.u32 %v666, 16
      %v693 = vrot.slane %v691, 7
      %v694 = vshll.u32 %v666, 16
      %v696 = vor.u32 %v693, %v694
      %v698 = vshrl.u32 %v667, 16
      %v700 = vrot.slane %v698, 7
      %v701 = vshll.u32 %v667, 16
      %v703 = vor.u32 %v700, %v701
      %v705 = vshrl.u32 %v668, 16
      %v707 = vrot.slane %v705, 7
      %v708 = vshll.u32 %v668, 16
      %v710 = vor.u32 %v707, %v708
      %v715 = vsel %vm682, %v493, %v689
      %v716 = vsel %vm682, %v494, %v696
      %v717 = vsel %vm682, %v495, %v703
      %v718 = vsel %vm682, %v496, %v710
      %v721 = vrot.slane %v669, 7
      %v722 = vrot.slane %v670, 7
      %v725 = vsel %vm681, %v261, %v721
      %v726 = vsel %vm681, %v262, %v722
      %s727 = scalar_lea.vmem %s251, 8
      %v728 = vld [vmem:[%s727] sm:$0xff]
      %v729 = vld [vmem:[%s727 + $0x10] sm:$0xff]
      %s730 = scalar_lea.vmem %s246, 16
      %v731 = vld [vmem:[%s730] sm:$0xf]
      %v732 = vld [vmem:[%s730 + $0x4] sm:$0xf]
      %v733 = vld [vmem:[%s730 + $0x8] sm:$0xf]
      %v734 = vld [vmem:[%s730 + $0xc] sm:$0xf]
      %v735 = vld [vmem:[%s730 + $0x20] sm:$0xf]
      %v736 = vld [vmem:[%s730 + $0x24] sm:$0xf]
      %v737 = vld [vmem:[%s730 + $0x28] sm:$0xf]
      %v738 = vld [vmem:[%s730 + $0x2c] sm:$0xf]
      %s739 = scalar_lea.vmem %s241, 16
      %v740 = vld [vmem:[%s739] sm:$0xff]
      %v741 = vld [vmem:[%s739 + $0x8] sm:$0xff]
      %v742 = vld [vmem:[%s739 + $0x20] sm:$0xff]
      %v743 = vld [vmem:[%s739 + $0x28] sm:$0xff]
      %v745 = vrot.slane %v675, 2
      %vm747 = vcmp.gt.f32.partialorder %v728, %v745
      %v748 = vsel %vm747, %v728, %v745
      %v750 = vrot.slane %v679, 2
      %v752 = vsel %vm747, %v574, %v750
      %v753 = vsel %vm747, 1, 0
      %vm754 = vcmp.eq.s32.totalorder %v753, 1
      %vm755 = vmpackc.low %vm754, %vm754
      %v760 = vrot.slane %v715, 5
      %v761 = vrot.slane %v760, 4
      %v762 = vrot.slane %v716, 5
      %v763 = vrot.slane %v762, 4
      %v764 = vrot.slane %v717, 5
      %v765 = vrot.slane %v764, 4
      %v766 = vrot.slane %v718, 5
      %v767 = vrot.slane %v766, 4
      %v772 = vsel %vm755, %v731, %v761
      %v773 = vsel %vm755, %v732, %v763
      %v774 = vsel %vm755, %v733, %v765
      %v775 = vsel %vm755, %v734, %v767
      %v778 = vrot.slane %v725, 2
      %v779 = vrot.slane %v726, 2
      %v782 = vsel %vm754, %v740, %v778
      %v783 = vsel %vm754, %v741, %v779
      %vm784 = vcmp.gt.f32.partialorder %v729, %v748
      %v785 = vsel %vm784, %v729, %v748
      %v786 = vsel %vm784, %v576, %v752
      %v787 = vsel %vm784, 1, 0
      %vm788 = vcmp.eq.s32.totalorder %v787, 1
      %vm789 = vmpackc.low %vm788, %vm788
      %v790 = vsel %vm789, %v735, %v772
      %v791 = vsel %vm789, %v736, %v773
      %v792 = vsel %vm789, %v737, %v774
      %v793 = vsel %vm789, %v738, %v775
      %v794 = vsel %vm788, %v742, %v782
      %v795 = vsel %vm788, %v743, %v783
      %v797 = vrot.slane %v785, 7
      %vm799 = vcmp.gt.f32.partialorder %v728, %v797
      %v800 = vsel %vm799, %v728, %v797
      %v802 = vrot.slane %v786, 7
      %v804 = vsel %vm799, %v574, %v802
      %v805 = vsel %vm799, 1, 0
      %vm806 = vcmp.eq.s32.totalorder %v805, 1
      %vm807 = vmpackc.low %vm806, %vm806
      %v809 = vshrl.u32 %v790, 16
      %v811 = vrot.slane %v809, 7
      %v812 = vshll.u32 %v790, 16
      %v814 = vor.u32 %v811, %v812
      %v816 = vshrl.u32 %v791, 16
      %v818 = vrot.slane %v816, 7
      %v819 = vshll.u32 %v791, 16
      %v821 = vor.u32 %v818, %v819
      %v823 = vshrl.u32 %v792, 16
      %v825 = vrot.slane %v823, 7
      %v826 = vshll.u32 %v792, 16
      %v828 = vor.u32 %v825, %v826
      %v830 = vshrl.u32 %v793, 16
      %v832 = vrot.slane %v830, 7
      %v833 = vshll.u32 %v793, 16
      %v835 = vor.u32 %v832, %v833
      %v840 = vsel %vm807, %v731, %v814
      %v841 = vsel %vm807, %v732, %v821
      %v842 = vsel %vm807, %v733, %v828
      %v843 = vsel %vm807, %v734, %v835
      %v846 = vrot.slane %v794, 7
      %v847 = vrot.slane %v795, 7
      %v850 = vsel %vm806, %v740, %v846
      %v851 = vsel %vm806, %v741, %v847
      %vm852 = vcmp.gt.f32.partialorder %v729, %v800
      %v853 = vsel %vm852, %v729, %v800
      %v854 = vsel %vm852, %v576, %v804
      %v855 = vsel %vm852, 1, 0
      %vm856 = vcmp.eq.s32.totalorder %v855, 1
      %vm857 = vmpackc.low %vm856, %vm856
      %v858 = vsel %vm857, %v735, %v840
      %v859 = vsel %vm857, %v736, %v841
      %v860 = vsel %vm857, %v737, %v842
      %v861 = vsel %vm857, %v738, %v843
      %v862 = vsel %vm856, %v742, %v850
      %v863 = vsel %vm856, %v743, %v851
      %v865 = vrot.slane %v853, 7
      %vm867 = vcmp.gt.f32.partialorder %v728, %v865
      %v868 = vsel %vm867, %v728, %v865
      %v870 = vrot.slane %v854, 7
      %v872 = vsel %vm867, %v574, %v870
      %v873 = vsel %vm867, 1, 0
      %vm874 = vcmp.eq.s32.totalorder %v873, 1
      %vm875 = vmpackc.low %vm874, %vm874
      %v877 = vshrl.u32 %v858, 16
      %v879 = vrot.slane %v877, 7
      %v880 = vshll.u32 %v858, 16
      %v882 = vor.u32 %v879, %v880
      %v884 = vshrl.u32 %v859, 16
      %v886 = vrot.slane %v884, 7
      %v887 = vshll.u32 %v859, 16
      %v889 = vor.u32 %v886, %v887
      %v891 = vshrl.u32 %v860, 16
      %v893 = vrot.slane %v891, 7
      %v894 = vshll.u32 %v860, 16
      %v896 = vor.u32 %v893, %v894
      %v898 = vshrl.u32 %v861, 16
      %v900 = vrot.slane %v898, 7
      %v901 = vshll.u32 %v861, 16
      %v903 = vor.u32 %v900, %v901
      %v908 = vsel %vm875, %v731, %v882
      %v909 = vsel %vm875, %v732, %v889
      %v910 = vsel %vm875, %v733, %v896
      %v911 = vsel %vm875, %v734, %v903
      %v914 = vrot.slane %v862, 7
      %v915 = vrot.slane %v863, 7
      %v918 = vsel %vm874, %v740, %v914
      %v919 = vsel %vm874, %v741, %v915
      %v921 = vrot.slane %v868, 2
      %922 = vrot.lane.b32.xlu0 %v921, 1
      %v923 = vpop.permute.xlu0 %922
      %vm925 = vcmp.gt.f32.partialorder %v577, %v923
      %v926 = vsel %vm925, %v577, %v923
      %v928 = vrot.slane %v872, 2
      %929 = vrot.lane.b32.xlu0 %v928, 1
      %v930 = vpop.permute.xlu0 %929
      %v932 = vsel %vm925, %v573, %v930
      %v933 = vsel %vm925, 1, 0
      %vm934 = vcmp.eq.s32.totalorder %v933, 1
      %vm935 = vmpackc.low %vm934, %vm934
      %v940 = vrot.slane %v908, 5
      %v941 = vrot.slane %v940, 4
      %v942 = vrot.slane %v909, 5
      %v943 = vrot.slane %v942, 4
      %v944 = vrot.slane %v910, 5
      %v945 = vrot.slane %v944, 4
      %v946 = vrot.slane %v911, 5
      %v947 = vrot.slane %v946, 4
      %948 = vrot.lane.b32.xlu0 %v941, 1
      %v949 = vpop.permute.xlu0 %948
      %950 = vrot.lane.b32.xlu0 %v943, 1
      %v951 = vpop.permute.xlu0 %950
      %952 = vrot.lane.b32.xlu0 %v945, 1
      %v953 = vpop.permute.xlu0 %952
      %954 = vrot.lane.b32.xlu0 %v947, 1
      %v955 = vpop.permute.xlu0 %954
      %v960 = vsel %vm935, %v493, %v949
      %v961 = vsel %vm935, %v494, %v951
      %v962 = vsel %vm935, %v495, %v953
      %v963 = vsel %vm935, %v496, %v955
      %v966 = vrot.slane %v918, 2
      %v967 = vrot.slane %v919, 2
      %968 = vrot.lane.b32.xlu0 %v966, 1
      %v969 = vpop.permute.xlu0 %968
      %970 = vrot.lane.b32.xlu0 %v967, 1
      %v971 = vpop.permute.xlu0 %970
      %v974 = vsel %vm934, %v261, %v969
      %v975 = vsel %vm934, %v262, %v971
      %vm976 = vcmp.gt.f32.partialorder %v578, %v926
      %v977 = vsel %vm976, %v578, %v926
      %v978 = vsel %vm976, %v575, %v932
      %v979 = vsel %vm976, 1, 0
      %vm980 = vcmp.eq.s32.totalorder %v979, 1
      %vm981 = vmpackc.low %vm980, %vm980
      %v982 = vsel %vm981, %v501, %v960
      %v983 = vsel %vm981, %v502, %v961
      %v984 = vsel %vm981, %v503, %v962
      %v985 = vsel %vm981, %v504, %v963
      %v986 = vsel %vm980, %v265, %v974
      %v987 = vsel %vm980, %v266, %v975
      %v989 = vrot.slane %v977, 7
      %vm991 = vcmp.gt.f32.partialorder %v577, %v989
      %v992 = vsel %vm991, %v577, %v989
      %v994 = vrot.slane %v978, 7
      %v996 = vsel %vm991, %v573, %v994
      %v997 = vsel %vm991, 1, 0
      %vm998 = vcmp.eq.s32.totalorder %v997, 1
      %vm999 = vmpackc.low %vm998, %vm998
      %v1001 = vshrl.u32 %v982, 16
      %v1003 = vrot.slane %v1001, 7
      %v1004 = vshll.u32 %v982, 16
      %v1006 = vor.u32 %v1003, %v1004
      %v1008 = vshrl.u32 %v983, 16
      %v1010 = vrot.slane %v1008, 7
      %v1011 = vshll.u32 %v983, 16
      %v1013 = vor.u32 %v1010, %v1011
      %v1015 = vshrl.u32 %v984, 16
      %v1017 = vrot.slane %v1015, 7
      %v1018 = vshll.u32 %v984, 16
      %v1020 = vor.u32 %v1017, %v1018
      %v1022 = vshrl.u32 %v985, 16
      %v1024 = vrot.slane %v1022, 7
      %v1025 = vshll.u32 %v985, 16
      %v1027 = vor.u32 %v1024, %v1025
      %v1032 = vsel %vm999, %v493, %v1006
      %v1033 = vsel %vm999, %v494, %v1013
      %v1034 = vsel %vm999, %v495, %v1020
      %v1035 = vsel %vm999, %v496, %v1027
      %v1038 = vrot.slane %v986, 7
      %v1039 = vrot.slane %v987, 7
      %v1042 = vsel %vm998, %v261, %v1038
      %v1043 = vsel %vm998, %v262, %v1039
      %vm1044 = vcmp.gt.f32.partialorder %v578, %v992
      %v1045 = vsel %vm1044, %v578, %v992
      %v1046 = vsel %vm1044, %v575, %v996
      %v1047 = vsel %vm1044, 1, 0
      %vm1048 = vcmp.eq.s32.totalorder %v1047, 1
      %vm1049 = vmpackc.low %vm1048, %vm1048
      %v1050 = vsel %vm1049, %v501, %v1032
      %v1051 = vsel %vm1049, %v502, %v1033
      %v1052 = vsel %vm1049, %v503, %v1034
      %v1053 = vsel %vm1049, %v504, %v1035
      %v1054 = vsel %vm1048, %v265, %v1042
      %v1055 = vsel %vm1048, %v266, %v1043
      %v1057 = vrot.slane %v1045, 7
      %vm1059 = vcmp.gt.f32.partialorder %v577, %v1057
      %v1060 = vsel %vm1059, %v577, %v1057
      %v1062 = vrot.slane %v1046, 7
      %v1064 = vsel %vm1059, %v573, %v1062
      %v1065 = vsel %vm1059, 1, 0
      %vm1066 = vcmp.eq.s32.totalorder %v1065, 1
      %vm1067 = vmpackc.low %vm1066, %vm1066
      %v1069 = vshrl.u32 %v1050, 16
      %v1071 = vrot.slane %v1069, 7
      %v1072 = vshll.u32 %v1050, 16
      %v1074 = vor.u32 %v1071, %v1072
      %v1076 = vshrl.u32 %v1051, 16
      %v1078 = vrot.slane %v1076, 7
      %v1079 = vshll.u32 %v1051, 16
      %v1081 = vor.u32 %v1078, %v1079
      %v1083 = vshrl.u32 %v1052, 16
      %v1085 = vrot.slane %v1083, 7
      %v1086 = vshll.u32 %v1052, 16
      %v1088 = vor.u32 %v1085, %v1086
      %v1090 = vshrl.u32 %v1053, 16
      %v1092 = vrot.slane %v1090, 7
      %v1093 = vshll.u32 %v1053, 16
      %v1095 = vor.u32 %v1092, %v1093
      %v1100 = vsel %vm1067, %v493, %v1074
      %v1101 = vsel %vm1067, %v494, %v1081
      %v1102 = vsel %vm1067, %v495, %v1088
      %v1103 = vsel %vm1067, %v496, %v1095
      %v1106 = vrot.slane %v1054, 7
      %v1107 = vrot.slane %v1055, 7
      %v1110 = vsel %vm1066, %v261, %v1106
      %v1111 = vsel %vm1066, %v262, %v1107
      %v1113 = vrot.slane %v1060, 2
      %vm1115 = vcmp.gt.f32.partialorder %v728, %v1113
      %v1116 = vsel %vm1115, %v728, %v1113
      %v1118 = vrot.slane %v1064, 2
      %v1120 = vsel %vm1115, %v574, %v1118
      %v1121 = vsel %vm1115, 1, 0
      %vm1122 = vcmp.eq.s32.totalorder %v1121, 1
      %vm1123 = vmpackc.low %vm1122, %vm1122
      %v1128 = vrot.slane %v1100, 5
      %v1129 = vrot.slane %v1128, 4
      %v1130 = vrot.slane %v1101, 5
      %v1131 = vrot.slane %v1130, 4
      %v1132 = vrot.slane %v1102, 5
      %v1133 = vrot.slane %v1132, 4
      %v1134 = vrot.slane %v1103, 5
      %v1135 = vrot.slane %v1134, 4
      %v1140 = vsel %vm1123, %v731, %v1129
      %v1141 = vsel %vm1123, %v732, %v1131
      %v1142 = vsel %vm1123, %v733, %v1133
      %v1143 = vsel %vm1123, %v734, %v1135
      %v1146 = vrot.slane %v1110, 2
      %v1147 = vrot.slane %v1111, 2
      %v1150 = vsel %vm1122, %v740, %v1146
      %v1151 = vsel %vm1122, %v741, %v1147
      %vm1152 = vcmp.gt.f32.partialorder %v729, %v1116
      %v1153 = vsel %vm1152, %v729, %v1116
      %v1154 = vsel %vm1152, %v576, %v1120
      %v1155 = vsel %vm1152, 1, 0
      %vm1156 = vcmp.eq.s32.totalorder %v1155, 1
      %vm1157 = vmpackc.low %vm1156, %vm1156
      %v1158 = vsel %vm1157, %v735, %v1140
      %v1159 = vsel %vm1157, %v736, %v1141
      %v1160 = vsel %vm1157, %v737, %v1142
      %v1161 = vsel %vm1157, %v738, %v1143
      %v1162 = vsel %vm1156, %v742, %v1150
      %v1163 = vsel %vm1156, %v743, %v1151
      %v1165 = vrot.slane %v1153, 7
      %vm1167 = vcmp.gt.f32.partialorder %v728, %v1165
      %v1168 = vsel %vm1167, %v728, %v1165
      %v1170 = vrot.slane %v1154, 7
      %v1172 = vsel %vm1167, %v574, %v1170
      %v1173 = vsel %vm1167, 1, 0
      %vm1174 = vcmp.eq.s32.totalorder %v1173, 1
      %vm1175 = vmpackc.low %vm1174, %vm1174
      %v1177 = vshrl.u32 %v1158, 16
      %v1179 = vrot.slane %v1177, 7
      %v1180 = vshll.u32 %v1158, 16
      %v1182 = vor.u32 %v1179, %v1180
      %v1184 = vshrl.u32 %v1159, 16
      %v1186 = vrot.slane %v1184, 7
      %v1187 = vshll.u32 %v1159, 16
      %v1189 = vor.u32 %v1186, %v1187
      %v1191 = vshrl.u32 %v1160, 16
      %v1193 = vrot.slane %v1191, 7
      %v1194 = vshll.u32 %v1160, 16
      %v1196 = vor.u32 %v1193, %v1194
      %v1198 = vshrl.u32 %v1161, 16
      %v1200 = vrot.slane %v1198, 7
      %v1201 = vshll.u32 %v1161, 16
      %v1203 = vor.u32 %v1200, %v1201
      %v1208 = vsel %vm1175, %v731, %v1182
      %v1209 = vsel %vm1175, %v732, %v1189
      %v1210 = vsel %vm1175, %v733, %v1196
      %v1211 = vsel %vm1175, %v734, %v1203
      %v1214 = vrot.slane %v1162, 7
      %v1215 = vrot.slane %v1163, 7
      %v1218 = vsel %vm1174, %v740, %v1214
      %v1219 = vsel %vm1174, %v741, %v1215
      %vm1220 = vcmp.gt.f32.partialorder %v729, %v1168
      %v1221 = vsel %vm1220, %v729, %v1168
      %v1222 = vsel %vm1220, %v576, %v1172
      %v1223 = vsel %vm1220, 1, 0
      %vm1224 = vcmp.eq.s32.totalorder %v1223, 1
      %vm1225 = vmpackc.low %vm1224, %vm1224
      %v1226 = vsel %vm1225, %v735, %v1208
      %v1227 = vsel %vm1225, %v736, %v1209
      %v1228 = vsel %vm1225, %v737, %v1210
      %v1229 = vsel %vm1225, %v738, %v1211
      %v1230 = vsel %vm1224, %v742, %v1218
      %v1231 = vsel %vm1224, %v743, %v1219
      %v1233 = vrot.slane %v1221, 7
      %vm1235 = vcmp.gt.f32.partialorder %v728, %v1233
      %v1236 = vsel %vm1235, %v728, %v1233
      %v1238 = vrot.slane %v1222, 7
      %v1240 = vsel %vm1235, %v574, %v1238
      %v1241 = vsel %vm1235, 1, 0
      %vm1242 = vcmp.eq.s32.totalorder %v1241, 1
      %vm1243 = vmpackc.low %vm1242, %vm1242
      %v1245 = vshrl.u32 %v1226, 16
      %v1247 = vrot.slane %v1245, 7
      %v1248 = vshll.u32 %v1226, 16
      %v1250 = vor.u32 %v1247, %v1248
      %v1252 = vshrl.u32 %v1227, 16
      %v1254 = vrot.slane %v1252, 7
      %v1255 = vshll.u32 %v1227, 16
      %v1257 = vor.u32 %v1254, %v1255
      %v1259 = vshrl.u32 %v1228, 16
      %v1261 = vrot.slane %v1259, 7
      %v1262 = vshll.u32 %v1228, 16
      %v1264 = vor.u32 %v1261, %v1262
      %v1266 = vshrl.u32 %v1229, 16
      %v1268 = vrot.slane %v1266, 7
      %v1269 = vshll.u32 %v1229, 16
      %v1271 = vor.u32 %v1268, %v1269
      %v1276 = vsel %vm1243, %v731, %v1250
      %v1277 = vsel %vm1243, %v732, %v1257
      %v1278 = vsel %vm1243, %v733, %v1264
      %v1279 = vsel %vm1243, %v734, %v1271
      %v1282 = vrot.slane %v1230, 7
      %v1283 = vrot.slane %v1231, 7
      %v1286 = vsel %vm1242, %v740, %v1282
      %v1287 = vsel %vm1242, %v741, %v1283
      %v1289 = vrot.slane %v1236, 2
      %1290 = vrot.lane.b32.xlu0 %v1289, 1
      %v1291 = vpop.permute.xlu0 %1290
      %vm1293 = vcmp.gt.f32.partialorder %v577, %v1291
      %v1294 = vsel %vm1293, %v577, %v1291
      %v1296 = vrot.slane %v1240, 2
      %1297 = vrot.lane.b32.xlu0 %v1296, 1
      %v1298 = vpop.permute.xlu0 %1297
      %v1300 = vsel %vm1293, %v573, %v1298
      %v1301 = vsel %vm1293, 1, 0
      %vm1302 = vcmp.eq.s32.totalorder %v1301, 1
      %vm1303 = vmpackc.low %vm1302, %vm1302
      %v1308 = vrot.slane %v1276, 5
      %v1309 = vrot.slane %v1308, 4
      %v1310 = vrot.slane %v1277, 5
      %v1311 = vrot.slane %v1310, 4
      %v1312 = vrot.slane %v1278, 5
      %v1313 = vrot.slane %v1312, 4
      %v1314 = vrot.slane %v1279, 5
      %v1315 = vrot.slane %v1314, 4
      %1316 = vrot.lane.b32.xlu0 %v1309, 1
      %v1317 = vpop.permute.xlu0 %1316
      %1318 = vrot.lane.b32.xlu0 %v1311, 1
      %v1319 = vpop.permute.xlu0 %1318
      %1320 = vrot.lane.b32.xlu0 %v1313, 1
      %v1321 = vpop.permute.xlu0 %1320
      %1322 = vrot.lane.b32.xlu0 %v1315, 1
      %v1323 = vpop.permute.xlu0 %1322
      %v1328 = vsel %vm1303, %v493, %v1317
      %v1329 = vsel %vm1303, %v494, %v1319
      %v1330 = vsel %vm1303, %v495, %v1321
      %v1331 = vsel %vm1303, %v496, %v1323
      %v1334 = vrot.slane %v1286, 2
      %v1335 = vrot.slane %v1287, 2
      %1336 = vrot.lane.b32.xlu0 %v1334, 1
      %v1337 = vpop.permute.xlu0 %1336
      %1338 = vrot.lane.b32.xlu0 %v1335, 1
      %v1339 = vpop.permute.xlu0 %1338
      %v1342 = vsel %vm1302, %v261, %v1337
      %v1343 = vsel %vm1302, %v262, %v1339
      %vm1344 = vcmp.gt.f32.partialorder %v578, %v1294
      %v1345 = vsel %vm1344, %v578, %v1294
      %v1346 = vsel %vm1344, %v575, %v1300
      %v1347 = vsel %vm1344, 1, 0
      %vm1348 = vcmp.eq.s32.totalorder %v1347, 1
      %vm1349 = vmpackc.low %vm1348, %vm1348
      %v1350 = vsel %vm1349, %v501, %v1328
      %v1351 = vsel %vm1349, %v502, %v1329
      %v1352 = vsel %vm1349, %v503, %v1330
      %v1353 = vsel %vm1349, %v504, %v1331
      %v1354 = vsel %vm1348, %v265, %v1342
      %v1355 = vsel %vm1348, %v266, %v1343
      %v1357 = vrot.slane %v1345, 7
      %vm1359 = vcmp.gt.f32.partialorder %v577, %v1357
      %v1360 = vsel %vm1359, %v577, %v1357
      %v1362 = vrot.slane %v1346, 7
      %v1364 = vsel %vm1359, %v573, %v1362
      %v1365 = vsel %vm1359, 1, 0
      %vm1366 = vcmp.eq.s32.totalorder %v1365, 1
      %vm1367 = vmpackc.low %vm1366, %vm1366
      %v1369 = vshrl.u32 %v1350, 16
      %v1371 = vrot.slane %v1369, 7
      %v1372 = vshll.u32 %v1350, 16
      %v1374 = vor.u32 %v1371, %v1372
      %v1376 = vshrl.u32 %v1351, 16
      %v1378 = vrot.slane %v1376, 7
      %v1379 = vshll.u32 %v1351, 16
      %v1381 = vor.u32 %v1378, %v1379
      %v1383 = vshrl.u32 %v1352, 16
      %v1385 = vrot.slane %v1383, 7
      %v1386 = vshll.u32 %v1352, 16
      %v1388 = vor.u32 %v1385, %v1386
      %v1390 = vshrl.u32 %v1353, 16
      %v1392 = vrot.slane %v1390, 7
      %v1393 = vshll.u32 %v1353, 16
      %v1395 = vor.u32 %v1392, %v1393
      %v1400 = vsel %vm1367, %v493, %v1374
      %v1401 = vsel %vm1367, %v494, %v1381
      %v1402 = vsel %vm1367, %v495, %v1388
      %v1403 = vsel %vm1367, %v496, %v1395
      %v1406 = vrot.slane %v1354, 7
      %v1407 = vrot.slane %v1355, 7
      %v1410 = vsel %vm1366, %v261, %v1406
      %v1411 = vsel %vm1366, %v262, %v1407
      %vm1412 = vcmp.gt.f32.partialorder %v578, %v1360
      %v1413 = vsel %vm1412, %v578, %v1360
      %v1414 = vsel %vm1412, %v575, %v1364
      %v1415 = vsel %vm1412, 1, 0
      %vm1416 = vcmp.eq.s32.totalorder %v1415, 1
      %vm1417 = vmpackc.low %vm1416, %vm1416
      %v1418 = vsel %vm1417, %v501, %v1400
      %v1419 = vsel %vm1417, %v502, %v1401
      %v1420 = vsel %vm1417, %v503, %v1402
      %v1421 = vsel %vm1417, %v504, %v1403
      %v1422 = vsel %vm1416, %v265, %v1410
      %v1423 = vsel %vm1416, %v266, %v1411
      %v1425 = vrot.slane %v1413, 7
      %vm1427 = vcmp.gt.f32.partialorder %v577, %v1425
      %v1429 = vrot.slane %v1414, 7
      %v1431 = vsel %vm1427, %v573, %v1429
      %v1432 = vsel %vm1427, 1, 0
      %vm1433 = vcmp.eq.s32.totalorder %v1432, 1
      %vm1434 = vmpackc.low %vm1433, %vm1433
      %v1436 = vshrl.u32 %v1418, 16
      %v1438 = vrot.slane %v1436, 7
      %v1439 = vshll.u32 %v1418, 16
      %v1441 = vor.u32 %v1438, %v1439
      %v1443 = vshrl.u32 %v1419, 16
      %v1445 = vrot.slane %v1443, 7
      %v1446 = vshll.u32 %v1419, 16
      %v1448 = vor.u32 %v1445, %v1446
      %v1450 = vshrl.u32 %v1420, 16
      %v1452 = vrot.slane %v1450, 7
      %v1453 = vshll.u32 %v1420, 16
      %v1455 = vor.u32 %v1452, %v1453
      %v1457 = vshrl.u32 %v1421, 16
      %v1459 = vrot.slane %v1457, 7
      %v1460 = vshll.u32 %v1421, 16
      %v1462 = vor.u32 %v1459, %v1460
      %v1467 = vsel %vm1434, %v493, %v1441
      %v1468 = vsel %vm1434, %v494, %v1448
      %v1469 = vsel %vm1434, %v495, %v1455
      %v1470 = vsel %vm1434, %v496, %v1462
      %v1473 = vrot.slane %v1422, 7
      %v1474 = vrot.slane %v1423, 7
      %v1477 = vsel %vm1433, %v261, %v1473
      %v1478 = vsel %vm1433, %v262, %v1474
      %v1479 = vmul.f32 %v1477, %v1477
      %v1480 = vmul.f32 %v1478, %v1478
      %vm1481 = vcmask 64530
      %v1482 = vsel %vm1481, %v1479, 0.0
      %v1483 = vsel %vm1481, %v1480, 0.0
      %v1484 = vadd.f32 %v1482, %v1483
      %v1485 = vmax.f32 %v1484, 1e-16
      %v1490 = vrot.slane %v493, 7
      %v1491 = vrot.slane %v494, 7
      %v1492 = vrot.slane %v495, 7
      %v1493 = vrot.slane %v496, 7
      %1494 = vrot.lane.b32.xlu0 %v1490, 2
      %v1495 = vpop.permute.xlu0 %1494
      %1496 = vrot.lane.b32.xlu0 %v1491, 2
      %v1497 = vpop.permute.xlu0 %1496
      %1498 = vrot.lane.b32.xlu0 %v1492, 2
      %v1499 = vpop.permute.xlu0 %1498
      %1500 = vrot.lane.b32.xlu0 %v1493, 2
      %v1501 = vpop.permute.xlu0 %1500
      %v1506 = vmul.bf16 %v1467, %v1495
      %v1507 = vmul.bf16 %v1468, %v1497
      %v1508 = vmul.bf16 %v1469, %v1499
      %v1509 = vmul.bf16 %v1470, %v1501
      %v1510 = vunpack.c.l.bf16 %v1506
      %v1511 = vunpack.c.l.bf16 %v1507
      %v1512 = vunpack.c.l.bf16 %v1508
      %v1513 = vunpack.c.l.bf16 %v1509
      %v1514 = vsel %vm1481, %v1510, 0.0
      %v1515 = vsel %vm1481, %v1511, 0.0
      %v1516 = vadd.f32 %v1514, %v1515
      %v1517 = vsel %vm1481, %v1512, 0.0
      %v1518 = vadd.f32 %v1516, %v1517
      %v1519 = vsel %vm1481, %v1513, 0.0
      %v1520 = vadd.f32 %v1518, %v1519
      %v1522 = vrot.slane %v573, 6
      %1523 = vrot.lane.b32.xlu0 %v1522, 2
      %v1524 = vpop.permute.xlu0 %1523
      %v1526 = vmul.f32 %v1431, %v1524
      %v1527 = vmul.f32 %v1520, %v1526
      %v1530 = vrot.slane %v261, 6
      %v1531 = vrot.slane %v262, 6
      %1532 = vrot.lane.b32.xlu0 %v1530, 2
      %v1533 = vpop.permute.xlu0 %1532
      %1534 = vrot.lane.b32.xlu0 %v1531, 2
      %v1535 = vpop.permute.xlu0 %1534
      %v1538 = vmul.f32 %v1477, %v1533
      %v1539 = vmul.f32 %v1478, %v1535
      %v1540 = vsel %vm1481, %v1538, 0.0
      %v1541 = vsel %vm1481, %v1539, 0.0
      %v1542 = vadd.f32 %v1540, %v1541
      %vm1543 = vcmask 46080
      %v1544 = vsel %vm1543, %v269, 0.0
      %v1545 = vsel %vm1543, %v273, 0.0
      %v1546 = vadd.f32 %v1544, %v1545
      %v1547 = vmax.f32 %v1546, 1e-16
      %v1549 = vrot.slane %v1547, 6
      %1550 = vrot.lane.b32.xlu0 %v1549, 2
      %v1551 = vpop.permute.xlu0 %1550
      %v1553 = vmul.f32 %v1485, %v1551
      %v1554 = vrsqrt.pop %v1553
      %v1555 = vmul.f32 %v1542, %v1554
      %v1556 = vmax.f32 %v1555, 0.0
      %v1557 = vmin.f32 %v1556, 1.0
      %v1558 = vsub.f32 %v1557, 1.0
      %v1559 = vmul.f32 %v1558, 1.4285715
      %v1560 = vmul.f32 %v1559, 1.442695
      %v1561 = vpow.pop %v1560
      %v1563 = vrot.slane %v489, 6
      %1564 = vrot.lane.b32.xlu0 %v1563, 2
      %v1565 = vpop.permute.xlu0 %1564
      %v1567 = vmul.f32 %v1561, %v1565
      %v1568 = vmul.f32 %v1567, 10.0
      %v1569 = vmul.f32 %v1568, 1.442695
      %v1570 = vpow.pop %v1569
      %v1571 = vadd.f32 %v1570, 0.0
      %v1572 = vmul.f32 %v1570, %v1527
      %v1573 = vadd.f32 %v1572, 0.0
      %v1574 = vmul.f32 %v1527, 10.0
      %v1575 = vmul.f32 %v1574, 1.442695
      %v1576 = vpow.pop %v1575
      %v1577 = vadd.f32 %v1576, 0.0
      %v1578 = vadd.f32 %v1567, 0.0
      %v1583 = vrot.slane %v501, 7
      %v1584 = vrot.slane %v502, 7
      %v1585 = vrot.slane %v503, 7
      %v1586 = vrot.slane %v504, 7
      %1587 = vrot.lane.b32.xlu0 %v1583, 2
      %v1588 = vpop.permute.xlu0 %1587
      %1589 = vrot.lane.b32.xlu0 %v1584, 2
      %v1590 = vpop.permute.xlu0 %1589
      %1591 = vrot.lane.b32.xlu0 %v1585, 2
      %v1592 = vpop.permute.xlu0 %1591
      %1593 = vrot.lane.b32.xlu0 %v1586, 2
      %v1594 = vpop.permute.xlu0 %1593
      %v1599 = vmul.bf16 %v1467, %v1588
      %v1600 = vmul.bf16 %v1468, %v1590
      %v1601 = vmul.bf16 %v1469, %v1592
      %v1602 = vmul.bf16 %v1470, %v1594
      %v1603 = vunpack.c.l.bf16 %v1599
      %v1604 = vunpack.c.l.bf16 %v1600
      %v1605 = vunpack.c.l.bf16 %v1601
      %v1606 = vunpack.c.l.bf16 %v1602
      %v1607 = vsel %vm1481, %v1603, 0.0
      %v1608 = vsel %vm1481, %v1604, 0.0
      %v1609 = vadd.f32 %v1607, %v1608
      %v1610 = vsel %vm1481, %v1605, 0.0
      %v1611 = vadd.f32 %v1609, %v1610
      %v1612 = vsel %vm1481, %v1606, 0.0
      %v1613 = vadd.f32 %v1611, %v1612
      %v1615 = vrot.slane %v575, 6
      %1616 = vrot.lane.b32.xlu0 %v1615, 2
      %v1617 = vpop.permute.xlu0 %1616
      %v1619 = vmul.f32 %v1431, %v1617
      %v1620 = vmul.f32 %v1613, %v1619
      %v1623 = vrot.slane %v265, 6
      %v1624 = vrot.slane %v266, 6
      %1625 = vrot.lane.b32.xlu0 %v1623, 2
      %v1626 = vpop.permute.xlu0 %1625
      %1627 = vrot.lane.b32.xlu0 %v1624, 2
      %v1628 = vpop.permute.xlu0 %1627
      %v1631 = vmul.f32 %v1477, %v1626
      %v1632 = vmul.f32 %v1478, %v1628
      %v1633 = vsel %vm1481, %v1631, 0.0
      %v1634 = vsel %vm1481, %v1632, 0.0
      %v1635 = vadd.f32 %v1633, %v1634
      %v1636 = vsel %vm1543, %v271, 0.0
      %v1637 = vsel %vm1543, %v275, 0.0
      %v1638 = vadd.f32 %v1636, %v1637
      %v1639 = vmax.f32 %v1638, 1e-16
      %v1641 = vrot.slane %v1639, 6
      %1642 = vrot.lane.b32.xlu0 %v1641, 2
      %v1643 = vpop.permute.xlu0 %1642
      %v1645 = vmul.f32 %v1485, %v1643
      %v1646 = vrsqrt.pop %v1645
      %v1647 = vmul.f32 %v1635, %v1646
      %v1648 = vmax.f32 %v1647, 0.0
      %v1649 = vmin.f32 %v1648, 1.0
      %v1650 = vsub.f32 %v1649, 1.0
      %v1651 = vmul.f32 %v1650, 1.4285715
      %v1652 = vmul.f32 %v1651, 1.442695
      %v1653 = vpow.pop %v1652
      %v1655 = vrot.slane %v491, 6
      %1656 = vrot.lane.b32.xlu0 %v1655, 2
      %v1657 = vpop.permute.xlu0 %1656
      %v1659 = vmul.f32 %v1653, %v1657
      %v1660 = vmul.f32 %v1659, 10.0
      %v1661 = vmul.f32 %v1660, 1.442695
      %v1662 = vpow.pop %v1661
      %v1663 = vadd.f32 %v1571, %v1662
      %v1664 = vmul.f32 %v1662, %v1620
      %v1665 = vadd.f32 %v1573, %v1664
      %v1666 = vmul.f32 %v1620, 10.0
      %v1667 = vmul.f32 %v1666, 1.442695
      %v1668 = vpow.pop %v1667
      %v1669 = vadd.f32 %v1577, %v1668
      %v1670 = vadd.f32 %v1578, %v1659
      %v1672 = vshrl.u32 %v493, 16
      %v1674 = vrot.slane %v1672, 7
      %v1675 = vshll.u32 %v493, 16
      %v1677 = vor.u32 %v1674, %v1675
      %v1679 = vshrl.u32 %v494, 16
      %v1681 = vrot.slane %v1679, 7
      %v1682 = vshll.u32 %v494, 16
      %v1684 = vor.u32 %v1681, %v1682
      %v1686 = vshrl.u32 %v495, 16
      %v1688 = vrot.slane %v1686, 7
      %v1689 = vshll.u32 %v495, 16
      %v1691 = vor.u32 %v1688, %v1689
      %v1693 = vshrl.u32 %v496, 16
      %v1695 = vrot.slane %v1693, 7
      %v1696 = vshll.u32 %v496, 16
      %v1698 = vor.u32 %v1695, %v1696
      %1699 = vrot.lane.b32.xlu0 %v1677, 2
      %v1700 = vpop.permute.xlu0 %1699
      %1701 = vrot.lane.b32.xlu0 %v1684, 2
      %v1702 = vpop.permute.xlu0 %1701
      %1703 = vrot.lane.b32.xlu0 %v1691, 2
      %v1704 = vpop.permute.xlu0 %1703
      %1705 = vrot.lane.b32.xlu0 %v1698, 2
      %v1706 = vpop.permute.xlu0 %1705
      %v1711 = vmul.bf16 %v1467, %v1700
      %v1712 = vmul.bf16 %v1468, %v1702
      %v1713 = vmul.bf16 %v1469, %v1704
      %v1714 = vmul.bf16 %v1470, %v1706
      %v1715 = vunpack.c.l.bf16 %v1711
      %v1716 = vunpack.c.l.bf16 %v1712
      %v1717 = vunpack.c.l.bf16 %v1713
      %v1718 = vunpack.c.l.bf16 %v1714
      %v1719 = vsel %vm1481, %v1715, 0.0
      %v1720 = vsel %vm1481, %v1716, 0.0
      %v1721 = vadd.f32 %v1719, %v1720
      %v1722 = vsel %vm1481, %v1717, 0.0
      %v1723 = vadd.f32 %v1721, %v1722
      %v1724 = vsel %vm1481, %v1718, 0.0
      %v1725 = vadd.f32 %v1723, %v1724
      %v1726 = vrot.slane %v573, 7
      %1727 = vrot.lane.b32.xlu0 %v1726, 2
      %v1728 = vpop.permute.xlu0 %1727
      %v1730 = vmul.f32 %v1431, %v1728
      %v1731 = vmul.f32 %v1725, %v1730
      %v1732 = vrot.slane %v261, 7
      %v1733 = vrot.slane %v262, 7
      %1734 = vrot.lane.b32.xlu0 %v1732, 2
      %v1735 = vpop.permute.xlu0 %1734
      %1736 = vrot.lane.b32.xlu0 %v1733, 2
      %v1737 = vpop.permute.xlu0 %1736
      %v1740 = vmul.f32 %v1477, %v1735
      %v1741 = vmul.f32 %v1478, %v1737
      %v1742 = vsel %vm1481, %v1740, 0.0
      %v1743 = vsel %vm1481, %v1741, 0.0
      %v1744 = vadd.f32 %v1742, %v1743
      %vm1745 = vcmask 47105
      %v1746 = vsel %vm1745, %v269, 0.0
      %v1747 = vsel %vm1745, %v273, 0.0
      %v1748 = vadd.f32 %v1746, %v1747
      %v1749 = vmax.f32 %v1748, 1e-16
      %v1751 = vrot.slane %v1749, 7
      %1752 = vrot.lane.b32.xlu0 %v1751, 2
      %v1753 = vpop.permute.xlu0 %1752
      %v1755 = vmul.f32 %v1485, %v1753
      %v1756 = vrsqrt.pop %v1755
      %v1757 = vmul.f32 %v1744, %v1756
      %v1758 = vmax.f32 %v1757, 0.0
      %v1759 = vmin.f32 %v1758, 1.0
      %v1760 = vsub.f32 %v1759, 1.0
      %v1761 = vmul.f32 %v1760, 1.4285715
      %v1762 = vmul.f32 %v1761, 1.442695
      %v1763 = vpow.pop %v1762
      %v1764 = vrot.slane %v489, 7
      %1765 = vrot.lane.b32.xlu0 %v1764, 2
      %v1766 = vpop.permute.xlu0 %1765
      %v1768 = vmul.f32 %v1763, %v1766
      %v1769 = vmul.f32 %v1768, 10.0
      %v1770 = vmul.f32 %v1769, 1.442695
      %v1771 = vpow.pop %v1770
      %v1772 = vadd.f32 %v1663, %v1771
      %v1773 = vmul.f32 %v1771, %v1731
      %v1774 = vadd.f32 %v1665, %v1773
      %v1775 = vmul.f32 %v1731, 10.0
      %v1776 = vmul.f32 %v1775, 1.442695
      %v1777 = vpow.pop %v1776
      %v1778 = vadd.f32 %v1669, %v1777
      %v1779 = vadd.f32 %v1670, %v1768
      %v1781 = vshrl.u32 %v501, 16
      %v1783 = vrot.slane %v1781, 7
      %v1784 = vshll.u32 %v501, 16
      %v1786 = vor.u32 %v1783, %v1784
      %v1788 = vshrl.u32 %v502, 16
      %v1790 = vrot.slane %v1788, 7
      %v1791 = vshll.u32 %v502, 16
      %v1793 = vor.u32 %v1790, %v1791
      %v1795 = vshrl.u32 %v503, 16
      %v1797 = vrot.slane %v1795, 7
      %v1798 = vshll.u32 %v503, 16
      %v1800 = vor.u32 %v1797, %v1798
      %v1802 = vshrl.u32 %v504, 16
      %v1804 = vrot.slane %v1802, 7
      %v1805 = vshll.u32 %v504, 16
      %v1807 = vor.u32 %v1804, %v1805
      %1808 = vrot.lane.b32.xlu0 %v1786, 2
      %v1809 = vpop.permute.xlu0 %1808
      %1810 = vrot.lane.b32.xlu0 %v1793, 2
      %v1811 = vpop.permute.xlu0 %1810
      %1812 = vrot.lane.b32.xlu0 %v1800, 2
      %v1813 = vpop.permute.xlu0 %1812
      %1814 = vrot.lane.b32.xlu0 %v1807, 2
      %v1815 = vpop.permute.xlu0 %1814
      %v1820 = vmul.bf16 %v1467, %v1809
      %v1821 = vmul.bf16 %v1468, %v1811
      %v1822 = vmul.bf16 %v1469, %v1813
      %v1823 = vmul.bf16 %v1470, %v1815
      %v1824 = vunpack.c.l.bf16 %v1820
      %v1825 = vunpack.c.l.bf16 %v1821
      %v1826 = vunpack.c.l.bf16 %v1822
      %v1827 = vunpack.c.l.bf16 %v1823
      %v1828 = vsel %vm1481, %v1824, 0.0
      %v1829 = vsel %vm1481, %v1825, 0.0
      %v1830 = vadd.f32 %v1828, %v1829
      %v1831 = vsel %vm1481, %v1826, 0.0
      %v1832 = vadd.f32 %v1830, %v1831
      %v1833 = vsel %vm1481, %v1827, 0.0
      %v1834 = vadd.f32 %v1832, %v1833
      %v1835 = vrot.slane %v575, 7
      %1836 = vrot.lane.b32.xlu0 %v1835, 2
      %v1837 = vpop.permute.xlu0 %1836
      %v1839 = vmul.f32 %v1431, %v1837
      %v1840 = vmul.f32 %v1834, %v1839
      %v1841 = vrot.slane %v265, 7
      %v1842 = vrot.slane %v266, 7
      %1843 = vrot.lane.b32.xlu0 %v1841, 2
      %v1844 = vpop.permute.xlu0 %1843
      %1845 = vrot.lane.b32.xlu0 %v1842, 2
      %v1846 = vpop.permute.xlu0 %1845
      %v1849 = vmul.f32 %v1477, %v1844
      %v1850 = vmul.f32 %v1478, %v1846
      %v1851 = vsel %vm1481, %v1849, 0.0
      %v1852 = vsel %vm1481, %v1850, 0.0
      %v1853 = vadd.f32 %v1851, %v1852
      %v1854 = vsel %vm1745, %v271, 0.0
      %v1855 = vsel %vm1745, %v275, 0.0
      %v1856 = vadd.f32 %v1854, %v1855
      %v1857 = vmax.f32 %v1856, 1e-16
      %v1859 = vrot.slane %v1857, 7
      %1860 = vrot.lane.b32.xlu0 %v1859, 2
      %v1861 = vpop.permute.xlu0 %1860
      %v1863 = vmul.f32 %v1485, %v1861
      %v1864 = vrsqrt.pop %v1863
      %v1865 = vmul.f32 %v1853, %v1864
      %v1866 = vmax.f32 %v1865, 0.0
      %v1867 = vmin.f32 %v1866, 1.0
      %v1868 = vsub.f32 %v1867, 1.0
      %v1869 = vmul.f32 %v1868, 1.4285715
      %v1870 = vmul.f32 %v1869, 1.442695
      %v1871 = vpow.pop %v1870
      %v1872 = vrot.slane %v491, 7
      %1873 = vrot.lane.b32.xlu0 %v1872, 2
      %v1874 = vpop.permute.xlu0 %1873
      %v1876 = vmul.f32 %v1871, %v1874
      %v1877 = vmul.f32 %v1876, 10.0
      %v1878 = vmul.f32 %v1877, 1.442695
      %v1879 = vpow.pop %v1878
      %v1880 = vadd.f32 %v1772, %v1879
      %v1881 = vmul.f32 %v1879, %v1840
      %v1882 = vadd.f32 %v1774, %v1881
      %v1883 = vmul.f32 %v1840, 10.0
      %v1884 = vmul.f32 %v1883, 1.442695
      %v1885 = vpow.pop %v1884
      %v1886 = vadd.f32 %v1778, %v1885
      %v1887 = vadd.f32 %v1779, %v1876
      %1888 = vrot.lane.b32.xlu0 %v493, 2
      %v1889 = vpop.permute.xlu0 %1888
      %1890 = vrot.lane.b32.xlu0 %v494, 2
      %v1891 = vpop.permute.xlu0 %1890
      %1892 = vrot.lane.b32.xlu0 %v495, 2
      %v1893 = vpop.permute.xlu0 %1892
      %1894 = vrot.lane.b32.xlu0 %v496, 2
      %v1895 = vpop.permute.xlu0 %1894
      %v1900 = vmul.bf16 %v1467, %v1889
      %v1901 = vmul.bf16 %v1468, %v1891
      %v1902 = vmul.bf16 %v1469, %v1893
      %v1903 = vmul.bf16 %v1470, %v1895
      %v1904 = vunpack.c.l.bf16 %v1900
      %v1905 = vunpack.c.l.bf16 %v1901
      %v1906 = vunpack.c.l.bf16 %v1902
      %v1907 = vunpack.c.l.bf16 %v1903
      %v1908 = vsel %vm1481, %v1904, 0.0
      %v1909 = vsel %vm1481, %v1905, 0.0
      %v1910 = vadd.f32 %v1908, %v1909
      %v1911 = vsel %vm1481, %v1906, 0.0
      %v1912 = vadd.f32 %v1910, %v1911
      %v1913 = vsel %vm1481, %v1907, 0.0
      %v1914 = vadd.f32 %v1912, %v1913
      %1915 = vrot.lane.b32.xlu0 %v573, 2
      %v1916 = vpop.permute.xlu0 %1915
      %v1918 = vmul.f32 %v1431, %v1916
      %v1919 = vmul.f32 %v1914, %v1918
      %1920 = vrot.lane.b32.xlu0 %v261, 2
      %v1921 = vpop.permute.xlu0 %1920
      %1922 = vrot.lane.b32.xlu0 %v262, 2
      %v1923 = vpop.permute.xlu0 %1922
      %v1926 = vmul.f32 %v1477, %v1921
      %v1927 = vmul.f32 %v1478, %v1923
      %v1928 = vsel %vm1481, %v1926, 0.0
      %v1929 = vsel %vm1481, %v1927, 0.0
      %v1930 = vadd.f32 %v1928, %v1929
      %vm1931 = vcmask 48130
      %v1932 = vsel %vm1931, %v269, 0.0
      %v1933 = vsel %vm1931, %v273, 0.0
      %v1934 = vadd.f32 %v1932, %v1933
      %v1935 = vmax.f32 %v1934, 1e-16
      %1937 = vrot.lane.b32.xlu0 %v1935, 2
      %v1938 = vpop.permute.xlu0 %1937
      %v1940 = vmul.f32 %v1485, %v1938
      %v1941 = vrsqrt.pop %v1940
      %v1942 = vmul.f32 %v1930, %v1941
      %v1943 = vmax.f32 %v1942, 0.0
      %v1944 = vmin.f32 %v1943, 1.0
      %v1945 = vsub.f32 %v1944, 1.0
      %v1946 = vmul.f32 %v1945, 1.4285715
      %v1947 = vmul.f32 %v1946, 1.442695
      %v1948 = vpow.pop %v1947
      %1949 = vrot.lane.b32.xlu0 %v489, 2
      %v1950 = vpop.permute.xlu0 %1949
      %v1952 = vmul.f32 %v1948, %v1950
      %v1953 = vmul.f32 %v1952, 10.0
      %v1954 = vmul.f32 %v1953, 1.442695
      %v1955 = vpow.pop %v1954
      %v1956 = vadd.f32 %v1880, %v1955
      %v1957 = vmul.f32 %v1955, %v1919
      %v1958 = vadd.f32 %v1882, %v1957
      %v1959 = vmul.f32 %v1919, 10.0
      %v1960 = vmul.f32 %v1959, 1.442695
      %v1961 = vpow.pop %v1960
      %v1962 = vadd.f32 %v1886, %v1961
      %v1963 = vadd.f32 %v1887, %v1952
      %v1968 = vrot.slane %v731, 7
      %v1969 = vrot.slane %v732, 7
      %v1970 = vrot.slane %v733, 7
      %v1971 = vrot.slane %v734, 7
      %1972 = vrot.lane.b32.xlu0 %v1968, 2
      %v1973 = vpop.permute.xlu0 %1972
      %1974 = vrot.lane.b32.xlu0 %v1969, 2
      %v1975 = vpop.permute.xlu0 %1974
      %1976 = vrot.lane.b32.xlu0 %v1970, 2
      %v1977 = vpop.permute.xlu0 %1976
      %1978 = vrot.lane.b32.xlu0 %v1971, 2
      %v1979 = vpop.permute.xlu0 %1978
      %v1984 = vmul.bf16 %v1467, %v1973
      %v1985 = vmul.bf16 %v1468, %v1975
      %v1986 = vmul.bf16 %v1469, %v1977
      %v1987 = vmul.bf16 %v1470, %v1979
      %v1988 = vunpack.c.l.bf16 %v1984
      %v1989 = vunpack.c.l.bf16 %v1985
      %v1990 = vunpack.c.l.bf16 %v1986
      %v1991 = vunpack.c.l.bf16 %v1987
      %v1992 = vsel %vm1481, %v1988, 0.0
      %v1993 = vsel %vm1481, %v1989, 0.0
      %v1994 = vadd.f32 %v1992, %v1993
      %v1995 = vsel %vm1481, %v1990, 0.0
      %v1996 = vadd.f32 %v1994, %v1995
      %v1997 = vsel %vm1481, %v1991, 0.0
      %v1998 = vadd.f32 %v1996, %v1997
      %v2000 = vrot.slane %v574, 6
      %2001 = vrot.lane.b32.xlu0 %v2000, 2
      %v2002 = vpop.permute.xlu0 %2001
      %v2004 = vmul.f32 %v1431, %v2002
      %v2005 = vmul.f32 %v1998, %v2004
      %v2008 = vrot.slane %v740, 6
      %v2009 = vrot.slane %v741, 6
      %2010 = vrot.lane.b32.xlu0 %v2008, 2
      %v2011 = vpop.permute.xlu0 %2010
      %2012 = vrot.lane.b32.xlu0 %v2009, 2
      %v2013 = vpop.permute.xlu0 %2012
      %v2016 = vmul.f32 %v1477, %v2011
      %v2017 = vmul.f32 %v1478, %v2013
      %v2018 = vsel %vm1481, %v2016, 0.0
      %v2019 = vsel %vm1481, %v2017, 0.0
      %v2020 = vadd.f32 %v2018, %v2019
      %v2021 = vmul.f32 %v740, %v740
      %v2022 = vmul.f32 %v741, %v741
      %v2023 = vsel %vm1543, %v2021, 0.0
      %v2024 = vsel %vm1543, %v2022, 0.0
      %v2025 = vadd.f32 %v2023, %v2024
      %v2026 = vmax.f32 %v2025, 1e-16
      %v2028 = vrot.slane %v2026, 6
      %2029 = vrot.lane.b32.xlu0 %v2028, 2
      %v2030 = vpop.permute.xlu0 %2029
      %v2032 = vmul.f32 %v1485, %v2030
      %v2033 = vrsqrt.pop %v2032
      %v2034 = vmul.f32 %v2020, %v2033
      %v2035 = vmax.f32 %v2034, 0.0
      %v2036 = vmin.f32 %v2035, 1.0
      %v2037 = vsub.f32 %v2036, 1.0
      %v2038 = vmul.f32 %v2037, 1.4285715
      %v2039 = vmul.f32 %v2038, 1.442695
      %v2040 = vpow.pop %v2039
      %v2042 = vrot.slane %v490, 6
      %2043 = vrot.lane.b32.xlu0 %v2042, 2
      %v2044 = vpop.permute.xlu0 %2043
      %v2046 = vmul.f32 %v2040, %v2044
      %v2047 = vmul.f32 %v2046, 10.0
      %v2048 = vmul.f32 %v2047, 1.442695
      %v2049 = vpow.pop %v2048
      %v2050 = vadd.f32 %v1956, %v2049
      %v2051 = vmul.f32 %v2049, %v2005
      %v2052 = vadd.f32 %v1958, %v2051
      %v2053 = vmul.f32 %v2005, 10.0
      %v2054 = vmul.f32 %v2053, 1.442695
      %v2055 = vpow.pop %v2054
      %v2056 = vadd.f32 %v1962, %v2055
      %v2057 = vadd.f32 %v1963, %v2046
      %v2062 = vrot.slane %v735, 7
      %v2063 = vrot.slane %v736, 7
      %v2064 = vrot.slane %v737, 7
      %v2065 = vrot.slane %v738, 7
      %2066 = vrot.lane.b32.xlu0 %v2062, 2
      %v2067 = vpop.permute.xlu0 %2066
      %2068 = vrot.lane.b32.xlu0 %v2063, 2
      %v2069 = vpop.permute.xlu0 %2068
      %2070 = vrot.lane.b32.xlu0 %v2064, 2
      %v2071 = vpop.permute.xlu0 %2070
      %2072 = vrot.lane.b32.xlu0 %v2065, 2
      %v2073 = vpop.permute.xlu0 %2072
      %v2078 = vmul.bf16 %v1467, %v2067
      %v2079 = vmul.bf16 %v1468, %v2069
      %v2080 = vmul.bf16 %v1469, %v2071
      %v2081 = vmul.bf16 %v1470, %v2073
      %v2082 = vunpack.c.l.bf16 %v2078
      %v2083 = vunpack.c.l.bf16 %v2079
      %v2084 = vunpack.c.l.bf16 %v2080
      %v2085 = vunpack.c.l.bf16 %v2081
      %v2086 = vsel %vm1481, %v2082, 0.0
      %v2087 = vsel %vm1481, %v2083, 0.0
      %v2088 = vadd.f32 %v2086, %v2087
      %v2089 = vsel %vm1481, %v2084, 0.0
      %v2090 = vadd.f32 %v2088, %v2089
      %v2091 = vsel %vm1481, %v2085, 0.0
      %v2092 = vadd.f32 %v2090, %v2091
      %v2094 = vrot.slane %v576, 6
      %2095 = vrot.lane.b32.xlu0 %v2094, 2
      %v2096 = vpop.permute.xlu0 %2095
      %v2098 = vmul.f32 %v1431, %v2096
      %v2099 = vmul.f32 %v2092, %v2098
      %v2102 = vrot.slane %v742, 6
      %v2103 = vrot.slane %v743, 6
      %2104 = vrot.lane.b32.xlu0 %v2102, 2
      %v2105 = vpop.permute.xlu0 %2104
      %2106 = vrot.lane.b32.xlu0 %v2103, 2
      %v2107 = vpop.permute.xlu0 %2106
      %v2110 = vmul.f32 %v1477, %v2105
      %v2111 = vmul.f32 %v1478, %v2107
      %v2112 = vsel %vm1481, %v2110, 0.0
      %v2113 = vsel %vm1481, %v2111, 0.0
      %v2114 = vadd.f32 %v2112, %v2113
      %v2115 = vmul.f32 %v742, %v742
      %v2116 = vmul.f32 %v743, %v743
      %v2117 = vsel %vm1543, %v2115, 0.0
      %v2118 = vsel %vm1543, %v2116, 0.0
      %v2119 = vadd.f32 %v2117, %v2118
      %v2120 = vmax.f32 %v2119, 1e-16
      %v2122 = vrot.slane %v2120, 6
      %2123 = vrot.lane.b32.xlu0 %v2122, 2
      %v2124 = vpop.permute.xlu0 %2123
      %v2126 = vmul.f32 %v1485, %v2124
      %v2127 = vrsqrt.pop %v2126
      %v2128 = vmul.f32 %v2114, %v2127
      %v2129 = vmax.f32 %v2128, 0.0
      %v2130 = vmin.f32 %v2129, 1.0
      %v2131 = vsub.f32 %v2130, 1.0
      %v2132 = vmul.f32 %v2131, 1.4285715
      %v2133 = vmul.f32 %v2132, 1.442695
      %v2134 = vpow.pop %v2133
      %v2136 = vrot.slane %v492, 6
      %2137 = vrot.lane.b32.xlu0 %v2136, 2
      %v2138 = vpop.permute.xlu0 %2137
      %v2140 = vmul.f32 %v2134, %v2138
      %v2141 = vmul.f32 %v2140, 10.0
      %v2142 = vmul.f32 %v2141, 1.442695
      %v2143 = vpow.pop %v2142
      %v2144 = vadd.f32 %v2050, %v2143
      %v2145 = vmul.f32 %v2143, %v2099
      %v2146 = vadd.f32 %v2052, %v2145
      %v2147 = vmul.f32 %v2099, 10.0
      %v2148 = vmul.f32 %v2147, 1.442695
      %v2149 = vpow.pop %v2148
      %v2150 = vadd.f32 %v2056, %v2149
      %v2151 = vadd.f32 %v2057, %v2140
      %v2153 = vshrl.u32 %v731, 16
      %v2155 = vrot.slane %v2153, 7
      %v2156 = vshll.u32 %v731, 16
      %v2158 = vor.u32 %v2155, %v2156
      %v2160 = vshrl.u32 %v732, 16
      %v2162 = vrot.slane %v2160, 7
      %v2163 = vshll.u32 %v732, 16
      %v2165 = vor.u32 %v2162, %v2163
      %v2167 = vshrl.u32 %v733, 16
      %v2169 = vrot.slane %v2167, 7
      %v2170 = vshll.u32 %v733, 16
      %v2172 = vor.u32 %v2169, %v2170
      %v2174 = vshrl.u32 %v734, 16
      %v2176 = vrot.slane %v2174, 7
      %v2177 = vshll.u32 %v734, 16
      %v2179 = vor.u32 %v2176, %v2177
      %2180 = vrot.lane.b32.xlu0 %v2158, 2
      %v2181 = vpop.permute.xlu0 %2180
      %2182 = vrot.lane.b32.xlu0 %v2165, 2
      %v2183 = vpop.permute.xlu0 %2182
      %2184 = vrot.lane.b32.xlu0 %v2172, 2
      %v2185 = vpop.permute.xlu0 %2184
      %2186 = vrot.lane.b32.xlu0 %v2179, 2
      %v2187 = vpop.permute.xlu0 %2186
      %v2192 = vmul.bf16 %v1467, %v2181
      %v2193 = vmul.bf16 %v1468, %v2183
      %v2194 = vmul.bf16 %v1469, %v2185
      %v2195 = vmul.bf16 %v1470, %v2187
      %v2196 = vunpack.c.l.bf16 %v2192
      %v2197 = vunpack.c.l.bf16 %v2193
      %v2198 = vunpack.c.l.bf16 %v2194
      %v2199 = vunpack.c.l.bf16 %v2195
      %v2200 = vsel %vm1481, %v2196, 0.0
      %v2201 = vsel %vm1481, %v2197, 0.0
      %v2202 = vadd.f32 %v2200, %v2201
      %v2203 = vsel %vm1481, %v2198, 0.0
      %v2204 = vadd.f32 %v2202, %v2203
      %v2205 = vsel %vm1481, %v2199, 0.0
      %v2206 = vadd.f32 %v2204, %v2205
      %v2207 = vrot.slane %v574, 7
      %2208 = vrot.lane.b32.xlu0 %v2207, 2
      %v2209 = vpop.permute.xlu0 %2208
      %v2211 = vmul.f32 %v1431, %v2209
      %v2212 = vmul.f32 %v2206, %v2211
      %v2213 = vrot.slane %v740, 7
      %v2214 = vrot.slane %v741, 7
      %2215 = vrot.lane.b32.xlu0 %v2213, 2
      %v2216 = vpop.permute.xlu0 %2215
      %2217 = vrot.lane.b32.xlu0 %v2214, 2
      %v2218 = vpop.permute.xlu0 %2217
      %v2221 = vmul.f32 %v1477, %v2216
      %v2222 = vmul.f32 %v1478, %v2218
      %v2223 = vsel %vm1481, %v2221, 0.0
      %v2224 = vsel %vm1481, %v2222, 0.0
      %v2225 = vadd.f32 %v2223, %v2224
      %v2226 = vsel %vm1745, %v2021, 0.0
      %v2227 = vsel %vm1745, %v2022, 0.0
      %v2228 = vadd.f32 %v2226, %v2227
      %v2229 = vmax.f32 %v2228, 1e-16
      %v2231 = vrot.slane %v2229, 7
      %2232 = vrot.lane.b32.xlu0 %v2231, 2
      %v2233 = vpop.permute.xlu0 %2232
      %v2235 = vmul.f32 %v1485, %v2233
      %v2236 = vrsqrt.pop %v2235
      %v2237 = vmul.f32 %v2225, %v2236
      %v2238 = vmax.f32 %v2237, 0.0
      %v2239 = vmin.f32 %v2238, 1.0
      %v2240 = vsub.f32 %v2239, 1.0
      %v2241 = vmul.f32 %v2240, 1.4285715
      %v2242 = vmul.f32 %v2241, 1.442695
      %v2243 = vpow.pop %v2242
      %v2244 = vrot.slane %v490, 7
      %2245 = vrot.lane.b32.xlu0 %v2244, 2
      %v2246 = vpop.permute.xlu0 %2245
      %v2248 = vmul.f32 %v2243, %v2246
      %v2249 = vmul.f32 %v2248, 10.0
      %v2250 = vmul.f32 %v2249, 1.442695
      %v2251 = vpow.pop %v2250
      %v2252 = vadd.f32 %v2144, %v2251
      %v2253 = vmul.f32 %v2251, %v2212
      %v2254 = vadd.f32 %v2146, %v2253
      %v2255 = vmul.f32 %v2212, 10.0
      %v2256 = vmul.f32 %v2255, 1.442695
      %v2257 = vpow.pop %v2256
      %v2258 = vadd.f32 %v2150, %v2257
      %v2259 = vadd.f32 %v2151, %v2248
      %v2261 = vshrl.u32 %v735, 16
      %v2263 = vrot.slane %v2261, 7
      %v2264 = vshll.u32 %v735, 16
      %v2266 = vor.u32 %v2263, %v2264
      %v2268 = vshrl.u32 %v736, 16
      %v2270 = vrot.slane %v2268, 7
      %v2271 = vshll.u32 %v736, 16
      %v2273 = vor.u32 %v2270, %v2271
      %v2275 = vshrl.u32 %v737, 16
      %v2277 = vrot.slane %v2275, 7
      %v2278 = vshll.u32 %v737, 16
      %v2280 = vor.u32 %v2277, %v2278
      %v2282 = vshrl.u32 %v738, 16
      %v2284 = vrot.slane %v2282, 7
      %v2285 = vshll.u32 %v738, 16
      %v2287 = vor.u32 %v2284, %v2285
      %2288 = vrot.lane.b32.xlu0 %v2266, 2
      %v2289 = vpop.permute.xlu0 %2288
      %2290 = vrot.lane.b32.xlu0 %v2273, 2
      %v2291 = vpop.permute.xlu0 %2290
      %2292 = vrot.lane.b32.xlu0 %v2280, 2
      %v2293 = vpop.permute.xlu0 %2292
      %2294 = vrot.lane.b32.xlu0 %v2287, 2
      %v2295 = vpop.permute.xlu0 %2294
      %v2300 = vmul.bf16 %v1467, %v2289
      %v2301 = vmul.bf16 %v1468, %v2291
      %v2302 = vmul.bf16 %v1469, %v2293
      %v2303 = vmul.bf16 %v1470, %v2295
      %v2304 = vunpack.c.l.bf16 %v2300
      %v2305 = vunpack.c.l.bf16 %v2301
      %v2306 = vunpack.c.l.bf16 %v2302
      %v2307 = vunpack.c.l.bf16 %v2303
      %v2308 = vsel %vm1481, %v2304, 0.0
      %v2309 = vsel %vm1481, %v2305, 0.0
      %v2310 = vadd.f32 %v2308, %v2309
      %v2311 = vsel %vm1481, %v2306, 0.0
      %v2312 = vadd.f32 %v2310, %v2311
      %v2313 = vsel %vm1481, %v2307, 0.0
      %v2314 = vadd.f32 %v2312, %v2313
      %v2315 = vrot.slane %v576, 7
      %2316 = vrot.lane.b32.xlu0 %v2315, 2
      %v2317 = vpop.permute.xlu0 %2316
      %v2319 = vmul.f32 %v1431, %v2317
      %v2320 = vmul.f32 %v2314, %v2319
      %v2321 = vrot.slane %v742, 7
      %v2322 = vrot.slane %v743, 7
      %2323 = vrot.lane.b32.xlu0 %v2321, 2
      %v2324 = vpop.permute.xlu0 %2323
      %2325 = vrot.lane.b32.xlu0 %v2322, 2
      %v2326 = vpop.permute.xlu0 %2325
      %v2329 = vmul.f32 %v1477, %v2324
      %v2330 = vmul.f32 %v1478, %v2326
      %v2331 = vsel %vm1481, %v2329, 0.0
      %v2332 = vsel %vm1481, %v2330, 0.0
      %v2333 = vadd.f32 %v2331, %v2332
      %v2334 = vsel %vm1745, %v2115, 0.0
      %v2335 = vsel %vm1745, %v2116, 0.0
      %v2336 = vadd.f32 %v2334, %v2335
      %v2337 = vmax.f32 %v2336, 1e-16
      %v2339 = vrot.slane %v2337, 7
      %2340 = vrot.lane.b32.xlu0 %v2339, 2
      %v2341 = vpop.permute.xlu0 %2340
      %v2343 = vmul.f32 %v1485, %v2341
      %v2344 = vrsqrt.pop %v2343
      %v2345 = vmul.f32 %v2333, %v2344
      %v2346 = vmax.f32 %v2345, 0.0
      %v2347 = vmin.f32 %v2346, 1.0
      %v2348 = vsub.f32 %v2347, 1.0
      %v2349 = vmul.f32 %v2348, 1.4285715
      %v2350 = vmul.f32 %v2349, 1.442695
      %v2351 = vpow.pop %v2350
      %v2352 = vrot.slane %v492, 7
      %2353 = vrot.lane.b32.xlu0 %v2352, 2
      %v2354 = vpop.permute.xlu0 %2353
      %v2356 = vmul.f32 %v2351, %v2354
      %v2357 = vmul.f32 %v2356, 10.0
      %v2358 = vmul.f32 %v2357, 1.442695
      %v2359 = vpow.pop %v2358
      %v2360 = vadd.f32 %v2252, %v2359
      %v2361 = vmul.f32 %v2359, %v2320
      %v2362 = vadd.f32 %v2254, %v2361
      %v2363 = vmul.f32 %v2320, 10.0
      %v2364 = vmul.f32 %v2363, 1.442695
      %v2365 = vpow.pop %v2364
      %v2366 = vadd.f32 %v2258, %v2365
      %v2367 = vadd.f32 %v2259, %v2356
      %2368 = vrot.lane.b32.xlu0 %v731, 2
      %v2369 = vpop.permute.xlu0 %2368
      %2370 = vrot.lane.b32.xlu0 %v732, 2
      %v2371 = vpop.permute.xlu0 %2370
      %2372 = vrot.lane.b32.xlu0 %v733, 2
      %v2373 = vpop.permute.xlu0 %2372
      %2374 = vrot.lane.b32.xlu0 %v734, 2
      %v2375 = vpop.permute.xlu0 %2374
      %v2380 = vmul.bf16 %v1467, %v2369
      %v2381 = vmul.bf16 %v1468, %v2371
      %v2382 = vmul.bf16 %v1469, %v2373
      %v2383 = vmul.bf16 %v1470, %v2375
      %v2384 = vunpack.c.l.bf16 %v2380
      %v2385 = vunpack.c.l.bf16 %v2381
      %v2386 = vunpack.c.l.bf16 %v2382
      %v2387 = vunpack.c.l.bf16 %v2383
      %v2388 = vsel %vm1481, %v2384, 0.0
      %v2389 = vsel %vm1481, %v2385, 0.0
      %v2390 = vadd.f32 %v2388, %v2389
      %v2391 = vsel %vm1481, %v2386, 0.0
      %v2392 = vadd.f32 %v2390, %v2391
      %v2393 = vsel %vm1481, %v2387, 0.0
      %v2394 = vadd.f32 %v2392, %v2393
      %2395 = vrot.lane.b32.xlu0 %v574, 2
      %v2396 = vpop.permute.xlu0 %2395
      %v2398 = vmul.f32 %v1431, %v2396
      %v2399 = vmul.f32 %v2394, %v2398
      %2400 = vrot.lane.b32.xlu0 %v740, 2
      %v2401 = vpop.permute.xlu0 %2400
      %2402 = vrot.lane.b32.xlu0 %v741, 2
      %v2403 = vpop.permute.xlu0 %2402
      %v2406 = vmul.f32 %v1477, %v2401
      %v2407 = vmul.f32 %v1478, %v2403
      %v2408 = vsel %vm1481, %v2406, 0.0
      %v2409 = vsel %vm1481, %v2407, 0.0
      %v2410 = vadd.f32 %v2408, %v2409
      %v2411 = vsel %vm1931, %v2021, 0.0
      %v2412 = vsel %vm1931, %v2022, 0.0
      %v2413 = vadd.f32 %v2411, %v2412
      %v2414 = vmax.f32 %v2413, 1e-16
      %2416 = vrot.lane.b32.xlu0 %v2414, 2
      %v2417 = vpop.permute.xlu0 %2416
      %v2419 = vmul.f32 %v1485, %v2417
      %v2420 = vrsqrt.pop %v2419
      %v2421 = vmul.f32 %v2410, %v2420
      %v2422 = vmax.f32 %v2421, 0.0
      %v2423 = vmin.f32 %v2422, 1.0
      %v2424 = vsub.f32 %v2423, 1.0
      %v2425 = vmul.f32 %v2424, 1.4285715
      %v2426 = vmul.f32 %v2425, 1.442695
      %v2427 = vpow.pop %v2426
      %2428 = vrot.lane.b32.xlu0 %v490, 2
      %v2429 = vpop.permute.xlu0 %2428
      %v2431 = vmul.f32 %v2427, %v2429
      %v2432 = vmul.f32 %v2431, 10.0
      %v2433 = vmul.f32 %v2432, 1.442695
      %v2434 = vpow.pop %v2433
      %v2435 = vadd.f32 %v2360, %v2434
      %v2436 = vmul.f32 %v2434, %v2399
      %v2437 = vadd.f32 %v2362, %v2436
      %v2438 = vmul.f32 %v2399, 10.0
      %v2439 = vmul.f32 %v2438, 1.442695
      %v2440 = vpow.pop %v2439
      %v2441 = vadd.f32 %v2366, %v2440
      %v2442 = vadd.f32 %v2367, %v2431
      %2443 = vrot.lane.b32.xlu0 %v1490, 1
      %v2444 = vpop.permute.xlu0 %2443
      %2445 = vrot.lane.b32.xlu0 %v1491, 1
      %v2446 = vpop.permute.xlu0 %2445
      %2447 = vrot.lane.b32.xlu0 %v1492, 1
      %v2448 = vpop.permute.xlu0 %2447
      %2449 = vrot.lane.b32.xlu0 %v1493, 1
      %v2450 = vpop.permute.xlu0 %2449
      %v2455 = vmul.bf16 %v1467, %v2444
      %v2456 = vmul.bf16 %v1468, %v2446
      %v2457 = vmul.bf16 %v1469, %v2448
      %v2458 = vmul.bf16 %v1470, %v2450
      %v2459 = vunpack.c.l.bf16 %v2455
      %v2460 = vunpack.c.l.bf16 %v2456
      %v2461 = vunpack.c.l.bf16 %v2457
      %v2462 = vunpack.c.l.bf16 %v2458
      %v2463 = vsel %vm1481, %v2459, 0.0
      %v2464 = vsel %vm1481, %v2460, 0.0
      %v2465 = vadd.f32 %v2463, %v2464
      %v2466 = vsel %vm1481, %v2461, 0.0
      %v2467 = vadd.f32 %v2465, %v2466
      %v2468 = vsel %vm1481, %v2462, 0.0
      %v2469 = vadd.f32 %v2467, %v2468
      %2470 = vrot.lane.b32.xlu0 %v1522, 1
      %v2471 = vpop.permute.xlu0 %2470
      %v2473 = vmul.f32 %v1431, %v2471
      %v2474 = vmul.f32 %v2469, %v2473
      %2475 = vrot.lane.b32.xlu0 %v1530, 1
      %v2476 = vpop.permute.xlu0 %2475
      %2477 = vrot.lane.b32.xlu0 %v1531, 1
      %v2478 = vpop.permute.xlu0 %2477
      %v2481 = vmul.f32 %v1477, %v2476
      %v2482 = vmul.f32 %v1478, %v2478
      %v2483 = vsel %vm1481, %v2481, 0.0
      %v2484 = vsel %vm1481, %v2482, 0.0
      %v2485 = vadd.f32 %v2483, %v2484
      %vm2486 = vcmask 54280
      %v2487 = vsel %vm2486, %v269, 0.0
      %v2488 = vsel %vm2486, %v273, 0.0
      %v2489 = vadd.f32 %v2487, %v2488
      %v2490 = vmax.f32 %v2489, 1e-16
      %v2492 = vrot.slane %v2490, 6
      %2493 = vrot.lane.b32.xlu0 %v2492, 1
      %v2494 = vpop.permute.xlu0 %2493
      %v2496 = vmul.f32 %v1485, %v2494
      %v2497 = vrsqrt.pop %v2496
      %v2498 = vmul.f32 %v2485, %v2497
      %v2499 = vmax.f32 %v2498, 0.0
      %v2500 = vmin.f32 %v2499, 1.0
      %v2501 = vsub.f32 %v2500, 1.0
      %v2502 = vmul.f32 %v2501, 1.4285715
      %v2503 = vmul.f32 %v2502, 1.442695
      %v2504 = vpow.pop %v2503
      %2505 = vrot.lane.b32.xlu0 %v1563, 1
      %v2506 = vpop.permute.xlu0 %2505
      %v2508 = vmul.f32 %v2504, %v2506
      %v2509 = vmul.f32 %v2508, 10.0
      %v2510 = vmul.f32 %v2509, 1.442695
      %v2511 = vpow.pop %v2510
      %v2512 = vadd.f32 %v2435, %v2511
      %v2513 = vmul.f32 %v2511, %v2474
      %v2514 = vadd.f32 %v2437, %v2513
      %v2515 = vmul.f32 %v2474, 10.0
      %v2516 = vmul.f32 %v2515, 1.442695
      %v2517 = vpow.pop %v2516
      %v2518 = vadd.f32 %v2441, %v2517
      %v2519 = vadd.f32 %v2442, %v2508
      %2520 = vrot.lane.b32.xlu0 %v1583, 1
      %v2521 = vpop.permute.xlu0 %2520
      %2522 = vrot.lane.b32.xlu0 %v1584, 1
      %v2523 = vpop.permute.xlu0 %2522
      %2524 = vrot.lane.b32.xlu0 %v1585, 1
      %v2525 = vpop.permute.xlu0 %2524
      %2526 = vrot.lane.b32.xlu0 %v1586, 1
      %v2527 = vpop.permute.xlu0 %2526
      %v2532 = vmul.bf16 %v1467, %v2521
      %v2533 = vmul.bf16 %v1468, %v2523
      %v2534 = vmul.bf16 %v1469, %v2525
      %v2535 = vmul.bf16 %v1470, %v2527
      %v2536 = vunpack.c.l.bf16 %v2532
      %v2537 = vunpack.c.l.bf16 %v2533
      %v2538 = vunpack.c.l.bf16 %v2534
      %v2539 = vunpack.c.l.bf16 %v2535
      %v2540 = vsel %vm1481, %v2536, 0.0
      %v2541 = vsel %vm1481, %v2537, 0.0
      %v2542 = vadd.f32 %v2540, %v2541
      %v2543 = vsel %vm1481, %v2538, 0.0
      %v2544 = vadd.f32 %v2542, %v2543
      %v2545 = vsel %vm1481, %v2539, 0.0
      %v2546 = vadd.f32 %v2544, %v2545
      %2547 = vrot.lane.b32.xlu0 %v1615, 1
      %v2548 = vpop.permute.xlu0 %2547
      %v2550 = vmul.f32 %v1431, %v2548
      %v2551 = vmul.f32 %v2546, %v2550
      %2552 = vrot.lane.b32.xlu0 %v1623, 1
      %v2553 = vpop.permute.xlu0 %2552
      %2554 = vrot.lane.b32.xlu0 %v1624, 1
      %v2555 = vpop.permute.xlu0 %2554
      %v2558 = vmul.f32 %v1477, %v2553
      %v2559 = vmul.f32 %v1478, %v2555
      %v2560 = vsel %vm1481, %v2558, 0.0
      %v2561 = vsel %vm1481, %v2559, 0.0
      %v2562 = vadd.f32 %v2560, %v2561
      %v2563 = vsel %vm2486, %v271, 0.0
      %v2564 = vsel %vm2486, %v275, 0.0
      %v2565 = vadd.f32 %v2563, %v2564
      %v2566 = vmax.f32 %v2565, 1e-16
      %v2568 = vrot.slane %v2566, 6
      %2569 = vrot.lane.b32.xlu0 %v2568, 1
      %v2570 = vpop.permute.xlu0 %2569
      %v2572 = vmul.f32 %v1485, %v2570
      %v2573 = vrsqrt.pop %v2572
      %v2574 = vmul.f32 %v2562, %v2573
      %v2575 = vmax.f32 %v2574, 0.0
      %v2576 = vmin.f32 %v2575, 1.0
      %v2577 = vsub.f32 %v2576, 1.0
      %v2578 = vmul.f32 %v2577, 1.4285715
      %v2579 = vmul.f32 %v2578, 1.442695
      %v2580 = vpow.pop %v2579
      %2581 = vrot.lane.b32.xlu0 %v1655, 1
      %v2582 = vpop.permute.xlu0 %2581
      %v2584 = vmul.f32 %v2580, %v2582
      %v2585 = vmul.f32 %v2584, 10.0
      %v2586 = vmul.f32 %v2585, 1.442695
      %v2587 = vpow.pop %v2586
      %v2588 = vadd.f32 %v2512, %v2587
      %v2589 = vmul.f32 %v2587, %v2551
      %v2590 = vadd.f32 %v2514, %v2589
      %v2591 = vmul.f32 %v2551, 10.0
      %v2592 = vmul.f32 %v2591, 1.442695
      %v2593 = vpow.pop %v2592
      %v2594 = vadd.f32 %v2518, %v2593
      %v2595 = vadd.f32 %v2519, %v2584
      %2596 = vrot.lane.b32.xlu0 %v1677, 1
      %v2597 = vpop.permute.xlu0 %2596
      %2598 = vrot.lane.b32.xlu0 %v1684, 1
      %v2599 = vpop.permute.xlu0 %2598
      %2600 = vrot.lane.b32.xlu0 %v1691, 1
      %v2601 = vpop.permute.xlu0 %2600
      %2602 = vrot.lane.b32.xlu0 %v1698, 1
      %v2603 = vpop.permute.xlu0 %2602
      %v2608 = vmul.bf16 %v1467, %v2597
      %v2609 = vmul.bf16 %v1468, %v2599
      %v2610 = vmul.bf16 %v1469, %v2601
      %v2611 = vmul.bf16 %v1470, %v2603
      %v2612 = vunpack.c.l.bf16 %v2608
      %v2613 = vunpack.c.l.bf16 %v2609
      %v2614 = vunpack.c.l.bf16 %v2610
      %v2615 = vunpack.c.l.bf16 %v2611
      %v2616 = vsel %vm1481, %v2612, 0.0
      %v2617 = vsel %vm1481, %v2613, 0.0
      %v2618 = vadd.f32 %v2616, %v2617
      %v2619 = vsel %vm1481, %v2614, 0.0
      %v2620 = vadd.f32 %v2618, %v2619
      %v2621 = vsel %vm1481, %v2615, 0.0
      %v2622 = vadd.f32 %v2620, %v2621
      %2623 = vrot.lane.b32.xlu0 %v1726, 1
      %v2624 = vpop.permute.xlu0 %2623
      %v2626 = vmul.f32 %v1431, %v2624
      %v2627 = vmul.f32 %v2622, %v2626
      %2628 = vrot.lane.b32.xlu0 %v1732, 1
      %v2629 = vpop.permute.xlu0 %2628
      %2630 = vrot.lane.b32.xlu0 %v1733, 1
      %v2631 = vpop.permute.xlu0 %2630
      %v2634 = vmul.f32 %v1477, %v2629
      %v2635 = vmul.f32 %v1478, %v2631
      %v2636 = vsel %vm1481, %v2634, 0.0
      %v2637 = vsel %vm1481, %v2635, 0.0
      %v2638 = vadd.f32 %v2636, %v2637
      %vm2639 = vcmask 55305
      %v2640 = vsel %vm2639, %v269, 0.0
      %v2641 = vsel %vm2639, %v273, 0.0
      %v2642 = vadd.f32 %v2640, %v2641
      %v2643 = vmax.f32 %v2642, 1e-16
      %v2645 = vrot.slane %v2643, 7
      %2646 = vrot.lane.b32.xlu0 %v2645, 1
      %v2647 = vpop.permute.xlu0 %2646
      %v2649 = vmul.f32 %v1485, %v2647
      %v2650 = vrsqrt.pop %v2649
      %v2651 = vmul.f32 %v2638, %v2650
      %v2652 = vmax.f32 %v2651, 0.0
      %v2653 = vmin.f32 %v2652, 1.0
      %v2654 = vsub.f32 %v2653, 1.0
      %v2655 = vmul.f32 %v2654, 1.4285715
      %v2656 = vmul.f32 %v2655, 1.442695
      %v2657 = vpow.pop %v2656
      %2658 = vrot.lane.b32.xlu0 %v1764, 1
      %v2659 = vpop.permute.xlu0 %2658
      %v2661 = vmul.f32 %v2657, %v2659
      %v2662 = vmul.f32 %v2661, 10.0
      %v2663 = vmul.f32 %v2662, 1.442695
      %v2664 = vpow.pop %v2663
      %v2665 = vadd.f32 %v2588, %v2664
      %v2666 = vmul.f32 %v2664, %v2627
      %v2667 = vadd.f32 %v2590, %v2666
      %v2668 = vmul.f32 %v2627, 10.0
      %v2669 = vmul.f32 %v2668, 1.442695
      %v2670 = vpow.pop %v2669
      %v2671 = vadd.f32 %v2594, %v2670
      %v2672 = vadd.f32 %v2595, %v2661
      %2673 = vrot.lane.b32.xlu0 %v1786, 1
      %v2674 = vpop.permute.xlu0 %2673
      %2675 = vrot.lane.b32.xlu0 %v1793, 1
      %v2676 = vpop.permute.xlu0 %2675
      %2677 = vrot.lane.b32.xlu0 %v1800, 1
      %v2678 = vpop.permute.xlu0 %2677
      %2679 = vrot.lane.b32.xlu0 %v1807, 1
      %v2680 = vpop.permute.xlu0 %2679
      %v2685 = vmul.bf16 %v1467, %v2674
      %v2686 = vmul.bf16 %v1468, %v2676
      %v2687 = vmul.bf16 %v1469, %v2678
      %v2688 = vmul.bf16 %v1470, %v2680
      %v2689 = vunpack.c.l.bf16 %v2685
      %v2690 = vunpack.c.l.bf16 %v2686
      %v2691 = vunpack.c.l.bf16 %v2687
      %v2692 = vunpack.c.l.bf16 %v2688
      %v2693 = vsel %vm1481, %v2689, 0.0
      %v2694 = vsel %vm1481, %v2690, 0.0
      %v2695 = vadd.f32 %v2693, %v2694
      %v2696 = vsel %vm1481, %v2691, 0.0
      %v2697 = vadd.f32 %v2695, %v2696
      %v2698 = vsel %vm1481, %v2692, 0.0
      %v2699 = vadd.f32 %v2697, %v2698
      %2700 = vrot.lane.b32.xlu0 %v1835, 1
      %v2701 = vpop.permute.xlu0 %2700
      %v2703 = vmul.f32 %v1431, %v2701
      %v2704 = vmul.f32 %v2699, %v2703
      %2705 = vrot.lane.b32.xlu0 %v1841, 1
      %v2706 = vpop.permute.xlu0 %2705
      %2707 = vrot.lane.b32.xlu0 %v1842, 1
      %v2708 = vpop.permute.xlu0 %2707
      %v2711 = vmul.f32 %v1477, %v2706
      %v2712 = vmul.f32 %v1478, %v2708
      %v2713 = vsel %vm1481, %v2711, 0.0
      %v2714 = vsel %vm1481, %v2712, 0.0
      %v2715 = vadd.f32 %v2713, %v2714
      %v2716 = vsel %vm2639, %v271, 0.0
      %v2717 = vsel %vm2639, %v275, 0.0
      %v2718 = vadd.f32 %v2716, %v2717
      %v2719 = vmax.f32 %v2718, 1e-16
      %v2721 = vrot.slane %v2719, 7
      %2722 = vrot.lane.b32.xlu0 %v2721, 1
      %v2723 = vpop.permute.xlu0 %2722
      %v2725 = vmul.f32 %v1485, %v2723
      %v2726 = vrsqrt.pop %v2725
      %v2727 = vmul.f32 %v2715, %v2726
      %v2728 = vmax.f32 %v2727, 0.0
      %v2729 = vmin.f32 %v2728, 1.0
      %v2730 = vsub.f32 %v2729, 1.0
      %v2731 = vmul.f32 %v2730, 1.4285715
      %v2732 = vmul.f32 %v2731, 1.442695
      %v2733 = vpow.pop %v2732
      %2734 = vrot.lane.b32.xlu0 %v1872, 1
      %v2735 = vpop.permute.xlu0 %2734
      %v2737 = vmul.f32 %v2733, %v2735
      %v2738 = vmul.f32 %v2737, 10.0
      %v2739 = vmul.f32 %v2738, 1.442695
      %v2740 = vpow.pop %v2739
      %v2741 = vadd.f32 %v2665, %v2740
      %v2742 = vmul.f32 %v2740, %v2704
      %v2743 = vadd.f32 %v2667, %v2742
      %v2744 = vmul.f32 %v2704, 10.0
      %v2745 = vmul.f32 %v2744, 1.442695
      %v2746 = vpow.pop %v2745
      %v2747 = vadd.f32 %v2671, %v2746
      %v2748 = vadd.f32 %v2672, %v2737
      %2749 = vrot.lane.b32.xlu0 %v493, 1
      %v2750 = vpop.permute.xlu0 %2749
      %2751 = vrot.lane.b32.xlu0 %v494, 1
      %v2752 = vpop.permute.xlu0 %2751
      %2753 = vrot.lane.b32.xlu0 %v495, 1
      %v2754 = vpop.permute.xlu0 %2753
      %2755 = vrot.lane.b32.xlu0 %v496, 1
      %v2756 = vpop.permute.xlu0 %2755
      %v2761 = vmul.bf16 %v1467, %v2750
      %v2762 = vmul.bf16 %v1468, %v2752
      %v2763 = vmul.bf16 %v1469, %v2754
      %v2764 = vmul.bf16 %v1470, %v2756
      %v2765 = vunpack.c.l.bf16 %v2761
      %v2766 = vunpack.c.l.bf16 %v2762
      %v2767 = vunpack.c.l.bf16 %v2763
      %v2768 = vunpack.c.l.bf16 %v2764
      %v2769 = vsel %vm1481, %v2765, 0.0
      %v2770 = vsel %vm1481, %v2766, 0.0
      %v2771 = vadd.f32 %v2769, %v2770
      %v2772 = vsel %vm1481, %v2767, 0.0
      %v2773 = vadd.f32 %v2771, %v2772
      %v2774 = vsel %vm1481, %v2768, 0.0
      %v2775 = vadd.f32 %v2773, %v2774
      %2776 = vrot.lane.b32.xlu0 %v573, 1
      %v2777 = vpop.permute.xlu0 %2776
      %v2779 = vmul.f32 %v1431, %v2777
      %v2780 = vmul.f32 %v2775, %v2779
      %2781 = vrot.lane.b32.xlu0 %v261, 1
      %v2782 = vpop.permute.xlu0 %2781
      %2783 = vrot.lane.b32.xlu0 %v262, 1
      %v2784 = vpop.permute.xlu0 %2783
      %v2787 = vmul.f32 %v1477, %v2782
      %v2788 = vmul.f32 %v1478, %v2784
      %v2789 = vsel %vm1481, %v2787, 0.0
      %v2790 = vsel %vm1481, %v2788, 0.0
      %v2791 = vadd.f32 %v2789, %v2790
      %vm2792 = vcmask 56330
      %v2793 = vsel %vm2792, %v269, 0.0
      %v2794 = vsel %vm2792, %v273, 0.0
      %v2795 = vadd.f32 %v2793, %v2794
      %v2796 = vmax.f32 %v2795, 1e-16
      %2798 = vrot.lane.b32.xlu0 %v2796, 1
      %v2799 = vpop.permute.xlu0 %2798
      %v2801 = vmul.f32 %v1485, %v2799
      %v2802 = vrsqrt.pop %v2801
      %v2803 = vmul.f32 %v2791, %v2802
      %v2804 = vmax.f32 %v2803, 0.0
      %v2805 = vmin.f32 %v2804, 1.0
      %v2806 = vsub.f32 %v2805, 1.0
      %v2807 = vmul.f32 %v2806, 1.4285715
      %v2808 = vmul.f32 %v2807, 1.442695
      %v2809 = vpow.pop %v2808
      %2810 = vrot.lane.b32.xlu0 %v489, 1
      %v2811 = vpop.permute.xlu0 %2810
      %v2813 = vmul.f32 %v2809, %v2811
      %v2814 = vmul.f32 %v2813, 10.0
      %v2815 = vmul.f32 %v2814, 1.442695
      %v2816 = vpow.pop %v2815
      %v2817 = vadd.f32 %v2741, %v2816
      %v2818 = vmul.f32 %v2816, %v2780
      %v2819 = vadd.f32 %v2743, %v2818
      %v2820 = vmul.f32 %v2780, 10.0
      %v2821 = vmul.f32 %v2820, 1.442695
      %v2822 = vpow.pop %v2821
      %v2823 = vadd.f32 %v2747, %v2822
      %v2824 = vadd.f32 %v2748, %v2813
      %2825 = vrot.lane.b32.xlu0 %v1968, 1
      %v2826 = vpop.permute.xlu0 %2825
      %2827 = vrot.lane.b32.xlu0 %v1969, 1
      %v2828 = vpop.permute.xlu0 %2827
      %2829 = vrot.lane.b32.xlu0 %v1970, 1
      %v2830 = vpop.permute.xlu0 %2829
      %2831 = vrot.lane.b32.xlu0 %v1971, 1
      %v2832 = vpop.permute.xlu0 %2831
      %v2837 = vmul.bf16 %v1467, %v2826
      %v2838 = vmul.bf16 %v1468, %v2828
      %v2839 = vmul.bf16 %v1469, %v2830
      %v2840 = vmul.bf16 %v1470, %v2832
      %v2841 = vunpack.c.l.bf16 %v2837
      %v2842 = vunpack.c.l.bf16 %v2838
      %v2843 = vunpack.c.l.bf16 %v2839
      %v2844 = vunpack.c.l.bf16 %v2840
      %v2845 = vsel %vm1481, %v2841, 0.0
      %v2846 = vsel %vm1481, %v2842, 0.0
      %v2847 = vadd.f32 %v2845, %v2846
      %v2848 = vsel %vm1481, %v2843, 0.0
      %v2849 = vadd.f32 %v2847, %v2848
      %v2850 = vsel %vm1481, %v2844, 0.0
      %v2851 = vadd.f32 %v2849, %v2850
      %2852 = vrot.lane.b32.xlu0 %v2000, 1
      %v2853 = vpop.permute.xlu0 %2852
      %v2855 = vmul.f32 %v1431, %v2853
      %v2856 = vmul.f32 %v2851, %v2855
      %2857 = vrot.lane.b32.xlu0 %v2008, 1
      %v2858 = vpop.permute.xlu0 %2857
      %2859 = vrot.lane.b32.xlu0 %v2009, 1
      %v2860 = vpop.permute.xlu0 %2859
      %v2863 = vmul.f32 %v1477, %v2858
      %v2864 = vmul.f32 %v1478, %v2860
      %v2865 = vsel %vm1481, %v2863, 0.0
      %v2866 = vsel %vm1481, %v2864, 0.0
      %v2867 = vadd.f32 %v2865, %v2866
      %v2868 = vsel %vm2486, %v2021, 0.0
      %v2869 = vsel %vm2486, %v2022, 0.0
      %v2870 = vadd.f32 %v2868, %v2869
      %v2871 = vmax.f32 %v2870, 1e-16
      %v2873 = vrot.slane %v2871, 6
      %2874 = vrot.lane.b32.xlu0 %v2873, 1
      %v2875 = vpop.permute.xlu0 %2874
      %v2877 = vmul.f32 %v1485, %v2875
      %v2878 = vrsqrt.pop %v2877
      %v2879 = vmul.f32 %v2867, %v2878
      %v2880 = vmax.f32 %v2879, 0.0
      %v2881 = vmin.f32 %v2880, 1.0
      %v2882 = vsub.f32 %v2881, 1.0
      %v2883 = vmul.f32 %v2882, 1.4285715
      %v2884 = vmul.f32 %v2883, 1.442695
      %v2885 = vpow.pop %v2884
      %2886 = vrot.lane.b32.xlu0 %v2042, 1
      %v2887 = vpop.permute.xlu0 %2886
      %v2889 = vmul.f32 %v2885, %v2887
      %v2890 = vmul.f32 %v2889, 10.0
      %v2891 = vmul.f32 %v2890, 1.442695
      %v2892 = vpow.pop %v2891
      %v2893 = vadd.f32 %v2817, %v2892
      %v2894 = vmul.f32 %v2892, %v2856
      %v2895 = vadd.f32 %v2819, %v2894
      %v2896 = vmul.f32 %v2856, 10.0
      %v2897 = vmul.f32 %v2896, 1.442695
      %v2898 = vpow.pop %v2897
      %v2899 = vadd.f32 %v2823, %v2898
      %v2900 = vadd.f32 %v2824, %v2889
      %2901 = vrot.lane.b32.xlu0 %v2062, 1
      %v2902 = vpop.permute.xlu0 %2901
      %2903 = vrot.lane.b32.xlu0 %v2063, 1
      %v2904 = vpop.permute.xlu0 %2903
      %2905 = vrot.lane.b32.xlu0 %v2064, 1
      %v2906 = vpop.permute.xlu0 %2905
      %2907 = vrot.lane.b32.xlu0 %v2065, 1
      %v2908 = vpop.permute.xlu0 %2907
      %v2913 = vmul.bf16 %v1467, %v2902
      %v2914 = vmul.bf16 %v1468, %v2904
      %v2915 = vmul.bf16 %v1469, %v2906
      %v2916 = vmul.bf16 %v1470, %v2908
      %v2917 = vunpack.c.l.bf16 %v2913
      %v2918 = vunpack.c.l.bf16 %v2914
      %v2919 = vunpack.c.l.bf16 %v2915
      %v2920 = vunpack.c.l.bf16 %v2916
      %v2921 = vsel %vm1481, %v2917, 0.0
      %v2922 = vsel %vm1481, %v2918, 0.0
      %v2923 = vadd.f32 %v2921, %v2922
      %v2924 = vsel %vm1481, %v2919, 0.0
      %v2925 = vadd.f32 %v2923, %v2924
      %v2926 = vsel %vm1481, %v2920, 0.0
      %v2927 = vadd.f32 %v2925, %v2926
      %2928 = vrot.lane.b32.xlu0 %v2094, 1
      %v2929 = vpop.permute.xlu0 %2928
      %v2931 = vmul.f32 %v1431, %v2929
      %v2932 = vmul.f32 %v2927, %v2931
      %2933 = vrot.lane.b32.xlu0 %v2102, 1
      %v2934 = vpop.permute.xlu0 %2933
      %2935 = vrot.lane.b32.xlu0 %v2103, 1
      %v2936 = vpop.permute.xlu0 %2935
      %v2939 = vmul.f32 %v1477, %v2934
      %v2940 = vmul.f32 %v1478, %v2936
      %v2941 = vsel %vm1481, %v2939, 0.0
      %v2942 = vsel %vm1481, %v2940, 0.0
      %v2943 = vadd.f32 %v2941, %v2942
      %v2944 = vsel %vm2486, %v2115, 0.0
      %v2945 = vsel %vm2486, %v2116, 0.0
      %v2946 = vadd.f32 %v2944, %v2945
      %v2947 = vmax.f32 %v2946, 1e-16
      %v2949 = vrot.slane %v2947, 6
      %2950 = vrot.lane.b32.xlu0 %v2949, 1
      %v2951 = vpop.permute.xlu0 %2950
      %v2953 = vmul.f32 %v1485, %v2951
      %v2954 = vrsqrt.pop %v2953
      %v2955 = vmul.f32 %v2943, %v2954
      %v2956 = vmax.f32 %v2955, 0.0
      %v2957 = vmin.f32 %v2956, 1.0
      %v2958 = vsub.f32 %v2957, 1.0
      %v2959 = vmul.f32 %v2958, 1.4285715
      %v2960 = vmul.f32 %v2959, 1.442695
      %v2961 = vpow.pop %v2960
      %2962 = vrot.lane.b32.xlu0 %v2136, 1
      %v2963 = vpop.permute.xlu0 %2962
      %v2965 = vmul.f32 %v2961, %v2963
      %v2966 = vmul.f32 %v2965, 10.0
      %v2967 = vmul.f32 %v2966, 1.442695
      %v2968 = vpow.pop %v2967
      %v2969 = vadd.f32 %v2893, %v2968
      %v2970 = vmul.f32 %v2968, %v2932
      %v2971 = vadd.f32 %v2895, %v2970
      %v2972 = vmul.f32 %v2932, 10.0
      %v2973 = vmul.f32 %v2972, 1.442695
      %v2974 = vpow.pop %v2973
      %v2975 = vadd.f32 %v2899, %v2974
      %v2976 = vadd.f32 %v2900, %v2965
      %2977 = vrot.lane.b32.xlu0 %v2158, 1
      %v2978 = vpop.permute.xlu0 %2977
      %2979 = vrot.lane.b32.xlu0 %v2165, 1
      %v2980 = vpop.permute.xlu0 %2979
      %2981 = vrot.lane.b32.xlu0 %v2172, 1
      %v2982 = vpop.permute.xlu0 %2981
      %2983 = vrot.lane.b32.xlu0 %v2179, 1
      %v2984 = vpop.permute.xlu0 %2983
      %v2989 = vmul.bf16 %v1467, %v2978
      %v2990 = vmul.bf16 %v1468, %v2980
      %v2991 = vmul.bf16 %v1469, %v2982
      %v2992 = vmul.bf16 %v1470, %v2984
      %v2993 = vunpack.c.l.bf16 %v2989
      %v2994 = vunpack.c.l.bf16 %v2990
      %v2995 = vunpack.c.l.bf16 %v2991
      %v2996 = vunpack.c.l.bf16 %v2992
      %v2997 = vsel %vm1481, %v2993, 0.0
      %v2998 = vsel %vm1481, %v2994, 0.0
      %v2999 = vadd.f32 %v2997, %v2998
      %v3000 = vsel %vm1481, %v2995, 0.0
      %v3001 = vadd.f32 %v2999, %v3000
      %v3002 = vsel %vm1481, %v2996, 0.0
      %v3003 = vadd.f32 %v3001, %v3002
      %3004 = vrot.lane.b32.xlu0 %v2207, 1
      %v3005 = vpop.permute.xlu0 %3004
      %v3007 = vmul.f32 %v1431, %v3005
      %v3008 = vmul.f32 %v3003, %v3007
      %3009 = vrot.lane.b32.xlu0 %v2213, 1
      %v3010 = vpop.permute.xlu0 %3009
      %3011 = vrot.lane.b32.xlu0 %v2214, 1
      %v3012 = vpop.permute.xlu0 %3011
      %v3015 = vmul.f32 %v1477, %v3010
      %v3016 = vmul.f32 %v1478, %v3012
      %v3017 = vsel %vm1481, %v3015, 0.0
      %v3018 = vsel %vm1481, %v3016, 0.0
      %v3019 = vadd.f32 %v3017, %v3018
      %v3020 = vsel %vm2639, %v2021, 0.0
      %v3021 = vsel %vm2639, %v2022, 0.0
      %v3022 = vadd.f32 %v3020, %v3021
      %v3023 = vmax.f32 %v3022, 1e-16
      %v3025 = vrot.slane %v3023, 7
      %3026 = vrot.lane.b32.xlu0 %v3025, 1
      %v3027 = vpop.permute.xlu0 %3026
      %v3029 = vmul.f32 %v1485, %v3027
      %v3030 = vrsqrt.pop %v3029
      %v3031 = vmul.f32 %v3019, %v3030
      %v3032 = vmax.f32 %v3031, 0.0
      %v3033 = vmin.f32 %v3032, 1.0
      %v3034 = vsub.f32 %v3033, 1.0
      %v3035 = vmul.f32 %v3034, 1.4285715
      %v3036 = vmul.f32 %v3035, 1.442695
      %v3037 = vpow.pop %v3036
      %3038 = vrot.lane.b32.xlu0 %v2244, 1
      %v3039 = vpop.permute.xlu0 %3038
      %v3041 = vmul.f32 %v3037, %v3039
      %v3042 = vmul.f32 %v3041, 10.0
      %v3043 = vmul.f32 %v3042, 1.442695
      %v3044 = vpow.pop %v3043
      %v3045 = vadd.f32 %v2969, %v3044
      %v3046 = vmul.f32 %v3044, %v3008
      %v3047 = vadd.f32 %v2971, %v3046
      %v3048 = vmul.f32 %v3008, 10.0
      %v3049 = vmul.f32 %v3048, 1.442695
      %v3050 = vpow.pop %v3049
      %v3051 = vadd.f32 %v2975, %v3050
      %v3052 = vadd.f32 %v2976, %v3041
      %3053 = vrot.lane.b32.xlu0 %v2266, 1
      %v3054 = vpop.permute.xlu0 %3053
      %3055 = vrot.lane.b32.xlu0 %v2273, 1
      %v3056 = vpop.permute.xlu0 %3055
      %3057 = vrot.lane.b32.xlu0 %v2280, 1
      %v3058 = vpop.permute.xlu0 %3057
      %3059 = vrot.lane.b32.xlu0 %v2287, 1
      %v3060 = vpop.permute.xlu0 %3059
      %v3065 = vmul.bf16 %v1467, %v3054
      %v3066 = vmul.bf16 %v1468, %v3056
      %v3067 = vmul.bf16 %v1469, %v3058
      %v3068 = vmul.bf16 %v1470, %v3060
      %v3069 = vunpack.c.l.bf16 %v3065
      %v3070 = vunpack.c.l.bf16 %v3066
      %v3071 = vunpack.c.l.bf16 %v3067
      %v3072 = vunpack.c.l.bf16 %v3068
      %v3073 = vsel %vm1481, %v3069, 0.0
      %v3074 = vsel %vm1481, %v3070, 0.0
      %v3075 = vadd.f32 %v3073, %v3074
      %v3076 = vsel %vm1481, %v3071, 0.0
      %v3077 = vadd.f32 %v3075, %v3076
      %v3078 = vsel %vm1481, %v3072, 0.0
      %v3079 = vadd.f32 %v3077, %v3078
      %3080 = vrot.lane.b32.xlu0 %v2315, 1
      %v3081 = vpop.permute.xlu0 %3080
      %v3083 = vmul.f32 %v1431, %v3081
      %v3084 = vmul.f32 %v3079, %v3083
      %3085 = vrot.lane.b32.xlu0 %v2321, 1
      %v3086 = vpop.permute.xlu0 %3085
      %3087 = vrot.lane.b32.xlu0 %v2322, 1
      %v3088 = vpop.permute.xlu0 %3087
      %v3091 = vmul.f32 %v1477, %v3086
      %v3092 = vmul.f32 %v1478, %v3088
      %v3093 = vsel %vm1481, %v3091, 0.0
      %v3094 = vsel %vm1481, %v3092, 0.0
      %v3095 = vadd.f32 %v3093, %v3094
      %v3096 = vsel %vm2639, %v2115, 0.0
      %v3097 = vsel %vm2639, %v2116, 0.0
      %v3098 = vadd.f32 %v3096, %v3097
      %v3099 = vmax.f32 %v3098, 1e-16
      %v3101 = vrot.slane %v3099, 7
      %3102 = vrot.lane.b32.xlu0 %v3101, 1
      %v3103 = vpop.permute.xlu0 %3102
      %v3105 = vmul.f32 %v1485, %v3103
      %v3106 = vrsqrt.pop %v3105
      %v3107 = vmul.f32 %v3095, %v3106
      %v3108 = vmax.f32 %v3107, 0.0
      %v3109 = vmin.f32 %v3108, 1.0
      %v3110 = vsub.f32 %v3109, 1.0
      %v3111 = vmul.f32 %v3110, 1.4285715
      %v3112 = vmul.f32 %v3111, 1.442695
      %v3113 = vpow.pop %v3112
      %3114 = vrot.lane.b32.xlu0 %v2352, 1
      %v3115 = vpop.permute.xlu0 %3114
      %v3117 = vmul.f32 %v3113, %v3115
      %v3118 = vmul.f32 %v3117, 10.0
      %v3119 = vmul.f32 %v3118, 1.442695
      %v3120 = vpow.pop %v3119
      %v3121 = vadd.f32 %v3045, %v3120
      %v3122 = vmul.f32 %v3120, %v3084
      %v3123 = vadd.f32 %v3047, %v3122
      %v3124 = vmul.f32 %v3084, 10.0
      %v3125 = vmul.f32 %v3124, 1.442695
      %v3126 = vpow.pop %v3125
      %v3127 = vadd.f32 %v3051, %v3126
      %v3128 = vadd.f32 %v3052, %v3117
      %3129 = vrot.lane.b32.xlu0 %v731, 1
      %v3130 = vpop.permute.xlu0 %3129
      %3131 = vrot.lane.b32.xlu0 %v732, 1
      %v3132 = vpop.permute.xlu0 %3131
      %3133 = vrot.lane.b32.xlu0 %v733, 1
      %v3134 = vpop.permute.xlu0 %3133
      %3135 = vrot.lane.b32.xlu0 %v734, 1
      %v3136 = vpop.permute.xlu0 %3135
      %v3141 = vmul.bf16 %v1467, %v3130
      %v3142 = vmul.bf16 %v1468, %v3132
      %v3143 = vmul.bf16 %v1469, %v3134
      %v3144 = vmul.bf16 %v1470, %v3136
      %v3145 = vunpack.c.l.bf16 %v3141
      %v3146 = vunpack.c.l.bf16 %v3142
      %v3147 = vunpack.c.l.bf16 %v3143
      %v3148 = vunpack.c.l.bf16 %v3144
      %v3149 = vsel %vm1481, %v3145, 0.0
      %v3150 = vsel %vm1481, %v3146, 0.0
      %v3151 = vadd.f32 %v3149, %v3150
      %v3152 = vsel %vm1481, %v3147, 0.0
      %v3153 = vadd.f32 %v3151, %v3152
      %v3154 = vsel %vm1481, %v3148, 0.0
      %v3155 = vadd.f32 %v3153, %v3154
      %3156 = vrot.lane.b32.xlu0 %v574, 1
      %v3157 = vpop.permute.xlu0 %3156
      %v3159 = vmul.f32 %v1431, %v3157
      %v3160 = vmul.f32 %v3155, %v3159
      %3161 = vrot.lane.b32.xlu0 %v740, 1
      %v3162 = vpop.permute.xlu0 %3161
      %3163 = vrot.lane.b32.xlu0 %v741, 1
      %v3164 = vpop.permute.xlu0 %3163
      %v3167 = vmul.f32 %v1477, %v3162
      %v3168 = vmul.f32 %v1478, %v3164
      %v3169 = vsel %vm1481, %v3167, 0.0
      %v3170 = vsel %vm1481, %v3168, 0.0
      %v3171 = vadd.f32 %v3169, %v3170
      %v3172 = vsel %vm2792, %v2021, 0.0
      %v3173 = vsel %vm2792, %v2022, 0.0
      %v3174 = vadd.f32 %v3172, %v3173
      %v3175 = vmax.f32 %v3174, 1e-16
      %3177 = vrot.lane.b32.xlu0 %v3175, 1
      %v3178 = vpop.permute.xlu0 %3177
      %v3180 = vmul.f32 %v1485, %v3178
      %v3181 = vrsqrt.pop %v3180
      %v3182 = vmul.f32 %v3171, %v3181
      %v3183 = vmax.f32 %v3182, 0.0
      %v3184 = vmin.f32 %v3183, 1.0
      %v3185 = vsub.f32 %v3184, 1.0
      %v3186 = vmul.f32 %v3185, 1.4285715
      %v3187 = vmul.f32 %v3186, 1.442695
      %v3188 = vpow.pop %v3187
      %3189 = vrot.lane.b32.xlu0 %v490, 1
      %v3190 = vpop.permute.xlu0 %3189
      %v3192 = vmul.f32 %v3188, %v3190
      %v3193 = vmul.f32 %v3192, 10.0
      %v3194 = vmul.f32 %v3193, 1.442695
      %v3195 = vpow.pop %v3194
      %v3196 = vadd.f32 %v3121, %v3195
      %v3197 = vmul.f32 %v3195, %v3160
      %v3198 = vadd.f32 %v3123, %v3197
      %v3199 = vmul.f32 %v3160, 10.0
      %v3200 = vmul.f32 %v3199, 1.442695
      %v3201 = vpow.pop %v3200
      %v3202 = vadd.f32 %v3127, %v3201
      %v3203 = vadd.f32 %v3128, %v3192
      %v3208 = vmul.bf16 %v1467, %v1490
      %v3209 = vmul.bf16 %v1468, %v1491
      %v3210 = vmul.bf16 %v1469, %v1492
      %v3211 = vmul.bf16 %v1470, %v1493
      %v3212 = vunpack.c.l.bf16 %v3208
      %v3213 = vunpack.c.l.bf16 %v3209
      %v3214 = vunpack.c.l.bf16 %v3210
      %v3215 = vunpack.c.l.bf16 %v3211
      %v3216 = vsel %vm1481, %v3212, 0.0
      %v3217 = vsel %vm1481, %v3213, 0.0
      %v3218 = vadd.f32 %v3216, %v3217
      %v3219 = vsel %vm1481, %v3214, 0.0
      %v3220 = vadd.f32 %v3218, %v3219
      %v3221 = vsel %vm1481, %v3215, 0.0
      %v3222 = vadd.f32 %v3220, %v3221
      %v3224 = vmul.f32 %v1431, %v1522
      %v3225 = vmul.f32 %v3222, %v3224
      %v3228 = vmul.f32 %v1477, %v1530
      %v3229 = vmul.f32 %v1478, %v1531
      %v3230 = vsel %vm1481, %v3228, 0.0
      %v3231 = vsel %vm1481, %v3229, 0.0
      %v3232 = vadd.f32 %v3230, %v3231
      %vm3233 = vcmask 62480
      %v3234 = vsel %vm3233, %v269, 0.0
      %v3235 = vsel %vm3233, %v273, 0.0
      %v3236 = vadd.f32 %v3234, %v3235
      %v3237 = vmax.f32 %v3236, 1e-16
      %v3239 = vrot.slane %v3237, 6
      %v3241 = vmul.f32 %v1485, %v3239
      %v3242 = vrsqrt.pop %v3241
      %v3243 = vmul.f32 %v3232, %v3242
      %v3244 = vmax.f32 %v3243, 0.0
      %v3245 = vmin.f32 %v3244, 1.0
      %v3246 = vsub.f32 %v3245, 1.0
      %v3247 = vmul.f32 %v3246, 1.4285715
      %v3248 = vmul.f32 %v3247, 1.442695
      %v3249 = vpow.pop %v3248
      %v3251 = vmul.f32 %v3249, %v1563
      %v3252 = vmul.f32 %v3251, 10.0
      %v3253 = vmul.f32 %v3252, 1.442695
      %v3254 = vpow.pop %v3253
      %v3255 = vadd.f32 %v3196, %v3254
      %v3256 = vmul.f32 %v3254, %v3225
      %v3257 = vadd.f32 %v3198, %v3256
      %v3258 = vmul.f32 %v3225, 10.0
      %v3259 = vmul.f32 %v3258, 1.442695
      %v3260 = vpow.pop %v3259
      %v3261 = vadd.f32 %v3202, %v3260
      %v3262 = vadd.f32 %v3203, %v3251
      %v3267 = vmul.bf16 %v1467, %v1583
      %v3268 = vmul.bf16 %v1468, %v1584
      %v3269 = vmul.bf16 %v1469, %v1585
      %v3270 = vmul.bf16 %v1470, %v1586
      %v3271 = vunpack.c.l.bf16 %v3267
      %v3272 = vunpack.c.l.bf16 %v3268
      %v3273 = vunpack.c.l.bf16 %v3269
      %v3274 = vunpack.c.l.bf16 %v3270
      %v3275 = vsel %vm1481, %v3271, 0.0
      %v3276 = vsel %vm1481, %v3272, 0.0
      %v3277 = vadd.f32 %v3275, %v3276
      %v3278 = vsel %vm1481, %v3273, 0.0
      %v3279 = vadd.f32 %v3277, %v3278
      %v3280 = vsel %vm1481, %v3274, 0.0
      %v3281 = vadd.f32 %v3279, %v3280
      %v3283 = vmul.f32 %v1431, %v1615
      %v3284 = vmul.f32 %v3281, %v3283
      %v3287 = vmul.f32 %v1477, %v1623
      %v3288 = vmul.f32 %v1478, %v1624
      %v3289 = vsel %vm1481, %v3287, 0.0
      %v3290 = vsel %vm1481, %v3288, 0.0
      %v3291 = vadd.f32 %v3289, %v3290
      %v3292 = vsel %vm3233, %v271, 0.0
      %v3293 = vsel %vm3233, %v275, 0.0
      %v3294 = vadd.f32 %v3292, %v3293
      %v3295 = vmax.f32 %v3294, 1e-16
      %v3297 = vrot.slane %v3295, 6
      %v3299 = vmul.f32 %v1485, %v3297
      %v3300 = vrsqrt.pop %v3299
      %v3301 = vmul.f32 %v3291, %v3300
      %v3302 = vmax.f32 %v3301, 0.0
      %v3303 = vmin.f32 %v3302, 1.0
      %v3304 = vsub.f32 %v3303, 1.0
      %v3305 = vmul.f32 %v3304, 1.4285715
      %v3306 = vmul.f32 %v3305, 1.442695
      %v3307 = vpow.pop %v3306
      %v3309 = vmul.f32 %v3307, %v1655
      %v3310 = vmul.f32 %v3309, 10.0
      %v3311 = vmul.f32 %v3310, 1.442695
      %v3312 = vpow.pop %v3311
      %v3313 = vadd.f32 %v3255, %v3312
      %v3314 = vmul.f32 %v3312, %v3284
      %v3315 = vadd.f32 %v3257, %v3314
      %v3316 = vmul.f32 %v3284, 10.0
      %v3317 = vmul.f32 %v3316, 1.442695
      %v3318 = vpow.pop %v3317
      %v3319 = vadd.f32 %v3261, %v3318
      %v3320 = vadd.f32 %v3262, %v3309
      %v3325 = vmul.bf16 %v1467, %v1677
      %v3326 = vmul.bf16 %v1468, %v1684
      %v3327 = vmul.bf16 %v1469, %v1691
      %v3328 = vmul.bf16 %v1470, %v1698
      %v3329 = vunpack.c.l.bf16 %v3325
      %v3330 = vunpack.c.l.bf16 %v3326
      %v3331 = vunpack.c.l.bf16 %v3327
      %v3332 = vunpack.c.l.bf16 %v3328
      %v3333 = vsel %vm1481, %v3329, 0.0
      %v3334 = vsel %vm1481, %v3330, 0.0
      %v3335 = vadd.f32 %v3333, %v3334
      %v3336 = vsel %vm1481, %v3331, 0.0
      %v3337 = vadd.f32 %v3335, %v3336
      %v3338 = vsel %vm1481, %v3332, 0.0
      %v3339 = vadd.f32 %v3337, %v3338
      %v3341 = vmul.f32 %v1431, %v1726
      %v3342 = vmul.f32 %v3339, %v3341
      %v3345 = vmul.f32 %v1477, %v1732
      %v3346 = vmul.f32 %v1478, %v1733
      %v3347 = vsel %vm1481, %v3345, 0.0
      %v3348 = vsel %vm1481, %v3346, 0.0
      %v3349 = vadd.f32 %v3347, %v3348
      %vm3350 = vcmask 63505
      %v3351 = vsel %vm3350, %v269, 0.0
      %v3352 = vsel %vm3350, %v273, 0.0
      %v3353 = vadd.f32 %v3351, %v3352
      %v3354 = vmax.f32 %v3353, 1e-16
      %v3356 = vrot.slane %v3354, 7
      %v3358 = vmul.f32 %v1485, %v3356
      %v3359 = vrsqrt.pop %v3358
      %v3360 = vmul.f32 %v3349, %v3359
      %v3361 = vmax.f32 %v3360, 0.0
      %v3362 = vmin.f32 %v3361, 1.0
      %v3363 = vsub.f32 %v3362, 1.0
      %v3364 = vmul.f32 %v3363, 1.4285715
      %v3365 = vmul.f32 %v3364, 1.442695
      %v3366 = vpow.pop %v3365
      %v3368 = vmul.f32 %v3366, %v1764
      %v3369 = vmul.f32 %v3368, 10.0
      %v3370 = vmul.f32 %v3369, 1.442695
      %v3371 = vpow.pop %v3370
      %v3372 = vadd.f32 %v3313, %v3371
      %v3373 = vmul.f32 %v3371, %v3342
      %v3374 = vadd.f32 %v3315, %v3373
      %v3375 = vmul.f32 %v3342, 10.0
      %v3376 = vmul.f32 %v3375, 1.442695
      %v3377 = vpow.pop %v3376
      %v3378 = vadd.f32 %v3319, %v3377
      %v3379 = vadd.f32 %v3320, %v3368
      %v3384 = vmul.bf16 %v1467, %v1786
      %v3385 = vmul.bf16 %v1468, %v1793
      %v3386 = vmul.bf16 %v1469, %v1800
      %v3387 = vmul.bf16 %v1470, %v1807
      %v3388 = vunpack.c.l.bf16 %v3384
      %v3389 = vunpack.c.l.bf16 %v3385
      %v3390 = vunpack.c.l.bf16 %v3386
      %v3391 = vunpack.c.l.bf16 %v3387
      %v3392 = vsel %vm1481, %v3388, 0.0
      %v3393 = vsel %vm1481, %v3389, 0.0
      %v3394 = vadd.f32 %v3392, %v3393
      %v3395 = vsel %vm1481, %v3390, 0.0
      %v3396 = vadd.f32 %v3394, %v3395
      %v3397 = vsel %vm1481, %v3391, 0.0
      %v3398 = vadd.f32 %v3396, %v3397
      %v3400 = vmul.f32 %v1431, %v1835
      %v3401 = vmul.f32 %v3398, %v3400
      %v3404 = vmul.f32 %v1477, %v1841
      %v3405 = vmul.f32 %v1478, %v1842
      %v3406 = vsel %vm1481, %v3404, 0.0
      %v3407 = vsel %vm1481, %v3405, 0.0
      %v3408 = vadd.f32 %v3406, %v3407
      %v3409 = vsel %vm3350, %v271, 0.0
      %v3410 = vsel %vm3350, %v275, 0.0
      %v3411 = vadd.f32 %v3409, %v3410
      %v3412 = vmax.f32 %v3411, 1e-16
      %v3414 = vrot.slane %v3412, 7
      %v3416 = vmul.f32 %v1485, %v3414
      %v3417 = vrsqrt.pop %v3416
      %v3418 = vmul.f32 %v3408, %v3417
      %v3419 = vmax.f32 %v3418, 0.0
      %v3420 = vmin.f32 %v3419, 1.0
      %v3421 = vsub.f32 %v3420, 1.0
      %v3422 = vmul.f32 %v3421, 1.4285715
      %v3423 = vmul.f32 %v3422, 1.442695
      %v3424 = vpow.pop %v3423
      %v3426 = vmul.f32 %v3424, %v1872
      %v3427 = vmul.f32 %v3426, 10.0
      %v3428 = vmul.f32 %v3427, 1.442695
      %v3429 = vpow.pop %v3428
      %v3430 = vadd.f32 %v3372, %v3429
      %v3431 = vmul.f32 %v3429, %v3401
      %v3432 = vadd.f32 %v3374, %v3431
      %v3433 = vmul.f32 %v3401, 10.0
      %v3434 = vmul.f32 %v3433, 1.442695
      %v3435 = vpow.pop %v3434
      %v3436 = vadd.f32 %v3378, %v3435
      %v3437 = vadd.f32 %v3379, %v3426
      %v3438 = vmul.bf16 %v1467, %v493
      %v3439 = vmul.bf16 %v1468, %v494
      %v3440 = vmul.bf16 %v1469, %v495
      %v3441 = vmul.bf16 %v1470, %v496
      %v3442 = vunpack.c.l.bf16 %v3438
      %v3443 = vunpack.c.l.bf16 %v3439
      %v3444 = vunpack.c.l.bf16 %v3440
      %v3445 = vunpack.c.l.bf16 %v3441
      %v3446 = vsel %vm1481, %v3442, 0.0
      %v3447 = vsel %vm1481, %v3443, 0.0
      %v3448 = vadd.f32 %v3446, %v3447
      %v3449 = vsel %vm1481, %v3444, 0.0
      %v3450 = vadd.f32 %v3448, %v3449
      %v3451 = vsel %vm1481, %v3445, 0.0
      %v3452 = vadd.f32 %v3450, %v3451
      %v3453 = vmul.f32 %v1431, %v573
      %v3454 = vmul.f32 %v3452, %v3453
      %v3455 = vmul.f32 %v1477, %v261
      %v3456 = vmul.f32 %v1478, %v262
      %v3457 = vsel %vm1481, %v3455, 0.0
      %v3458 = vsel %vm1481, %v3456, 0.0
      %v3459 = vadd.f32 %v3457, %v3458
      %v3460 = vsel %vm1481, %v269, 0.0
      %v3461 = vsel %vm1481, %v273, 0.0
      %v3462 = vadd.f32 %v3460, %v3461
      %v3463 = vmax.f32 %v3462, 1e-16
      %v3464 = vmul.f32 %v1485, %v3463
      %v3465 = vrsqrt.pop %v3464
      %v3466 = vmul.f32 %v3459, %v3465
      %v3467 = vmax.f32 %v3466, 0.0
      %v3468 = vmin.f32 %v3467, 1.0
      %v3469 = vsub.f32 %v3468, 1.0
      %v3470 = vmul.f32 %v3469, 1.4285715
      %v3471 = vmul.f32 %v3470, 1.442695
      %v3472 = vpow.pop %v3471
      %v3473 = vmul.f32 %v3472, %v489
      %v3474 = vmul.f32 %v3473, 10.0
      %v3475 = vmul.f32 %v3474, 1.442695
      %v3476 = vpow.pop %v3475
      %v3477 = vadd.f32 %v3430, %v3476
      %v3478 = vmul.f32 %v3476, %v3454
      %v3479 = vadd.f32 %v3432, %v3478
      %v3480 = vmul.f32 %v3454, 10.0
      %v3481 = vmul.f32 %v3480, 1.442695
      %v3482 = vpow.pop %v3481
      %v3483 = vadd.f32 %v3436, %v3482
      %v3484 = vadd.f32 %v3437, %v3473
      %v3485 = vlog2.pop %v3483
      %v3486 = vmul.f32 %v3485, 0.6931472
      %v3487 = vrcp.pop %v3477
      %v3488 = vmul.f32 %v3479, %v3487
      %v3489 = vmul.f32 %v3488, 10.0
      %v3490 = vsub.f32 %v3486, %v3489
      %v3491 = vmul.f32 %v3484, 0.04
      %v3492 = vsub.f32 %v3491, 0.01
      %v3493 = vmax.f32 %v3492, 0.0
      %v3494 = vmul.f32 %v3490, %v3493
      %v3496 = vrot.slane %v3494, 2
      %3497 = vrot.lane.b32.xlu0 %v3496, 126
      %v3498 = vpop.permute.xlu0 %3497
      %v3500 = vsel %vm1543, %v3498, 0.0
      %3501 = vadd.xlane.f32.xlu0 %v3500
      %v3502 = vpop.xlane.xlu0 %3501
      %v3503 = vrot.slane %v3502, 4
      %v3504 = vadd.f32 %v3502, %v3503
      %v3505 = vrot.slane %v3504, 2
      %v3506 = vadd.f32 %v3504, %v3505
      %v3507 = vrot.slane %v3506, 1
      %v3508 = vadd.f32 %v3506, %v3507
      %s3509 = vtos %v3508
      %v3511 = vrot.slane %v3493, 2
      %3512 = vrot.lane.b32.xlu0 %v3511, 126
      %v3513 = vpop.permute.xlu0 %3512
      %v3515 = vsel %vm1543, %v3513, 0.0
      %3516 = vadd.xlane.f32.xlu0 %v3515
      %v3517 = vpop.xlane.xlu0 %3516
      %v3518 = vrot.slane %v3517, 4
      %v3519 = vadd.f32 %v3517, %v3518
      %v3520 = vrot.slane %v3519, 2
      %v3521 = vadd.f32 %v3519, %v3520
      %v3522 = vrot.slane %v3521, 1
      %v3523 = vadd.f32 %v3521, %v3522
      %s3524 = vtos %v3523
      %v3525 = vlaneseq
      %v3526 = vshrl.u32 %v3525, 7
      %vm3527 = vcmp.eq.s32.totalorder %v3526, 0
      %vm3528 = vcmp.eq.s32.totalorder %v3526, 1
      %vm3529 = vcmp.eq.s32.totalorder %v3526, 2
      %v3530 = vstv %s3524
      %v3531 = vsel %vm3529, %v3530, 0.0
      %v3532 = vstv %s3509
      %v3533 = vsel %vm3528, %v3532, %v3531
      %v3534 = vstv %s475
      %v3535 = vsel %vm3527, %v3534, %v3533
      %3536 = vst [vmem:[%s255] sm:$0xff] %v3535
      %p3537 = scmp.lt.s32.totalorder %s15, 1
      %s3538 = scalar_select %p3537, %s15, 1
      %s3539 = smul.addr %s3538, 8
      %s3540 = scalar_lea.vmem %s4, %s3539
      // Predicated region
      $region37: #{flow_guided_seg_loss.1} parent=35 // pred_check
        %p3541 = pneg %p137
      $region38: #{flow_guided_seg_loss.1} parent=35 // pred_check_branch
        %3543 = sbr.rel (%p3541) target = $region40
      $region39: #{flow_guided_seg_loss.1} parent=35 // pred_region
        _
      $region40: #{flow_guided_seg_loss.1} parent=35 // pred_fallthru
        _
    $region36: #{flow_guided_seg_loss.1} parent=5 // pred_fallthru
      _
    %p3544 = scmp.le.s32.totalorder 2, %s10
    // Predicated region
    $region41: #{flow_guided_seg_loss.1} parent=5 // pred_check
      %p3545 = pneg %p3544
    $region42: #{flow_guided_seg_loss.1} parent=5 // pred_check_branch
      %3547 = sbr.rel (%p3545) target = $region44
    $region43: #{flow_guided_seg_loss.1} parent=5 // pred_region
      %s3548 = ssub.s32 %s10, 2
      // Predicated region
      $region45: #{flow_guided_seg_loss.1} parent=43 // pred_check
        %p3549 = pneg %p143
      $region46: #{flow_guided_seg_loss.1} parent=43 // pred_check_branch
        %3551 = sbr.rel (%p3549) target = $region48
      $region47: #{flow_guided_seg_loss.1} parent=43 // pred_region
        %p3552 = scmp.lt.s32.totalorder %s16, 1
        %s3553 = scalar_select %p3552, %s16, 1
        %s3554 = smul.addr %s3553, 8
        %s3555 = scalar_lea.vmem %s4, %s3554
      $region48: #{flow_guided_seg_loss.1} parent=43 // pred_fallthru
        _
    $region44: #{flow_guided_seg_loss.1} parent=5 // pred_fallthru
      _
  $region6: #{flow_guided_seg_loss.1} parent=0 // loop_footer
    %s14 = sadd.s32 1, %s10
  $region7: #{flow_guided_seg_loss.1} parent=0 // loop_footer_branch
    %9 = sbr.rel target = $region3
  $region8: #{flow_guided_seg_loss.1} parent=0 // loop_exit
    _

</llo_original>
